<compile_context>
chip_gen: v6e
topology: v6e:2x2x1
jax: 0.10.0
libtpu: 0.0.40
codegen_flags: <defaults>
</compile_context>

<pallas_src>
import jax
import jax.numpy as jnp
from jax import lax
from jax.experimental import pallas as pl
from jax.experimental.pallas import tpu as pltpu

# Problem constants implied by the module (fc1 expects 6*4*4 -> 16x16 input).
C_IN = 4 * 128      # 512
C_OUT = 6
KH = KW = 3
STRIDE = 4
PAD = 1
H = W = 16
OH = OW = 4
P = OH * OW                 # 16 output spatial positions
K_FLAT = C_IN * H * W       # 131072 flattened input features per batch row


def behaviour_kernel(x_ref, w_ref, b_ref, logit_ref, sig_ref):
    # x_ref: (TILE_B, K_FLAT) VMEM, w_ref: (1, K_FLAT) VMEM (resident),
    # b_ref: (1, 1) SMEM scalar.
    # Lane-dense VPU multiply + reduce (avoids an N=1 masked MXU matmul).
    prod = x_ref[...] * w_ref[...]                           # (TILE_B, K)
    logits = jnp.sum(prod, axis=-1, keepdims=True) + b_ref[0, 0]
    logit_ref[...] = logits
    sig_ref[...] = jax.nn.sigmoid(logits)


def _fold_params(w_conv, b_conv, w_fc, b_fc):
    """Fold conv1 + flatten + fc1 (all affine) into one (1, C*H*W) weight
    plus a scalar bias, matching PyTorch's (c, h, w) flatten order."""
    wfc_cp = w_fc.reshape(C_OUT, P).astype(jnp.float32)      # [c_out, p], p = oh*OW+ow
    # Fold fc into conv weight per output spatial position p.
    w_comb = jnp.einsum('oikl,op->pikl',
                        w_conv.astype(jnp.float32), wfc_cp)  # (P, C_IN, KH, KW)
    # Scatter each 3x3 window into padded input coordinates (stride 4, pad 1).
    w_eff_pad = jnp.zeros((C_IN, H + 2 * PAD, W + 2 * PAD), jnp.float32)
    for oh in range(OH):
        for ow in range(OW):
            p = oh * OW + ow
            w_eff_pad = w_eff_pad.at[:, oh * STRIDE:oh * STRIDE + KH,
                                        ow * STRIDE:ow * STRIDE + KW].add(w_comb[p])
    w_eff = w_eff_pad[:, PAD:PAD + H, PAD:PAD + W].reshape(1, K_FLAT)
    b_eff = (jnp.sum(b_conv.astype(jnp.float32)[:, None] * wfc_cp)
             + b_fc.astype(jnp.float32)[0]).reshape(1, 1)
    return w_eff, b_eff


@jax.jit
def behaviour_forward(x, w_conv, b_conv, w_fc, b_fc):
    """x: (B, 512, 16, 16) f32 NCHW.  Returns (logits, sigmoid(logits)), each (B, 1)."""
    B = x.shape[0]
    w_eff, b_eff = _fold_params(w_conv, b_conv, w_fc, b_fc)
    x_flat = x.reshape(B, K_FLAT).astype(jnp.float32)        # free view (C-order)

    # Batch tile: 16 rows = 8 MiB per buffer -> 16 MiB double-buffered + 1 MiB
    # of resident weight.  Fits v7x (64 MiB physical) and v5e/v6e comfortably.
    TILE_B = 16 if B >= 16 else 8
    Bp = ((B + TILE_B - 1) // TILE_B) * TILE_B
    if Bp != B:
        x_flat = jnp.pad(x_flat, ((0, Bp - B), (0, 0)))
    grid = (Bp // TILE_B,)

    cost = pl.CostEstimate(
        flops=2 * Bp * K_FLAT,
        transcendentals=Bp,
        bytes_accessed=4 * (Bp * K_FLAT + K_FLAT + 1 + 2 * Bp))

    logits, sig = pl.pallas_call(
        behaviour_kernel,
        out_shape=(jax.ShapeDtypeStruct((Bp, 1), jnp.float32),
                   jax.ShapeDtypeStruct((Bp, 1), jnp.float32)),
        grid=grid,
        in_specs=[
            pl.BlockSpec((TILE_B, K_FLAT), lambda i: (i, 0)),          # x tile
            pl.BlockSpec((1, K_FLAT), lambda i: (0, 0)),               # resident W_eff
            pl.BlockSpec(memory_space=pltpu.MemorySpace.SMEM),         # scalar bias
        ],
        out_specs=(pl.BlockSpec((TILE_B, 1), lambda i: (i, 0)),
                   pl.BlockSpec((TILE_B, 1), lambda i: (i, 0))),
        compiler_params=pltpu.CompilerParams(
            dimension_semantics=("parallel",),
            vmem_limit_bytes=32 * 1024 * 1024),
        cost_estimate=cost,
    )(x_flat, w_eff, b_eff)
    return logits[:B], sig[:B]


def behaviour_ref(x, w_conv, b_conv, w_fc, b_fc):
    """Pure-JAX reference matching the PyTorch forward."""
    conv = lax.conv_general_dilated(
        x, w_conv, window_strides=(STRIDE, STRIDE),
        padding=((PAD, PAD), (PAD, PAD)),
        dimension_numbers=("NCHW", "OIHW", "NCHW"),
        precision=lax.Precision.HIGHEST)
    conv = conv + b_conv[None, :, None, None]
    flat = conv.reshape(x.shape[0], -1)                      # (B, 96), (c,h,w) order
    logits = jnp.dot(flat, w_fc.T, precision=lax.Precision.HIGHEST) + b_fc
    return logits, jax.nn.sigmoid(logits)


if __name__ == "__main__":
    key = jax.random.PRNGKey(0)
    kx, kw1, kb1, kw2, kb2 = jax.random.split(key, 5)

    B = 2
    x = jax.random.normal(kx, (B, C_IN, H, W), dtype=jnp.float32)

    # Deterministic synthetic parameters (shapes from Behaviour.__init__).
    w_conv = jax.random.normal(kw1, (C_OUT, C_IN, KH, KW), dtype=jnp.float32) * 0.02
    b_conv = jax.random.normal(kb1, (C_OUT,), dtype=jnp.float32) * 0.02
    w_fc = jax.random.normal(kw2, (1, C_OUT * OH * OW), dtype=jnp.float32) * 0.05
    b_fc = jax.random.normal(kb2, (1,), dtype=jnp.float32) * 0.05

    logits, sig = behaviour_forward(x, w_conv, b_conv, w_fc, b_fc)
    logits = jax.block_until_ready(logits)
    sig = jax.block_until_ready(sig)

    ref_logits, ref_sig = behaviour_ref(x, w_conv, b_conv, w_fc, b_fc)
    assert logits.shape == (B, 1) and sig.shape == (B, 1)
    assert jnp.allclose(logits, ref_logits, rtol=1e-4, atol=1e-4), (
        float(jnp.max(jnp.abs(logits - ref_logits))))
    assert jnp.allclose(sig, ref_sig, rtol=1e-4, atol=1e-4)

    print("KERNEL_OK")
</pallas_src>

<mosaic_0001>
module attributes {stable_mosaic.version = 11 : i64} {
  func.func @behaviour_kernel(%arg0: i32, %arg1: memref<8x131072xf32, #tpu.memory_space<vmem>>, %arg2: memref<1x131072xf32, #tpu.memory_space<vmem>>, %arg3: memref<1x1xf32, #tpu.memory_space<smem>>, %arg4: memref<8x1xf32, #tpu.memory_space<vmem>>, %arg5: memref<8x1xf32, #tpu.memory_space<vmem>>) attributes {dimension_semantics = [#tpu.dimension_semantics<parallel>], iteration_bounds = array<i64: 1>, scalar_prefetch = 0 : i64, scratch_operands = 0 : i64, tpu.core_type = #tpu.core_type<tc>, window_params = [{transform_indices = @transform_0, window_bounds = array<i64: 8, 131072>}, {pipeline_mode = #tpu.pipeline_mode<synchronous>, transform_indices = @transform_1, window_bounds = array<i64: 1, 131072>}, {transform_indices = @transform_2, window_bounds = array<i64: 1, 1>}, {transform_indices = @transform_3, window_bounds = array<i64: 8, 1>}, {transform_indices = @transform_4, window_bounds = array<i64: 8, 1>}]} {
    %c0 = arith.constant 0 : index
    %c0_0 = arith.constant 0 : index
    %0 = vector.load %arg1[%c0, %c0_0] : memref<8x131072xf32, #tpu.memory_space<vmem>>, vector<8x131072xf32>
    %c0_1 = arith.constant 0 : index
    %c0_2 = arith.constant 0 : index
    %1 = vector.load %arg2[%c0_1, %c0_2] : memref<1x131072xf32, #tpu.memory_space<vmem>>, vector<1x131072xf32>
    %2 = vector.broadcast %1 : vector<1x131072xf32> to vector<8x131072xf32>
    %3 = arith.mulf %0, %2 : vector<8x131072xf32>
    %cst = arith.constant dense<0.000000e+00> : vector<8xf32>
    %4 = vector.multi_reduction <add>, %3, %cst [1] : vector<8x131072xf32> to vector<8xf32>
    %5 = vector.shape_cast %4 : vector<8xf32> to vector<8x1xf32>
    %c0_3 = arith.constant 0 : index
    %c0_4 = arith.constant 0 : index
    %6 = memref.load %arg3[%c0_3, %c0_4] : memref<1x1xf32, #tpu.memory_space<smem>>
    %7 = vector.broadcast %6 : f32 to vector<8x1xf32>
    %8 = arith.addf %5, %7 : vector<8x1xf32>
    %c0_5 = arith.constant 0 : index
    %c0_6 = arith.constant 0 : index
    %9 = vector.load %arg4[%c0_5, %c0_6] : memref<8x1xf32, #tpu.memory_space<vmem>>, vector<8x1xf32>
    tpu.vector_store %arg4[%c0_5, %c0_6], %8 {strides = array<i32>} : memref<8x1xf32, #tpu.memory_space<vmem>>, vector<8x1xf32>,
    %10 = arith.negf %8 : vector<8x1xf32>
    %11 = math.exp %10 : vector<8x1xf32>
    %cst_7 = arith.constant 1.000000e+00 : f32
    %12 = vector.broadcast %cst_7 : f32 to vector<8x1xf32>
    %13 = arith.addf %12, %11 : vector<8x1xf32>
    %14 = arith.divf %12, %13 : vector<8x1xf32>
    %c0_8 = arith.constant 0 : index
    %c0_9 = arith.constant 0 : index
    %15 = vector.load %arg5[%c0_8, %c0_9] : memref<8x1xf32, #tpu.memory_space<vmem>>, vector<8x1xf32>
    tpu.vector_store %arg5[%c0_8, %c0_9], %14 {strides = array<i32>} : memref<8x1xf32, #tpu.memory_space<vmem>>, vector<8x1xf32>,
    return
  }
  func.func @transform_0(%arg0: i32) -> (i32, i32) {
    %c0_i32 = arith.constant 0 : i32
    %c0_i32_0 = arith.constant 0 : i32
    return %arg0, %c0_i32 : i32, i32
  }
  func.func @transform_1(%arg0: i32) -> (i32, i32) {
    %c0_i32 = arith.constant 0 : i32
    %c0_i32_0 = arith.constant 0 : i32
    %c0_i32_1 = arith.constant 0 : i32
    return %c0_i32, %c0_i32_0 : i32, i32
  }
  func.func @transform_2(%arg0: i32) -> (i32, i32) {
    %c0_i32 = arith.constant 0 : i32
    %c0_i32_0 = arith.constant 0 : i32
    %c0_i32_1 = arith.constant 0 : i32
    return %c0_i32, %c0_i32_0 : i32, i32
  }
  func.func @transform_3(%arg0: i32) -> (i32, i32) {
    %c0_i32 = arith.constant 0 : i32
    %c0_i32_0 = arith.constant 0 : i32
    return %arg0, %c0_i32 : i32, i32
  }
  func.func @transform_4(%arg0: i32) -> (i32, i32) {
    %c0_i32 = arith.constant 0 : i32
    %c0_i32_0 = arith.constant 0 : i32
    return %arg0, %c0_i32 : i32, i32
  }
}

</mosaic_0001>

<llo_original>
// kernel: behaviour_forward.1
$region0: #{behaviour_forward.1}
  #allocation0 [shape = 'u32[]', space=smem, size = 0x4, offset = 0x4, fixed_abs, tag = 'smem constant byte address 0x4 - core index']
  #allocation1 [shape = 'u32[144,128]{1,0:T(1,128)}', space=vmem, size = 0x12000, scoped, tag = 'internal scratch']
  #allocation2 [shape = 'f32[1,1]{1,0:T(1,128)S(6)}', space=smem, size = 0x200, scoped, tag = 'scoped memory for behaviour_forward.1']
  %s0 = inlined_call_operand.vmem [shape: f32[8,131072], index: 0, kind: input, shape index: {}]
  %s1 = inlined_call_operand.vmem [shape: f32[1,131072], index: 1, kind: input, shape index: {}]
  %s2 = inlined_call_operand.<no memory space> [shape: f32[1,1], index: 2, kind: input, shape index: {}]
  %s3 = inlined_call_operand.vmem [shape: f32[8,1], index: 3, kind: output, shape index: {0}]
  %s4 = inlined_call_operand.vmem [shape: f32[8,1], index: 4, kind: output, shape index: {1}]
  %5 = xla_tuple %s3, %s4
  %s6 = sld [smem:[#allocation0]]
  $region30: #{behaviour_forward.1} parent=0
    _
  %s8 = ssub.s32 1, %s6
  %s9 = scalar_select 0, %s8, %s6
  %10 = sst [smem:[#allocation2]] %s2
  // Predicated region
  $region2: #{behaviour_forward.1} parent=0 // pred_check
    _
  $region3: #{behaviour_forward.1} parent=0 // pred_check_branch
    %12 = sbr.rel (0) target = $region5
  $region4: #{behaviour_forward.1} parent=0 // pred_region
    _
  $region5: #{behaviour_forward.1} parent=0 // pred_fallthru
    _
  // Predicated region
  $region6: #{behaviour_forward.1} parent=0 // pred_check
    _
  $region7: #{behaviour_forward.1} parent=0 // pred_check_branch
    %14 = sbr.rel (0) target = $region9
  $region8: #{behaviour_forward.1} parent=0 // pred_region
    _
  $region9: #{behaviour_forward.1} parent=0 // pred_fallthru
    _
  // Predicated region
  $region10: #{behaviour_forward.1} parent=0 // pred_check
    _
  $region11: #{behaviour_forward.1} parent=0 // pred_check_branch
    %16 = sbr.rel (0) target = $region13
  $region12: #{behaviour_forward.1} parent=0 // pred_region
    _
  $region13: #{behaviour_forward.1} parent=0 // pred_fallthru
    _
  %v17 = vld [vmem:[%s0] sm:$0xff]
  %v18 = vld [vmem:[%s0 + $0x8] sm:$0xff]
  %v19 = vld [vmem:[%s0 + $0x10] sm:$0xff]
  %v20 = vld [vmem:[%s0 + $0x18] sm:$0xff]
  %v21 = vld [vmem:[%s0 + $0x20] sm:$0xff]
  %v22 = vld [vmem:[%s0 + $0x28] sm:$0xff]
  %v23 = vld [vmem:[%s0 + $0x30] sm:$0xff]
  %v24 = vld [vmem:[%s0 + $0x38] sm:$0xff]
  %v25 = vld [vmem:[%s0 + $0x40] sm:$0xff]
  %v26 = vld [vmem:[%s0 + $0x48] sm:$0xff]
  %v27 = vld [vmem:[%s0 + $0x50] sm:$0xff]
  %v28 = vld [vmem:[%s0 + $0x58] sm:$0xff]
  %v29 = vld [vmem:[%s0 + $0x60] sm:$0xff]
  %v30 = vld [vmem:[%s0 + $0x68] sm:$0xff]
  %v31 = vld [vmem:[%s0 + $0x70] sm:$0xff]
  %v32 = vld [vmem:[%s0 + $0x78] sm:$0xff]
  %v33 = vld [vmem:[%s0 + $0x80] sm:$0xff]
  %v34 = vld [vmem:[%s0 + $0x88] sm:$0xff]
  %v35 = vld [vmem:[%s0 + $0x90] sm:$0xff]
  %v36 = vld [vmem:[%s0 + $0x98] sm:$0xff]
  %v37 = vld [vmem:[%s0 + $0xa0] sm:$0xff]
  %v38 = vld [vmem:[%s0 + $0xa8] sm:$0xff]
  %v39 = vld [vmem:[%s0 + $0xb0] sm:$0xff]
  %v40 = vld [vmem:[%s0 + $0xb8] sm:$0xff]
  %v41 = vld [vmem:[%s0 + $0xc0] sm:$0xff]
  %v42 = vld [vmem:[%s0 + $0xc8] sm:$0xff]
  %v43 = vld [vmem:[%s0 + $0xd0] sm:$0xff]
  %v44 = vld [vmem:[%s0 + $0xd8] sm:$0xff]
  %v45 = vld [vmem:[%s0 + $0xe0] sm:$0xff]
  %v46 = vld [vmem:[%s0 + $0xe8] sm:$0xff]
  %v47 = vld [vmem:[%s0 + $0xf0] sm:$0xff]
  %v48 = vld [vmem:[%s0 + $0xf8] sm:$0xff]
  %v49 = vld [vmem:[%s0 + $0x100] sm:$0xff]
  %v50 = vld [vmem:[%s0 + $0x108] sm:$0xff]
  %v51 = vld [vmem:[%s0 + $0x110] sm:$0xff]
  %v52 = vld [vmem:[%s0 + $0x118] sm:$0xff]
  %v53 = vld [vmem:[%s0 + $0x120] sm:$0xff]
  %v54 = vld [vmem:[%s0 + $0x128] sm:$0xff]
  %v55 = vld [vmem:[%s0 + $0x130] sm:$0xff]
  %v56 = vld [vmem:[%s0 + $0x138] sm:$0xff]
  %v57 = vld [vmem:[%s0 + $0x140] sm:$0xff]
  %v58 = vld [vmem:[%s0 + $0x148] sm:$0xff]
  %v59 = vld [vmem:[%s0 + $0x150] sm:$0xff]
  %v60 = vld [vmem:[%s0 + $0x158] sm:$0xff]
  %v61 = vld [vmem:[%s0 + $0x160] sm:$0xff]
  %v62 = vld [vmem:[%s0 + $0x168] sm:$0xff]
  %v63 = vld [vmem:[%s0 + $0x170] sm:$0xff]
  %v64 = vld [vmem:[%s0 + $0x178] sm:$0xff]
  %v65 = vld [vmem:[%s0 + $0x180] sm:$0xff]
  %v66 = vld [vmem:[%s0 + $0x188] sm:$0xff]
  %v67 = vld [vmem:[%s0 + $0x190] sm:$0xff]
  %v68 = vld [vmem:[%s0 + $0x198] sm:$0xff]
  %v69 = vld [vmem:[%s0 + $0x1a0] sm:$0xff]
  %v70 = vld [vmem:[%s0 + $0x1a8] sm:$0xff]
  %v71 = vld [vmem:[%s0 + $0x1b0] sm:$0xff]
  %v72 = vld [vmem:[%s0 + $0x1b8] sm:$0xff]
  %v73 = vld [vmem:[%s0 + $0x1c0] sm:$0xff]
  %v74 = vld [vmem:[%s0 + $0x1c8] sm:$0xff]
  %v75 = vld [vmem:[%s0 + $0x1d0] sm:$0xff]
  %v76 = vld [vmem:[%s0 + $0x1d8] sm:$0xff]
  %v77 = vld [vmem:[%s0 + $0x1e0] sm:$0xff]
  %v78 = vld [vmem:[%s0 + $0x1e8] sm:$0xff]
  %v79 = vld [vmem:[%s0 + $0x1f0] sm:$0xff]
  %v80 = vld [vmem:[%s0 + $0x1f8] sm:$0xff]
  %v81 = vld [vmem:[%s0 + $0x200] sm:$0xff]
  %v82 = vld [vmem:[%s0 + $0x208] sm:$0xff]
  %v83 = vld [vmem:[%s0 + $0x210] sm:$0xff]
  %v84 = vld [vmem:[%s0 + $0x218] sm:$0xff]
  %v85 = vld [vmem:[%s0 + $0x220] sm:$0xff]
  %v86 = vld [vmem:[%s0 + $0x228] sm:$0xff]
  %v87 = vld [vmem:[%s0 + $0x230] sm:$0xff]
  %v88 = vld [vmem:[%s0 + $0x238] sm:$0xff]
  %v89 = vld [vmem:[%s0 + $0x240] sm:$0xff]
  %v90 = vld [vmem:[%s0 + $0x248] sm:$0xff]
  %v91 = vld [vmem:[%s0 + $0x250] sm:$0xff]
  %v92 = vld [vmem:[%s0 + $0x258] sm:$0xff]
  %v93 = vld [vmem:[%s0 + $0x260] sm:$0xff]
  %v94 = vld [vmem:[%s0 + $0x268] sm:$0xff]
  %v95 = vld [vmem:[%s0 + $0x270] sm:$0xff]
  %v96 = vld [vmem:[%s0 + $0x278] sm:$0xff]
  %v97 = vld [vmem:[%s0 + $0x280] sm:$0xff]
  %v98 = vld [vmem:[%s0 + $0x288] sm:$0xff]
  %v99 = vld [vmem:[%s0 + $0x290] sm:$0xff]
  %v100 = vld [vmem:[%s0 + $0x298] sm:$0xff]
  %v101 = vld [vmem:[%s0 + $0x2a0] sm:$0xff]
  %v102 = vld [vmem:[%s0 + $0x2a8] sm:$0xff]
  %v103 = vld [vmem:[%s0 + $0x2b0] sm:$0xff]
  %v104 = vld [vmem:[%s0 + $0x2b8] sm:$0xff]
  %v105 = vld [vmem:[%s0 + $0x2c0] sm:$0xff]
  %v106 = vld [vmem:[%s0 + $0x2c8] sm:$0xff]
  %v107 = vld [vmem:[%s0 + $0x2d0] sm:$0xff]
  %v108 = vld [vmem:[%s0 + $0x2d8] sm:$0xff]
  %v109 = vld [vmem:[%s0 + $0x2e0] sm:$0xff]
  %v110 = vld [vmem:[%s0 + $0x2e8] sm:$0xff]
  %v111 = vld [vmem:[%s0 + $0x2f0] sm:$0xff]
  %v112 = vld [vmem:[%s0 + $0x2f8] sm:$0xff]
  %v113 = vld [vmem:[%s0 + $0x300] sm:$0xff]
  %v114 = vld [vmem:[%s0 + $0x308] sm:$0xff]
  %v115 = vld [vmem:[%s0 + $0x310] sm:$0xff]
  %v116 = vld [vmem:[%s0 + $0x318] sm:$0xff]
  %v117 = vld [vmem:[%s0 + $0x320] sm:$0xff]
  %v118 = vld [vmem:[%s0 + $0x328] sm:$0xff]
  %v119 = vld [vmem:[%s0 + $0x330] sm:$0xff]
  %v120 = vld [vmem:[%s0 + $0x338] sm:$0xff]
  %v121 = vld [vmem:[%s0 + $0x340] sm:$0xff]
  %v122 = vld [vmem:[%s0 + $0x348] sm:$0xff]
  %v123 = vld [vmem:[%s0 + $0x350] sm:$0xff]
  %v124 = vld [vmem:[%s0 + $0x358] sm:$0xff]
  %v125 = vld [vmem:[%s0 + $0x360] sm:$0xff]
  %v126 = vld [vmem:[%s0 + $0x368] sm:$0xff]
  %v127 = vld [vmem:[%s0 + $0x370] sm:$0xff]
  %v128 = vld [vmem:[%s0 + $0x378] sm:$0xff]
  %v129 = vld [vmem:[%s0 + $0x380] sm:$0xff]
  %v130 = vld [vmem:[%s0 + $0x388] sm:$0xff]
  %v131 = vld [vmem:[%s0 + $0x390] sm:$0xff]
  %v132 = vld [vmem:[%s0 + $0x398] sm:$0xff]
  %v133 = vld [vmem:[%s0 + $0x3a0] sm:$0xff]
  %v134 = vld [vmem:[%s0 + $0x3a8] sm:$0xff]
  %v135 = vld [vmem:[%s0 + $0x3b0] sm:$0xff]
  %v136 = vld [vmem:[%s0 + $0x3b8] sm:$0xff]
  %v137 = vld [vmem:[%s0 + $0x3c0] sm:$0xff]
  %v138 = vld [vmem:[%s0 + $0x3c8] sm:$0xff]
  %v139 = vld [vmem:[%s0 + $0x3d0] sm:$0xff]
  %v140 = vld [vmem:[%s0 + $0x3d8] sm:$0xff]
  %v141 = vld [vmem:[%s0 + $0x3e0] sm:$0xff]
  %v142 = vld [vmem:[%s0 + $0x3e8] sm:$0xff]
  %v143 = vld [vmem:[%s0 + $0x3f0] sm:$0xff]
  %v144 = vld [vmem:[%s0 + $0x3f8] sm:$0xff]
  %v145 = vld [vmem:[%s0 + $0x400] sm:$0xff]
  %v146 = vld [vmem:[%s0 + $0x408] sm:$0xff]
  %v147 = vld [vmem:[%s0 + $0x410] sm:$0xff]
  %v148 = vld [vmem:[%s0 + $0x418] sm:$0xff]
  %v149 = vld [vmem:[%s0 + $0x420] sm:$0xff]
  %v150 = vld [vmem:[%s0 + $0x428] sm:$0xff]
  %v151 = vld [vmem:[%s0 + $0x430] sm:$0xff]
  %v152 = vld [vmem:[%s0 + $0x438] sm:$0xff]
  %v153 = vld [vmem:[%s0 + $0x440] sm:$0xff]
  %v154 = vld [vmem:[%s0 + $0x448] sm:$0xff]
  %v155 = vld [vmem:[%s0 + $0x450] sm:$0xff]
  %v156 = vld [vmem:[%s0 + $0x458] sm:$0xff]
  %v157 = vld [vmem:[%s0 + $0x460] sm:$0xff]
  %v158 = vld [vmem:[%s0 + $0x468] sm:$0xff]
  %v159 = vld [vmem:[%s0 + $0x470] sm:$0xff]
  %v160 = vld [vmem:[%s0 + $0x478] sm:$0xff]
  %v161 = vld [vmem:[%s0 + $0x480] sm:$0xff]
  %v162 = vld [vmem:[%s0 + $0x488] sm:$0xff]
  %v163 = vld [vmem:[%s0 + $0x490] sm:$0xff]
  %v164 = vld [vmem:[%s0 + $0x498] sm:$0xff]
  %v165 = vld [vmem:[%s0 + $0x4a0] sm:$0xff]
  %v166 = vld [vmem:[%s0 + $0x4a8] sm:$0xff]
  %v167 = vld [vmem:[%s0 + $0x4b0] sm:$0xff]
  %v168 = vld [vmem:[%s0 + $0x4b8] sm:$0xff]
  %v169 = vld [vmem:[%s0 + $0x4c0] sm:$0xff]
  %v170 = vld [vmem:[%s0 + $0x4c8] sm:$0xff]
  %v171 = vld [vmem:[%s0 + $0x4d0] sm:$0xff]
  %v172 = vld [vmem:[%s0 + $0x4d8] sm:$0xff]
  %v173 = vld [vmem:[%s0 + $0x4e0] sm:$0xff]
  %v174 = vld [vmem:[%s0 + $0x4e8] sm:$0xff]
  %v175 = vld [vmem:[%s0 + $0x4f0] sm:$0xff]
  %v176 = vld [vmem:[%s0 + $0x4f8] sm:$0xff]
  %v177 = vld [vmem:[%s0 + $0x500] sm:$0xff]
  %v178 = vld [vmem:[%s0 + $0x508] sm:$0xff]
  %v179 = vld [vmem:[%s0 + $0x510] sm:$0xff]
  %v180 = vld [vmem:[%s0 + $0x518] sm:$0xff]
  %v181 = vld [vmem:[%s0 + $0x520] sm:$0xff]
  %v182 = vld [vmem:[%s0 + $0x528] sm:$0xff]
  %v183 = vld [vmem:[%s0 + $0x530] sm:$0xff]
  %v184 = vld [vmem:[%s0 + $0x538] sm:$0xff]
  %v185 = vld [vmem:[%s0 + $0x540] sm:$0xff]
  %v186 = vld [vmem:[%s0 + $0x548] sm:$0xff]
  %v187 = vld [vmem:[%s0 + $0x550] sm:$0xff]
  %v188 = vld [vmem:[%s0 + $0x558] sm:$0xff]
  %v189 = vld [vmem:[%s0 + $0x560] sm:$0xff]
  %v190 = vld [vmem:[%s0 + $0x568] sm:$0xff]
  %v191 = vld [vmem:[%s0 + $0x570] sm:$0xff]
  %v192 = vld [vmem:[%s0 + $0x578] sm:$0xff]
  %v193 = vld [vmem:[%s0 + $0x580] sm:$0xff]
  %v194 = vld [vmem:[%s0 + $0x588] sm:$0xff]
  %v195 = vld [vmem:[%s0 + $0x590] sm:$0xff]
  %v196 = vld [vmem:[%s0 + $0x598] sm:$0xff]
  %v197 = vld [vmem:[%s0 + $0x5a0] sm:$0xff]
  %v198 = vld [vmem:[%s0 + $0x5a8] sm:$0xff]
  %v199 = vld [vmem:[%s0 + $0x5b0] sm:$0xff]
  %v200 = vld [vmem:[%s0 + $0x5b8] sm:$0xff]
  %v201 = vld [vmem:[%s0 + $0x5c0] sm:$0xff]
  %v202 = vld [vmem:[%s0 + $0x5c8] sm:$0xff]
  %v203 = vld [vmem:[%s0 + $0x5d0] sm:$0xff]
  %v204 = vld [vmem:[%s0 + $0x5d8] sm:$0xff]
  %v205 = vld [vmem:[%s0 + $0x5e0] sm:$0xff]
  %v206 = vld [vmem:[%s0 + $0x5e8] sm:$0xff]
  %v207 = vld [vmem:[%s0 + $0x5f0] sm:$0xff]
  %v208 = vld [vmem:[%s0 + $0x5f8] sm:$0xff]
  %v209 = vld [vmem:[%s0 + $0x600] sm:$0xff]
  %v210 = vld [vmem:[%s0 + $0x608] sm:$0xff]
  %v211 = vld [vmem:[%s0 + $0x610] sm:$0xff]
  %v212 = vld [vmem:[%s0 + $0x618] sm:$0xff]
  %v213 = vld [vmem:[%s0 + $0x620] sm:$0xff]
  %v214 = vld [vmem:[%s0 + $0x628] sm:$0xff]
  %v215 = vld [vmem:[%s0 + $0x630] sm:$0xff]
  %v216 = vld [vmem:[%s0 + $0x638] sm:$0xff]
  %v217 = vld [vmem:[%s0 + $0x640] sm:$0xff]
  %v218 = vld [vmem:[%s0 + $0x648] sm:$0xff]
  %v219 = vld [vmem:[%s0 + $0x650] sm:$0xff]
  %v220 = vld [vmem:[%s0 + $0x658] sm:$0xff]
  %v221 = vld [vmem:[%s0 + $0x660] sm:$0xff]
  %v222 = vld [vmem:[%s0 + $0x668] sm:$0xff]
  %v223 = vld [vmem:[%s0 + $0x670] sm:$0xff]
  %v224 = vld [vmem:[%s0 + $0x678] sm:$0xff]
  %v225 = vld [vmem:[%s0 + $0x680] sm:$0xff]
  %v226 = vld [vmem:[%s0 + $0x688] sm:$0xff]
  %v227 = vld [vmem:[%s0 + $0x690] sm:$0xff]
  %v228 = vld [vmem:[%s0 + $0x698] sm:$0xff]
  %v229 = vld [vmem:[%s0 + $0x6a0] sm:$0xff]
  %v230 = vld [vmem:[%s0 + $0x6a8] sm:$0xff]
  %v231 = vld [vmem:[%s0 + $0x6b0] sm:$0xff]
  %v232 = vld [vmem:[%s0 + $0x6b8] sm:$0xff]
  %v233 = vld [vmem:[%s0 + $0x6c0] sm:$0xff]
  %v234 = vld [vmem:[%s0 + $0x6c8] sm:$0xff]
  %v235 = vld [vmem:[%s0 + $0x6d0] sm:$0xff]
  %v236 = vld [vmem:[%s0 + $0x6d8] sm:$0xff]
  %v237 = vld [vmem:[%s0 + $0x6e0] sm:$0xff]
  %v238 = vld [vmem:[%s0 + $0x6e8] sm:$0xff]
  %v239 = vld [vmem:[%s0 + $0x6f0] sm:$0xff]
  %v240 = vld [vmem:[%s0 + $0x6f8] sm:$0xff]
  %v241 = vld [vmem:[%s0 + $0x700] sm:$0xff]
  %v242 = vld [vmem:[%s0 + $0x708] sm:$0xff]
  %v243 = vld [vmem:[%s0 + $0x710] sm:$0xff]
  %v244 = vld [vmem:[%s0 + $0x718] sm:$0xff]
  %v245 = vld [vmem:[%s0 + $0x720] sm:$0xff]
  %v246 = vld [vmem:[%s0 + $0x728] sm:$0xff]
  %v247 = vld [vmem:[%s0 + $0x730] sm:$0xff]
  %v248 = vld [vmem:[%s0 + $0x738] sm:$0xff]
  %v249 = vld [vmem:[%s0 + $0x740] sm:$0xff]
  %v250 = vld [vmem:[%s0 + $0x748] sm:$0xff]
  %v251 = vld [vmem:[%s0 + $0x750] sm:$0xff]
  %v252 = vld [vmem:[%s0 + $0x758] sm:$0xff]
  %v253 = vld [vmem:[%s0 + $0x760] sm:$0xff]
  %v254 = vld [vmem:[%s0 + $0x768] sm:$0xff]
  %v255 = vld [vmem:[%s0 + $0x770] sm:$0xff]
  %v256 = vld [vmem:[%s0 + $0x778] sm:$0xff]
  %v257 = vld [vmem:[%s0 + $0x780] sm:$0xff]
  %v258 = vld [vmem:[%s0 + $0x788] sm:$0xff]
  %v259 = vld [vmem:[%s0 + $0x790] sm:$0xff]
  %v260 = vld [vmem:[%s0 + $0x798] sm:$0xff]
  %v261 = vld [vmem:[%s0 + $0x7a0] sm:$0xff]
  %v262 = vld [vmem:[%s0 + $0x7a8] sm:$0xff]
  %v263 = vld [vmem:[%s0 + $0x7b0] sm:$0xff]
  %v264 = vld [vmem:[%s0 + $0x7b8] sm:$0xff]
  %v265 = vld [vmem:[%s0 + $0x7c0] sm:$0xff]
  %v266 = vld [vmem:[%s0 + $0x7c8] sm:$0xff]
  %v267 = vld [vmem:[%s0 + $0x7d0] sm:$0xff]
  %v268 = vld [vmem:[%s0 + $0x7d8] sm:$0xff]
  %v269 = vld [vmem:[%s0 + $0x7e0] sm:$0xff]
  %v270 = vld [vmem:[%s0 + $0x7e8] sm:$0xff]
  %v271 = vld [vmem:[%s0 + $0x7f0] sm:$0xff]
  %v272 = vld [vmem:[%s0 + $0x7f8] sm:$0xff]
  %v273 = vld [vmem:[%s0 + $0x800] sm:$0xff]
  %v274 = vld [vmem:[%s0 + $0x808] sm:$0xff]
  %v275 = vld [vmem:[%s0 + $0x810] sm:$0xff]
  %v276 = vld [vmem:[%s0 + $0x818] sm:$0xff]
  %v277 = vld [vmem:[%s0 + $0x820] sm:$0xff]
  %v278 = vld [vmem:[%s0 + $0x828] sm:$0xff]
  %v279 = vld [vmem:[%s0 + $0x830] sm:$0xff]
  %v280 = vld [vmem:[%s0 + $0x838] sm:$0xff]
  %v281 = vld [vmem:[%s0 + $0x840] sm:$0xff]
  %v282 = vld [vmem:[%s0 + $0x848] sm:$0xff]
  %v283 = vld [vmem:[%s0 + $0x850] sm:$0xff]
  %v284 = vld [vmem:[%s0 + $0x858] sm:$0xff]
  %v285 = vld [vmem:[%s0 + $0x860] sm:$0xff]
  %v286 = vld [vmem:[%s0 + $0x868] sm:$0xff]
  %v287 = vld [vmem:[%s0 + $0x870] sm:$0xff]
  %v288 = vld [vmem:[%s0 + $0x878] sm:$0xff]
  %v289 = vld [vmem:[%s0 + $0x880] sm:$0xff]
  %v290 = vld [vmem:[%s0 + $0x888] sm:$0xff]
  %v291 = vld [vmem:[%s0 + $0x890] sm:$0xff]
  %v292 = vld [vmem:[%s0 + $0x898] sm:$0xff]
  %v293 = vld [vmem:[%s0 + $0x8a0] sm:$0xff]
  %v294 = vld [vmem:[%s0 + $0x8a8] sm:$0xff]
  %v295 = vld [vmem:[%s0 + $0x8b0] sm:$0xff]
  %v296 = vld [vmem:[%s0 + $0x8b8] sm:$0xff]
  %v297 = vld [vmem:[%s0 + $0x8c0] sm:$0xff]
  %v298 = vld [vmem:[%s0 + $0x8c8] sm:$0xff]
  %v299 = vld [vmem:[%s0 + $0x8d0] sm:$0xff]
  %v300 = vld [vmem:[%s0 + $0x8d8] sm:$0xff]
  %v301 = vld [vmem:[%s0 + $0x8e0] sm:$0xff]
  %v302 = vld [vmem:[%s0 + $0x8e8] sm:$0xff]
  %v303 = vld [vmem:[%s0 + $0x8f0] sm:$0xff]
  %v304 = vld [vmem:[%s0 + $0x8f8] sm:$0xff]
  %v305 = vld [vmem:[%s0 + $0x900] sm:$0xff]
  %v306 = vld [vmem:[%s0 + $0x908] sm:$0xff]
  %v307 = vld [vmem:[%s0 + $0x910] sm:$0xff]
  %v308 = vld [vmem:[%s0 + $0x918] sm:$0xff]
  %v309 = vld [vmem:[%s0 + $0x920] sm:$0xff]
  %v310 = vld [vmem:[%s0 + $0x928] sm:$0xff]
  %v311 = vld [vmem:[%s0 + $0x930] sm:$0xff]
  %v312 = vld [vmem:[%s0 + $0x938] sm:$0xff]
  %v313 = vld [vmem:[%s0 + $0x940] sm:$0xff]
  %v314 = vld [vmem:[%s0 + $0x948] sm:$0xff]
  %v315 = vld [vmem:[%s0 + $0x950] sm:$0xff]
  %v316 = vld [vmem:[%s0 + $0x958] sm:$0xff]
  %v317 = vld [vmem:[%s0 + $0x960] sm:$0xff]
  %v318 = vld [vmem:[%s0 + $0x968] sm:$0xff]
  %v319 = vld [vmem:[%s0 + $0x970] sm:$0xff]
  %v320 = vld [vmem:[%s0 + $0x978] sm:$0xff]
  %v321 = vld [vmem:[%s0 + $0x980] sm:$0xff]
  %v322 = vld [vmem:[%s0 + $0x988] sm:$0xff]
  %v323 = vld [vmem:[%s0 + $0x990] sm:$0xff]
  %v324 = vld [vmem:[%s0 + $0x998] sm:$0xff]
  %v325 = vld [vmem:[%s0 + $0x9a0] sm:$0xff]
  %v326 = vld [vmem:[%s0 + $0x9a8] sm:$0xff]
  %v327 = vld [vmem:[%s0 + $0x9b0] sm:$0xff]
  %v328 = vld [vmem:[%s0 + $0x9b8] sm:$0xff]
  %v329 = vld [vmem:[%s0 + $0x9c0] sm:$0xff]
  %v330 = vld [vmem:[%s0 + $0x9c8] sm:$0xff]
  %v331 = vld [vmem:[%s0 + $0x9d0] sm:$0xff]
  %v332 = vld [vmem:[%s0 + $0x9d8] sm:$0xff]
  %v333 = vld [vmem:[%s0 + $0x9e0] sm:$0xff]
  %v334 = vld [vmem:[%s0 + $0x9e8] sm:$0xff]
  %v335 = vld [vmem:[%s0 + $0x9f0] sm:$0xff]
  %v336 = vld [vmem:[%s0 + $0x9f8] sm:$0xff]
  %v337 = vld [vmem:[%s0 + $0xa00] sm:$0xff]
  %v338 = vld [vmem:[%s0 + $0xa08] sm:$0xff]
  %v339 = vld [vmem:[%s0 + $0xa10] sm:$0xff]
  %v340 = vld [vmem:[%s0 + $0xa18] sm:$0xff]
  %v341 = vld [vmem:[%s0 + $0xa20] sm:$0xff]
  %v342 = vld [vmem:[%s0 + $0xa28] sm:$0xff]
  %v343 = vld [vmem:[%s0 + $0xa30] sm:$0xff]
  %v344 = vld [vmem:[%s0 + $0xa38] sm:$0xff]
  %v345 = vld [vmem:[%s0 + $0xa40] sm:$0xff]
  %v346 = vld [vmem:[%s0 + $0xa48] sm:$0xff]
  %v347 = vld [vmem:[%s0 + $0xa50] sm:$0xff]
  %v348 = vld [vmem:[%s0 + $0xa58] sm:$0xff]
  %v349 = vld [vmem:[%s0 + $0xa60] sm:$0xff]
  %v350 = vld [vmem:[%s0 + $0xa68] sm:$0xff]
  %v351 = vld [vmem:[%s0 + $0xa70] sm:$0xff]
  %v352 = vld [vmem:[%s0 + $0xa78] sm:$0xff]
  %v353 = vld [vmem:[%s0 + $0xa80] sm:$0xff]
  %v354 = vld [vmem:[%s0 + $0xa88] sm:$0xff]
  %v355 = vld [vmem:[%s0 + $0xa90] sm:$0xff]
  %v356 = vld [vmem:[%s0 + $0xa98] sm:$0xff]
  %v357 = vld [vmem:[%s0 + $0xaa0] sm:$0xff]
  %v358 = vld [vmem:[%s0 + $0xaa8] sm:$0xff]
  %v359 = vld [vmem:[%s0 + $0xab0] sm:$0xff]
  %v360 = vld [vmem:[%s0 + $0xab8] sm:$0xff]
  %v361 = vld [vmem:[%s0 + $0xac0] sm:$0xff]
  %v362 = vld [vmem:[%s0 + $0xac8] sm:$0xff]
  %v363 = vld [vmem:[%s0 + $0xad0] sm:$0xff]
  %v364 = vld [vmem:[%s0 + $0xad8] sm:$0xff]
  %v365 = vld [vmem:[%s0 + $0xae0] sm:$0xff]
  %v366 = vld [vmem:[%s0 + $0xae8] sm:$0xff]
  %v367 = vld [vmem:[%s0 + $0xaf0] sm:$0xff]
  %v368 = vld [vmem:[%s0 + $0xaf8] sm:$0xff]
  %v369 = vld [vmem:[%s0 + $0xb00] sm:$0xff]
  %v370 = vld [vmem:[%s0 + $0xb08] sm:$0xff]
  %v371 = vld [vmem:[%s0 + $0xb10] sm:$0xff]
  %v372 = vld [vmem:[%s0 + $0xb18] sm:$0xff]
  %v373 = vld [vmem:[%s0 + $0xb20] sm:$0xff]
  %v374 = vld [vmem:[%s0 + $0xb28] sm:$0xff]
  %v375 = vld [vmem:[%s0 + $0xb30] sm:$0xff]
  %v376 = vld [vmem:[%s0 + $0xb38] sm:$0xff]
  %v377 = vld [vmem:[%s0 + $0xb40] sm:$0xff]
  %v378 = vld [vmem:[%s0 + $0xb48] sm:$0xff]
  %v379 = vld [vmem:[%s0 + $0xb50] sm:$0xff]
  %v380 = vld [vmem:[%s0 + $0xb58] sm:$0xff]
  %v381 = vld [vmem:[%s0 + $0xb60] sm:$0xff]
  %v382 = vld [vmem:[%s0 + $0xb68] sm:$0xff]
  %v383 = vld [vmem:[%s0 + $0xb70] sm:$0xff]
  %v384 = vld [vmem:[%s0 + $0xb78] sm:$0xff]
  %v385 = vld [vmem:[%s0 + $0xb80] sm:$0xff]
  %v386 = vld [vmem:[%s0 + $0xb88] sm:$0xff]
  %v387 = vld [vmem:[%s0 + $0xb90] sm:$0xff]
  %v388 = vld [vmem:[%s0 + $0xb98] sm:$0xff]
  %v389 = vld [vmem:[%s0 + $0xba0] sm:$0xff]
  %v390 = vld [vmem:[%s0 + $0xba8] sm:$0xff]
  %v391 = vld [vmem:[%s0 + $0xbb0] sm:$0xff]
  %v392 = vld [vmem:[%s0 + $0xbb8] sm:$0xff]
  %v393 = vld [vmem:[%s0 + $0xbc0] sm:$0xff]
  %v394 = vld [vmem:[%s0 + $0xbc8] sm:$0xff]
  %v395 = vld [vmem:[%s0 + $0xbd0] sm:$0xff]
  %v396 = vld [vmem:[%s0 + $0xbd8] sm:$0xff]
  %v397 = vld [vmem:[%s0 + $0xbe0] sm:$0xff]
  %v398 = vld [vmem:[%s0 + $0xbe8] sm:$0xff]
  %v399 = vld [vmem:[%s0 + $0xbf0] sm:$0xff]
  %v400 = vld [vmem:[%s0 + $0xbf8] sm:$0xff]
  %v401 = vld [vmem:[%s0 + $0xc00] sm:$0xff]
  %v402 = vld [vmem:[%s0 + $0xc08] sm:$0xff]
  %v403 = vld [vmem:[%s0 + $0xc10] sm:$0xff]
  %v404 = vld [vmem:[%s0 + $0xc18] sm:$0xff]
  %v405 = vld [vmem:[%s0 + $0xc20] sm:$0xff]
  %v406 = vld [vmem:[%s0 + $0xc28] sm:$0xff]
  %v407 = vld [vmem:[%s0 + $0xc30] sm:$0xff]
  %v408 = vld [vmem:[%s0 + $0xc38] sm:$0xff]
  %v409 = vld [vmem:[%s0 + $0xc40] sm:$0xff]
  %v410 = vld [vmem:[%s0 + $0xc48] sm:$0xff]
  %v411 = vld [vmem:[%s0 + $0xc50] sm:$0xff]
  %v412 = vld [vmem:[%s0 + $0xc58] sm:$0xff]
  %v413 = vld [vmem:[%s0 + $0xc60] sm:$0xff]
  %v414 = vld [vmem:[%s0 + $0xc68] sm:$0xff]
  %v415 = vld [vmem:[%s0 + $0xc70] sm:$0xff]
  %v416 = vld [vmem:[%s0 + $0xc78] sm:$0xff]
  %v417 = vld [vmem:[%s0 + $0xc80] sm:$0xff]
  %v418 = vld [vmem:[%s0 + $0xc88] sm:$0xff]
  %v419 = vld [vmem:[%s0 + $0xc90] sm:$0xff]
  %v420 = vld [vmem:[%s0 + $0xc98] sm:$0xff]
  %v421 = vld [vmem:[%s0 + $0xca0] sm:$0xff]
  %v422 = vld [vmem:[%s0 + $0xca8] sm:$0xff]
  %v423 = vld [vmem:[%s0 + $0xcb0] sm:$0xff]
  %v424 = vld [vmem:[%s0 + $0xcb8] sm:$0xff]
  %v425 = vld [vmem:[%s0 + $0xcc0] sm:$0xff]
  %v426 = vld [vmem:[%s0 + $0xcc8] sm:$0xff]
  %v427 = vld [vmem:[%s0 + $0xcd0] sm:$0xff]
  %v428 = vld [vmem:[%s0 + $0xcd8] sm:$0xff]
  %v429 = vld [vmem:[%s0 + $0xce0] sm:$0xff]
  %v430 = vld [vmem:[%s0 + $0xce8] sm:$0xff]
  %v431 = vld [vmem:[%s0 + $0xcf0] sm:$0xff]
  %v432 = vld [vmem:[%s0 + $0xcf8] sm:$0xff]
  %v433 = vld [vmem:[%s0 + $0xd00] sm:$0xff]
  %v434 = vld [vmem:[%s0 + $0xd08] sm:$0xff]
  %v435 = vld [vmem:[%s0 + $0xd10] sm:$0xff]
  %v436 = vld [vmem:[%s0 + $0xd18] sm:$0xff]
  %v437 = vld [vmem:[%s0 + $0xd20] sm:$0xff]
  %v438 = vld [vmem:[%s0 + $0xd28] sm:$0xff]
  %v439 = vld [vmem:[%s0 + $0xd30] sm:$0xff]
  %v440 = vld [vmem:[%s0 + $0xd38] sm:$0xff]
  %v441 = vld [vmem:[%s0 + $0xd40] sm:$0xff]
  %v442 = vld [vmem:[%s0 + $0xd48] sm:$0xff]
  %v443 = vld [vmem:[%s0 + $0xd50] sm:$0xff]
  %v444 = vld [vmem:[%s0 + $0xd58] sm:$0xff]
  %v445 = vld [vmem:[%s0 + $0xd60] sm:$0xff]
  %v446 = vld [vmem:[%s0 + $0xd68] sm:$0xff]
  %v447 = vld [vmem:[%s0 + $0xd70] sm:$0xff]
  %v448 = vld [vmem:[%s0 + $0xd78] sm:$0xff]
  %v449 = vld [vmem:[%s0 + $0xd80] sm:$0xff]
  %v450 = vld [vmem:[%s0 + $0xd88] sm:$0xff]
  %v451 = vld [vmem:[%s0 + $0xd90] sm:$0xff]
  %v452 = vld [vmem:[%s0 + $0xd98] sm:$0xff]
  %v453 = vld [vmem:[%s0 + $0xda0] sm:$0xff]
  %v454 = vld [vmem:[%s0 + $0xda8] sm:$0xff]
  %v455 = vld [vmem:[%s0 + $0xdb0] sm:$0xff]
  %v456 = vld [vmem:[%s0 + $0xdb8] sm:$0xff]
  %v457 = vld [vmem:[%s0 + $0xdc0] sm:$0xff]
  %v458 = vld [vmem:[%s0 + $0xdc8] sm:$0xff]
  %v459 = vld [vmem:[%s0 + $0xdd0] sm:$0xff]
  %v460 = vld [vmem:[%s0 + $0xdd8] sm:$0xff]
  %v461 = vld [vmem:[%s0 + $0xde0] sm:$0xff]
  %v462 = vld [vmem:[%s0 + $0xde8] sm:$0xff]
  %v463 = vld [vmem:[%s0 + $0xdf0] sm:$0xff]
  %v464 = vld [vmem:[%s0 + $0xdf8] sm:$0xff]
  %v465 = vld [vmem:[%s0 + $0xe00] sm:$0xff]
  %v466 = vld [vmem:[%s0 + $0xe08] sm:$0xff]
  %v467 = vld [vmem:[%s0 + $0xe10] sm:$0xff]
  %v468 = vld [vmem:[%s0 + $0xe18] sm:$0xff]
  %v469 = vld [vmem:[%s0 + $0xe20] sm:$0xff]
  %v470 = vld [vmem:[%s0 + $0xe28] sm:$0xff]
  %v471 = vld [vmem:[%s0 + $0xe30] sm:$0xff]
  %v472 = vld [vmem:[%s0 + $0xe38] sm:$0xff]
  %v473 = vld [vmem:[%s0 + $0xe40] sm:$0xff]
  %v474 = vld [vmem:[%s0 + $0xe48] sm:$0xff]
  %v475 = vld [vmem:[%s0 + $0xe50] sm:$0xff]
  %v476 = vld [vmem:[%s0 + $0xe58] sm:$0xff]
  %v477 = vld [vmem:[%s0 + $0xe60] sm:$0xff]
  %v478 = vld [vmem:[%s0 + $0xe68] sm:$0xff]
  %v479 = vld [vmem:[%s0 + $0xe70] sm:$0xff]
  %v480 = vld [vmem:[%s0 + $0xe78] sm:$0xff]
  %v481 = vld [vmem:[%s0 + $0xe80] sm:$0xff]
  %v482 = vld [vmem:[%s0 + $0xe88] sm:$0xff]
  %v483 = vld [vmem:[%s0 + $0xe90] sm:$0xff]
  %v484 = vld [vmem:[%s0 + $0xe98] sm:$0xff]
  %v485 = vld [vmem:[%s0 + $0xea0] sm:$0xff]
  %v486 = vld [vmem:[%s0 + $0xea8] sm:$0xff]
  %v487 = vld [vmem:[%s0 + $0xeb0] sm:$0xff]
  %v488 = vld [vmem:[%s0 + $0xeb8] sm:$0xff]
  %v489 = vld [vmem:[%s0 + $0xec0] sm:$0xff]
  %v490 = vld [vmem:[%s0 + $0xec8] sm:$0xff]
  %v491 = vld [vmem:[%s0 + $0xed0] sm:$0xff]
  %v492 = vld [vmem:[%s0 + $0xed8] sm:$0xff]
  %v493 = vld [vmem:[%s0 + $0xee0] sm:$0xff]
  %v494 = vld [vmem:[%s0 + $0xee8] sm:$0xff]
  %v495 = vld [vmem:[%s0 + $0xef0] sm:$0xff]
  %v496 = vld [vmem:[%s0 + $0xef8] sm:$0xff]
  %v497 = vld [vmem:[%s0 + $0xf00] sm:$0xff]
  %v498 = vld [vmem:[%s0 + $0xf08] sm:$0xff]
  %v499 = vld [vmem:[%s0 + $0xf10] sm:$0xff]
  %v500 = vld [vmem:[%s0 + $0xf18] sm:$0xff]
  %v501 = vld [vmem:[%s0 + $0xf20] sm:$0xff]
  %v502 = vld [vmem:[%s0 + $0xf28] sm:$0xff]
  %v503 = vld [vmem:[%s0 + $0xf30] sm:$0xff]
  %v504 = vld [vmem:[%s0 + $0xf38] sm:$0xff]
  %v505 = vld [vmem:[%s0 + $0xf40] sm:$0xff]
  %v506 = vld [vmem:[%s0 + $0xf48] sm:$0xff]
  %v507 = vld [vmem:[%s0 + $0xf50] sm:$0xff]
  %v508 = vld [vmem:[%s0 + $0xf58] sm:$0xff]
  %v509 = vld [vmem:[%s0 + $0xf60] sm:$0xff]
  %v510 = vld [vmem:[%s0 + $0xf68] sm:$0xff]
  %v511 = vld [vmem:[%s0 + $0xf70] sm:$0xff]
  %v512 = vld [vmem:[%s0 + $0xf78] sm:$0xff]
  %v513 = vld [vmem:[%s0 + $0xf80] sm:$0xff]
  %v514 = vld [vmem:[%s0 + $0xf88] sm:$0xff]
  %v515 = vld [vmem:[%s0 + $0xf90] sm:$0xff]
  %v516 = vld [vmem:[%s0 + $0xf98] sm:$0xff]
  %v517 = vld [vmem:[%s0 + $0xfa0] sm:$0xff]
  %v518 = vld [vmem:[%s0 + $0xfa8] sm:$0xff]
  %v519 = vld [vmem:[%s0 + $0xfb0] sm:$0xff]
  %v520 = vld [vmem:[%s0 + $0xfb8] sm:$0xff]
  %v521 = vld [vmem:[%s0 + $0xfc0] sm:$0xff]
  %v522 = vld [vmem:[%s0 + $0xfc8] sm:$0xff]
  %v523 = vld [vmem:[%s0 + $0xfd0] sm:$0xff]
  %v524 = vld [vmem:[%s0 + $0xfd8] sm:$0xff]
  %v525 = vld [vmem:[%s0 + $0xfe0] sm:$0xff]
  %v526 = vld [vmem:[%s0 + $0xfe8] sm:$0xff]
  %v527 = vld [vmem:[%s0 + $0xff0] sm:$0xff]
  %v528 = vld [vmem:[%s0 + $0xff8] sm:$0xff]
  %v529 = vld [vmem:[%s0 + $0x1000] sm:$0xff]
  %v530 = vld [vmem:[%s0 + $0x1008] sm:$0xff]
  %v531 = vld [vmem:[%s0 + $0x1010] sm:$0xff]
  %v532 = vld [vmem:[%s0 + $0x1018] sm:$0xff]
  %v533 = vld [vmem:[%s0 + $0x1020] sm:$0xff]
  %v534 = vld [vmem:[%s0 + $0x1028] sm:$0xff]
  %v535 = vld [vmem:[%s0 + $0x1030] sm:$0xff]
  %v536 = vld [vmem:[%s0 + $0x1038] sm:$0xff]
  %v537 = vld [vmem:[%s0 + $0x1040] sm:$0xff]
  %v538 = vld [vmem:[%s0 + $0x1048] sm:$0xff]
  %v539 = vld [vmem:[%s0 + $0x1050] sm:$0xff]
  %v540 = vld [vmem:[%s0 + $0x1058] sm:$0xff]
  %v541 = vld [vmem:[%s0 + $0x1060] sm:$0xff]
  %v542 = vld [vmem:[%s0 + $0x1068] sm:$0xff]
  %v543 = vld [vmem:[%s0 + $0x1070] sm:$0xff]
  %v544 = vld [vmem:[%s0 + $0x1078] sm:$0xff]
  %v545 = vld [vmem:[%s0 + $0x1080] sm:$0xff]
  %v546 = vld [vmem:[%s0 + $0x1088] sm:$0xff]
  %v547 = vld [vmem:[%s0 + $0x1090] sm:$0xff]
  %v548 = vld [vmem:[%s0 + $0x1098] sm:$0xff]
  %v549 = vld [vmem:[%s0 + $0x10a0] sm:$0xff]
  %v550 = vld [vmem:[%s0 + $0x10a8] sm:$0xff]
  %v551 = vld [vmem:[%s0 + $0x10b0] sm:$0xff]
  %v552 = vld [vmem:[%s0 + $0x10b8] sm:$0xff]
  %v553 = vld [vmem:[%s0 + $0x10c0] sm:$0xff]
  %v554 = vld [vmem:[%s0 + $0x10c8] sm:$0xff]
  %v555 = vld [vmem:[%s0 + $0x10d0] sm:$0xff]
  %v556 = vld [vmem:[%s0 + $0x10d8] sm:$0xff]
  %v557 = vld [vmem:[%s0 + $0x10e0] sm:$0xff]
  %v558 = vld [vmem:[%s0 + $0x10e8] sm:$0xff]
  %v559 = vld [vmem:[%s0 + $0x10f0] sm:$0xff]
  %v560 = vld [vmem:[%s0 + $0x10f8] sm:$0xff]
  %v561 = vld [vmem:[%s0 + $0x1100] sm:$0xff]
  %v562 = vld [vmem:[%s0 + $0x1108] sm:$0xff]
  %v563 = vld [vmem:[%s0 + $0x1110] sm:$0xff]
  %v564 = vld [vmem:[%s0 + $0x1118] sm:$0xff]
  %v565 = vld [vmem:[%s0 + $0x1120] sm:$0xff]
  %v566 = vld [vmem:[%s0 + $0x1128] sm:$0xff]
  %v567 = vld [vmem:[%s0 + $0x1130] sm:$0xff]
  %v568 = vld [vmem:[%s0 + $0x1138] sm:$0xff]
  %v569 = vld [vmem:[%s0 + $0x1140] sm:$0xff]
  %v570 = vld [vmem:[%s0 + $0x1148] sm:$0xff]
  %v571 = vld [vmem:[%s0 + $0x1150] sm:$0xff]
  %v572 = vld [vmem:[%s0 + $0x1158] sm:$0xff]
  %v573 = vld [vmem:[%s0 + $0x1160] sm:$0xff]
  %v574 = vld [vmem:[%s0 + $0x1168] sm:$0xff]
  %v575 = vld [vmem:[%s0 + $0x1170] sm:$0xff]
  %v576 = vld [vmem:[%s0 + $0x1178] sm:$0xff]
  %v577 = vld [vmem:[%s0 + $0x1180] sm:$0xff]
  %v578 = vld [vmem:[%s0 + $0x1188] sm:$0xff]
  %v579 = vld [vmem:[%s0 + $0x1190] sm:$0xff]
  %v580 = vld [vmem:[%s0 + $0x1198] sm:$0xff]
  %v581 = vld [vmem:[%s0 + $0x11a0] sm:$0xff]
  %v582 = vld [vmem:[%s0 + $0x11a8] sm:$0xff]
  %v583 = vld [vmem:[%s0 + $0x11b0] sm:$0xff]
  %v584 = vld [vmem:[%s0 + $0x11b8] sm:$0xff]
  %v585 = vld [vmem:[%s0 + $0x11c0] sm:$0xff]
  %v586 = vld [vmem:[%s0 + $0x11c8] sm:$0xff]
  %v587 = vld [vmem:[%s0 + $0x11d0] sm:$0xff]
  %v588 = vld [vmem:[%s0 + $0x11d8] sm:$0xff]
  %v589 = vld [vmem:[%s0 + $0x11e0] sm:$0xff]
  %v590 = vld [vmem:[%s0 + $0x11e8] sm:$0xff]
  %v591 = vld [vmem:[%s0 + $0x11f0] sm:$0xff]
  %v592 = vld [vmem:[%s0 + $0x11f8] sm:$0xff]
  %v593 = vld [vmem:[%s0 + $0x1200] sm:$0xff]
  %v594 = vld [vmem:[%s0 + $0x1208] sm:$0xff]
  %v595 = vld [vmem:[%s0 + $0x1210] sm:$0xff]
  %v596 = vld [vmem:[%s0 + $0x1218] sm:$0xff]
  %v597 = vld [vmem:[%s0 + $0x1220] sm:$0xff]
  %v598 = vld [vmem:[%s0 + $0x1228] sm:$0xff]
  %v599 = vld [vmem:[%s0 + $0x1230] sm:$0xff]
  %v600 = vld [vmem:[%s0 + $0x1238] sm:$0xff]
  %v601 = vld [vmem:[%s0 + $0x1240] sm:$0xff]
  %v602 = vld [vmem:[%s0 + $0x1248] sm:$0xff]
  %v603 = vld [vmem:[%s0 + $0x1250] sm:$0xff]
  %v604 = vld [vmem:[%s0 + $0x1258] sm:$0xff]
  %v605 = vld [vmem:[%s0 + $0x1260] sm:$0xff]
  %v606 = vld [vmem:[%s0 + $0x1268] sm:$0xff]
  %v607 = vld [vmem:[%s0 + $0x1270] sm:$0xff]
  %v608 = vld [vmem:[%s0 + $0x1278] sm:$0xff]
  %v609 = vld [vmem:[%s0 + $0x1280] sm:$0xff]
  %v610 = vld [vmem:[%s0 + $0x1288] sm:$0xff]
  %v611 = vld [vmem:[%s0 + $0x1290] sm:$0xff]
  %v612 = vld [vmem:[%s0 + $0x1298] sm:$0xff]
  %v613 = vld [vmem:[%s0 + $0x12a0] sm:$0xff]
  %v614 = vld [vmem:[%s0 + $0x12a8] sm:$0xff]
  %v615 = vld [vmem:[%s0 + $0x12b0] sm:$0xff]
  %v616 = vld [vmem:[%s0 + $0x12b8] sm:$0xff]
  %v617 = vld [vmem:[%s0 + $0x12c0] sm:$0xff]
  %v618 = vld [vmem:[%s0 + $0x12c8] sm:$0xff]
  %v619 = vld [vmem:[%s0 + $0x12d0] sm:$0xff]
  %v620 = vld [vmem:[%s0 + $0x12d8] sm:$0xff]
  %v621 = vld [vmem:[%s0 + $0x12e0] sm:$0xff]
  %v622 = vld [vmem:[%s0 + $0x12e8] sm:$0xff]
  %v623 = vld [vmem:[%s0 + $0x12f0] sm:$0xff]
  %v624 = vld [vmem:[%s0 + $0x12f8] sm:$0xff]
  %v625 = vld [vmem:[%s0 + $0x1300] sm:$0xff]
  %v626 = vld [vmem:[%s0 + $0x1308] sm:$0xff]
  %v627 = vld [vmem:[%s0 + $0x1310] sm:$0xff]
  %v628 = vld [vmem:[%s0 + $0x1318] sm:$0xff]
  %v629 = vld [vmem:[%s0 + $0x1320] sm:$0xff]
  %v630 = vld [vmem:[%s0 + $0x1328] sm:$0xff]
  %v631 = vld [vmem:[%s0 + $0x1330] sm:$0xff]
  %v632 = vld [vmem:[%s0 + $0x1338] sm:$0xff]
  %v633 = vld [vmem:[%s0 + $0x1340] sm:$0xff]
  %v634 = vld [vmem:[%s0 + $0x1348] sm:$0xff]
  %v635 = vld [vmem:[%s0 + $0x1350] sm:$0xff]
  %v636 = vld [vmem:[%s0 + $0x1358] sm:$0xff]
  %v637 = vld [vmem:[%s0 + $0x1360] sm:$0xff]
  %v638 = vld [vmem:[%s0 + $0x1368] sm:$0xff]
  %v639 = vld [vmem:[%s0 + $0x1370] sm:$0xff]
  %v640 = vld [vmem:[%s0 + $0x1378] sm:$0xff]
  %v641 = vld [vmem:[%s0 + $0x1380] sm:$0xff]
  %v642 = vld [vmem:[%s0 + $0x1388] sm:$0xff]
  %v643 = vld [vmem:[%s0 + $0x1390] sm:$0xff]
  %v644 = vld [vmem:[%s0 + $0x1398] sm:$0xff]
  %v645 = vld [vmem:[%s0 + $0x13a0] sm:$0xff]
  %v646 = vld [vmem:[%s0 + $0x13a8] sm:$0xff]
  %v647 = vld [vmem:[%s0 + $0x13b0] sm:$0xff]
  %v648 = vld [vmem:[%s0 + $0x13b8] sm:$0xff]
  %v649 = vld [vmem:[%s0 + $0x13c0] sm:$0xff]
  %v650 = vld [vmem:[%s0 + $0x13c8] sm:$0xff]
  %v651 = vld [vmem:[%s0 + $0x13d0] sm:$0xff]
  %v652 = vld [vmem:[%s0 + $0x13d8] sm:$0xff]
  %v653 = vld [vmem:[%s0 + $0x13e0] sm:$0xff]
  %v654 = vld [vmem:[%s0 + $0x13e8] sm:$0xff]
  %v655 = vld [vmem:[%s0 + $0x13f0] sm:$0xff]
  %v656 = vld [vmem:[%s0 + $0x13f8] sm:$0xff]
  %v657 = vld [vmem:[%s0 + $0x1400] sm:$0xff]
  %v658 = vld [vmem:[%s0 + $0x1408] sm:$0xff]
  %v659 = vld [vmem:[%s0 + $0x1410] sm:$0xff]
  %v660 = vld [vmem:[%s0 + $0x1418] sm:$0xff]
  %v661 = vld [vmem:[%s0 + $0x1420] sm:$0xff]
  %v662 = vld [vmem:[%s0 + $0x1428] sm:$0xff]
  %v663 = vld [vmem:[%s0 + $0x1430] sm:$0xff]
  %v664 = vld [vmem:[%s0 + $0x1438] sm:$0xff]
  %v665 = vld [vmem:[%s0 + $0x1440] sm:$0xff]
  %v666 = vld [vmem:[%s0 + $0x1448] sm:$0xff]
  %v667 = vld [vmem:[%s0 + $0x1450] sm:$0xff]
  %v668 = vld [vmem:[%s0 + $0x1458] sm:$0xff]
  %v669 = vld [vmem:[%s0 + $0x1460] sm:$0xff]
  %v670 = vld [vmem:[%s0 + $0x1468] sm:$0xff]
  %v671 = vld [vmem:[%s0 + $0x1470] sm:$0xff]
  %v672 = vld [vmem:[%s0 + $0x1478] sm:$0xff]
  %v673 = vld [vmem:[%s0 + $0x1480] sm:$0xff]
  %v674 = vld [vmem:[%s0 + $0x1488] sm:$0xff]
  %v675 = vld [vmem:[%s0 + $0x1490] sm:$0xff]
  %v676 = vld [vmem:[%s0 + $0x1498] sm:$0xff]
  %v677 = vld [vmem:[%s0 + $0x14a0] sm:$0xff]
  %v678 = vld [vmem:[%s0 + $0x14a8] sm:$0xff]
  %v679 = vld [vmem:[%s0 + $0x14b0] sm:$0xff]
  %v680 = vld [vmem:[%s0 + $0x14b8] sm:$0xff]
  %v681 = vld [vmem:[%s0 + $0x14c0] sm:$0xff]
  %v682 = vld [vmem:[%s0 + $0x14c8] sm:$0xff]
  %v683 = vld [vmem:[%s0 + $0x14d0] sm:$0xff]
  %v684 = vld [vmem:[%s0 + $0x14d8] sm:$0xff]
  %v685 = vld [vmem:[%s0 + $0x14e0] sm:$0xff]
  %v686 = vld [vmem:[%s0 + $0x14e8] sm:$0xff]
  %v687 = vld [vmem:[%s0 + $0x14f0] sm:$0xff]
  %v688 = vld [vmem:[%s0 + $0x14f8] sm:$0xff]
  %v689 = vld [vmem:[%s0 + $0x1500] sm:$0xff]
  %v690 = vld [vmem:[%s0 + $0x1508] sm:$0xff]
  %v691 = vld [vmem:[%s0 + $0x1510] sm:$0xff]
  %v692 = vld [vmem:[%s0 + $0x1518] sm:$0xff]
  %v693 = vld [vmem:[%s0 + $0x1520] sm:$0xff]
  %v694 = vld [vmem:[%s0 + $0x1528] sm:$0xff]
  %v695 = vld [vmem:[%s0 + $0x1530] sm:$0xff]
  %v696 = vld [vmem:[%s0 + $0x1538] sm:$0xff]
  %v697 = vld [vmem:[%s0 + $0x1540] sm:$0xff]
  %v698 = vld [vmem:[%s0 + $0x1548] sm:$0xff]
  %v699 = vld [vmem:[%s0 + $0x1550] sm:$0xff]
  %v700 = vld [vmem:[%s0 + $0x1558] sm:$0xff]
  %v701 = vld [vmem:[%s0 + $0x1560] sm:$0xff]
  %v702 = vld [vmem:[%s0 + $0x1568] sm:$0xff]
  %v703 = vld [vmem:[%s0 + $0x1570] sm:$0xff]
  %v704 = vld [vmem:[%s0 + $0x1578] sm:$0xff]
  %v705 = vld [vmem:[%s0 + $0x1580] sm:$0xff]
  %v706 = vld [vmem:[%s0 + $0x1588] sm:$0xff]
  %v707 = vld [vmem:[%s0 + $0x1590] sm:$0xff]
  %v708 = vld [vmem:[%s0 + $0x1598] sm:$0xff]
  %v709 = vld [vmem:[%s0 + $0x15a0] sm:$0xff]
  %v710 = vld [vmem:[%s0 + $0x15a8] sm:$0xff]
  %v711 = vld [vmem:[%s0 + $0x15b0] sm:$0xff]
  %v712 = vld [vmem:[%s0 + $0x15b8] sm:$0xff]
  %v713 = vld [vmem:[%s0 + $0x15c0] sm:$0xff]
  %v714 = vld [vmem:[%s0 + $0x15c8] sm:$0xff]
  %v715 = vld [vmem:[%s0 + $0x15d0] sm:$0xff]
  %v716 = vld [vmem:[%s0 + $0x15d8] sm:$0xff]
  %v717 = vld [vmem:[%s0 + $0x15e0] sm:$0xff]
  %v718 = vld [vmem:[%s0 + $0x15e8] sm:$0xff]
  %v719 = vld [vmem:[%s0 + $0x15f0] sm:$0xff]
  %v720 = vld [vmem:[%s0 + $0x15f8] sm:$0xff]
  %v721 = vld [vmem:[%s0 + $0x1600] sm:$0xff]
  %v722 = vld [vmem:[%s0 + $0x1608] sm:$0xff]
  %v723 = vld [vmem:[%s0 + $0x1610] sm:$0xff]
  %v724 = vld [vmem:[%s0 + $0x1618] sm:$0xff]
  %v725 = vld [vmem:[%s0 + $0x1620] sm:$0xff]
  %v726 = vld [vmem:[%s0 + $0x1628] sm:$0xff]
  %v727 = vld [vmem:[%s0 + $0x1630] sm:$0xff]
  %v728 = vld [vmem:[%s0 + $0x1638] sm:$0xff]
  %v729 = vld [vmem:[%s0 + $0x1640] sm:$0xff]
  %v730 = vld [vmem:[%s0 + $0x1648] sm:$0xff]
  %v731 = vld [vmem:[%s0 + $0x1650] sm:$0xff]
  %v732 = vld [vmem:[%s0 + $0x1658] sm:$0xff]
  %v733 = vld [vmem:[%s0 + $0x1660] sm:$0xff]
  %v734 = vld [vmem:[%s0 + $0x1668] sm:$0xff]
  %v735 = vld [vmem:[%s0 + $0x1670] sm:$0xff]
  %v736 = vld [vmem:[%s0 + $0x1678] sm:$0xff]
  %v737 = vld [vmem:[%s0 + $0x1680] sm:$0xff]
  %v738 = vld [vmem:[%s0 + $0x1688] sm:$0xff]
  %v739 = vld [vmem:[%s0 + $0x1690] sm:$0xff]
  %v740 = vld [vmem:[%s0 + $0x1698] sm:$0xff]
  %v741 = vld [vmem:[%s0 + $0x16a0] sm:$0xff]
  %v742 = vld [vmem:[%s0 + $0x16a8] sm:$0xff]
  %v743 = vld [vmem:[%s0 + $0x16b0] sm:$0xff]
  %v744 = vld [vmem:[%s0 + $0x16b8] sm:$0xff]
  %v745 = vld [vmem:[%s0 + $0x16c0] sm:$0xff]
  %v746 = vld [vmem:[%s0 + $0x16c8] sm:$0xff]
  %v747 = vld [vmem:[%s0 + $0x16d0] sm:$0xff]
  %v748 = vld [vmem:[%s0 + $0x16d8] sm:$0xff]
  %v749 = vld [vmem:[%s0 + $0x16e0] sm:$0xff]
  %v750 = vld [vmem:[%s0 + $0x16e8] sm:$0xff]
  %v751 = vld [vmem:[%s0 + $0x16f0] sm:$0xff]
  %v752 = vld [vmem:[%s0 + $0x16f8] sm:$0xff]
  %v753 = vld [vmem:[%s0 + $0x1700] sm:$0xff]
  %v754 = vld [vmem:[%s0 + $0x1708] sm:$0xff]
  %v755 = vld [vmem:[%s0 + $0x1710] sm:$0xff]
  %v756 = vld [vmem:[%s0 + $0x1718] sm:$0xff]
  %v757 = vld [vmem:[%s0 + $0x1720] sm:$0xff]
  %v758 = vld [vmem:[%s0 + $0x1728] sm:$0xff]
  %v759 = vld [vmem:[%s0 + $0x1730] sm:$0xff]
  %v760 = vld [vmem:[%s0 + $0x1738] sm:$0xff]
  %v761 = vld [vmem:[%s0 + $0x1740] sm:$0xff]
  %v762 = vld [vmem:[%s0 + $0x1748] sm:$0xff]
  %v763 = vld [vmem:[%s0 + $0x1750] sm:$0xff]
  %v764 = vld [vmem:[%s0 + $0x1758] sm:$0xff]
  %v765 = vld [vmem:[%s0 + $0x1760] sm:$0xff]
  %v766 = vld [vmem:[%s0 + $0x1768] sm:$0xff]
  %v767 = vld [vmem:[%s0 + $0x1770] sm:$0xff]
  %v768 = vld [vmem:[%s0 + $0x1778] sm:$0xff]
  %v769 = vld [vmem:[%s0 + $0x1780] sm:$0xff]
  %v770 = vld [vmem:[%s0 + $0x1788] sm:$0xff]
  %v771 = vld [vmem:[%s0 + $0x1790] sm:$0xff]
  %v772 = vld [vmem:[%s0 + $0x1798] sm:$0xff]
  %v773 = vld [vmem:[%s0 + $0x17a0] sm:$0xff]
  %v774 = vld [vmem:[%s0 + $0x17a8] sm:$0xff]
  %v775 = vld [vmem:[%s0 + $0x17b0] sm:$0xff]
  %v776 = vld [vmem:[%s0 + $0x17b8] sm:$0xff]
  %v777 = vld [vmem:[%s0 + $0x17c0] sm:$0xff]
  %v778 = vld [vmem:[%s0 + $0x17c8] sm:$0xff]
  %v779 = vld [vmem:[%s0 + $0x17d0] sm:$0xff]
  %v780 = vld [vmem:[%s0 + $0x17d8] sm:$0xff]
  %v781 = vld [vmem:[%s0 + $0x17e0] sm:$0xff]
  %v782 = vld [vmem:[%s0 + $0x17e8] sm:$0xff]
  %v783 = vld [vmem:[%s0 + $0x17f0] sm:$0xff]
  %v784 = vld [vmem:[%s0 + $0x17f8] sm:$0xff]
  %v785 = vld [vmem:[%s0 + $0x1800] sm:$0xff]
  %v786 = vld [vmem:[%s0 + $0x1808] sm:$0xff]
  %v787 = vld [vmem:[%s0 + $0x1810] sm:$0xff]
  %v788 = vld [vmem:[%s0 + $0x1818] sm:$0xff]
  %v789 = vld [vmem:[%s0 + $0x1820] sm:$0xff]
  %v790 = vld [vmem:[%s0 + $0x1828] sm:$0xff]
  %v791 = vld [vmem:[%s0 + $0x1830] sm:$0xff]
  %v792 = vld [vmem:[%s0 + $0x1838] sm:$0xff]
  %v793 = vld [vmem:[%s0 + $0x1840] sm:$0xff]
  %v794 = vld [vmem:[%s0 + $0x1848] sm:$0xff]
  %v795 = vld [vmem:[%s0 + $0x1850] sm:$0xff]
  %v796 = vld [vmem:[%s0 + $0x1858] sm:$0xff]
  %v797 = vld [vmem:[%s0 + $0x1860] sm:$0xff]
  %v798 = vld [vmem:[%s0 + $0x1868] sm:$0xff]
  %v799 = vld [vmem:[%s0 + $0x1870] sm:$0xff]
  %v800 = vld [vmem:[%s0 + $0x1878] sm:$0xff]
  %v801 = vld [vmem:[%s0 + $0x1880] sm:$0xff]
  %v802 = vld [vmem:[%s0 + $0x1888] sm:$0xff]
  %v803 = vld [vmem:[%s0 + $0x1890] sm:$0xff]
  %v804 = vld [vmem:[%s0 + $0x1898] sm:$0xff]
  %v805 = vld [vmem:[%s0 + $0x18a0] sm:$0xff]
  %v806 = vld [vmem:[%s0 + $0x18a8] sm:$0xff]
  %v807 = vld [vmem:[%s0 + $0x18b0] sm:$0xff]
  %v808 = vld [vmem:[%s0 + $0x18b8] sm:$0xff]
  %v809 = vld [vmem:[%s0 + $0x18c0] sm:$0xff]
  %v810 = vld [vmem:[%s0 + $0x18c8] sm:$0xff]
  %v811 = vld [vmem:[%s0 + $0x18d0] sm:$0xff]
  %v812 = vld [vmem:[%s0 + $0x18d8] sm:$0xff]
  %v813 = vld [vmem:[%s0 + $0x18e0] sm:$0xff]
  %v814 = vld [vmem:[%s0 + $0x18e8] sm:$0xff]
  %v815 = vld [vmem:[%s0 + $0x18f0] sm:$0xff]
  %v816 = vld [vmem:[%s0 + $0x18f8] sm:$0xff]
  %v817 = vld [vmem:[%s0 + $0x1900] sm:$0xff]
  %v818 = vld [vmem:[%s0 + $0x1908] sm:$0xff]
  %v819 = vld [vmem:[%s0 + $0x1910] sm:$0xff]
  %v820 = vld [vmem:[%s0 + $0x1918] sm:$0xff]
  %v821 = vld [vmem:[%s0 + $0x1920] sm:$0xff]
  %v822 = vld [vmem:[%s0 + $0x1928] sm:$0xff]
  %v823 = vld [vmem:[%s0 + $0x1930] sm:$0xff]
  %v824 = vld [vmem:[%s0 + $0x1938] sm:$0xff]
  %v825 = vld [vmem:[%s0 + $0x1940] sm:$0xff]
  %v826 = vld [vmem:[%s0 + $0x1948] sm:$0xff]
  %v827 = vld [vmem:[%s0 + $0x1950] sm:$0xff]
  %v828 = vld [vmem:[%s0 + $0x1958] sm:$0xff]
  %v829 = vld [vmem:[%s0 + $0x1960] sm:$0xff]
  %v830 = vld [vmem:[%s0 + $0x1968] sm:$0xff]
  %v831 = vld [vmem:[%s0 + $0x1970] sm:$0xff]
  %v832 = vld [vmem:[%s0 + $0x1978] sm:$0xff]
  %v833 = vld [vmem:[%s0 + $0x1980] sm:$0xff]
  %v834 = vld [vmem:[%s0 + $0x1988] sm:$0xff]
  %v835 = vld [vmem:[%s0 + $0x1990] sm:$0xff]
  %v836 = vld [vmem:[%s0 + $0x1998] sm:$0xff]
  %v837 = vld [vmem:[%s0 + $0x19a0] sm:$0xff]
  %v838 = vld [vmem:[%s0 + $0x19a8] sm:$0xff]
  %v839 = vld [vmem:[%s0 + $0x19b0] sm:$0xff]
  %v840 = vld [vmem:[%s0 + $0x19b8] sm:$0xff]
  %v841 = vld [vmem:[%s0 + $0x19c0] sm:$0xff]
  %v842 = vld [vmem:[%s0 + $0x19c8] sm:$0xff]
  %v843 = vld [vmem:[%s0 + $0x19d0] sm:$0xff]
  %v844 = vld [vmem:[%s0 + $0x19d8] sm:$0xff]
  %v845 = vld [vmem:[%s0 + $0x19e0] sm:$0xff]
  %v846 = vld [vmem:[%s0 + $0x19e8] sm:$0xff]
  %v847 = vld [vmem:[%s0 + $0x19f0] sm:$0xff]
  %v848 = vld [vmem:[%s0 + $0x19f8] sm:$0xff]
  %v849 = vld [vmem:[%s0 + $0x1a00] sm:$0xff]
  %v850 = vld [vmem:[%s0 + $0x1a08] sm:$0xff]
  %v851 = vld [vmem:[%s0 + $0x1a10] sm:$0xff]
  %v852 = vld [vmem:[%s0 + $0x1a18] sm:$0xff]
  %v853 = vld [vmem:[%s0 + $0x1a20] sm:$0xff]
  %v854 = vld [vmem:[%s0 + $0x1a28] sm:$0xff]
  %v855 = vld [vmem:[%s0 + $0x1a30] sm:$0xff]
  %v856 = vld [vmem:[%s0 + $0x1a38] sm:$0xff]
  %v857 = vld [vmem:[%s0 + $0x1a40] sm:$0xff]
  %v858 = vld [vmem:[%s0 + $0x1a48] sm:$0xff]
  %v859 = vld [vmem:[%s0 + $0x1a50] sm:$0xff]
  %v860 = vld [vmem:[%s0 + $0x1a58] sm:$0xff]
  %v861 = vld [vmem:[%s0 + $0x1a60] sm:$0xff]
  %v862 = vld [vmem:[%s0 + $0x1a68] sm:$0xff]
  %v863 = vld [vmem:[%s0 + $0x1a70] sm:$0xff]
  %v864 = vld [vmem:[%s0 + $0x1a78] sm:$0xff]
  %v865 = vld [vmem:[%s0 + $0x1a80] sm:$0xff]
  %v866 = vld [vmem:[%s0 + $0x1a88] sm:$0xff]
  %v867 = vld [vmem:[%s0 + $0x1a90] sm:$0xff]
  %v868 = vld [vmem:[%s0 + $0x1a98] sm:$0xff]
  %v869 = vld [vmem:[%s0 + $0x1aa0] sm:$0xff]
  %v870 = vld [vmem:[%s0 + $0x1aa8] sm:$0xff]
  %v871 = vld [vmem:[%s0 + $0x1ab0] sm:$0xff]
  %v872 = vld [vmem:[%s0 + $0x1ab8] sm:$0xff]
  %v873 = vld [vmem:[%s0 + $0x1ac0] sm:$0xff]
  %v874 = vld [vmem:[%s0 + $0x1ac8] sm:$0xff]
  %v875 = vld [vmem:[%s0 + $0x1ad0] sm:$0xff]
  %v876 = vld [vmem:[%s0 + $0x1ad8] sm:$0xff]
  %v877 = vld [vmem:[%s0 + $0x1ae0] sm:$0xff]
  %v878 = vld [vmem:[%s0 + $0x1ae8] sm:$0xff]
  %v879 = vld [vmem:[%s0 + $0x1af0] sm:$0xff]
  %v880 = vld [vmem:[%s0 + $0x1af8] sm:$0xff]
  %v881 = vld [vmem:[%s0 + $0x1b00] sm:$0xff]
  %v882 = vld [vmem:[%s0 + $0x1b08] sm:$0xff]
  %v883 = vld [vmem:[%s0 + $0x1b10] sm:$0xff]
  %v884 = vld [vmem:[%s0 + $0x1b18] sm:$0xff]
  %v885 = vld [vmem:[%s0 + $0x1b20] sm:$0xff]
  %v886 = vld [vmem:[%s0 + $0x1b28] sm:$0xff]
  %v887 = vld [vmem:[%s0 + $0x1b30] sm:$0xff]
  %v888 = vld [vmem:[%s0 + $0x1b38] sm:$0xff]
  %v889 = vld [vmem:[%s0 + $0x1b40] sm:$0xff]
  %v890 = vld [vmem:[%s0 + $0x1b48] sm:$0xff]
  %v891 = vld [vmem:[%s0 + $0x1b50] sm:$0xff]
  %v892 = vld [vmem:[%s0 + $0x1b58] sm:$0xff]
  %v893 = vld [vmem:[%s0 + $0x1b60] sm:$0xff]
  %v894 = vld [vmem:[%s0 + $0x1b68] sm:$0xff]
  %v895 = vld [vmem:[%s0 + $0x1b70] sm:$0xff]
  %v896 = vld [vmem:[%s0 + $0x1b78] sm:$0xff]
  %v897 = vld [vmem:[%s0 + $0x1b80] sm:$0xff]
  %v898 = vld [vmem:[%s0 + $0x1b88] sm:$0xff]
  %v899 = vld [vmem:[%s0 + $0x1b90] sm:$0xff]
  %v900 = vld [vmem:[%s0 + $0x1b98] sm:$0xff]
  %v901 = vld [vmem:[%s0 + $0x1ba0] sm:$0xff]
  %v902 = vld [vmem:[%s0 + $0x1ba8] sm:$0xff]
  %v903 = vld [vmem:[%s0 + $0x1bb0] sm:$0xff]
  %v904 = vld [vmem:[%s0 + $0x1bb8] sm:$0xff]
  %v905 = vld [vmem:[%s0 + $0x1bc0] sm:$0xff]
  %v906 = vld [vmem:[%s0 + $0x1bc8] sm:$0xff]
  %v907 = vld [vmem:[%s0 + $0x1bd0] sm:$0xff]
  %v908 = vld [vmem:[%s0 + $0x1bd8] sm:$0xff]
  %v909 = vld [vmem:[%s0 + $0x1be0] sm:$0xff]
  %v910 = vld [vmem:[%s0 + $0x1be8] sm:$0xff]
  %v911 = vld [vmem:[%s0 + $0x1bf0] sm:$0xff]
  %v912 = vld [vmem:[%s0 + $0x1bf8] sm:$0xff]
  %v913 = vld [vmem:[%s0 + $0x1c00] sm:$0xff]
  %v914 = vld [vmem:[%s0 + $0x1c08] sm:$0xff]
  %v915 = vld [vmem:[%s0 + $0x1c10] sm:$0xff]
  %v916 = vld [vmem:[%s0 + $0x1c18] sm:$0xff]
  %v917 = vld [vmem:[%s0 + $0x1c20] sm:$0xff]
  %v918 = vld [vmem:[%s0 + $0x1c28] sm:$0xff]
  %v919 = vld [vmem:[%s0 + $0x1c30] sm:$0xff]
  %v920 = vld [vmem:[%s0 + $0x1c38] sm:$0xff]
  %v921 = vld [vmem:[%s0 + $0x1c40] sm:$0xff]
  %v922 = vld [vmem:[%s0 + $0x1c48] sm:$0xff]
  %v923 = vld [vmem:[%s0 + $0x1c50] sm:$0xff]
  %v924 = vld [vmem:[%s0 + $0x1c58] sm:$0xff]
  %v925 = vld [vmem:[%s0 + $0x1c60] sm:$0xff]
  %v926 = vld [vmem:[%s0 + $0x1c68] sm:$0xff]
  %v927 = vld [vmem:[%s0 + $0x1c70] sm:$0xff]
  %v928 = vld [vmem:[%s0 + $0x1c78] sm:$0xff]
  %v929 = vld [vmem:[%s0 + $0x1c80] sm:$0xff]
  %v930 = vld [vmem:[%s0 + $0x1c88] sm:$0xff]
  %v931 = vld [vmem:[%s0 + $0x1c90] sm:$0xff]
  %v932 = vld [vmem:[%s0 + $0x1c98] sm:$0xff]
  %v933 = vld [vmem:[%s0 + $0x1ca0] sm:$0xff]
  %v934 = vld [vmem:[%s0 + $0x1ca8] sm:$0xff]
  %v935 = vld [vmem:[%s0 + $0x1cb0] sm:$0xff]
  %v936 = vld [vmem:[%s0 + $0x1cb8] sm:$0xff]
  %v937 = vld [vmem:[%s0 + $0x1cc0] sm:$0xff]
  %v938 = vld [vmem:[%s0 + $0x1cc8] sm:$0xff]
  %v939 = vld [vmem:[%s0 + $0x1cd0] sm:$0xff]
  %v940 = vld [vmem:[%s0 + $0x1cd8] sm:$0xff]
  %v941 = vld [vmem:[%s0 + $0x1ce0] sm:$0xff]
  %v942 = vld [vmem:[%s0 + $0x1ce8] sm:$0xff]
  %v943 = vld [vmem:[%s0 + $0x1cf0] sm:$0xff]
  %v944 = vld [vmem:[%s0 + $0x1cf8] sm:$0xff]
  %v945 = vld [vmem:[%s0 + $0x1d00] sm:$0xff]
  %v946 = vld [vmem:[%s0 + $0x1d08] sm:$0xff]
  %v947 = vld [vmem:[%s0 + $0x1d10] sm:$0xff]
  %v948 = vld [vmem:[%s0 + $0x1d18] sm:$0xff]
  %v949 = vld [vmem:[%s0 + $0x1d20] sm:$0xff]
  %v950 = vld [vmem:[%s0 + $0x1d28] sm:$0xff]
  %v951 = vld [vmem:[%s0 + $0x1d30] sm:$0xff]
  %v952 = vld [vmem:[%s0 + $0x1d38] sm:$0xff]
  %v953 = vld [vmem:[%s0 + $0x1d40] sm:$0xff]
  %v954 = vld [vmem:[%s0 + $0x1d48] sm:$0xff]
  %v955 = vld [vmem:[%s0 + $0x1d50] sm:$0xff]
  %v956 = vld [vmem:[%s0 + $0x1d58] sm:$0xff]
  %v957 = vld [vmem:[%s0 + $0x1d60] sm:$0xff]
  %v958 = vld [vmem:[%s0 + $0x1d68] sm:$0xff]
  %v959 = vld [vmem:[%s0 + $0x1d70] sm:$0xff]
  %v960 = vld [vmem:[%s0 + $0x1d78] sm:$0xff]
  %v961 = vld [vmem:[%s0 + $0x1d80] sm:$0xff]
  %v962 = vld [vmem:[%s0 + $0x1d88] sm:$0xff]
  %v963 = vld [vmem:[%s0 + $0x1d90] sm:$0xff]
  %v964 = vld [vmem:[%s0 + $0x1d98] sm:$0xff]
  %v965 = vld [vmem:[%s0 + $0x1da0] sm:$0xff]
  %v966 = vld [vmem:[%s0 + $0x1da8] sm:$0xff]
  %v967 = vld [vmem:[%s0 + $0x1db0] sm:$0xff]
  %v968 = vld [vmem:[%s0 + $0x1db8] sm:$0xff]
  %v969 = vld [vmem:[%s0 + $0x1dc0] sm:$0xff]
  %v970 = vld [vmem:[%s0 + $0x1dc8] sm:$0xff]
  %v971 = vld [vmem:[%s0 + $0x1dd0] sm:$0xff]
  %v972 = vld [vmem:[%s0 + $0x1dd8] sm:$0xff]
  %v973 = vld [vmem:[%s0 + $0x1de0] sm:$0xff]
  %v974 = vld [vmem:[%s0 + $0x1de8] sm:$0xff]
  %v975 = vld [vmem:[%s0 + $0x1df0] sm:$0xff]
  %v976 = vld [vmem:[%s0 + $0x1df8] sm:$0xff]
  %v977 = vld [vmem:[%s0 + $0x1e00] sm:$0xff]
  %v978 = vld [vmem:[%s0 + $0x1e08] sm:$0xff]
  %v979 = vld [vmem:[%s0 + $0x1e10] sm:$0xff]
  %v980 = vld [vmem:[%s0 + $0x1e18] sm:$0xff]
  %v981 = vld [vmem:[%s0 + $0x1e20] sm:$0xff]
  %v982 = vld [vmem:[%s0 + $0x1e28] sm:$0xff]
  %v983 = vld [vmem:[%s0 + $0x1e30] sm:$0xff]
  %v984 = vld [vmem:[%s0 + $0x1e38] sm:$0xff]
  %v985 = vld [vmem:[%s0 + $0x1e40] sm:$0xff]
  %v986 = vld [vmem:[%s0 + $0x1e48] sm:$0xff]
  %v987 = vld [vmem:[%s0 + $0x1e50] sm:$0xff]
  %v988 = vld [vmem:[%s0 + $0x1e58] sm:$0xff]
  %v989 = vld [vmem:[%s0 + $0x1e60] sm:$0xff]
  %v990 = vld [vmem:[%s0 + $0x1e68] sm:$0xff]
  %v991 = vld [vmem:[%s0 + $0x1e70] sm:$0xff]
  %v992 = vld [vmem:[%s0 + $0x1e78] sm:$0xff]
  %v993 = vld [vmem:[%s0 + $0x1e80] sm:$0xff]
  %v994 = vld [vmem:[%s0 + $0x1e88] sm:$0xff]
  %v995 = vld [vmem:[%s0 + $0x1e90] sm:$0xff]
  %v996 = vld [vmem:[%s0 + $0x1e98] sm:$0xff]
  %v997 = vld [vmem:[%s0 + $0x1ea0] sm:$0xff]
  %v998 = vld [vmem:[%s0 + $0x1ea8] sm:$0xff]
  %v999 = vld [vmem:[%s0 + $0x1eb0] sm:$0xff]
  %v1000 = vld [vmem:[%s0 + $0x1eb8] sm:$0xff]
  %v1001 = vld [vmem:[%s0 + $0x1ec0] sm:$0xff]
  %v1002 = vld [vmem:[%s0 + $0x1ec8] sm:$0xff]
  %v1003 = vld [vmem:[%s0 + $0x1ed0] sm:$0xff]
  %v1004 = vld [vmem:[%s0 + $0x1ed8] sm:$0xff]
  %v1005 = vld [vmem:[%s0 + $0x1ee0] sm:$0xff]
  %v1006 = vld [vmem:[%s0 + $0x1ee8] sm:$0xff]
  %v1007 = vld [vmem:[%s0 + $0x1ef0] sm:$0xff]
  %v1008 = vld [vmem:[%s0 + $0x1ef8] sm:$0xff]
  %v1009 = vld [vmem:[%s0 + $0x1f00] sm:$0xff]
  %v1010 = vld [vmem:[%s0 + $0x1f08] sm:$0xff]
  %v1011 = vld [vmem:[%s0 + $0x1f10] sm:$0xff]
  %v1012 = vld [vmem:[%s0 + $0x1f18] sm:$0xff]
  %v1013 = vld [vmem:[%s0 + $0x1f20] sm:$0xff]
  %v1014 = vld [vmem:[%s0 + $0x1f28] sm:$0xff]
  %v1015 = vld [vmem:[%s0 + $0x1f30] sm:$0xff]
  %v1016 = vld [vmem:[%s0 + $0x1f38] sm:$0xff]
  %v1017 = vld [vmem:[%s0 + $0x1f40] sm:$0xff]
  %v1018 = vld [vmem:[%s0 + $0x1f48] sm:$0xff]
  %v1019 = vld [vmem:[%s0 + $0x1f50] sm:$0xff]
  %v1020 = vld [vmem:[%s0 + $0x1f58] sm:$0xff]
  %v1021 = vld [vmem:[%s0 + $0x1f60] sm:$0xff]
  %v1022 = vld [vmem:[%s0 + $0x1f68] sm:$0xff]
  %v1023 = vld [vmem:[%s0 + $0x1f70] sm:$0xff]
  %v1024 = vld [vmem:[%s0 + $0x1f78] sm:$0xff]
  %v1025 = vld [vmem:[%s0 + $0x1f80] sm:$0xff]
  %v1026 = vld [vmem:[%s0 + $0x1f88] sm:$0xff]
  %v1027 = vld [vmem:[%s0 + $0x1f90] sm:$0xff]
  %v1028 = vld [vmem:[%s0 + $0x1f98] sm:$0xff]
  %v1029 = vld [vmem:[%s0 + $0x1fa0] sm:$0xff]
  %v1030 = vld [vmem:[%s0 + $0x1fa8] sm:$0xff]
  %v1031 = vld [vmem:[%s0 + $0x1fb0] sm:$0xff]
  %v1032 = vld [vmem:[%s0 + $0x1fb8] sm:$0xff]
  %v1033 = vld [vmem:[%s0 + $0x1fc0] sm:$0xff]
  %v1034 = vld [vmem:[%s0 + $0x1fc8] sm:$0xff]
  %v1035 = vld [vmem:[%s0 + $0x1fd0] sm:$0xff]
  %v1036 = vld [vmem:[%s0 + $0x1fd8] sm:$0xff]
  %v1037 = vld [vmem:[%s0 + $0x1fe0] sm:$0xff]
  %v1038 = vld [vmem:[%s0 + $0x1fe8] sm:$0xff]
  %v1039 = vld [vmem:[%s0 + $0x1ff0] sm:$0xff]
  %v1040 = vld [vmem:[%s0 + $0x1ff8] sm:$0xff]
  %v1041 = vld [vmem:[%s1] sm:$0xff]
  %v1042 = vld [vmem:[%s1 + $0x8] sm:$0xff]
  %v1043 = vld [vmem:[%s1 + $0x10] sm:$0xff]
  %v1044 = vld [vmem:[%s1 + $0x18] sm:$0xff]
  %v1045 = vld [vmem:[%s1 + $0x20] sm:$0xff]
  %v1046 = vld [vmem:[%s1 + $0x28] sm:$0xff]
  %v1047 = vld [vmem:[%s1 + $0x30] sm:$0xff]
  %v1048 = vld [vmem:[%s1 + $0x38] sm:$0xff]
  %v1049 = vld [vmem:[%s1 + $0x40] sm:$0xff]
  %v1050 = vld [vmem:[%s1 + $0x48] sm:$0xff]
  %v1051 = vld [vmem:[%s1 + $0x50] sm:$0xff]
  %v1052 = vld [vmem:[%s1 + $0x58] sm:$0xff]
  %v1053 = vld [vmem:[%s1 + $0x60] sm:$0xff]
  %v1054 = vld [vmem:[%s1 + $0x68] sm:$0xff]
  %v1055 = vld [vmem:[%s1 + $0x70] sm:$0xff]
  %v1056 = vld [vmem:[%s1 + $0x78] sm:$0xff]
  %v1057 = vld [vmem:[%s1 + $0x80] sm:$0xff]
  %v1058 = vld [vmem:[%s1 + $0x88] sm:$0xff]
  %v1059 = vld [vmem:[%s1 + $0x90] sm:$0xff]
  %v1060 = vld [vmem:[%s1 + $0x98] sm:$0xff]
  %v1061 = vld [vmem:[%s1 + $0xa0] sm:$0xff]
  %v1062 = vld [vmem:[%s1 + $0xa8] sm:$0xff]
  %v1063 = vld [vmem:[%s1 + $0xb0] sm:$0xff]
  %v1064 = vld [vmem:[%s1 + $0xb8] sm:$0xff]
  %v1065 = vld [vmem:[%s1 + $0xc0] sm:$0xff]
  %v1066 = vld [vmem:[%s1 + $0xc8] sm:$0xff]
  %v1067 = vld [vmem:[%s1 + $0xd0] sm:$0xff]
  %v1068 = vld [vmem:[%s1 + $0xd8] sm:$0xff]
  %v1069 = vld [vmem:[%s1 + $0xe0] sm:$0xff]
  %v1070 = vld [vmem:[%s1 + $0xe8] sm:$0xff]
  %v1071 = vld [vmem:[%s1 + $0xf0] sm:$0xff]
  %v1072 = vld [vmem:[%s1 + $0xf8] sm:$0xff]
  %v1073 = vld [vmem:[%s1 + $0x100] sm:$0xff]
  %v1074 = vld [vmem:[%s1 + $0x108] sm:$0xff]
  %v1075 = vld [vmem:[%s1 + $0x110] sm:$0xff]
  %v1076 = vld [vmem:[%s1 + $0x118] sm:$0xff]
  %v1077 = vld [vmem:[%s1 + $0x120] sm:$0xff]
  %v1078 = vld [vmem:[%s1 + $0x128] sm:$0xff]
  %v1079 = vld [vmem:[%s1 + $0x130] sm:$0xff]
  %v1080 = vld [vmem:[%s1 + $0x138] sm:$0xff]
  %v1081 = vld [vmem:[%s1 + $0x140] sm:$0xff]
  %v1082 = vld [vmem:[%s1 + $0x148] sm:$0xff]
  %v1083 = vld [vmem:[%s1 + $0x150] sm:$0xff]
  %v1084 = vld [vmem:[%s1 + $0x158] sm:$0xff]
  %v1085 = vld [vmem:[%s1 + $0x160] sm:$0xff]
  %v1086 = vld [vmem:[%s1 + $0x168] sm:$0xff]
  %v1087 = vld [vmem:[%s1 + $0x170] sm:$0xff]
  %v1088 = vld [vmem:[%s1 + $0x178] sm:$0xff]
  %v1089 = vld [vmem:[%s1 + $0x180] sm:$0xff]
  %v1090 = vld [vmem:[%s1 + $0x188] sm:$0xff]
  %v1091 = vld [vmem:[%s1 + $0x190] sm:$0xff]
  %v1092 = vld [vmem:[%s1 + $0x198] sm:$0xff]
  %v1093 = vld [vmem:[%s1 + $0x1a0] sm:$0xff]
  %v1094 = vld [vmem:[%s1 + $0x1a8] sm:$0xff]
  %v1095 = vld [vmem:[%s1 + $0x1b0] sm:$0xff]
  %v1096 = vld [vmem:[%s1 + $0x1b8] sm:$0xff]
  %v1097 = vld [vmem:[%s1 + $0x1c0] sm:$0xff]
  %v1098 = vld [vmem:[%s1 + $0x1c8] sm:$0xff]
  %v1099 = vld [vmem:[%s1 + $0x1d0] sm:$0xff]
  %v1100 = vld [vmem:[%s1 + $0x1d8] sm:$0xff]
  %v1101 = vld [vmem:[%s1 + $0x1e0] sm:$0xff]
  %v1102 = vld [vmem:[%s1 + $0x1e8] sm:$0xff]
  %v1103 = vld [vmem:[%s1 + $0x1f0] sm:$0xff]
  %v1104 = vld [vmem:[%s1 + $0x1f8] sm:$0xff]
  %v1105 = vld [vmem:[%s1 + $0x200] sm:$0xff]
  %v1106 = vld [vmem:[%s1 + $0x208] sm:$0xff]
  %v1107 = vld [vmem:[%s1 + $0x210] sm:$0xff]
  %v1108 = vld [vmem:[%s1 + $0x218] sm:$0xff]
  %v1109 = vld [vmem:[%s1 + $0x220] sm:$0xff]
  %v1110 = vld [vmem:[%s1 + $0x228] sm:$0xff]
  %v1111 = vld [vmem:[%s1 + $0x230] sm:$0xff]
  %v1112 = vld [vmem:[%s1 + $0x238] sm:$0xff]
  %v1113 = vld [vmem:[%s1 + $0x240] sm:$0xff]
  %v1114 = vld [vmem:[%s1 + $0x248] sm:$0xff]
  %v1115 = vld [vmem:[%s1 + $0x250] sm:$0xff]
  %v1116 = vld [vmem:[%s1 + $0x258] sm:$0xff]
  %v1117 = vld [vmem:[%s1 + $0x260] sm:$0xff]
  %v1118 = vld [vmem:[%s1 + $0x268] sm:$0xff]
  %v1119 = vld [vmem:[%s1 + $0x270] sm:$0xff]
  %v1120 = vld [vmem:[%s1 + $0x278] sm:$0xff]
  %v1121 = vld [vmem:[%s1 + $0x280] sm:$0xff]
  %v1122 = vld [vmem:[%s1 + $0x288] sm:$0xff]
  %v1123 = vld [vmem:[%s1 + $0x290] sm:$0xff]
  %v1124 = vld [vmem:[%s1 + $0x298] sm:$0xff]
  %v1125 = vld [vmem:[%s1 + $0x2a0] sm:$0xff]
  %v1126 = vld [vmem:[%s1 + $0x2a8] sm:$0xff]
  %v1127 = vld [vmem:[%s1 + $0x2b0] sm:$0xff]
  %v1128 = vld [vmem:[%s1 + $0x2b8] sm:$0xff]
  %v1129 = vld [vmem:[%s1 + $0x2c0] sm:$0xff]
  %v1130 = vld [vmem:[%s1 + $0x2c8] sm:$0xff]
  %v1131 = vld [vmem:[%s1 + $0x2d0] sm:$0xff]
  %v1132 = vld [vmem:[%s1 + $0x2d8] sm:$0xff]
  %v1133 = vld [vmem:[%s1 + $0x2e0] sm:$0xff]
  %v1134 = vld [vmem:[%s1 + $0x2e8] sm:$0xff]
  %v1135 = vld [vmem:[%s1 + $0x2f0] sm:$0xff]
  %v1136 = vld [vmem:[%s1 + $0x2f8] sm:$0xff]
  %v1137 = vld [vmem:[%s1 + $0x300] sm:$0xff]
  %v1138 = vld [vmem:[%s1 + $0x308] sm:$0xff]
  %v1139 = vld [vmem:[%s1 + $0x310] sm:$0xff]
  %v1140 = vld [vmem:[%s1 + $0x318] sm:$0xff]
  %v1141 = vld [vmem:[%s1 + $0x320] sm:$0xff]
  %v1142 = vld [vmem:[%s1 + $0x328] sm:$0xff]
  %v1143 = vld [vmem:[%s1 + $0x330] sm:$0xff]
  %v1144 = vld [vmem:[%s1 + $0x338] sm:$0xff]
  %v1145 = vld [vmem:[%s1 + $0x340] sm:$0xff]
  %v1146 = vld [vmem:[%s1 + $0x348] sm:$0xff]
  %v1147 = vld [vmem:[%s1 + $0x350] sm:$0xff]
  %v1148 = vld [vmem:[%s1 + $0x358] sm:$0xff]
  %v1149 = vld [vmem:[%s1 + $0x360] sm:$0xff]
  %v1150 = vld [vmem:[%s1 + $0x368] sm:$0xff]
  %v1151 = vld [vmem:[%s1 + $0x370] sm:$0xff]
  %v1152 = vld [vmem:[%s1 + $0x378] sm:$0xff]
  %v1153 = vld [vmem:[%s1 + $0x380] sm:$0xff]
  %v1154 = vld [vmem:[%s1 + $0x388] sm:$0xff]
  %v1155 = vld [vmem:[%s1 + $0x390] sm:$0xff]
  %v1156 = vld [vmem:[%s1 + $0x398] sm:$0xff]
  %v1157 = vld [vmem:[%s1 + $0x3a0] sm:$0xff]
  %v1158 = vld [vmem:[%s1 + $0x3a8] sm:$0xff]
  %v1159 = vld [vmem:[%s1 + $0x3b0] sm:$0xff]
  %v1160 = vld [vmem:[%s1 + $0x3b8] sm:$0xff]
  %v1161 = vld [vmem:[%s1 + $0x3c0] sm:$0xff]
  %v1162 = vld [vmem:[%s1 + $0x3c8] sm:$0xff]
  %v1163 = vld [vmem:[%s1 + $0x3d0] sm:$0xff]
  %v1164 = vld [vmem:[%s1 + $0x3d8] sm:$0xff]
  %v1165 = vld [vmem:[%s1 + $0x3e0] sm:$0xff]
  %v1166 = vld [vmem:[%s1 + $0x3e8] sm:$0xff]
  %v1167 = vld [vmem:[%s1 + $0x3f0] sm:$0xff]
  %v1168 = vld [vmem:[%s1 + $0x3f8] sm:$0xff]
  %v1297 = vlaneseq
  %v1298 = vshrl.u32 %v1297, 7
  %v1299 = vsub.s32 0, %v1298
  %v1300 = vrot.slane %v1041, %v1299
  %v1301 = vlaneseq
  %v1302 = vshrl.u32 %v1301, 7
  %v1303 = vsub.s32 1, %v1302
  %v1304 = vrot.slane %v1041, %v1303
  %v1305 = vlaneseq
  %v1306 = vshrl.u32 %v1305, 7
  %v1307 = vsub.s32 2, %v1306
  %v1308 = vrot.slane %v1041, %v1307
  %v1309 = vlaneseq
  %v1310 = vshrl.u32 %v1309, 7
  %v1311 = vsub.s32 3, %v1310
  %v1312 = vrot.slane %v1041, %v1311
  %v1313 = vlaneseq
  %v1314 = vshrl.u32 %v1313, 7
  %v1315 = vsub.s32 4, %v1314
  %v1316 = vrot.slane %v1041, %v1315
  %v1317 = vlaneseq
  %v1318 = vshrl.u32 %v1317, 7
  %v1319 = vsub.s32 5, %v1318
  %v1320 = vrot.slane %v1041, %v1319
  %v1321 = vlaneseq
  %v1322 = vshrl.u32 %v1321, 7
  %v1323 = vsub.s32 6, %v1322
  %v1324 = vrot.slane %v1041, %v1323
  %v1325 = vlaneseq
  %v1326 = vshrl.u32 %v1325, 7
  %v1327 = vsub.s32 7, %v1326
  %v1328 = vrot.slane %v1041, %v1327
  %v1329 = vlaneseq
  %v1330 = vshrl.u32 %v1329, 7
  %v1331 = vsub.s32 0, %v1330
  %v1332 = vrot.slane %v1042, %v1331
  %v1333 = vlaneseq
  %v1334 = vshrl.u32 %v1333, 7
  %v1335 = vsub.s32 1, %v1334
  %v1336 = vrot.slane %v1042, %v1335
  %v1337 = vlaneseq
  %v1338 = vshrl.u32 %v1337, 7
  %v1339 = vsub.s32 2, %v1338
  %v1340 = vrot.slane %v1042, %v1339
  %v1341 = vlaneseq
  %v1342 = vshrl.u32 %v1341, 7
  %v1343 = vsub.s32 3, %v1342
  %v1344 = vrot.slane %v1042, %v1343
  %v1345 = vlaneseq
  %v1346 = vshrl.u32 %v1345, 7
  %v1347 = vsub.s32 4, %v1346
  %v1348 = vrot.slane %v1042, %v1347
  %v1349 = vlaneseq
  %v1350 = vshrl.u32 %v1349, 7
  %v1351 = vsub.s32 5, %v1350
  %v1352 = vrot.slane %v1042, %v1351
  %v1353 = vlaneseq
  %v1354 = vshrl.u32 %v1353, 7
  %v1355 = vsub.s32 6, %v1354
  %v1356 = vrot.slane %v1042, %v1355
  %v1357 = vlaneseq
  %v1358 = vshrl.u32 %v1357, 7
  %v1359 = vsub.s32 7, %v1358
  %v1360 = vrot.slane %v1042, %v1359
  %v1361 = vlaneseq
  %v1362 = vshrl.u32 %v1361, 7
  %v1363 = vsub.s32 0, %v1362
  %v1364 = vrot.slane %v1043, %v1363
  %v1365 = vlaneseq
  %v1366 = vshrl.u32 %v1365, 7
  %v1367 = vsub.s32 1, %v1366
  %v1368 = vrot.slane %v1043, %v1367
  %v1369 = vlaneseq
  %v1370 = vshrl.u32 %v1369, 7
  %v1371 = vsub.s32 2, %v1370
  %v1372 = vrot.slane %v1043, %v1371
  %v1373 = vlaneseq
  %v1374 = vshrl.u32 %v1373, 7
  %v1375 = vsub.s32 3, %v1374
  %v1376 = vrot.slane %v1043, %v1375
  %v1377 = vlaneseq
  %v1378 = vshrl.u32 %v1377, 7
  %v1379 = vsub.s32 4, %v1378
  %v1380 = vrot.slane %v1043, %v1379
  %v1381 = vlaneseq
  %v1382 = vshrl.u32 %v1381, 7
  %v1383 = vsub.s32 5, %v1382
  %v1384 = vrot.slane %v1043, %v1383
  %v1385 = vlaneseq
  %v1386 = vshrl.u32 %v1385, 7
  %v1387 = vsub.s32 6, %v1386
  %v1388 = vrot.slane %v1043, %v1387
  %v1389 = vlaneseq
  %v1390 = vshrl.u32 %v1389, 7
  %v1391 = vsub.s32 7, %v1390
  %v1392 = vrot.slane %v1043, %v1391
  %v1393 = vlaneseq
  %v1394 = vshrl.u32 %v1393, 7
  %v1395 = vsub.s32 0, %v1394
  %v1396 = vrot.slane %v1044, %v1395
  %v1397 = vlaneseq
  %v1398 = vshrl.u32 %v1397, 7
  %v1399 = vsub.s32 1, %v1398
  %v1400 = vrot.slane %v1044, %v1399
  %v1401 = vlaneseq
  %v1402 = vshrl.u32 %v1401, 7
  %v1403 = vsub.s32 2, %v1402
  %v1404 = vrot.slane %v1044, %v1403
  %v1405 = vlaneseq
  %v1406 = vshrl.u32 %v1405, 7
  %v1407 = vsub.s32 3, %v1406
  %v1408 = vrot.slane %v1044, %v1407
  %v1409 = vlaneseq
  %v1410 = vshrl.u32 %v1409, 7
  %v1411 = vsub.s32 4, %v1410
  %v1412 = vrot.slane %v1044, %v1411
  %v1413 = vlaneseq
  %v1414 = vshrl.u32 %v1413, 7
  %v1415 = vsub.s32 5, %v1414
  %v1416 = vrot.slane %v1044, %v1415
  %v1417 = vlaneseq
  %v1418 = vshrl.u32 %v1417, 7
  %v1419 = vsub.s32 6, %v1418
  %v1420 = vrot.slane %v1044, %v1419
  %v1421 = vlaneseq
  %v1422 = vshrl.u32 %v1421, 7
  %v1423 = vsub.s32 7, %v1422
  %v1424 = vrot.slane %v1044, %v1423
  %v1425 = vlaneseq
  %v1426 = vshrl.u32 %v1425, 7
  %v1427 = vsub.s32 0, %v1426
  %v1428 = vrot.slane %v1045, %v1427
  %v1429 = vlaneseq
  %v1430 = vshrl.u32 %v1429, 7
  %v1431 = vsub.s32 1, %v1430
  %v1432 = vrot.slane %v1045, %v1431
  %v1433 = vlaneseq
  %v1434 = vshrl.u32 %v1433, 7
  %v1435 = vsub.s32 2, %v1434
  %v1436 = vrot.slane %v1045, %v1435
  %v1437 = vlaneseq
  %v1438 = vshrl.u32 %v1437, 7
  %v1439 = vsub.s32 3, %v1438
  %v1440 = vrot.slane %v1045, %v1439
  %v1441 = vlaneseq
  %v1442 = vshrl.u32 %v1441, 7
  %v1443 = vsub.s32 4, %v1442
  %v1444 = vrot.slane %v1045, %v1443
  %v1445 = vlaneseq
  %v1446 = vshrl.u32 %v1445, 7
  %v1447 = vsub.s32 5, %v1446
  %v1448 = vrot.slane %v1045, %v1447
  %v1449 = vlaneseq
  %v1450 = vshrl.u32 %v1449, 7
  %v1451 = vsub.s32 6, %v1450
  %v1452 = vrot.slane %v1045, %v1451
  %v1453 = vlaneseq
  %v1454 = vshrl.u32 %v1453, 7
  %v1455 = vsub.s32 7, %v1454
  %v1456 = vrot.slane %v1045, %v1455
  %v1457 = vlaneseq
  %v1458 = vshrl.u32 %v1457, 7
  %v1459 = vsub.s32 0, %v1458
  %v1460 = vrot.slane %v1046, %v1459
  %v1461 = vlaneseq
  %v1462 = vshrl.u32 %v1461, 7
  %v1463 = vsub.s32 1, %v1462
  %v1464 = vrot.slane %v1046, %v1463
  %v1465 = vlaneseq
  %v1466 = vshrl.u32 %v1465, 7
  %v1467 = vsub.s32 2, %v1466
  %v1468 = vrot.slane %v1046, %v1467
  %v1469 = vlaneseq
  %v1470 = vshrl.u32 %v1469, 7
  %v1471 = vsub.s32 3, %v1470
  %v1472 = vrot.slane %v1046, %v1471
  %v1473 = vlaneseq
  %v1474 = vshrl.u32 %v1473, 7
  %v1475 = vsub.s32 4, %v1474
  %v1476 = vrot.slane %v1046, %v1475
  %v1477 = vlaneseq
  %v1478 = vshrl.u32 %v1477, 7
  %v1479 = vsub.s32 5, %v1478
  %v1480 = vrot.slane %v1046, %v1479
  %v1481 = vlaneseq
  %v1482 = vshrl.u32 %v1481, 7
  %v1483 = vsub.s32 6, %v1482
  %v1484 = vrot.slane %v1046, %v1483
  %v1485 = vlaneseq
  %v1486 = vshrl.u32 %v1485, 7
  %v1487 = vsub.s32 7, %v1486
  %v1488 = vrot.slane %v1046, %v1487
  %v1489 = vlaneseq
  %v1490 = vshrl.u32 %v1489, 7
  %v1491 = vsub.s32 0, %v1490
  %v1492 = vrot.slane %v1047, %v1491
  %v1493 = vlaneseq
  %v1494 = vshrl.u32 %v1493, 7
  %v1495 = vsub.s32 1, %v1494
  %v1496 = vrot.slane %v1047, %v1495
  %v1497 = vlaneseq
  %v1498 = vshrl.u32 %v1497, 7
  %v1499 = vsub.s32 2, %v1498
  %v1500 = vrot.slane %v1047, %v1499
  %v1501 = vlaneseq
  %v1502 = vshrl.u32 %v1501, 7
  %v1503 = vsub.s32 3, %v1502
  %v1504 = vrot.slane %v1047, %v1503
  %v1505 = vlaneseq
  %v1506 = vshrl.u32 %v1505, 7
  %v1507 = vsub.s32 4, %v1506
  %v1508 = vrot.slane %v1047, %v1507
  %v1509 = vlaneseq
  %v1510 = vshrl.u32 %v1509, 7
  %v1511 = vsub.s32 5, %v1510
  %v1512 = vrot.slane %v1047, %v1511
  %v1513 = vlaneseq
  %v1514 = vshrl.u32 %v1513, 7
  %v1515 = vsub.s32 6, %v1514
  %v1516 = vrot.slane %v1047, %v1515
  %v1517 = vlaneseq
  %v1518 = vshrl.u32 %v1517, 7
  %v1519 = vsub.s32 7, %v1518
  %v1520 = vrot.slane %v1047, %v1519
  %v1521 = vlaneseq
  %v1522 = vshrl.u32 %v1521, 7
  %v1523 = vsub.s32 0, %v1522
  %v1524 = vrot.slane %v1048, %v1523
  %v1525 = vlaneseq
  %v1526 = vshrl.u32 %v1525, 7
  %v1527 = vsub.s32 1, %v1526
  %v1528 = vrot.slane %v1048, %v1527
  %v1529 = vlaneseq
  %v1530 = vshrl.u32 %v1529, 7
  %v1531 = vsub.s32 2, %v1530
  %v1532 = vrot.slane %v1048, %v1531
  %v1533 = vlaneseq
  %v1534 = vshrl.u32 %v1533, 7
  %v1535 = vsub.s32 3, %v1534
  %v1536 = vrot.slane %v1048, %v1535
  %v1537 = vlaneseq
  %v1538 = vshrl.u32 %v1537, 7
  %v1539 = vsub.s32 4, %v1538
  %v1540 = vrot.slane %v1048, %v1539
  %v1541 = vlaneseq
  %v1542 = vshrl.u32 %v1541, 7
  %v1543 = vsub.s32 5, %v1542
  %v1544 = vrot.slane %v1048, %v1543
  %v1545 = vlaneseq
  %v1546 = vshrl.u32 %v1545, 7
  %v1547 = vsub.s32 6, %v1546
  %v1548 = vrot.slane %v1048, %v1547
  %v1549 = vlaneseq
  %v1550 = vshrl.u32 %v1549, 7
  %v1551 = vsub.s32 7, %v1550
  %v1552 = vrot.slane %v1048, %v1551
  %v1553 = vlaneseq
  %v1554 = vshrl.u32 %v1553, 7
  %v1555 = vsub.s32 0, %v1554
  %v1556 = vrot.slane %v1049, %v1555
  %v1557 = vlaneseq
  %v1558 = vshrl.u32 %v1557, 7
  %v1559 = vsub.s32 1, %v1558
  %v1560 = vrot.slane %v1049, %v1559
  %v1561 = vlaneseq
  %v1562 = vshrl.u32 %v1561, 7
  %v1563 = vsub.s32 2, %v1562
  %v1564 = vrot.slane %v1049, %v1563
  %v1565 = vlaneseq
  %v1566 = vshrl.u32 %v1565, 7
  %v1567 = vsub.s32 3, %v1566
  %v1568 = vrot.slane %v1049, %v1567
  %v1569 = vlaneseq
  %v1570 = vshrl.u32 %v1569, 7
  %v1571 = vsub.s32 4, %v1570
  %v1572 = vrot.slane %v1049, %v1571
  %v1573 = vlaneseq
  %v1574 = vshrl.u32 %v1573, 7
  %v1575 = vsub.s32 5, %v1574
  %v1576 = vrot.slane %v1049, %v1575
  %v1577 = vlaneseq
  %v1578 = vshrl.u32 %v1577, 7
  %v1579 = vsub.s32 6, %v1578
  %v1580 = vrot.slane %v1049, %v1579
  %v1581 = vlaneseq
  %v1582 = vshrl.u32 %v1581, 7
  %v1583 = vsub.s32 7, %v1582
  %v1584 = vrot.slane %v1049, %v1583
  %v1585 = vlaneseq
  %v1586 = vshrl.u32 %v1585, 7
  %v1587 = vsub.s32 0, %v1586
  %v1588 = vrot.slane %v1050, %v1587
  %v1589 = vlaneseq
  %v1590 = vshrl.u32 %v1589, 7
  %v1591 = vsub.s32 1, %v1590
  %v1592 = vrot.slane %v1050, %v1591
  %v1593 = vlaneseq
  %v1594 = vshrl.u32 %v1593, 7
  %v1595 = vsub.s32 2, %v1594
  %v1596 = vrot.slane %v1050, %v1595
  %v1597 = vlaneseq
  %v1598 = vshrl.u32 %v1597, 7
  %v1599 = vsub.s32 3, %v1598
  %v1600 = vrot.slane %v1050, %v1599
  %v1601 = vlaneseq
  %v1602 = vshrl.u32 %v1601, 7
  %v1603 = vsub.s32 4, %v1602
  %v1604 = vrot.slane %v1050, %v1603
  %v1605 = vlaneseq
  %v1606 = vshrl.u32 %v1605, 7
  %v1607 = vsub.s32 5, %v1606
  %v1608 = vrot.slane %v1050, %v1607
  %v1609 = vlaneseq
  %v1610 = vshrl.u32 %v1609, 7
  %v1611 = vsub.s32 6, %v1610
  %v1612 = vrot.slane %v1050, %v1611
  %v1613 = vlaneseq
  %v1614 = vshrl.u32 %v1613, 7
  %v1615 = vsub.s32 7, %v1614
  %v1616 = vrot.slane %v1050, %v1615
  %v1617 = vlaneseq
  %v1618 = vshrl.u32 %v1617, 7
  %v1619 = vsub.s32 0, %v1618
  %v1620 = vrot.slane %v1051, %v1619
  %v1621 = vlaneseq
  %v1622 = vshrl.u32 %v1621, 7
  %v1623 = vsub.s32 1, %v1622
  %v1624 = vrot.slane %v1051, %v1623
  %v1625 = vlaneseq
  %v1626 = vshrl.u32 %v1625, 7
  %v1627 = vsub.s32 2, %v1626
  %v1628 = vrot.slane %v1051, %v1627
  %v1629 = vlaneseq
  %v1630 = vshrl.u32 %v1629, 7
  %v1631 = vsub.s32 3, %v1630
  %v1632 = vrot.slane %v1051, %v1631
  %v1633 = vlaneseq
  %v1634 = vshrl.u32 %v1633, 7
  %v1635 = vsub.s32 4, %v1634
  %v1636 = vrot.slane %v1051, %v1635
  %v1637 = vlaneseq
  %v1638 = vshrl.u32 %v1637, 7
  %v1639 = vsub.s32 5, %v1638
  %v1640 = vrot.slane %v1051, %v1639
  %v1641 = vlaneseq
  %v1642 = vshrl.u32 %v1641, 7
  %v1643 = vsub.s32 6, %v1642
  %v1644 = vrot.slane %v1051, %v1643
  %v1645 = vlaneseq
  %v1646 = vshrl.u32 %v1645, 7
  %v1647 = vsub.s32 7, %v1646
  %v1648 = vrot.slane %v1051, %v1647
  %v1649 = vlaneseq
  %v1650 = vshrl.u32 %v1649, 7
  %v1651 = vsub.s32 0, %v1650
  %v1652 = vrot.slane %v1052, %v1651
  %v1653 = vlaneseq
  %v1654 = vshrl.u32 %v1653, 7
  %v1655 = vsub.s32 1, %v1654
  %v1656 = vrot.slane %v1052, %v1655
  %v1657 = vlaneseq
  %v1658 = vshrl.u32 %v1657, 7
  %v1659 = vsub.s32 2, %v1658
  %v1660 = vrot.slane %v1052, %v1659
  %v1661 = vlaneseq
  %v1662 = vshrl.u32 %v1661, 7
  %v1663 = vsub.s32 3, %v1662
  %v1664 = vrot.slane %v1052, %v1663
  %v1665 = vlaneseq
  %v1666 = vshrl.u32 %v1665, 7
  %v1667 = vsub.s32 4, %v1666
  %v1668 = vrot.slane %v1052, %v1667
  %v1669 = vlaneseq
  %v1670 = vshrl.u32 %v1669, 7
  %v1671 = vsub.s32 5, %v1670
  %v1672 = vrot.slane %v1052, %v1671
  %v1673 = vlaneseq
  %v1674 = vshrl.u32 %v1673, 7
  %v1675 = vsub.s32 6, %v1674
  %v1676 = vrot.slane %v1052, %v1675
  %v1677 = vlaneseq
  %v1678 = vshrl.u32 %v1677, 7
  %v1679 = vsub.s32 7, %v1678
  %v1680 = vrot.slane %v1052, %v1679
  %v1681 = vlaneseq
  %v1682 = vshrl.u32 %v1681, 7
  %v1683 = vsub.s32 0, %v1682
  %v1684 = vrot.slane %v1053, %v1683
  %v1685 = vlaneseq
  %v1686 = vshrl.u32 %v1685, 7
  %v1687 = vsub.s32 1, %v1686
  %v1688 = vrot.slane %v1053, %v1687
  %v1689 = vlaneseq
  %v1690 = vshrl.u32 %v1689, 7
  %v1691 = vsub.s32 2, %v1690
  %v1692 = vrot.slane %v1053, %v1691
  %v1693 = vlaneseq
  %v1694 = vshrl.u32 %v1693, 7
  %v1695 = vsub.s32 3, %v1694
  %v1696 = vrot.slane %v1053, %v1695
  %v1697 = vlaneseq
  %v1698 = vshrl.u32 %v1697, 7
  %v1699 = vsub.s32 4, %v1698
  %v1700 = vrot.slane %v1053, %v1699
  %v1701 = vlaneseq
  %v1702 = vshrl.u32 %v1701, 7
  %v1703 = vsub.s32 5, %v1702
  %v1704 = vrot.slane %v1053, %v1703
  %v1705 = vlaneseq
  %v1706 = vshrl.u32 %v1705, 7
  %v1707 = vsub.s32 6, %v1706
  %v1708 = vrot.slane %v1053, %v1707
  %v1709 = vlaneseq
  %v1710 = vshrl.u32 %v1709, 7
  %v1711 = vsub.s32 7, %v1710
  %v1712 = vrot.slane %v1053, %v1711
  %v1713 = vlaneseq
  %v1714 = vshrl.u32 %v1713, 7
  %v1715 = vsub.s32 0, %v1714
  %v1716 = vrot.slane %v1054, %v1715
  %v1717 = vlaneseq
  %v1718 = vshrl.u32 %v1717, 7
  %v1719 = vsub.s32 1, %v1718
  %v1720 = vrot.slane %v1054, %v1719
  %v1721 = vlaneseq
  %v1722 = vshrl.u32 %v1721, 7
  %v1723 = vsub.s32 2, %v1722
  %v1724 = vrot.slane %v1054, %v1723
  %v1725 = vlaneseq
  %v1726 = vshrl.u32 %v1725, 7
  %v1727 = vsub.s32 3, %v1726
  %v1728 = vrot.slane %v1054, %v1727
  %v1729 = vlaneseq
  %v1730 = vshrl.u32 %v1729, 7
  %v1731 = vsub.s32 4, %v1730
  %v1732 = vrot.slane %v1054, %v1731
  %v1733 = vlaneseq
  %v1734 = vshrl.u32 %v1733, 7
  %v1735 = vsub.s32 5, %v1734
  %v1736 = vrot.slane %v1054, %v1735
  %v1737 = vlaneseq
  %v1738 = vshrl.u32 %v1737, 7
  %v1739 = vsub.s32 6, %v1738
  %v1740 = vrot.slane %v1054, %v1739
  %v1741 = vlaneseq
  %v1742 = vshrl.u32 %v1741, 7
  %v1743 = vsub.s32 7, %v1742
  %v1744 = vrot.slane %v1054, %v1743
  %v1745 = vlaneseq
  %v1746 = vshrl.u32 %v1745, 7
  %v1747 = vsub.s32 0, %v1746
  %v1748 = vrot.slane %v1055, %v1747
  %v1749 = vlaneseq
  %v1750 = vshrl.u32 %v1749, 7
  %v1751 = vsub.s32 1, %v1750
  %v1752 = vrot.slane %v1055, %v1751
  %v1753 = vlaneseq
  %v1754 = vshrl.u32 %v1753, 7
  %v1755 = vsub.s32 2, %v1754
  %v1756 = vrot.slane %v1055, %v1755
  %v1757 = vlaneseq
  %v1758 = vshrl.u32 %v1757, 7
  %v1759 = vsub.s32 3, %v1758
  %v1760 = vrot.slane %v1055, %v1759
  %v1761 = vlaneseq
  %v1762 = vshrl.u32 %v1761, 7
  %v1763 = vsub.s32 4, %v1762
  %v1764 = vrot.slane %v1055, %v1763
  %v1765 = vlaneseq
  %v1766 = vshrl.u32 %v1765, 7
  %v1767 = vsub.s32 5, %v1766
  %v1768 = vrot.slane %v1055, %v1767
  %v1769 = vlaneseq
  %v1770 = vshrl.u32 %v1769, 7
  %v1771 = vsub.s32 6, %v1770
  %v1772 = vrot.slane %v1055, %v1771
  %v1773 = vlaneseq
  %v1774 = vshrl.u32 %v1773, 7
  %v1775 = vsub.s32 7, %v1774
  %v1776 = vrot.slane %v1055, %v1775
  %v1777 = vlaneseq
  %v1778 = vshrl.u32 %v1777, 7
  %v1779 = vsub.s32 0, %v1778
  %v1780 = vrot.slane %v1056, %v1779
  %v1781 = vlaneseq
  %v1782 = vshrl.u32 %v1781, 7
  %v1783 = vsub.s32 1, %v1782
  %v1784 = vrot.slane %v1056, %v1783
  %v1785 = vlaneseq
  %v1786 = vshrl.u32 %v1785, 7
  %v1787 = vsub.s32 2, %v1786
  %v1788 = vrot.slane %v1056, %v1787
  %v1789 = vlaneseq
  %v1790 = vshrl.u32 %v1789, 7
  %v1791 = vsub.s32 3, %v1790
  %v1792 = vrot.slane %v1056, %v1791
  %v1793 = vlaneseq
  %v1794 = vshrl.u32 %v1793, 7
  %v1795 = vsub.s32 4, %v1794
  %v1796 = vrot.slane %v1056, %v1795
  %v1797 = vlaneseq
  %v1798 = vshrl.u32 %v1797, 7
  %v1799 = vsub.s32 5, %v1798
  %v1800 = vrot.slane %v1056, %v1799
  %v1801 = vlaneseq
  %v1802 = vshrl.u32 %v1801, 7
  %v1803 = vsub.s32 6, %v1802
  %v1804 = vrot.slane %v1056, %v1803
  %v1805 = vlaneseq
  %v1806 = vshrl.u32 %v1805, 7
  %v1807 = vsub.s32 7, %v1806
  %v1808 = vrot.slane %v1056, %v1807
  %v1809 = vlaneseq
  %v1810 = vshrl.u32 %v1809, 7
  %v1811 = vsub.s32 0, %v1810
  %v1812 = vrot.slane %v1057, %v1811
  %v1813 = vlaneseq
  %v1814 = vshrl.u32 %v1813, 7
  %v1815 = vsub.s32 1, %v1814
  %v1816 = vrot.slane %v1057, %v1815
  %v1817 = vlaneseq
  %v1818 = vshrl.u32 %v1817, 7
  %v1819 = vsub.s32 2, %v1818
  %v1820 = vrot.slane %v1057, %v1819
  %v1821 = vlaneseq
  %v1822 = vshrl.u32 %v1821, 7
  %v1823 = vsub.s32 3, %v1822
  %v1824 = vrot.slane %v1057, %v1823
  %v1825 = vlaneseq
  %v1826 = vshrl.u32 %v1825, 7
  %v1827 = vsub.s32 4, %v1826
  %v1828 = vrot.slane %v1057, %v1827
  %v1829 = vlaneseq
  %v1830 = vshrl.u32 %v1829, 7
  %v1831 = vsub.s32 5, %v1830
  %v1832 = vrot.slane %v1057, %v1831
  %v1833 = vlaneseq
  %v1834 = vshrl.u32 %v1833, 7
  %v1835 = vsub.s32 6, %v1834
  %v1836 = vrot.slane %v1057, %v1835
  %v1837 = vlaneseq
  %v1838 = vshrl.u32 %v1837, 7
  %v1839 = vsub.s32 7, %v1838
  %v1840 = vrot.slane %v1057, %v1839
  %v1841 = vlaneseq
  %v1842 = vshrl.u32 %v1841, 7
  %v1843 = vsub.s32 0, %v1842
  %v1844 = vrot.slane %v1058, %v1843
  %v1845 = vlaneseq
  %v1846 = vshrl.u32 %v1845, 7
  %v1847 = vsub.s32 1, %v1846
  %v1848 = vrot.slane %v1058, %v1847
  %v1849 = vlaneseq
  %v1850 = vshrl.u32 %v1849, 7
  %v1851 = vsub.s32 2, %v1850
  %v1852 = vrot.slane %v1058, %v1851
  %v1853 = vlaneseq
  %v1854 = vshrl.u32 %v1853, 7
  %v1855 = vsub.s32 3, %v1854
  %v1856 = vrot.slane %v1058, %v1855
  %v1857 = vlaneseq
  %v1858 = vshrl.u32 %v1857, 7
  %v1859 = vsub.s32 4, %v1858
  %v1860 = vrot.slane %v1058, %v1859
  %v1861 = vlaneseq
  %v1862 = vshrl.u32 %v1861, 7
  %v1863 = vsub.s32 5, %v1862
  %v1864 = vrot.slane %v1058, %v1863
  %v1865 = vlaneseq
  %v1866 = vshrl.u32 %v1865, 7
  %v1867 = vsub.s32 6, %v1866
  %v1868 = vrot.slane %v1058, %v1867
  %v1869 = vlaneseq
  %v1870 = vshrl.u32 %v1869, 7
  %v1871 = vsub.s32 7, %v1870
  %v1872 = vrot.slane %v1058, %v1871
  %v1873 = vlaneseq
  %v1874 = vshrl.u32 %v1873, 7
  %v1875 = vsub.s32 0, %v1874
  %v1876 = vrot.slane %v1059, %v1875
  %v1877 = vlaneseq
  %v1878 = vshrl.u32 %v1877, 7
  %v1879 = vsub.s32 1, %v1878
  %v1880 = vrot.slane %v1059, %v1879
  %v1881 = vlaneseq
  %v1882 = vshrl.u32 %v1881, 7
  %v1883 = vsub.s32 2, %v1882
  %v1884 = vrot.slane %v1059, %v1883
  %v1885 = vlaneseq
  %v1886 = vshrl.u32 %v1885, 7
  %v1887 = vsub.s32 3, %v1886
  %v1888 = vrot.slane %v1059, %v1887
  %v1889 = vlaneseq
  %v1890 = vshrl.u32 %v1889, 7
  %v1891 = vsub.s32 4, %v1890
  %v1892 = vrot.slane %v1059, %v1891
  %v1893 = vlaneseq
  %v1894 = vshrl.u32 %v1893, 7
  %v1895 = vsub.s32 5, %v1894
  %v1896 = vrot.slane %v1059, %v1895
  %v1897 = vlaneseq
  %v1898 = vshrl.u32 %v1897, 7
  %v1899 = vsub.s32 6, %v1898
  %v1900 = vrot.slane %v1059, %v1899
  %v1901 = vlaneseq
  %v1902 = vshrl.u32 %v1901, 7
  %v1903 = vsub.s32 7, %v1902
  %v1904 = vrot.slane %v1059, %v1903
  %v1905 = vlaneseq
  %v1906 = vshrl.u32 %v1905, 7
  %v1907 = vsub.s32 0, %v1906
  %v1908 = vrot.slane %v1060, %v1907
  %v1909 = vlaneseq
  %v1910 = vshrl.u32 %v1909, 7
  %v1911 = vsub.s32 1, %v1910
  %v1912 = vrot.slane %v1060, %v1911
  %v1913 = vlaneseq
  %v1914 = vshrl.u32 %v1913, 7
  %v1915 = vsub.s32 2, %v1914
  %v1916 = vrot.slane %v1060, %v1915
  %v1917 = vlaneseq
  %v1918 = vshrl.u32 %v1917, 7
  %v1919 = vsub.s32 3, %v1918
  %v1920 = vrot.slane %v1060, %v1919
  %v1921 = vlaneseq
  %v1922 = vshrl.u32 %v1921, 7
  %v1923 = vsub.s32 4, %v1922
  %v1924 = vrot.slane %v1060, %v1923
  %v1925 = vlaneseq
  %v1926 = vshrl.u32 %v1925, 7
  %v1927 = vsub.s32 5, %v1926
  %v1928 = vrot.slane %v1060, %v1927
  %v1929 = vlaneseq
  %v1930 = vshrl.u32 %v1929, 7
  %v1931 = vsub.s32 6, %v1930
  %v1932 = vrot.slane %v1060, %v1931
  %v1933 = vlaneseq
  %v1934 = vshrl.u32 %v1933, 7
  %v1935 = vsub.s32 7, %v1934
  %v1936 = vrot.slane %v1060, %v1935
  %v1937 = vlaneseq
  %v1938 = vshrl.u32 %v1937, 7
  %v1939 = vsub.s32 0, %v1938
  %v1940 = vrot.slane %v1061, %v1939
  %v1941 = vlaneseq
  %v1942 = vshrl.u32 %v1941, 7
  %v1943 = vsub.s32 1, %v1942
  %v1944 = vrot.slane %v1061, %v1943
  %v1945 = vlaneseq
  %v1946 = vshrl.u32 %v1945, 7
  %v1947 = vsub.s32 2, %v1946
  %v1948 = vrot.slane %v1061, %v1947
  %v1949 = vlaneseq
  %v1950 = vshrl.u32 %v1949, 7
  %v1951 = vsub.s32 3, %v1950
  %v1952 = vrot.slane %v1061, %v1951
  %v1953 = vlaneseq
  %v1954 = vshrl.u32 %v1953, 7
  %v1955 = vsub.s32 4, %v1954
  %v1956 = vrot.slane %v1061, %v1955
  %v1957 = vlaneseq
  %v1958 = vshrl.u32 %v1957, 7
  %v1959 = vsub.s32 5, %v1958
  %v1960 = vrot.slane %v1061, %v1959
  %v1961 = vlaneseq
  %v1962 = vshrl.u32 %v1961, 7
  %v1963 = vsub.s32 6, %v1962
  %v1964 = vrot.slane %v1061, %v1963
  %v1965 = vlaneseq
  %v1966 = vshrl.u32 %v1965, 7
  %v1967 = vsub.s32 7, %v1966
  %v1968 = vrot.slane %v1061, %v1967
  %v1969 = vlaneseq
  %v1970 = vshrl.u32 %v1969, 7
  %v1971 = vsub.s32 0, %v1970
  %v1972 = vrot.slane %v1062, %v1971
  %v1973 = vlaneseq
  %v1974 = vshrl.u32 %v1973, 7
  %v1975 = vsub.s32 1, %v1974
  %v1976 = vrot.slane %v1062, %v1975
  %v1977 = vlaneseq
  %v1978 = vshrl.u32 %v1977, 7
  %v1979 = vsub.s32 2, %v1978
  %v1980 = vrot.slane %v1062, %v1979
  %v1981 = vlaneseq
  %v1982 = vshrl.u32 %v1981, 7
  %v1983 = vsub.s32 3, %v1982
  %v1984 = vrot.slane %v1062, %v1983
  %v1985 = vlaneseq
  %v1986 = vshrl.u32 %v1985, 7
  %v1987 = vsub.s32 4, %v1986
  %v1988 = vrot.slane %v1062, %v1987
  %v1989 = vlaneseq
  %v1990 = vshrl.u32 %v1989, 7
  %v1991 = vsub.s32 5, %v1990
  %v1992 = vrot.slane %v1062, %v1991
  %v1993 = vlaneseq
  %v1994 = vshrl.u32 %v1993, 7
  %v1995 = vsub.s32 6, %v1994
  %v1996 = vrot.slane %v1062, %v1995
  %v1997 = vlaneseq
  %v1998 = vshrl.u32 %v1997, 7
  %v1999 = vsub.s32 7, %v1998
  %v2000 = vrot.slane %v1062, %v1999
  %v2001 = vlaneseq
  %v2002 = vshrl.u32 %v2001, 7
  %v2003 = vsub.s32 0, %v2002
  %v2004 = vrot.slane %v1063, %v2003
  %v2005 = vlaneseq
  %v2006 = vshrl.u32 %v2005, 7
  %v2007 = vsub.s32 1, %v2006
  %v2008 = vrot.slane %v1063, %v2007
  %v2009 = vlaneseq
  %v2010 = vshrl.u32 %v2009, 7
  %v2011 = vsub.s32 2, %v2010
  %v2012 = vrot.slane %v1063, %v2011
  %v2013 = vlaneseq
  %v2014 = vshrl.u32 %v2013, 7
  %v2015 = vsub.s32 3, %v2014
  %v2016 = vrot.slane %v1063, %v2015
  %v2017 = vlaneseq
  %v2018 = vshrl.u32 %v2017, 7
  %v2019 = vsub.s32 4, %v2018
  %v2020 = vrot.slane %v1063, %v2019
  %v2021 = vlaneseq
  %v2022 = vshrl.u32 %v2021, 7
  %v2023 = vsub.s32 5, %v2022
  %v2024 = vrot.slane %v1063, %v2023
  %v2025 = vlaneseq
  %v2026 = vshrl.u32 %v2025, 7
  %v2027 = vsub.s32 6, %v2026
  %v2028 = vrot.slane %v1063, %v2027
  %v2029 = vlaneseq
  %v2030 = vshrl.u32 %v2029, 7
  %v2031 = vsub.s32 7, %v2030
  %v2032 = vrot.slane %v1063, %v2031
  %v2033 = vlaneseq
  %v2034 = vshrl.u32 %v2033, 7
  %v2035 = vsub.s32 0, %v2034
  %v2036 = vrot.slane %v1064, %v2035
  %v2037 = vlaneseq
  %v2038 = vshrl.u32 %v2037, 7
  %v2039 = vsub.s32 1, %v2038
  %v2040 = vrot.slane %v1064, %v2039
  %v2041 = vlaneseq
  %v2042 = vshrl.u32 %v2041, 7
  %v2043 = vsub.s32 2, %v2042
  %v2044 = vrot.slane %v1064, %v2043
  %v2045 = vlaneseq
  %v2046 = vshrl.u32 %v2045, 7
  %v2047 = vsub.s32 3, %v2046
  %v2048 = vrot.slane %v1064, %v2047
  %v2049 = vlaneseq
  %v2050 = vshrl.u32 %v2049, 7
  %v2051 = vsub.s32 4, %v2050
  %v2052 = vrot.slane %v1064, %v2051
  %v2053 = vlaneseq
  %v2054 = vshrl.u32 %v2053, 7
  %v2055 = vsub.s32 5, %v2054
  %v2056 = vrot.slane %v1064, %v2055
  %v2057 = vlaneseq
  %v2058 = vshrl.u32 %v2057, 7
  %v2059 = vsub.s32 6, %v2058
  %v2060 = vrot.slane %v1064, %v2059
  %v2061 = vlaneseq
  %v2062 = vshrl.u32 %v2061, 7
  %v2063 = vsub.s32 7, %v2062
  %v2064 = vrot.slane %v1064, %v2063
  %v2065 = vlaneseq
  %v2066 = vshrl.u32 %v2065, 7
  %v2067 = vsub.s32 0, %v2066
  %v2068 = vrot.slane %v1065, %v2067
  %v2069 = vlaneseq
  %v2070 = vshrl.u32 %v2069, 7
  %v2071 = vsub.s32 1, %v2070
  %v2072 = vrot.slane %v1065, %v2071
  %v2073 = vlaneseq
  %v2074 = vshrl.u32 %v2073, 7
  %v2075 = vsub.s32 2, %v2074
  %v2076 = vrot.slane %v1065, %v2075
  %v2077 = vlaneseq
  %v2078 = vshrl.u32 %v2077, 7
  %v2079 = vsub.s32 3, %v2078
  %v2080 = vrot.slane %v1065, %v2079
  %v2081 = vlaneseq
  %v2082 = vshrl.u32 %v2081, 7
  %v2083 = vsub.s32 4, %v2082
  %v2084 = vrot.slane %v1065, %v2083
  %v2085 = vlaneseq
  %v2086 = vshrl.u32 %v2085, 7
  %v2087 = vsub.s32 5, %v2086
  %v2088 = vrot.slane %v1065, %v2087
  %v2089 = vlaneseq
  %v2090 = vshrl.u32 %v2089, 7
  %v2091 = vsub.s32 6, %v2090
  %v2092 = vrot.slane %v1065, %v2091
  %v2093 = vlaneseq
  %v2094 = vshrl.u32 %v2093, 7
  %v2095 = vsub.s32 7, %v2094
  %v2096 = vrot.slane %v1065, %v2095
  %v2097 = vlaneseq
  %v2098 = vshrl.u32 %v2097, 7
  %v2099 = vsub.s32 0, %v2098
  %v2100 = vrot.slane %v1066, %v2099
  %v2101 = vlaneseq
  %v2102 = vshrl.u32 %v2101, 7
  %v2103 = vsub.s32 1, %v2102
  %v2104 = vrot.slane %v1066, %v2103
  %v2105 = vlaneseq
  %v2106 = vshrl.u32 %v2105, 7
  %v2107 = vsub.s32 2, %v2106
  %v2108 = vrot.slane %v1066, %v2107
  %v2109 = vlaneseq
  %v2110 = vshrl.u32 %v2109, 7
  %v2111 = vsub.s32 3, %v2110
  %v2112 = vrot.slane %v1066, %v2111
  %v2113 = vlaneseq
  %v2114 = vshrl.u32 %v2113, 7
  %v2115 = vsub.s32 4, %v2114
  %v2116 = vrot.slane %v1066, %v2115
  %v2117 = vlaneseq
  %v2118 = vshrl.u32 %v2117, 7
  %v2119 = vsub.s32 5, %v2118
  %v2120 = vrot.slane %v1066, %v2119
  %v2121 = vlaneseq
  %v2122 = vshrl.u32 %v2121, 7
  %v2123 = vsub.s32 6, %v2122
  %v2124 = vrot.slane %v1066, %v2123
  %v2125 = vlaneseq
  %v2126 = vshrl.u32 %v2125, 7
  %v2127 = vsub.s32 7, %v2126
  %v2128 = vrot.slane %v1066, %v2127
  %v2129 = vlaneseq
  %v2130 = vshrl.u32 %v2129, 7
  %v2131 = vsub.s32 0, %v2130
  %v2132 = vrot.slane %v1067, %v2131
  %v2133 = vlaneseq
  %v2134 = vshrl.u32 %v2133, 7
  %v2135 = vsub.s32 1, %v2134
  %v2136 = vrot.slane %v1067, %v2135
  %v2137 = vlaneseq
  %v2138 = vshrl.u32 %v2137, 7
  %v2139 = vsub.s32 2, %v2138
  %v2140 = vrot.slane %v1067, %v2139
  %v2141 = vlaneseq
  %v2142 = vshrl.u32 %v2141, 7
  %v2143 = vsub.s32 3, %v2142
  %v2144 = vrot.slane %v1067, %v2143
  %v2145 = vlaneseq
  %v2146 = vshrl.u32 %v2145, 7
  %v2147 = vsub.s32 4, %v2146
  %v2148 = vrot.slane %v1067, %v2147
  %v2149 = vlaneseq
  %v2150 = vshrl.u32 %v2149, 7
  %v2151 = vsub.s32 5, %v2150
  %v2152 = vrot.slane %v1067, %v2151
  %v2153 = vlaneseq
  %v2154 = vshrl.u32 %v2153, 7
  %v2155 = vsub.s32 6, %v2154
  %v2156 = vrot.slane %v1067, %v2155
  %v2157 = vlaneseq
  %v2158 = vshrl.u32 %v2157, 7
  %v2159 = vsub.s32 7, %v2158
  %v2160 = vrot.slane %v1067, %v2159
  %v2161 = vlaneseq
  %v2162 = vshrl.u32 %v2161, 7
  %v2163 = vsub.s32 0, %v2162
  %v2164 = vrot.slane %v1068, %v2163
  %v2165 = vlaneseq
  %v2166 = vshrl.u32 %v2165, 7
  %v2167 = vsub.s32 1, %v2166
  %v2168 = vrot.slane %v1068, %v2167
  %v2169 = vlaneseq
  %v2170 = vshrl.u32 %v2169, 7
  %v2171 = vsub.s32 2, %v2170
  %v2172 = vrot.slane %v1068, %v2171
  %v2173 = vlaneseq
  %v2174 = vshrl.u32 %v2173, 7
  %v2175 = vsub.s32 3, %v2174
  %v2176 = vrot.slane %v1068, %v2175
  %v2177 = vlaneseq
  %v2178 = vshrl.u32 %v2177, 7
  %v2179 = vsub.s32 4, %v2178
  %v2180 = vrot.slane %v1068, %v2179
  %v2181 = vlaneseq
  %v2182 = vshrl.u32 %v2181, 7
  %v2183 = vsub.s32 5, %v2182
  %v2184 = vrot.slane %v1068, %v2183
  %v2185 = vlaneseq
  %v2186 = vshrl.u32 %v2185, 7
  %v2187 = vsub.s32 6, %v2186
  %v2188 = vrot.slane %v1068, %v2187
  %v2189 = vlaneseq
  %v2190 = vshrl.u32 %v2189, 7
  %v2191 = vsub.s32 7, %v2190
  %v2192 = vrot.slane %v1068, %v2191
  %v2193 = vlaneseq
  %v2194 = vshrl.u32 %v2193, 7
  %v2195 = vsub.s32 0, %v2194
  %v2196 = vrot.slane %v1069, %v2195
  %v2197 = vlaneseq
  %v2198 = vshrl.u32 %v2197, 7
  %v2199 = vsub.s32 1, %v2198
  %v2200 = vrot.slane %v1069, %v2199
  %v2201 = vlaneseq
  %v2202 = vshrl.u32 %v2201, 7
  %v2203 = vsub.s32 2, %v2202
  %v2204 = vrot.slane %v1069, %v2203
  %v2205 = vlaneseq
  %v2206 = vshrl.u32 %v2205, 7
  %v2207 = vsub.s32 3, %v2206
  %v2208 = vrot.slane %v1069, %v2207
  %v2209 = vlaneseq
  %v2210 = vshrl.u32 %v2209, 7
  %v2211 = vsub.s32 4, %v2210
  %v2212 = vrot.slane %v1069, %v2211
  %v2213 = vlaneseq
  %v2214 = vshrl.u32 %v2213, 7
  %v2215 = vsub.s32 5, %v2214
  %v2216 = vrot.slane %v1069, %v2215
  %v2217 = vlaneseq
  %v2218 = vshrl.u32 %v2217, 7
  %v2219 = vsub.s32 6, %v2218
  %v2220 = vrot.slane %v1069, %v2219
  %v2221 = vlaneseq
  %v2222 = vshrl.u32 %v2221, 7
  %v2223 = vsub.s32 7, %v2222
  %v2224 = vrot.slane %v1069, %v2223
  %v2225 = vlaneseq
  %v2226 = vshrl.u32 %v2225, 7
  %v2227 = vsub.s32 0, %v2226
  %v2228 = vrot.slane %v1070, %v2227
  %v2229 = vlaneseq
  %v2230 = vshrl.u32 %v2229, 7
  %v2231 = vsub.s32 1, %v2230
  %v2232 = vrot.slane %v1070, %v2231
  %v2233 = vlaneseq
  %v2234 = vshrl.u32 %v2233, 7
  %v2235 = vsub.s32 2, %v2234
  %v2236 = vrot.slane %v1070, %v2235
  %v2237 = vlaneseq
  %v2238 = vshrl.u32 %v2237, 7
  %v2239 = vsub.s32 3, %v2238
  %v2240 = vrot.slane %v1070, %v2239
  %v2241 = vlaneseq
  %v2242 = vshrl.u32 %v2241, 7
  %v2243 = vsub.s32 4, %v2242
  %v2244 = vrot.slane %v1070, %v2243
  %v2245 = vlaneseq
  %v2246 = vshrl.u32 %v2245, 7
  %v2247 = vsub.s32 5, %v2246
  %v2248 = vrot.slane %v1070, %v2247
  %v2249 = vlaneseq
  %v2250 = vshrl.u32 %v2249, 7
  %v2251 = vsub.s32 6, %v2250
  %v2252 = vrot.slane %v1070, %v2251
  %v2253 = vlaneseq
  %v2254 = vshrl.u32 %v2253, 7
  %v2255 = vsub.s32 7, %v2254
  %v2256 = vrot.slane %v1070, %v2255
  %v2257 = vlaneseq
  %v2258 = vshrl.u32 %v2257, 7
  %v2259 = vsub.s32 0, %v2258
  %v2260 = vrot.slane %v1071, %v2259
  %v2261 = vlaneseq
  %v2262 = vshrl.u32 %v2261, 7
  %v2263 = vsub.s32 1, %v2262
  %v2264 = vrot.slane %v1071, %v2263
  %v2265 = vlaneseq
  %v2266 = vshrl.u32 %v2265, 7
  %v2267 = vsub.s32 2, %v2266
  %v2268 = vrot.slane %v1071, %v2267
  %v2269 = vlaneseq
  %v2270 = vshrl.u32 %v2269, 7
  %v2271 = vsub.s32 3, %v2270
  %v2272 = vrot.slane %v1071, %v2271
  %v2273 = vlaneseq
  %v2274 = vshrl.u32 %v2273, 7
  %v2275 = vsub.s32 4, %v2274
  %v2276 = vrot.slane %v1071, %v2275
  %v2277 = vlaneseq
  %v2278 = vshrl.u32 %v2277, 7
  %v2279 = vsub.s32 5, %v2278
  %v2280 = vrot.slane %v1071, %v2279
  %v2281 = vlaneseq
  %v2282 = vshrl.u32 %v2281, 7
  %v2283 = vsub.s32 6, %v2282
  %v2284 = vrot.slane %v1071, %v2283
  %v2285 = vlaneseq
  %v2286 = vshrl.u32 %v2285, 7
  %v2287 = vsub.s32 7, %v2286
  %v2288 = vrot.slane %v1071, %v2287
  %v2289 = vlaneseq
  %v2290 = vshrl.u32 %v2289, 7
  %v2291 = vsub.s32 0, %v2290
  %v2292 = vrot.slane %v1072, %v2291
  %v2293 = vlaneseq
  %v2294 = vshrl.u32 %v2293, 7
  %v2295 = vsub.s32 1, %v2294
  %v2296 = vrot.slane %v1072, %v2295
  %v2297 = vlaneseq
  %v2298 = vshrl.u32 %v2297, 7
  %v2299 = vsub.s32 2, %v2298
  %v2300 = vrot.slane %v1072, %v2299
  %v2301 = vlaneseq
  %v2302 = vshrl.u32 %v2301, 7
  %v2303 = vsub.s32 3, %v2302
  %v2304 = vrot.slane %v1072, %v2303
  %v2305 = vlaneseq
  %v2306 = vshrl.u32 %v2305, 7
  %v2307 = vsub.s32 4, %v2306
  %v2308 = vrot.slane %v1072, %v2307
  %v2309 = vlaneseq
  %v2310 = vshrl.u32 %v2309, 7
  %v2311 = vsub.s32 5, %v2310
  %v2312 = vrot.slane %v1072, %v2311
  %v2313 = vlaneseq
  %v2314 = vshrl.u32 %v2313, 7
  %v2315 = vsub.s32 6, %v2314
  %v2316 = vrot.slane %v1072, %v2315
  %v2317 = vlaneseq
  %v2318 = vshrl.u32 %v2317, 7
  %v2319 = vsub.s32 7, %v2318
  %v2320 = vrot.slane %v1072, %v2319
  %v2321 = vlaneseq
  %v2322 = vshrl.u32 %v2321, 7
  %v2323 = vsub.s32 0, %v2322
  %v2324 = vrot.slane %v1073, %v2323
  %v2325 = vlaneseq
  %v2326 = vshrl.u32 %v2325, 7
  %v2327 = vsub.s32 1, %v2326
  %v2328 = vrot.slane %v1073, %v2327
  %v2329 = vlaneseq
  %v2330 = vshrl.u32 %v2329, 7
  %v2331 = vsub.s32 2, %v2330
  %v2332 = vrot.slane %v1073, %v2331
  %v2333 = vlaneseq
  %v2334 = vshrl.u32 %v2333, 7
  %v2335 = vsub.s32 3, %v2334
  %v2336 = vrot.slane %v1073, %v2335
  %v2337 = vlaneseq
  %v2338 = vshrl.u32 %v2337, 7
  %v2339 = vsub.s32 4, %v2338
  %v2340 = vrot.slane %v1073, %v2339
  %v2341 = vlaneseq
  %v2342 = vshrl.u32 %v2341, 7
  %v2343 = vsub.s32 5, %v2342
  %v2344 = vrot.slane %v1073, %v2343
  %v2345 = vlaneseq
  %v2346 = vshrl.u32 %v2345, 7
  %v2347 = vsub.s32 6, %v2346
  %v2348 = vrot.slane %v1073, %v2347
  %v2349 = vlaneseq
  %v2350 = vshrl.u32 %v2349, 7
  %v2351 = vsub.s32 7, %v2350
  %v2352 = vrot.slane %v1073, %v2351
  %v2353 = vlaneseq
  %v2354 = vshrl.u32 %v2353, 7
  %v2355 = vsub.s32 0, %v2354
  %v2356 = vrot.slane %v1074, %v2355
  %v2357 = vlaneseq
  %v2358 = vshrl.u32 %v2357, 7
  %v2359 = vsub.s32 1, %v2358
  %v2360 = vrot.slane %v1074, %v2359
  %v2361 = vlaneseq
  %v2362 = vshrl.u32 %v2361, 7
  %v2363 = vsub.s32 2, %v2362
  %v2364 = vrot.slane %v1074, %v2363
  %v2365 = vlaneseq
  %v2366 = vshrl.u32 %v2365, 7
  %v2367 = vsub.s32 3, %v2366
  %v2368 = vrot.slane %v1074, %v2367
  %v2369 = vlaneseq
  %v2370 = vshrl.u32 %v2369, 7
  %v2371 = vsub.s32 4, %v2370
  %v2372 = vrot.slane %v1074, %v2371
  %v2373 = vlaneseq
  %v2374 = vshrl.u32 %v2373, 7
  %v2375 = vsub.s32 5, %v2374
  %v2376 = vrot.slane %v1074, %v2375
  %v2377 = vlaneseq
  %v2378 = vshrl.u32 %v2377, 7
  %v2379 = vsub.s32 6, %v2378
  %v2380 = vrot.slane %v1074, %v2379
  %v2381 = vlaneseq
  %v2382 = vshrl.u32 %v2381, 7
  %v2383 = vsub.s32 7, %v2382
  %v2384 = vrot.slane %v1074, %v2383
  %v2385 = vlaneseq
  %v2386 = vshrl.u32 %v2385, 7
  %v2387 = vsub.s32 0, %v2386
  %v2388 = vrot.slane %v1075, %v2387
  %v2389 = vlaneseq
  %v2390 = vshrl.u32 %v2389, 7
  %v2391 = vsub.s32 1, %v2390
  %v2392 = vrot.slane %v1075, %v2391
  %v2393 = vlaneseq
  %v2394 = vshrl.u32 %v2393, 7
  %v2395 = vsub.s32 2, %v2394
  %v2396 = vrot.slane %v1075, %v2395
  %v2397 = vlaneseq
  %v2398 = vshrl.u32 %v2397, 7
  %v2399 = vsub.s32 3, %v2398
  %v2400 = vrot.slane %v1075, %v2399
  %v2401 = vlaneseq
  %v2402 = vshrl.u32 %v2401, 7
  %v2403 = vsub.s32 4, %v2402
  %v2404 = vrot.slane %v1075, %v2403
  %v2405 = vlaneseq
  %v2406 = vshrl.u32 %v2405, 7
  %v2407 = vsub.s32 5, %v2406
  %v2408 = vrot.slane %v1075, %v2407
  %v2409 = vlaneseq
  %v2410 = vshrl.u32 %v2409, 7
  %v2411 = vsub.s32 6, %v2410
  %v2412 = vrot.slane %v1075, %v2411
  %v2413 = vlaneseq
  %v2414 = vshrl.u32 %v2413, 7
  %v2415 = vsub.s32 7, %v2414
  %v2416 = vrot.slane %v1075, %v2415
  %v2417 = vlaneseq
  %v2418 = vshrl.u32 %v2417, 7
  %v2419 = vsub.s32 0, %v2418
  %v2420 = vrot.slane %v1076, %v2419
  %v2421 = vlaneseq
  %v2422 = vshrl.u32 %v2421, 7
  %v2423 = vsub.s32 1, %v2422
  %v2424 = vrot.slane %v1076, %v2423
  %v2425 = vlaneseq
  %v2426 = vshrl.u32 %v2425, 7
  %v2427 = vsub.s32 2, %v2426
  %v2428 = vrot.slane %v1076, %v2427
  %v2429 = vlaneseq
  %v2430 = vshrl.u32 %v2429, 7
  %v2431 = vsub.s32 3, %v2430
  %v2432 = vrot.slane %v1076, %v2431
  %v2433 = vlaneseq
  %v2434 = vshrl.u32 %v2433, 7
  %v2435 = vsub.s32 4, %v2434
  %v2436 = vrot.slane %v1076, %v2435
  %v2437 = vlaneseq
  %v2438 = vshrl.u32 %v2437, 7
  %v2439 = vsub.s32 5, %v2438
  %v2440 = vrot.slane %v1076, %v2439
  %v2441 = vlaneseq
  %v2442 = vshrl.u32 %v2441, 7
  %v2443 = vsub.s32 6, %v2442
  %v2444 = vrot.slane %v1076, %v2443
  %v2445 = vlaneseq
  %v2446 = vshrl.u32 %v2445, 7
  %v2447 = vsub.s32 7, %v2446
  %v2448 = vrot.slane %v1076, %v2447
  %v2449 = vlaneseq
  %v2450 = vshrl.u32 %v2449, 7
  %v2451 = vsub.s32 0, %v2450
  %v2452 = vrot.slane %v1077, %v2451
  %v2453 = vlaneseq
  %v2454 = vshrl.u32 %v2453, 7
  %v2455 = vsub.s32 1, %v2454
  %v2456 = vrot.slane %v1077, %v2455
  %v2457 = vlaneseq
  %v2458 = vshrl.u32 %v2457, 7
  %v2459 = vsub.s32 2, %v2458
  %v2460 = vrot.slane %v1077, %v2459
  %v2461 = vlaneseq
  %v2462 = vshrl.u32 %v2461, 7
  %v2463 = vsub.s32 3, %v2462
  %v2464 = vrot.slane %v1077, %v2463
  %v2465 = vlaneseq
  %v2466 = vshrl.u32 %v2465, 7
  %v2467 = vsub.s32 4, %v2466
  %v2468 = vrot.slane %v1077, %v2467
  %v2469 = vlaneseq
  %v2470 = vshrl.u32 %v2469, 7
  %v2471 = vsub.s32 5, %v2470
  %v2472 = vrot.slane %v1077, %v2471
  %v2473 = vlaneseq
  %v2474 = vshrl.u32 %v2473, 7
  %v2475 = vsub.s32 6, %v2474
  %v2476 = vrot.slane %v1077, %v2475
  %v2477 = vlaneseq
  %v2478 = vshrl.u32 %v2477, 7
  %v2479 = vsub.s32 7, %v2478
  %v2480 = vrot.slane %v1077, %v2479
  %v2481 = vlaneseq
  %v2482 = vshrl.u32 %v2481, 7
  %v2483 = vsub.s32 0, %v2482
  %v2484 = vrot.slane %v1078, %v2483
  %v2485 = vlaneseq
  %v2486 = vshrl.u32 %v2485, 7
  %v2487 = vsub.s32 1, %v2486
  %v2488 = vrot.slane %v1078, %v2487
  %v2489 = vlaneseq
  %v2490 = vshrl.u32 %v2489, 7
  %v2491 = vsub.s32 2, %v2490
  %v2492 = vrot.slane %v1078, %v2491
  %v2493 = vlaneseq
  %v2494 = vshrl.u32 %v2493, 7
  %v2495 = vsub.s32 3, %v2494
  %v2496 = vrot.slane %v1078, %v2495
  %v2497 = vlaneseq
  %v2498 = vshrl.u32 %v2497, 7
  %v2499 = vsub.s32 4, %v2498
  %v2500 = vrot.slane %v1078, %v2499
  %v2501 = vlaneseq
  %v2502 = vshrl.u32 %v2501, 7
  %v2503 = vsub.s32 5, %v2502
  %v2504 = vrot.slane %v1078, %v2503
  %v2505 = vlaneseq
  %v2506 = vshrl.u32 %v2505, 7
  %v2507 = vsub.s32 6, %v2506
  %v2508 = vrot.slane %v1078, %v2507
  %v2509 = vlaneseq
  %v2510 = vshrl.u32 %v2509, 7
  %v2511 = vsub.s32 7, %v2510
  %v2512 = vrot.slane %v1078, %v2511
  %v2513 = vlaneseq
  %v2514 = vshrl.u32 %v2513, 7
  %v2515 = vsub.s32 0, %v2514
  %v2516 = vrot.slane %v1079, %v2515
  %v2517 = vlaneseq
  %v2518 = vshrl.u32 %v2517, 7
  %v2519 = vsub.s32 1, %v2518
  %v2520 = vrot.slane %v1079, %v2519
  %v2521 = vlaneseq
  %v2522 = vshrl.u32 %v2521, 7
  %v2523 = vsub.s32 2, %v2522
  %v2524 = vrot.slane %v1079, %v2523
  %v2525 = vlaneseq
  %v2526 = vshrl.u32 %v2525, 7
  %v2527 = vsub.s32 3, %v2526
  %v2528 = vrot.slane %v1079, %v2527
  %v2529 = vlaneseq
  %v2530 = vshrl.u32 %v2529, 7
  %v2531 = vsub.s32 4, %v2530
  %v2532 = vrot.slane %v1079, %v2531
  %v2533 = vlaneseq
  %v2534 = vshrl.u32 %v2533, 7
  %v2535 = vsub.s32 5, %v2534
  %v2536 = vrot.slane %v1079, %v2535
  %v2537 = vlaneseq
  %v2538 = vshrl.u32 %v2537, 7
  %v2539 = vsub.s32 6, %v2538
  %v2540 = vrot.slane %v1079, %v2539
  %v2541 = vlaneseq
  %v2542 = vshrl.u32 %v2541, 7
  %v2543 = vsub.s32 7, %v2542
  %v2544 = vrot.slane %v1079, %v2543
  %v2545 = vlaneseq
  %v2546 = vshrl.u32 %v2545, 7
  %v2547 = vsub.s32 0, %v2546
  %v2548 = vrot.slane %v1080, %v2547
  %v2549 = vlaneseq
  %v2550 = vshrl.u32 %v2549, 7
  %v2551 = vsub.s32 1, %v2550
  %v2552 = vrot.slane %v1080, %v2551
  %v2553 = vlaneseq
  %v2554 = vshrl.u32 %v2553, 7
  %v2555 = vsub.s32 2, %v2554
  %v2556 = vrot.slane %v1080, %v2555
  %v2557 = vlaneseq
  %v2558 = vshrl.u32 %v2557, 7
  %v2559 = vsub.s32 3, %v2558
  %v2560 = vrot.slane %v1080, %v2559
  %v2561 = vlaneseq
  %v2562 = vshrl.u32 %v2561, 7
  %v2563 = vsub.s32 4, %v2562
  %v2564 = vrot.slane %v1080, %v2563
  %v2565 = vlaneseq
  %v2566 = vshrl.u32 %v2565, 7
  %v2567 = vsub.s32 5, %v2566
  %v2568 = vrot.slane %v1080, %v2567
  %v2569 = vlaneseq
  %v2570 = vshrl.u32 %v2569, 7
  %v2571 = vsub.s32 6, %v2570
  %v2572 = vrot.slane %v1080, %v2571
  %v2573 = vlaneseq
  %v2574 = vshrl.u32 %v2573, 7
  %v2575 = vsub.s32 7, %v2574
  %v2576 = vrot.slane %v1080, %v2575
  %v2577 = vlaneseq
  %v2578 = vshrl.u32 %v2577, 7
  %v2579 = vsub.s32 0, %v2578
  %v2580 = vrot.slane %v1081, %v2579
  %v2581 = vlaneseq
  %v2582 = vshrl.u32 %v2581, 7
  %v2583 = vsub.s32 1, %v2582
  %v2584 = vrot.slane %v1081, %v2583
  %v2585 = vlaneseq
  %v2586 = vshrl.u32 %v2585, 7
  %v2587 = vsub.s32 2, %v2586
  %v2588 = vrot.slane %v1081, %v2587
  %v2589 = vlaneseq
  %v2590 = vshrl.u32 %v2589, 7
  %v2591 = vsub.s32 3, %v2590
  %v2592 = vrot.slane %v1081, %v2591
  %v2593 = vlaneseq
  %v2594 = vshrl.u32 %v2593, 7
  %v2595 = vsub.s32 4, %v2594
  %v2596 = vrot.slane %v1081, %v2595
  %v2597 = vlaneseq
  %v2598 = vshrl.u32 %v2597, 7
  %v2599 = vsub.s32 5, %v2598
  %v2600 = vrot.slane %v1081, %v2599
  %v2601 = vlaneseq
  %v2602 = vshrl.u32 %v2601, 7
  %v2603 = vsub.s32 6, %v2602
  %v2604 = vrot.slane %v1081, %v2603
  %v2605 = vlaneseq
  %v2606 = vshrl.u32 %v2605, 7
  %v2607 = vsub.s32 7, %v2606
  %v2608 = vrot.slane %v1081, %v2607
  %v2609 = vlaneseq
  %v2610 = vshrl.u32 %v2609, 7
  %v2611 = vsub.s32 0, %v2610
  %v2612 = vrot.slane %v1082, %v2611
  %v2613 = vlaneseq
  %v2614 = vshrl.u32 %v2613, 7
  %v2615 = vsub.s32 1, %v2614
  %v2616 = vrot.slane %v1082, %v2615
  %v2617 = vlaneseq
  %v2618 = vshrl.u32 %v2617, 7
  %v2619 = vsub.s32 2, %v2618
  %v2620 = vrot.slane %v1082, %v2619
  %v2621 = vlaneseq
  %v2622 = vshrl.u32 %v2621, 7
  %v2623 = vsub.s32 3, %v2622
  %v2624 = vrot.slane %v1082, %v2623
  %v2625 = vlaneseq
  %v2626 = vshrl.u32 %v2625, 7
  %v2627 = vsub.s32 4, %v2626
  %v2628 = vrot.slane %v1082, %v2627
  %v2629 = vlaneseq
  %v2630 = vshrl.u32 %v2629, 7
  %v2631 = vsub.s32 5, %v2630
  %v2632 = vrot.slane %v1082, %v2631
  %v2633 = vlaneseq
  %v2634 = vshrl.u32 %v2633, 7
  %v2635 = vsub.s32 6, %v2634
  %v2636 = vrot.slane %v1082, %v2635
  %v2637 = vlaneseq
  %v2638 = vshrl.u32 %v2637, 7
  %v2639 = vsub.s32 7, %v2638
  %v2640 = vrot.slane %v1082, %v2639
  %v2641 = vlaneseq
  %v2642 = vshrl.u32 %v2641, 7
  %v2643 = vsub.s32 0, %v2642
  %v2644 = vrot.slane %v1083, %v2643
  %v2645 = vlaneseq
  %v2646 = vshrl.u32 %v2645, 7
  %v2647 = vsub.s32 1, %v2646
  %v2648 = vrot.slane %v1083, %v2647
  %v2649 = vlaneseq
  %v2650 = vshrl.u32 %v2649, 7
  %v2651 = vsub.s32 2, %v2650
  %v2652 = vrot.slane %v1083, %v2651
  %v2653 = vlaneseq
  %v2654 = vshrl.u32 %v2653, 7
  %v2655 = vsub.s32 3, %v2654
  %v2656 = vrot.slane %v1083, %v2655
  %v2657 = vlaneseq
  %v2658 = vshrl.u32 %v2657, 7
  %v2659 = vsub.s32 4, %v2658
  %v2660 = vrot.slane %v1083, %v2659
  %v2661 = vlaneseq
  %v2662 = vshrl.u32 %v2661, 7
  %v2663 = vsub.s32 5, %v2662
  %v2664 = vrot.slane %v1083, %v2663
  %v2665 = vlaneseq
  %v2666 = vshrl.u32 %v2665, 7
  %v2667 = vsub.s32 6, %v2666
  %v2668 = vrot.slane %v1083, %v2667
  %v2669 = vlaneseq
  %v2670 = vshrl.u32 %v2669, 7
  %v2671 = vsub.s32 7, %v2670
  %v2672 = vrot.slane %v1083, %v2671
  %v2673 = vlaneseq
  %v2674 = vshrl.u32 %v2673, 7
  %v2675 = vsub.s32 0, %v2674
  %v2676 = vrot.slane %v1084, %v2675
  %v2677 = vlaneseq
  %v2678 = vshrl.u32 %v2677, 7
  %v2679 = vsub.s32 1, %v2678
  %v2680 = vrot.slane %v1084, %v2679
  %v2681 = vlaneseq
  %v2682 = vshrl.u32 %v2681, 7
  %v2683 = vsub.s32 2, %v2682
  %v2684 = vrot.slane %v1084, %v2683
  %v2685 = vlaneseq
  %v2686 = vshrl.u32 %v2685, 7
  %v2687 = vsub.s32 3, %v2686
  %v2688 = vrot.slane %v1084, %v2687
  %v2689 = vlaneseq
  %v2690 = vshrl.u32 %v2689, 7
  %v2691 = vsub.s32 4, %v2690
  %v2692 = vrot.slane %v1084, %v2691
  %v2693 = vlaneseq
  %v2694 = vshrl.u32 %v2693, 7
  %v2695 = vsub.s32 5, %v2694
  %v2696 = vrot.slane %v1084, %v2695
  %v2697 = vlaneseq
  %v2698 = vshrl.u32 %v2697, 7
  %v2699 = vsub.s32 6, %v2698
  %v2700 = vrot.slane %v1084, %v2699
  %v2701 = vlaneseq
  %v2702 = vshrl.u32 %v2701, 7
  %v2703 = vsub.s32 7, %v2702
  %v2704 = vrot.slane %v1084, %v2703
  %v2705 = vlaneseq
  %v2706 = vshrl.u32 %v2705, 7
  %v2707 = vsub.s32 0, %v2706
  %v2708 = vrot.slane %v1085, %v2707
  %v2709 = vlaneseq
  %v2710 = vshrl.u32 %v2709, 7
  %v2711 = vsub.s32 1, %v2710
  %v2712 = vrot.slane %v1085, %v2711
  %v2713 = vlaneseq
  %v2714 = vshrl.u32 %v2713, 7
  %v2715 = vsub.s32 2, %v2714
  %v2716 = vrot.slane %v1085, %v2715
  %v2717 = vlaneseq
  %v2718 = vshrl.u32 %v2717, 7
  %v2719 = vsub.s32 3, %v2718
  %v2720 = vrot.slane %v1085, %v2719
  %v2721 = vlaneseq
  %v2722 = vshrl.u32 %v2721, 7
  %v2723 = vsub.s32 4, %v2722
  %v2724 = vrot.slane %v1085, %v2723
  %v2725 = vlaneseq
  %v2726 = vshrl.u32 %v2725, 7
  %v2727 = vsub.s32 5, %v2726
  %v2728 = vrot.slane %v1085, %v2727
  %v2729 = vlaneseq
  %v2730 = vshrl.u32 %v2729, 7
  %v2731 = vsub.s32 6, %v2730
  %v2732 = vrot.slane %v1085, %v2731
  %v2733 = vlaneseq
  %v2734 = vshrl.u32 %v2733, 7
  %v2735 = vsub.s32 7, %v2734
  %v2736 = vrot.slane %v1085, %v2735
  %v2737 = vlaneseq
  %v2738 = vshrl.u32 %v2737, 7
  %v2739 = vsub.s32 0, %v2738
  %v2740 = vrot.slane %v1086, %v2739
  %v2741 = vlaneseq
  %v2742 = vshrl.u32 %v2741, 7
  %v2743 = vsub.s32 1, %v2742
  %v2744 = vrot.slane %v1086, %v2743
  %v2745 = vlaneseq
  %v2746 = vshrl.u32 %v2745, 7
  %v2747 = vsub.s32 2, %v2746
  %v2748 = vrot.slane %v1086, %v2747
  %v2749 = vlaneseq
  %v2750 = vshrl.u32 %v2749, 7
  %v2751 = vsub.s32 3, %v2750
  %v2752 = vrot.slane %v1086, %v2751
  %v2753 = vlaneseq
  %v2754 = vshrl.u32 %v2753, 7
  %v2755 = vsub.s32 4, %v2754
  %v2756 = vrot.slane %v1086, %v2755
  %v2757 = vlaneseq
  %v2758 = vshrl.u32 %v2757, 7
  %v2759 = vsub.s32 5, %v2758
  %v2760 = vrot.slane %v1086, %v2759
  %v2761 = vlaneseq
  %v2762 = vshrl.u32 %v2761, 7
  %v2763 = vsub.s32 6, %v2762
  %v2764 = vrot.slane %v1086, %v2763
  %v2765 = vlaneseq
  %v2766 = vshrl.u32 %v2765, 7
  %v2767 = vsub.s32 7, %v2766
  %v2768 = vrot.slane %v1086, %v2767
  %v2769 = vlaneseq
  %v2770 = vshrl.u32 %v2769, 7
  %v2771 = vsub.s32 0, %v2770
  %v2772 = vrot.slane %v1087, %v2771
  %v2773 = vlaneseq
  %v2774 = vshrl.u32 %v2773, 7
  %v2775 = vsub.s32 1, %v2774
  %v2776 = vrot.slane %v1087, %v2775
  %v2777 = vlaneseq
  %v2778 = vshrl.u32 %v2777, 7
  %v2779 = vsub.s32 2, %v2778
  %v2780 = vrot.slane %v1087, %v2779
  %v2781 = vlaneseq
  %v2782 = vshrl.u32 %v2781, 7
  %v2783 = vsub.s32 3, %v2782
  %v2784 = vrot.slane %v1087, %v2783
  %v2785 = vlaneseq
  %v2786 = vshrl.u32 %v2785, 7
  %v2787 = vsub.s32 4, %v2786
  %v2788 = vrot.slane %v1087, %v2787
  %v2789 = vlaneseq
  %v2790 = vshrl.u32 %v2789, 7
  %v2791 = vsub.s32 5, %v2790
  %v2792 = vrot.slane %v1087, %v2791
  %v2793 = vlaneseq
  %v2794 = vshrl.u32 %v2793, 7
  %v2795 = vsub.s32 6, %v2794
  %v2796 = vrot.slane %v1087, %v2795
  %v2797 = vlaneseq
  %v2798 = vshrl.u32 %v2797, 7
  %v2799 = vsub.s32 7, %v2798
  %v2800 = vrot.slane %v1087, %v2799
  %v2801 = vlaneseq
  %v2802 = vshrl.u32 %v2801, 7
  %v2803 = vsub.s32 0, %v2802
  %v2804 = vrot.slane %v1088, %v2803
  %v2805 = vlaneseq
  %v2806 = vshrl.u32 %v2805, 7
  %v2807 = vsub.s32 1, %v2806
  %v2808 = vrot.slane %v1088, %v2807
  %v2809 = vlaneseq
  %v2810 = vshrl.u32 %v2809, 7
  %v2811 = vsub.s32 2, %v2810
  %v2812 = vrot.slane %v1088, %v2811
  %v2813 = vlaneseq
  %v2814 = vshrl.u32 %v2813, 7
  %v2815 = vsub.s32 3, %v2814
  %v2816 = vrot.slane %v1088, %v2815
  %v2817 = vlaneseq
  %v2818 = vshrl.u32 %v2817, 7
  %v2819 = vsub.s32 4, %v2818
  %v2820 = vrot.slane %v1088, %v2819
  %v2821 = vlaneseq
  %v2822 = vshrl.u32 %v2821, 7
  %v2823 = vsub.s32 5, %v2822
  %v2824 = vrot.slane %v1088, %v2823
  %v2825 = vlaneseq
  %v2826 = vshrl.u32 %v2825, 7
  %v2827 = vsub.s32 6, %v2826
  %v2828 = vrot.slane %v1088, %v2827
  %v2829 = vlaneseq
  %v2830 = vshrl.u32 %v2829, 7
  %v2831 = vsub.s32 7, %v2830
  %v2832 = vrot.slane %v1088, %v2831
  %v2833 = vlaneseq
  %v2834 = vshrl.u32 %v2833, 7
  %v2835 = vsub.s32 0, %v2834
  %v2836 = vrot.slane %v1089, %v2835
  %v2837 = vlaneseq
  %v2838 = vshrl.u32 %v2837, 7
  %v2839 = vsub.s32 1, %v2838
  %v2840 = vrot.slane %v1089, %v2839
  %v2841 = vlaneseq
  %v2842 = vshrl.u32 %v2841, 7
  %v2843 = vsub.s32 2, %v2842
  %v2844 = vrot.slane %v1089, %v2843
  %v2845 = vlaneseq
  %v2846 = vshrl.u32 %v2845, 7
  %v2847 = vsub.s32 3, %v2846
  %v2848 = vrot.slane %v1089, %v2847
  %v2849 = vlaneseq
  %v2850 = vshrl.u32 %v2849, 7
  %v2851 = vsub.s32 4, %v2850
  %v2852 = vrot.slane %v1089, %v2851
  %v2853 = vlaneseq
  %v2854 = vshrl.u32 %v2853, 7
  %v2855 = vsub.s32 5, %v2854
  %v2856 = vrot.slane %v1089, %v2855
  %v2857 = vlaneseq
  %v2858 = vshrl.u32 %v2857, 7
  %v2859 = vsub.s32 6, %v2858
  %v2860 = vrot.slane %v1089, %v2859
  %v2861 = vlaneseq
  %v2862 = vshrl.u32 %v2861, 7
  %v2863 = vsub.s32 7, %v2862
  %v2864 = vrot.slane %v1089, %v2863
  %v2865 = vlaneseq
  %v2866 = vshrl.u32 %v2865, 7
  %v2867 = vsub.s32 0, %v2866
  %v2868 = vrot.slane %v1090, %v2867
  %v2869 = vlaneseq
  %v2870 = vshrl.u32 %v2869, 7
  %v2871 = vsub.s32 1, %v2870
  %v2872 = vrot.slane %v1090, %v2871
  %v2873 = vlaneseq
  %v2874 = vshrl.u32 %v2873, 7
  %v2875 = vsub.s32 2, %v2874
  %v2876 = vrot.slane %v1090, %v2875
  %v2877 = vlaneseq
  %v2878 = vshrl.u32 %v2877, 7
  %v2879 = vsub.s32 3, %v2878
  %v2880 = vrot.slane %v1090, %v2879
  %v2881 = vlaneseq
  %v2882 = vshrl.u32 %v2881, 7
  %v2883 = vsub.s32 4, %v2882
  %v2884 = vrot.slane %v1090, %v2883
  %v2885 = vlaneseq
  %v2886 = vshrl.u32 %v2885, 7
  %v2887 = vsub.s32 5, %v2886
  %v2888 = vrot.slane %v1090, %v2887
  %v2889 = vlaneseq
  %v2890 = vshrl.u32 %v2889, 7
  %v2891 = vsub.s32 6, %v2890
  %v2892 = vrot.slane %v1090, %v2891
  %v2893 = vlaneseq
  %v2894 = vshrl.u32 %v2893, 7
  %v2895 = vsub.s32 7, %v2894
  %v2896 = vrot.slane %v1090, %v2895
  %v2897 = vlaneseq
  %v2898 = vshrl.u32 %v2897, 7
  %v2899 = vsub.s32 0, %v2898
  %v2900 = vrot.slane %v1091, %v2899
  %v2901 = vlaneseq
  %v2902 = vshrl.u32 %v2901, 7
  %v2903 = vsub.s32 1, %v2902
  %v2904 = vrot.slane %v1091, %v2903
  %v2905 = vlaneseq
  %v2906 = vshrl.u32 %v2905, 7
  %v2907 = vsub.s32 2, %v2906
  %v2908 = vrot.slane %v1091, %v2907
  %v2909 = vlaneseq
  %v2910 = vshrl.u32 %v2909, 7
  %v2911 = vsub.s32 3, %v2910
  %v2912 = vrot.slane %v1091, %v2911
  %v2913 = vlaneseq
  %v2914 = vshrl.u32 %v2913, 7
  %v2915 = vsub.s32 4, %v2914
  %v2916 = vrot.slane %v1091, %v2915
  %v2917 = vlaneseq
  %v2918 = vshrl.u32 %v2917, 7
  %v2919 = vsub.s32 5, %v2918
  %v2920 = vrot.slane %v1091, %v2919
  %v2921 = vlaneseq
  %v2922 = vshrl.u32 %v2921, 7
  %v2923 = vsub.s32 6, %v2922
  %v2924 = vrot.slane %v1091, %v2923
  %v2925 = vlaneseq
  %v2926 = vshrl.u32 %v2925, 7
  %v2927 = vsub.s32 7, %v2926
  %v2928 = vrot.slane %v1091, %v2927
  %v2929 = vlaneseq
  %v2930 = vshrl.u32 %v2929, 7
  %v2931 = vsub.s32 0, %v2930
  %v2932 = vrot.slane %v1092, %v2931
  %v2933 = vlaneseq
  %v2934 = vshrl.u32 %v2933, 7
  %v2935 = vsub.s32 1, %v2934
  %v2936 = vrot.slane %v1092, %v2935
  %v2937 = vlaneseq
  %v2938 = vshrl.u32 %v2937, 7
  %v2939 = vsub.s32 2, %v2938
  %v2940 = vrot.slane %v1092, %v2939
  %v2941 = vlaneseq
  %v2942 = vshrl.u32 %v2941, 7
  %v2943 = vsub.s32 3, %v2942
  %v2944 = vrot.slane %v1092, %v2943
  %v2945 = vlaneseq
  %v2946 = vshrl.u32 %v2945, 7
  %v2947 = vsub.s32 4, %v2946
  %v2948 = vrot.slane %v1092, %v2947
  %v2949 = vlaneseq
  %v2950 = vshrl.u32 %v2949, 7
  %v2951 = vsub.s32 5, %v2950
  %v2952 = vrot.slane %v1092, %v2951
  %v2953 = vlaneseq
  %v2954 = vshrl.u32 %v2953, 7
  %v2955 = vsub.s32 6, %v2954
  %v2956 = vrot.slane %v1092, %v2955
  %v2957 = vlaneseq
  %v2958 = vshrl.u32 %v2957, 7
  %v2959 = vsub.s32 7, %v2958
  %v2960 = vrot.slane %v1092, %v2959
  %v2961 = vlaneseq
  %v2962 = vshrl.u32 %v2961, 7
  %v2963 = vsub.s32 0, %v2962
  %v2964 = vrot.slane %v1093, %v2963
  %v2965 = vlaneseq
  %v2966 = vshrl.u32 %v2965, 7
  %v2967 = vsub.s32 1, %v2966
  %v2968 = vrot.slane %v1093, %v2967
  %v2969 = vlaneseq
  %v2970 = vshrl.u32 %v2969, 7
  %v2971 = vsub.s32 2, %v2970
  %v2972 = vrot.slane %v1093, %v2971
  %v2973 = vlaneseq
  %v2974 = vshrl.u32 %v2973, 7
  %v2975 = vsub.s32 3, %v2974
  %v2976 = vrot.slane %v1093, %v2975
  %v2977 = vlaneseq
  %v2978 = vshrl.u32 %v2977, 7
  %v2979 = vsub.s32 4, %v2978
  %v2980 = vrot.slane %v1093, %v2979
  %v2981 = vlaneseq
  %v2982 = vshrl.u32 %v2981, 7
  %v2983 = vsub.s32 5, %v2982
  %v2984 = vrot.slane %v1093, %v2983
  %v2985 = vlaneseq
  %v2986 = vshrl.u32 %v2985, 7
  %v2987 = vsub.s32 6, %v2986
  %v2988 = vrot.slane %v1093, %v2987
  %v2989 = vlaneseq
  %v2990 = vshrl.u32 %v2989, 7
  %v2991 = vsub.s32 7, %v2990
  %v2992 = vrot.slane %v1093, %v2991
  %v2993 = vlaneseq
  %v2994 = vshrl.u32 %v2993, 7
  %v2995 = vsub.s32 0, %v2994
  %v2996 = vrot.slane %v1094, %v2995
  %v2997 = vlaneseq
  %v2998 = vshrl.u32 %v2997, 7
  %v2999 = vsub.s32 1, %v2998
  %v3000 = vrot.slane %v1094, %v2999
  %v3001 = vlaneseq
  %v3002 = vshrl.u32 %v3001, 7
  %v3003 = vsub.s32 2, %v3002
  %v3004 = vrot.slane %v1094, %v3003
  %v3005 = vlaneseq
  %v3006 = vshrl.u32 %v3005, 7
  %v3007 = vsub.s32 3, %v3006
  %v3008 = vrot.slane %v1094, %v3007
  %v3009 = vlaneseq
  %v3010 = vshrl.u32 %v3009, 7
  %v3011 = vsub.s32 4, %v3010
  %v3012 = vrot.slane %v1094, %v3011
  %v3013 = vlaneseq
  %v3014 = vshrl.u32 %v3013, 7
  %v3015 = vsub.s32 5, %v3014
  %v3016 = vrot.slane %v1094, %v3015
  %v3017 = vlaneseq
  %v3018 = vshrl.u32 %v3017, 7
  %v3019 = vsub.s32 6, %v3018
  %v3020 = vrot.slane %v1094, %v3019
  %v3021 = vlaneseq
  %v3022 = vshrl.u32 %v3021, 7
  %v3023 = vsub.s32 7, %v3022
  %v3024 = vrot.slane %v1094, %v3023
  %v3025 = vlaneseq
  %v3026 = vshrl.u32 %v3025, 7
  %v3027 = vsub.s32 0, %v3026
  %v3028 = vrot.slane %v1095, %v3027
  %v3029 = vlaneseq
  %v3030 = vshrl.u32 %v3029, 7
  %v3031 = vsub.s32 1, %v3030
  %v3032 = vrot.slane %v1095, %v3031
  %v3033 = vlaneseq
  %v3034 = vshrl.u32 %v3033, 7
  %v3035 = vsub.s32 2, %v3034
  %v3036 = vrot.slane %v1095, %v3035
  %v3037 = vlaneseq
  %v3038 = vshrl.u32 %v3037, 7
  %v3039 = vsub.s32 3, %v3038
  %v3040 = vrot.slane %v1095, %v3039
  %v3041 = vlaneseq
  %v3042 = vshrl.u32 %v3041, 7
  %v3043 = vsub.s32 4, %v3042
  %v3044 = vrot.slane %v1095, %v3043
  %v3045 = vlaneseq
  %v3046 = vshrl.u32 %v3045, 7
  %v3047 = vsub.s32 5, %v3046
  %v3048 = vrot.slane %v1095, %v3047
  %v3049 = vlaneseq
  %v3050 = vshrl.u32 %v3049, 7
  %v3051 = vsub.s32 6, %v3050
  %v3052 = vrot.slane %v1095, %v3051
  %v3053 = vlaneseq
  %v3054 = vshrl.u32 %v3053, 7
  %v3055 = vsub.s32 7, %v3054
  %v3056 = vrot.slane %v1095, %v3055
  %v3057 = vlaneseq
  %v3058 = vshrl.u32 %v3057, 7
  %v3059 = vsub.s32 0, %v3058
  %v3060 = vrot.slane %v1096, %v3059
  %v3061 = vlaneseq
  %v3062 = vshrl.u32 %v3061, 7
  %v3063 = vsub.s32 1, %v3062
  %v3064 = vrot.slane %v1096, %v3063
  %v3065 = vlaneseq
  %v3066 = vshrl.u32 %v3065, 7
  %v3067 = vsub.s32 2, %v3066
  %v3068 = vrot.slane %v1096, %v3067
  %v3069 = vlaneseq
  %v3070 = vshrl.u32 %v3069, 7
  %v3071 = vsub.s32 3, %v3070
  %v3072 = vrot.slane %v1096, %v3071
  %v3073 = vlaneseq
  %v3074 = vshrl.u32 %v3073, 7
  %v3075 = vsub.s32 4, %v3074
  %v3076 = vrot.slane %v1096, %v3075
  %v3077 = vlaneseq
  %v3078 = vshrl.u32 %v3077, 7
  %v3079 = vsub.s32 5, %v3078
  %v3080 = vrot.slane %v1096, %v3079
  %v3081 = vlaneseq
  %v3082 = vshrl.u32 %v3081, 7
  %v3083 = vsub.s32 6, %v3082
  %v3084 = vrot.slane %v1096, %v3083
  %v3085 = vlaneseq
  %v3086 = vshrl.u32 %v3085, 7
  %v3087 = vsub.s32 7, %v3086
  %v3088 = vrot.slane %v1096, %v3087
  %v3089 = vlaneseq
  %v3090 = vshrl.u32 %v3089, 7
  %v3091 = vsub.s32 0, %v3090
  %v3092 = vrot.slane %v1097, %v3091
  %v3093 = vlaneseq
  %v3094 = vshrl.u32 %v3093, 7
  %v3095 = vsub.s32 1, %v3094
  %v3096 = vrot.slane %v1097, %v3095
  %v3097 = vlaneseq
  %v3098 = vshrl.u32 %v3097, 7
  %v3099 = vsub.s32 2, %v3098
  %v3100 = vrot.slane %v1097, %v3099
  %v3101 = vlaneseq
  %v3102 = vshrl.u32 %v3101, 7
  %v3103 = vsub.s32 3, %v3102
  %v3104 = vrot.slane %v1097, %v3103
  %v3105 = vlaneseq
  %v3106 = vshrl.u32 %v3105, 7
  %v3107 = vsub.s32 4, %v3106
  %v3108 = vrot.slane %v1097, %v3107
  %v3109 = vlaneseq
  %v3110 = vshrl.u32 %v3109, 7
  %v3111 = vsub.s32 5, %v3110
  %v3112 = vrot.slane %v1097, %v3111
  %v3113 = vlaneseq
  %v3114 = vshrl.u32 %v3113, 7
  %v3115 = vsub.s32 6, %v3114
  %v3116 = vrot.slane %v1097, %v3115
  %v3117 = vlaneseq
  %v3118 = vshrl.u32 %v3117, 7
  %v3119 = vsub.s32 7, %v3118
  %v3120 = vrot.slane %v1097, %v3119
  %v3121 = vlaneseq
  %v3122 = vshrl.u32 %v3121, 7
  %v3123 = vsub.s32 0, %v3122
  %v3124 = vrot.slane %v1098, %v3123
  %v3125 = vlaneseq
  %v3126 = vshrl.u32 %v3125, 7
  %v3127 = vsub.s32 1, %v3126
  %v3128 = vrot.slane %v1098, %v3127
  %v3129 = vlaneseq
  %v3130 = vshrl.u32 %v3129, 7
  %v3131 = vsub.s32 2, %v3130
  %v3132 = vrot.slane %v1098, %v3131
  %v3133 = vlaneseq
  %v3134 = vshrl.u32 %v3133, 7
  %v3135 = vsub.s32 3, %v3134
  %v3136 = vrot.slane %v1098, %v3135
  %v3137 = vlaneseq
  %v3138 = vshrl.u32 %v3137, 7
  %v3139 = vsub.s32 4, %v3138
  %v3140 = vrot.slane %v1098, %v3139
  %v3141 = vlaneseq
  %v3142 = vshrl.u32 %v3141, 7
  %v3143 = vsub.s32 5, %v3142
  %v3144 = vrot.slane %v1098, %v3143
  %v3145 = vlaneseq
  %v3146 = vshrl.u32 %v3145, 7
  %v3147 = vsub.s32 6, %v3146
  %v3148 = vrot.slane %v1098, %v3147
  %v3149 = vlaneseq
  %v3150 = vshrl.u32 %v3149, 7
  %v3151 = vsub.s32 7, %v3150
  %v3152 = vrot.slane %v1098, %v3151
  %v3153 = vlaneseq
  %v3154 = vshrl.u32 %v3153, 7
  %v3155 = vsub.s32 0, %v3154
  %v3156 = vrot.slane %v1099, %v3155
  %v3157 = vlaneseq
  %v3158 = vshrl.u32 %v3157, 7
  %v3159 = vsub.s32 1, %v3158
  %v3160 = vrot.slane %v1099, %v3159
  %v3161 = vlaneseq
  %v3162 = vshrl.u32 %v3161, 7
  %v3163 = vsub.s32 2, %v3162
  %v3164 = vrot.slane %v1099, %v3163
  %v3165 = vlaneseq
  %v3166 = vshrl.u32 %v3165, 7
  %v3167 = vsub.s32 3, %v3166
  %v3168 = vrot.slane %v1099, %v3167
  %v3169 = vlaneseq
  %v3170 = vshrl.u32 %v3169, 7
  %v3171 = vsub.s32 4, %v3170
  %v3172 = vrot.slane %v1099, %v3171
  %v3173 = vlaneseq
  %v3174 = vshrl.u32 %v3173, 7
  %v3175 = vsub.s32 5, %v3174
  %v3176 = vrot.slane %v1099, %v3175
  %v3177 = vlaneseq
  %v3178 = vshrl.u32 %v3177, 7
  %v3179 = vsub.s32 6, %v3178
  %v3180 = vrot.slane %v1099, %v3179
  %v3181 = vlaneseq
  %v3182 = vshrl.u32 %v3181, 7
  %v3183 = vsub.s32 7, %v3182
  %v3184 = vrot.slane %v1099, %v3183
  %v3185 = vlaneseq
  %v3186 = vshrl.u32 %v3185, 7
  %v3187 = vsub.s32 0, %v3186
  %v3188 = vrot.slane %v1100, %v3187
  %v3189 = vlaneseq
  %v3190 = vshrl.u32 %v3189, 7
  %v3191 = vsub.s32 1, %v3190
  %v3192 = vrot.slane %v1100, %v3191
  %v3193 = vlaneseq
  %v3194 = vshrl.u32 %v3193, 7
  %v3195 = vsub.s32 2, %v3194
  %v3196 = vrot.slane %v1100, %v3195
  %v3197 = vlaneseq
  %v3198 = vshrl.u32 %v3197, 7
  %v3199 = vsub.s32 3, %v3198
  %v3200 = vrot.slane %v1100, %v3199
  %v3201 = vlaneseq
  %v3202 = vshrl.u32 %v3201, 7
  %v3203 = vsub.s32 4, %v3202
  %v3204 = vrot.slane %v1100, %v3203
  %v3205 = vlaneseq
  %v3206 = vshrl.u32 %v3205, 7
  %v3207 = vsub.s32 5, %v3206
  %v3208 = vrot.slane %v1100, %v3207
  %v3209 = vlaneseq
  %v3210 = vshrl.u32 %v3209, 7
  %v3211 = vsub.s32 6, %v3210
  %v3212 = vrot.slane %v1100, %v3211
  %v3213 = vlaneseq
  %v3214 = vshrl.u32 %v3213, 7
  %v3215 = vsub.s32 7, %v3214
  %v3216 = vrot.slane %v1100, %v3215
  %v3217 = vlaneseq
  %v3218 = vshrl.u32 %v3217, 7
  %v3219 = vsub.s32 0, %v3218
  %v3220 = vrot.slane %v1101, %v3219
  %v3221 = vlaneseq
  %v3222 = vshrl.u32 %v3221, 7
  %v3223 = vsub.s32 1, %v3222
  %v3224 = vrot.slane %v1101, %v3223
  %v3225 = vlaneseq
  %v3226 = vshrl.u32 %v3225, 7
  %v3227 = vsub.s32 2, %v3226
  %v3228 = vrot.slane %v1101, %v3227
  %v3229 = vlaneseq
  %v3230 = vshrl.u32 %v3229, 7
  %v3231 = vsub.s32 3, %v3230
  %v3232 = vrot.slane %v1101, %v3231
  %v3233 = vlaneseq
  %v3234 = vshrl.u32 %v3233, 7
  %v3235 = vsub.s32 4, %v3234
  %v3236 = vrot.slane %v1101, %v3235
  %v3237 = vlaneseq
  %v3238 = vshrl.u32 %v3237, 7
  %v3239 = vsub.s32 5, %v3238
  %v3240 = vrot.slane %v1101, %v3239
  %v3241 = vlaneseq
  %v3242 = vshrl.u32 %v3241, 7
  %v3243 = vsub.s32 6, %v3242
  %v3244 = vrot.slane %v1101, %v3243
  %v3245 = vlaneseq
  %v3246 = vshrl.u32 %v3245, 7
  %v3247 = vsub.s32 7, %v3246
  %v3248 = vrot.slane %v1101, %v3247
  %v3249 = vlaneseq
  %v3250 = vshrl.u32 %v3249, 7
  %v3251 = vsub.s32 0, %v3250
  %v3252 = vrot.slane %v1102, %v3251
  %v3253 = vlaneseq
  %v3254 = vshrl.u32 %v3253, 7
  %v3255 = vsub.s32 1, %v3254
  %v3256 = vrot.slane %v1102, %v3255
  %v3257 = vlaneseq
  %v3258 = vshrl.u32 %v3257, 7
  %v3259 = vsub.s32 2, %v3258
  %v3260 = vrot.slane %v1102, %v3259
  %v3261 = vlaneseq
  %v3262 = vshrl.u32 %v3261, 7
  %v3263 = vsub.s32 3, %v3262
  %v3264 = vrot.slane %v1102, %v3263
  %v3265 = vlaneseq
  %v3266 = vshrl.u32 %v3265, 7
  %v3267 = vsub.s32 4, %v3266
  %v3268 = vrot.slane %v1102, %v3267
  %v3269 = vlaneseq
  %v3270 = vshrl.u32 %v3269, 7
  %v3271 = vsub.s32 5, %v3270
  %v3272 = vrot.slane %v1102, %v3271
  %v3273 = vlaneseq
  %v3274 = vshrl.u32 %v3273, 7
  %v3275 = vsub.s32 6, %v3274
  %v3276 = vrot.slane %v1102, %v3275
  %v3277 = vlaneseq
  %v3278 = vshrl.u32 %v3277, 7
  %v3279 = vsub.s32 7, %v3278
  %v3280 = vrot.slane %v1102, %v3279
  %v3281 = vlaneseq
  %v3282 = vshrl.u32 %v3281, 7
  %v3283 = vsub.s32 0, %v3282
  %v3284 = vrot.slane %v1103, %v3283
  %v3285 = vlaneseq
  %v3286 = vshrl.u32 %v3285, 7
  %v3287 = vsub.s32 1, %v3286
  %v3288 = vrot.slane %v1103, %v3287
  %v3289 = vlaneseq
  %v3290 = vshrl.u32 %v3289, 7
  %v3291 = vsub.s32 2, %v3290
  %v3292 = vrot.slane %v1103, %v3291
  %v3293 = vlaneseq
  %v3294 = vshrl.u32 %v3293, 7
  %v3295 = vsub.s32 3, %v3294
  %v3296 = vrot.slane %v1103, %v3295
  %v3297 = vlaneseq
  %v3298 = vshrl.u32 %v3297, 7
  %v3299 = vsub.s32 4, %v3298
  %v3300 = vrot.slane %v1103, %v3299
  %v3301 = vlaneseq
  %v3302 = vshrl.u32 %v3301, 7
  %v3303 = vsub.s32 5, %v3302
  %v3304 = vrot.slane %v1103, %v3303
  %v3305 = vlaneseq
  %v3306 = vshrl.u32 %v3305, 7
  %v3307 = vsub.s32 6, %v3306
  %v3308 = vrot.slane %v1103, %v3307
  %v3309 = vlaneseq
  %v3310 = vshrl.u32 %v3309, 7
  %v3311 = vsub.s32 7, %v3310
  %v3312 = vrot.slane %v1103, %v3311
  %v3313 = vlaneseq
  %v3314 = vshrl.u32 %v3313, 7
  %v3315 = vsub.s32 0, %v3314
  %v3316 = vrot.slane %v1104, %v3315
  %v3317 = vlaneseq
  %v3318 = vshrl.u32 %v3317, 7
  %v3319 = vsub.s32 1, %v3318
  %v3320 = vrot.slane %v1104, %v3319
  %v3321 = vlaneseq
  %v3322 = vshrl.u32 %v3321, 7
  %v3323 = vsub.s32 2, %v3322
  %v3324 = vrot.slane %v1104, %v3323
  %v3325 = vlaneseq
  %v3326 = vshrl.u32 %v3325, 7
  %v3327 = vsub.s32 3, %v3326
  %v3328 = vrot.slane %v1104, %v3327
  %v3329 = vlaneseq
  %v3330 = vshrl.u32 %v3329, 7
  %v3331 = vsub.s32 4, %v3330
  %v3332 = vrot.slane %v1104, %v3331
  %v3333 = vlaneseq
  %v3334 = vshrl.u32 %v3333, 7
  %v3335 = vsub.s32 5, %v3334
  %v3336 = vrot.slane %v1104, %v3335
  %v3337 = vlaneseq
  %v3338 = vshrl.u32 %v3337, 7
  %v3339 = vsub.s32 6, %v3338
  %v3340 = vrot.slane %v1104, %v3339
  %v3341 = vlaneseq
  %v3342 = vshrl.u32 %v3341, 7
  %v3343 = vsub.s32 7, %v3342
  %v3344 = vrot.slane %v1104, %v3343
  %v3345 = vlaneseq
  %v3346 = vshrl.u32 %v3345, 7
  %v3347 = vsub.s32 0, %v3346
  %v3348 = vrot.slane %v1105, %v3347
  %v3349 = vlaneseq
  %v3350 = vshrl.u32 %v3349, 7
  %v3351 = vsub.s32 1, %v3350
  %v3352 = vrot.slane %v1105, %v3351
  %v3353 = vlaneseq
  %v3354 = vshrl.u32 %v3353, 7
  %v3355 = vsub.s32 2, %v3354
  %v3356 = vrot.slane %v1105, %v3355
  %v3357 = vlaneseq
  %v3358 = vshrl.u32 %v3357, 7
  %v3359 = vsub.s32 3, %v3358
  %v3360 = vrot.slane %v1105, %v3359
  %v3361 = vlaneseq
  %v3362 = vshrl.u32 %v3361, 7
  %v3363 = vsub.s32 4, %v3362
  %v3364 = vrot.slane %v1105, %v3363
  %v3365 = vlaneseq
  %v3366 = vshrl.u32 %v3365, 7
  %v3367 = vsub.s32 5, %v3366
  %v3368 = vrot.slane %v1105, %v3367
  %v3369 = vlaneseq
  %v3370 = vshrl.u32 %v3369, 7
  %v3371 = vsub.s32 6, %v3370
  %v3372 = vrot.slane %v1105, %v3371
  %v3373 = vlaneseq
  %v3374 = vshrl.u32 %v3373, 7
  %v3375 = vsub.s32 7, %v3374
  %v3376 = vrot.slane %v1105, %v3375
  %v3377 = vlaneseq
  %v3378 = vshrl.u32 %v3377, 7
  %v3379 = vsub.s32 0, %v3378
  %v3380 = vrot.slane %v1106, %v3379
  %v3381 = vlaneseq
  %v3382 = vshrl.u32 %v3381, 7
  %v3383 = vsub.s32 1, %v3382
  %v3384 = vrot.slane %v1106, %v3383
  %v3385 = vlaneseq
  %v3386 = vshrl.u32 %v3385, 7
  %v3387 = vsub.s32 2, %v3386
  %v3388 = vrot.slane %v1106, %v3387
  %v3389 = vlaneseq
  %v3390 = vshrl.u32 %v3389, 7
  %v3391 = vsub.s32 3, %v3390
  %v3392 = vrot.slane %v1106, %v3391
  %v3393 = vlaneseq
  %v3394 = vshrl.u32 %v3393, 7
  %v3395 = vsub.s32 4, %v3394
  %v3396 = vrot.slane %v1106, %v3395
  %v3397 = vlaneseq
  %v3398 = vshrl.u32 %v3397, 7
  %v3399 = vsub.s32 5, %v3398
  %v3400 = vrot.slane %v1106, %v3399
  %v3401 = vlaneseq
  %v3402 = vshrl.u32 %v3401, 7
  %v3403 = vsub.s32 6, %v3402
  %v3404 = vrot.slane %v1106, %v3403
  %v3405 = vlaneseq
  %v3406 = vshrl.u32 %v3405, 7
  %v3407 = vsub.s32 7, %v3406
  %v3408 = vrot.slane %v1106, %v3407
  %v3409 = vlaneseq
  %v3410 = vshrl.u32 %v3409, 7
  %v3411 = vsub.s32 0, %v3410
  %v3412 = vrot.slane %v1107, %v3411
  %v3413 = vlaneseq
  %v3414 = vshrl.u32 %v3413, 7
  %v3415 = vsub.s32 1, %v3414
  %v3416 = vrot.slane %v1107, %v3415
  %v3417 = vlaneseq
  %v3418 = vshrl.u32 %v3417, 7
  %v3419 = vsub.s32 2, %v3418
  %v3420 = vrot.slane %v1107, %v3419
  %v3421 = vlaneseq
  %v3422 = vshrl.u32 %v3421, 7
  %v3423 = vsub.s32 3, %v3422
  %v3424 = vrot.slane %v1107, %v3423
  %v3425 = vlaneseq
  %v3426 = vshrl.u32 %v3425, 7
  %v3427 = vsub.s32 4, %v3426
  %v3428 = vrot.slane %v1107, %v3427
  %v3429 = vlaneseq
  %v3430 = vshrl.u32 %v3429, 7
  %v3431 = vsub.s32 5, %v3430
  %v3432 = vrot.slane %v1107, %v3431
  %v3433 = vlaneseq
  %v3434 = vshrl.u32 %v3433, 7
  %v3435 = vsub.s32 6, %v3434
  %v3436 = vrot.slane %v1107, %v3435
  %v3437 = vlaneseq
  %v3438 = vshrl.u32 %v3437, 7
  %v3439 = vsub.s32 7, %v3438
  %v3440 = vrot.slane %v1107, %v3439
  %v3441 = vlaneseq
  %v3442 = vshrl.u32 %v3441, 7
  %v3443 = vsub.s32 0, %v3442
  %v3444 = vrot.slane %v1108, %v3443
  %v3445 = vlaneseq
  %v3446 = vshrl.u32 %v3445, 7
  %v3447 = vsub.s32 1, %v3446
  %v3448 = vrot.slane %v1108, %v3447
  %v3449 = vlaneseq
  %v3450 = vshrl.u32 %v3449, 7
  %v3451 = vsub.s32 2, %v3450
  %v3452 = vrot.slane %v1108, %v3451
  %v3453 = vlaneseq
  %v3454 = vshrl.u32 %v3453, 7
  %v3455 = vsub.s32 3, %v3454
  %v3456 = vrot.slane %v1108, %v3455
  %v3457 = vlaneseq
  %v3458 = vshrl.u32 %v3457, 7
  %v3459 = vsub.s32 4, %v3458
  %v3460 = vrot.slane %v1108, %v3459
  %v3461 = vlaneseq
  %v3462 = vshrl.u32 %v3461, 7
  %v3463 = vsub.s32 5, %v3462
  %v3464 = vrot.slane %v1108, %v3463
  %v3465 = vlaneseq
  %v3466 = vshrl.u32 %v3465, 7
  %v3467 = vsub.s32 6, %v3466
  %v3468 = vrot.slane %v1108, %v3467
  %v3469 = vlaneseq
  %v3470 = vshrl.u32 %v3469, 7
  %v3471 = vsub.s32 7, %v3470
  %v3472 = vrot.slane %v1108, %v3471
  %v3473 = vlaneseq
  %v3474 = vshrl.u32 %v3473, 7
  %v3475 = vsub.s32 0, %v3474
  %v3476 = vrot.slane %v1109, %v3475
  %v3477 = vlaneseq
  %v3478 = vshrl.u32 %v3477, 7
  %v3479 = vsub.s32 1, %v3478
  %v3480 = vrot.slane %v1109, %v3479
  %v3481 = vlaneseq
  %v3482 = vshrl.u32 %v3481, 7
  %v3483 = vsub.s32 2, %v3482
  %v3484 = vrot.slane %v1109, %v3483
  %v3485 = vlaneseq
  %v3486 = vshrl.u32 %v3485, 7
  %v3487 = vsub.s32 3, %v3486
  %v3488 = vrot.slane %v1109, %v3487
  %v3489 = vlaneseq
  %v3490 = vshrl.u32 %v3489, 7
  %v3491 = vsub.s32 4, %v3490
  %v3492 = vrot.slane %v1109, %v3491
  %v3493 = vlaneseq
  %v3494 = vshrl.u32 %v3493, 7
  %v3495 = vsub.s32 5, %v3494
  %v3496 = vrot.slane %v1109, %v3495
  %v3497 = vlaneseq
  %v3498 = vshrl.u32 %v3497, 7
  %v3499 = vsub.s32 6, %v3498
  %v3500 = vrot.slane %v1109, %v3499
  %v3501 = vlaneseq
  %v3502 = vshrl.u32 %v3501, 7
  %v3503 = vsub.s32 7, %v3502
  %v3504 = vrot.slane %v1109, %v3503
  %v3505 = vlaneseq
  %v3506 = vshrl.u32 %v3505, 7
  %v3507 = vsub.s32 0, %v3506
  %v3508 = vrot.slane %v1110, %v3507
  %v3509 = vlaneseq
  %v3510 = vshrl.u32 %v3509, 7
  %v3511 = vsub.s32 1, %v3510
  %v3512 = vrot.slane %v1110, %v3511
  %v3513 = vlaneseq
  %v3514 = vshrl.u32 %v3513, 7
  %v3515 = vsub.s32 2, %v3514
  %v3516 = vrot.slane %v1110, %v3515
  %v3517 = vlaneseq
  %v3518 = vshrl.u32 %v3517, 7
  %v3519 = vsub.s32 3, %v3518
  %v3520 = vrot.slane %v1110, %v3519
  %v3521 = vlaneseq
  %v3522 = vshrl.u32 %v3521, 7
  %v3523 = vsub.s32 4, %v3522
  %v3524 = vrot.slane %v1110, %v3523
  %v3525 = vlaneseq
  %v3526 = vshrl.u32 %v3525, 7
  %v3527 = vsub.s32 5, %v3526
  %v3528 = vrot.slane %v1110, %v3527
  %v3529 = vlaneseq
  %v3530 = vshrl.u32 %v3529, 7
  %v3531 = vsub.s32 6, %v3530
  %v3532 = vrot.slane %v1110, %v3531
  %v3533 = vlaneseq
  %v3534 = vshrl.u32 %v3533, 7
  %v3535 = vsub.s32 7, %v3534
  %v3536 = vrot.slane %v1110, %v3535
  %v3537 = vlaneseq
  %v3538 = vshrl.u32 %v3537, 7
  %v3539 = vsub.s32 0, %v3538
  %v3540 = vrot.slane %v1111, %v3539
  %v3541 = vlaneseq
  %v3542 = vshrl.u32 %v3541, 7
  %v3543 = vsub.s32 1, %v3542
  %v3544 = vrot.slane %v1111, %v3543
  %v3545 = vlaneseq
  %v3546 = vshrl.u32 %v3545, 7
  %v3547 = vsub.s32 2, %v3546
  %v3548 = vrot.slane %v1111, %v3547
  %v3549 = vlaneseq
  %v3550 = vshrl.u32 %v3549, 7
  %v3551 = vsub.s32 3, %v3550
  %v3552 = vrot.slane %v1111, %v3551
  %v3553 = vlaneseq
  %v3554 = vshrl.u32 %v3553, 7
  %v3555 = vsub.s32 4, %v3554
  %v3556 = vrot.slane %v1111, %v3555
  %v3557 = vlaneseq
  %v3558 = vshrl.u32 %v3557, 7
  %v3559 = vsub.s32 5, %v3558
  %v3560 = vrot.slane %v1111, %v3559
  %v3561 = vlaneseq
  %v3562 = vshrl.u32 %v3561, 7
  %v3563 = vsub.s32 6, %v3562
  %v3564 = vrot.slane %v1111, %v3563
  %v3565 = vlaneseq
  %v3566 = vshrl.u32 %v3565, 7
  %v3567 = vsub.s32 7, %v3566
  %v3568 = vrot.slane %v1111, %v3567
  %v3569 = vlaneseq
  %v3570 = vshrl.u32 %v3569, 7
  %v3571 = vsub.s32 0, %v3570
  %v3572 = vrot.slane %v1112, %v3571
  %v3573 = vlaneseq
  %v3574 = vshrl.u32 %v3573, 7
  %v3575 = vsub.s32 1, %v3574
  %v3576 = vrot.slane %v1112, %v3575
  %v3577 = vlaneseq
  %v3578 = vshrl.u32 %v3577, 7
  %v3579 = vsub.s32 2, %v3578
  %v3580 = vrot.slane %v1112, %v3579
  %v3581 = vlaneseq
  %v3582 = vshrl.u32 %v3581, 7
  %v3583 = vsub.s32 3, %v3582
  %v3584 = vrot.slane %v1112, %v3583
  %v3585 = vlaneseq
  %v3586 = vshrl.u32 %v3585, 7
  %v3587 = vsub.s32 4, %v3586
  %v3588 = vrot.slane %v1112, %v3587
  %v3589 = vlaneseq
  %v3590 = vshrl.u32 %v3589, 7
  %v3591 = vsub.s32 5, %v3590
  %v3592 = vrot.slane %v1112, %v3591
  %v3593 = vlaneseq
  %v3594 = vshrl.u32 %v3593, 7
  %v3595 = vsub.s32 6, %v3594
  %v3596 = vrot.slane %v1112, %v3595
  %v3597 = vlaneseq
  %v3598 = vshrl.u32 %v3597, 7
  %v3599 = vsub.s32 7, %v3598
  %v3600 = vrot.slane %v1112, %v3599
  %v3601 = vlaneseq
  %v3602 = vshrl.u32 %v3601, 7
  %v3603 = vsub.s32 0, %v3602
  %v3604 = vrot.slane %v1113, %v3603
  %v3605 = vlaneseq
  %v3606 = vshrl.u32 %v3605, 7
  %v3607 = vsub.s32 1, %v3606
  %v3608 = vrot.slane %v1113, %v3607
  %v3609 = vlaneseq
  %v3610 = vshrl.u32 %v3609, 7
  %v3611 = vsub.s32 2, %v3610
  %v3612 = vrot.slane %v1113, %v3611
  %v3613 = vlaneseq
  %v3614 = vshrl.u32 %v3613, 7
  %v3615 = vsub.s32 3, %v3614
  %v3616 = vrot.slane %v1113, %v3615
  %v3617 = vlaneseq
  %v3618 = vshrl.u32 %v3617, 7
  %v3619 = vsub.s32 4, %v3618
  %v3620 = vrot.slane %v1113, %v3619
  %v3621 = vlaneseq
  %v3622 = vshrl.u32 %v3621, 7
  %v3623 = vsub.s32 5, %v3622
  %v3624 = vrot.slane %v1113, %v3623
  %v3625 = vlaneseq
  %v3626 = vshrl.u32 %v3625, 7
  %v3627 = vsub.s32 6, %v3626
  %v3628 = vrot.slane %v1113, %v3627
  %v3629 = vlaneseq
  %v3630 = vshrl.u32 %v3629, 7
  %v3631 = vsub.s32 7, %v3630
  %v3632 = vrot.slane %v1113, %v3631
  %v3633 = vlaneseq
  %v3634 = vshrl.u32 %v3633, 7
  %v3635 = vsub.s32 0, %v3634
  %v3636 = vrot.slane %v1114, %v3635
  %v3637 = vlaneseq
  %v3638 = vshrl.u32 %v3637, 7
  %v3639 = vsub.s32 1, %v3638
  %v3640 = vrot.slane %v1114, %v3639
  %v3641 = vlaneseq
  %v3642 = vshrl.u32 %v3641, 7
  %v3643 = vsub.s32 2, %v3642
  %v3644 = vrot.slane %v1114, %v3643
  %v3645 = vlaneseq
  %v3646 = vshrl.u32 %v3645, 7
  %v3647 = vsub.s32 3, %v3646
  %v3648 = vrot.slane %v1114, %v3647
  %v3649 = vlaneseq
  %v3650 = vshrl.u32 %v3649, 7
  %v3651 = vsub.s32 4, %v3650
  %v3652 = vrot.slane %v1114, %v3651
  %v3653 = vlaneseq
  %v3654 = vshrl.u32 %v3653, 7
  %v3655 = vsub.s32 5, %v3654
  %v3656 = vrot.slane %v1114, %v3655
  %v3657 = vlaneseq
  %v3658 = vshrl.u32 %v3657, 7
  %v3659 = vsub.s32 6, %v3658
  %v3660 = vrot.slane %v1114, %v3659
  %v3661 = vlaneseq
  %v3662 = vshrl.u32 %v3661, 7
  %v3663 = vsub.s32 7, %v3662
  %v3664 = vrot.slane %v1114, %v3663
  %v3665 = vlaneseq
  %v3666 = vshrl.u32 %v3665, 7
  %v3667 = vsub.s32 0, %v3666
  %v3668 = vrot.slane %v1115, %v3667
  %v3669 = vlaneseq
  %v3670 = vshrl.u32 %v3669, 7
  %v3671 = vsub.s32 1, %v3670
  %v3672 = vrot.slane %v1115, %v3671
  %v3673 = vlaneseq
  %v3674 = vshrl.u32 %v3673, 7
  %v3675 = vsub.s32 2, %v3674
  %v3676 = vrot.slane %v1115, %v3675
  %v3677 = vlaneseq
  %v3678 = vshrl.u32 %v3677, 7
  %v3679 = vsub.s32 3, %v3678
  %v3680 = vrot.slane %v1115, %v3679
  %v3681 = vlaneseq
  %v3682 = vshrl.u32 %v3681, 7
  %v3683 = vsub.s32 4, %v3682
  %v3684 = vrot.slane %v1115, %v3683
  %v3685 = vlaneseq
  %v3686 = vshrl.u32 %v3685, 7
  %v3687 = vsub.s32 5, %v3686
  %v3688 = vrot.slane %v1115, %v3687
  %v3689 = vlaneseq
  %v3690 = vshrl.u32 %v3689, 7
  %v3691 = vsub.s32 6, %v3690
  %v3692 = vrot.slane %v1115, %v3691
  %v3693 = vlaneseq
  %v3694 = vshrl.u32 %v3693, 7
  %v3695 = vsub.s32 7, %v3694
  %v3696 = vrot.slane %v1115, %v3695
  %v3697 = vlaneseq
  %v3698 = vshrl.u32 %v3697, 7
  %v3699 = vsub.s32 0, %v3698
  %v3700 = vrot.slane %v1116, %v3699
  %v3701 = vlaneseq
  %v3702 = vshrl.u32 %v3701, 7
  %v3703 = vsub.s32 1, %v3702
  %v3704 = vrot.slane %v1116, %v3703
  %v3705 = vlaneseq
  %v3706 = vshrl.u32 %v3705, 7
  %v3707 = vsub.s32 2, %v3706
  %v3708 = vrot.slane %v1116, %v3707
  %v3709 = vlaneseq
  %v3710 = vshrl.u32 %v3709, 7
  %v3711 = vsub.s32 3, %v3710
  %v3712 = vrot.slane %v1116, %v3711
  %v3713 = vlaneseq
  %v3714 = vshrl.u32 %v3713, 7
  %v3715 = vsub.s32 4, %v3714
  %v3716 = vrot.slane %v1116, %v3715
  %v3717 = vlaneseq
  %v3718 = vshrl.u32 %v3717, 7
  %v3719 = vsub.s32 5, %v3718
  %v3720 = vrot.slane %v1116, %v3719
  %v3721 = vlaneseq
  %v3722 = vshrl.u32 %v3721, 7
  %v3723 = vsub.s32 6, %v3722
  %v3724 = vrot.slane %v1116, %v3723
  %v3725 = vlaneseq
  %v3726 = vshrl.u32 %v3725, 7
  %v3727 = vsub.s32 7, %v3726
  %v3728 = vrot.slane %v1116, %v3727
  %v3729 = vlaneseq
  %v3730 = vshrl.u32 %v3729, 7
  %v3731 = vsub.s32 0, %v3730
  %v3732 = vrot.slane %v1117, %v3731
  %v3733 = vlaneseq
  %v3734 = vshrl.u32 %v3733, 7
  %v3735 = vsub.s32 1, %v3734
  %v3736 = vrot.slane %v1117, %v3735
  %v3737 = vlaneseq
  %v3738 = vshrl.u32 %v3737, 7
  %v3739 = vsub.s32 2, %v3738
  %v3740 = vrot.slane %v1117, %v3739
  %v3741 = vlaneseq
  %v3742 = vshrl.u32 %v3741, 7
  %v3743 = vsub.s32 3, %v3742
  %v3744 = vrot.slane %v1117, %v3743
  %v3745 = vlaneseq
  %v3746 = vshrl.u32 %v3745, 7
  %v3747 = vsub.s32 4, %v3746
  %v3748 = vrot.slane %v1117, %v3747
  %v3749 = vlaneseq
  %v3750 = vshrl.u32 %v3749, 7
  %v3751 = vsub.s32 5, %v3750
  %v3752 = vrot.slane %v1117, %v3751
  %v3753 = vlaneseq
  %v3754 = vshrl.u32 %v3753, 7
  %v3755 = vsub.s32 6, %v3754
  %v3756 = vrot.slane %v1117, %v3755
  %v3757 = vlaneseq
  %v3758 = vshrl.u32 %v3757, 7
  %v3759 = vsub.s32 7, %v3758
  %v3760 = vrot.slane %v1117, %v3759
  %v3761 = vlaneseq
  %v3762 = vshrl.u32 %v3761, 7
  %v3763 = vsub.s32 0, %v3762
  %v3764 = vrot.slane %v1118, %v3763
  %v3765 = vlaneseq
  %v3766 = vshrl.u32 %v3765, 7
  %v3767 = vsub.s32 1, %v3766
  %v3768 = vrot.slane %v1118, %v3767
  %v3769 = vlaneseq
  %v3770 = vshrl.u32 %v3769, 7
  %v3771 = vsub.s32 2, %v3770
  %v3772 = vrot.slane %v1118, %v3771
  %v3773 = vlaneseq
  %v3774 = vshrl.u32 %v3773, 7
  %v3775 = vsub.s32 3, %v3774
  %v3776 = vrot.slane %v1118, %v3775
  %v3777 = vlaneseq
  %v3778 = vshrl.u32 %v3777, 7
  %v3779 = vsub.s32 4, %v3778
  %v3780 = vrot.slane %v1118, %v3779
  %v3781 = vlaneseq
  %v3782 = vshrl.u32 %v3781, 7
  %v3783 = vsub.s32 5, %v3782
  %v3784 = vrot.slane %v1118, %v3783
  %v3785 = vlaneseq
  %v3786 = vshrl.u32 %v3785, 7
  %v3787 = vsub.s32 6, %v3786
  %v3788 = vrot.slane %v1118, %v3787
  %v3789 = vlaneseq
  %v3790 = vshrl.u32 %v3789, 7
  %v3791 = vsub.s32 7, %v3790
  %v3792 = vrot.slane %v1118, %v3791
  %v3793 = vlaneseq
  %v3794 = vshrl.u32 %v3793, 7
  %v3795 = vsub.s32 0, %v3794
  %v3796 = vrot.slane %v1119, %v3795
  %v3797 = vlaneseq
  %v3798 = vshrl.u32 %v3797, 7
  %v3799 = vsub.s32 1, %v3798
  %v3800 = vrot.slane %v1119, %v3799
  %v3801 = vlaneseq
  %v3802 = vshrl.u32 %v3801, 7
  %v3803 = vsub.s32 2, %v3802
  %v3804 = vrot.slane %v1119, %v3803
  %v3805 = vlaneseq
  %v3806 = vshrl.u32 %v3805, 7
  %v3807 = vsub.s32 3, %v3806
  %v3808 = vrot.slane %v1119, %v3807
  %v3809 = vlaneseq
  %v3810 = vshrl.u32 %v3809, 7
  %v3811 = vsub.s32 4, %v3810
  %v3812 = vrot.slane %v1119, %v3811
  %v3813 = vlaneseq
  %v3814 = vshrl.u32 %v3813, 7
  %v3815 = vsub.s32 5, %v3814
  %v3816 = vrot.slane %v1119, %v3815
  %v3817 = vlaneseq
  %v3818 = vshrl.u32 %v3817, 7
  %v3819 = vsub.s32 6, %v3818
  %v3820 = vrot.slane %v1119, %v3819
  %v3821 = vlaneseq
  %v3822 = vshrl.u32 %v3821, 7
  %v3823 = vsub.s32 7, %v3822
  %v3824 = vrot.slane %v1119, %v3823
  %v3825 = vlaneseq
  %v3826 = vshrl.u32 %v3825, 7
  %v3827 = vsub.s32 0, %v3826
  %v3828 = vrot.slane %v1120, %v3827
  %v3829 = vlaneseq
  %v3830 = vshrl.u32 %v3829, 7
  %v3831 = vsub.s32 1, %v3830
  %v3832 = vrot.slane %v1120, %v3831
  %v3833 = vlaneseq
  %v3834 = vshrl.u32 %v3833, 7
  %v3835 = vsub.s32 2, %v3834
  %v3836 = vrot.slane %v1120, %v3835
  %v3837 = vlaneseq
  %v3838 = vshrl.u32 %v3837, 7
  %v3839 = vsub.s32 3, %v3838
  %v3840 = vrot.slane %v1120, %v3839
  %v3841 = vlaneseq
  %v3842 = vshrl.u32 %v3841, 7
  %v3843 = vsub.s32 4, %v3842
  %v3844 = vrot.slane %v1120, %v3843
  %v3845 = vlaneseq
  %v3846 = vshrl.u32 %v3845, 7
  %v3847 = vsub.s32 5, %v3846
  %v3848 = vrot.slane %v1120, %v3847
  %v3849 = vlaneseq
  %v3850 = vshrl.u32 %v3849, 7
  %v3851 = vsub.s32 6, %v3850
  %v3852 = vrot.slane %v1120, %v3851
  %v3853 = vlaneseq
  %v3854 = vshrl.u32 %v3853, 7
  %v3855 = vsub.s32 7, %v3854
  %v3856 = vrot.slane %v1120, %v3855
  %v3857 = vlaneseq
  %v3858 = vshrl.u32 %v3857, 7
  %v3859 = vsub.s32 0, %v3858
  %v3860 = vrot.slane %v1121, %v3859
  %v3861 = vlaneseq
  %v3862 = vshrl.u32 %v3861, 7
  %v3863 = vsub.s32 1, %v3862
  %v3864 = vrot.slane %v1121, %v3863
  %v3865 = vlaneseq
  %v3866 = vshrl.u32 %v3865, 7
  %v3867 = vsub.s32 2, %v3866
  %v3868 = vrot.slane %v1121, %v3867
  %v3869 = vlaneseq
  %v3870 = vshrl.u32 %v3869, 7
  %v3871 = vsub.s32 3, %v3870
  %v3872 = vrot.slane %v1121, %v3871
  %v3873 = vlaneseq
  %v3874 = vshrl.u32 %v3873, 7
  %v3875 = vsub.s32 4, %v3874
  %v3876 = vrot.slane %v1121, %v3875
  %v3877 = vlaneseq
  %v3878 = vshrl.u32 %v3877, 7
  %v3879 = vsub.s32 5, %v3878
  %v3880 = vrot.slane %v1121, %v3879
  %v3881 = vlaneseq
  %v3882 = vshrl.u32 %v3881, 7
  %v3883 = vsub.s32 6, %v3882
  %v3884 = vrot.slane %v1121, %v3883
  %v3885 = vlaneseq
  %v3886 = vshrl.u32 %v3885, 7
  %v3887 = vsub.s32 7, %v3886
  %v3888 = vrot.slane %v1121, %v3887
  %v3889 = vlaneseq
  %v3890 = vshrl.u32 %v3889, 7
  %v3891 = vsub.s32 0, %v3890
  %v3892 = vrot.slane %v1122, %v3891
  %v3893 = vlaneseq
  %v3894 = vshrl.u32 %v3893, 7
  %v3895 = vsub.s32 1, %v3894
  %v3896 = vrot.slane %v1122, %v3895
  %v3897 = vlaneseq
  %v3898 = vshrl.u32 %v3897, 7
  %v3899 = vsub.s32 2, %v3898
  %v3900 = vrot.slane %v1122, %v3899
  %v3901 = vlaneseq
  %v3902 = vshrl.u32 %v3901, 7
  %v3903 = vsub.s32 3, %v3902
  %v3904 = vrot.slane %v1122, %v3903
  %v3905 = vlaneseq
  %v3906 = vshrl.u32 %v3905, 7
  %v3907 = vsub.s32 4, %v3906
  %v3908 = vrot.slane %v1122, %v3907
  %v3909 = vlaneseq
  %v3910 = vshrl.u32 %v3909, 7
  %v3911 = vsub.s32 5, %v3910
  %v3912 = vrot.slane %v1122, %v3911
  %v3913 = vlaneseq
  %v3914 = vshrl.u32 %v3913, 7
  %v3915 = vsub.s32 6, %v3914
  %v3916 = vrot.slane %v1122, %v3915
  %v3917 = vlaneseq
  %v3918 = vshrl.u32 %v3917, 7
  %v3919 = vsub.s32 7, %v3918
  %v3920 = vrot.slane %v1122, %v3919
  %v3921 = vlaneseq
  %v3922 = vshrl.u32 %v3921, 7
  %v3923 = vsub.s32 0, %v3922
  %v3924 = vrot.slane %v1123, %v3923
  %v3925 = vlaneseq
  %v3926 = vshrl.u32 %v3925, 7
  %v3927 = vsub.s32 1, %v3926
  %v3928 = vrot.slane %v1123, %v3927
  %v3929 = vlaneseq
  %v3930 = vshrl.u32 %v3929, 7
  %v3931 = vsub.s32 2, %v3930
  %v3932 = vrot.slane %v1123, %v3931
  %v3933 = vlaneseq
  %v3934 = vshrl.u32 %v3933, 7
  %v3935 = vsub.s32 3, %v3934
  %v3936 = vrot.slane %v1123, %v3935
  %v3937 = vlaneseq
  %v3938 = vshrl.u32 %v3937, 7
  %v3939 = vsub.s32 4, %v3938
  %v3940 = vrot.slane %v1123, %v3939
  %v3941 = vlaneseq
  %v3942 = vshrl.u32 %v3941, 7
  %v3943 = vsub.s32 5, %v3942
  %v3944 = vrot.slane %v1123, %v3943
  %v3945 = vlaneseq
  %v3946 = vshrl.u32 %v3945, 7
  %v3947 = vsub.s32 6, %v3946
  %v3948 = vrot.slane %v1123, %v3947
  %v3949 = vlaneseq
  %v3950 = vshrl.u32 %v3949, 7
  %v3951 = vsub.s32 7, %v3950
  %v3952 = vrot.slane %v1123, %v3951
  %v3953 = vlaneseq
  %v3954 = vshrl.u32 %v3953, 7
  %v3955 = vsub.s32 0, %v3954
  %v3956 = vrot.slane %v1124, %v3955
  %v3957 = vlaneseq
  %v3958 = vshrl.u32 %v3957, 7
  %v3959 = vsub.s32 1, %v3958
  %v3960 = vrot.slane %v1124, %v3959
  %v3961 = vlaneseq
  %v3962 = vshrl.u32 %v3961, 7
  %v3963 = vsub.s32 2, %v3962
  %v3964 = vrot.slane %v1124, %v3963
  %v3965 = vlaneseq
  %v3966 = vshrl.u32 %v3965, 7
  %v3967 = vsub.s32 3, %v3966
  %v3968 = vrot.slane %v1124, %v3967
  %v3969 = vlaneseq
  %v3970 = vshrl.u32 %v3969, 7
  %v3971 = vsub.s32 4, %v3970
  %v3972 = vrot.slane %v1124, %v3971
  %v3973 = vlaneseq
  %v3974 = vshrl.u32 %v3973, 7
  %v3975 = vsub.s32 5, %v3974
  %v3976 = vrot.slane %v1124, %v3975
  %v3977 = vlaneseq
  %v3978 = vshrl.u32 %v3977, 7
  %v3979 = vsub.s32 6, %v3978
  %v3980 = vrot.slane %v1124, %v3979
  %v3981 = vlaneseq
  %v3982 = vshrl.u32 %v3981, 7
  %v3983 = vsub.s32 7, %v3982
  %v3984 = vrot.slane %v1124, %v3983
  %v3985 = vlaneseq
  %v3986 = vshrl.u32 %v3985, 7
  %v3987 = vsub.s32 0, %v3986
  %v3988 = vrot.slane %v1125, %v3987
  %v3989 = vlaneseq
  %v3990 = vshrl.u32 %v3989, 7
  %v3991 = vsub.s32 1, %v3990
  %v3992 = vrot.slane %v1125, %v3991
  %v3993 = vlaneseq
  %v3994 = vshrl.u32 %v3993, 7
  %v3995 = vsub.s32 2, %v3994
  %v3996 = vrot.slane %v1125, %v3995
  %v3997 = vlaneseq
  %v3998 = vshrl.u32 %v3997, 7
  %v3999 = vsub.s32 3, %v3998
  %v4000 = vrot.slane %v1125, %v3999
  %v4001 = vlaneseq
  %v4002 = vshrl.u32 %v4001, 7
  %v4003 = vsub.s32 4, %v4002
  %v4004 = vrot.slane %v1125, %v4003
  %v4005 = vlaneseq
  %v4006 = vshrl.u32 %v4005, 7
  %v4007 = vsub.s32 5, %v4006
  %v4008 = vrot.slane %v1125, %v4007
  %v4009 = vlaneseq
  %v4010 = vshrl.u32 %v4009, 7
  %v4011 = vsub.s32 6, %v4010
  %v4012 = vrot.slane %v1125, %v4011
  %v4013 = vlaneseq
  %v4014 = vshrl.u32 %v4013, 7
  %v4015 = vsub.s32 7, %v4014
  %v4016 = vrot.slane %v1125, %v4015
  %v4017 = vlaneseq
  %v4018 = vshrl.u32 %v4017, 7
  %v4019 = vsub.s32 0, %v4018
  %v4020 = vrot.slane %v1126, %v4019
  %v4021 = vlaneseq
  %v4022 = vshrl.u32 %v4021, 7
  %v4023 = vsub.s32 1, %v4022
  %v4024 = vrot.slane %v1126, %v4023
  %v4025 = vlaneseq
  %v4026 = vshrl.u32 %v4025, 7
  %v4027 = vsub.s32 2, %v4026
  %v4028 = vrot.slane %v1126, %v4027
  %v4029 = vlaneseq
  %v4030 = vshrl.u32 %v4029, 7
  %v4031 = vsub.s32 3, %v4030
  %v4032 = vrot.slane %v1126, %v4031
  %v4033 = vlaneseq
  %v4034 = vshrl.u32 %v4033, 7
  %v4035 = vsub.s32 4, %v4034
  %v4036 = vrot.slane %v1126, %v4035
  %v4037 = vlaneseq
  %v4038 = vshrl.u32 %v4037, 7
  %v4039 = vsub.s32 5, %v4038
  %v4040 = vrot.slane %v1126, %v4039
  %v4041 = vlaneseq
  %v4042 = vshrl.u32 %v4041, 7
  %v4043 = vsub.s32 6, %v4042
  %v4044 = vrot.slane %v1126, %v4043
  %v4045 = vlaneseq
  %v4046 = vshrl.u32 %v4045, 7
  %v4047 = vsub.s32 7, %v4046
  %v4048 = vrot.slane %v1126, %v4047
  %v4049 = vlaneseq
  %v4050 = vshrl.u32 %v4049, 7
  %v4051 = vsub.s32 0, %v4050
  %v4052 = vrot.slane %v1127, %v4051
  %v4053 = vlaneseq
  %v4054 = vshrl.u32 %v4053, 7
  %v4055 = vsub.s32 1, %v4054
  %v4056 = vrot.slane %v1127, %v4055
  %v4057 = vlaneseq
  %v4058 = vshrl.u32 %v4057, 7
  %v4059 = vsub.s32 2, %v4058
  %v4060 = vrot.slane %v1127, %v4059
  %v4061 = vlaneseq
  %v4062 = vshrl.u32 %v4061, 7
  %v4063 = vsub.s32 3, %v4062
  %v4064 = vrot.slane %v1127, %v4063
  %v4065 = vlaneseq
  %v4066 = vshrl.u32 %v4065, 7
  %v4067 = vsub.s32 4, %v4066
  %v4068 = vrot.slane %v1127, %v4067
  %v4069 = vlaneseq
  %v4070 = vshrl.u32 %v4069, 7
  %v4071 = vsub.s32 5, %v4070
  %v4072 = vrot.slane %v1127, %v4071
  %v4073 = vlaneseq
  %v4074 = vshrl.u32 %v4073, 7
  %v4075 = vsub.s32 6, %v4074
  %v4076 = vrot.slane %v1127, %v4075
  %v4077 = vlaneseq
  %v4078 = vshrl.u32 %v4077, 7
  %v4079 = vsub.s32 7, %v4078
  %v4080 = vrot.slane %v1127, %v4079
  %v4081 = vlaneseq
  %v4082 = vshrl.u32 %v4081, 7
  %v4083 = vsub.s32 0, %v4082
  %v4084 = vrot.slane %v1128, %v4083
  %v4085 = vlaneseq
  %v4086 = vshrl.u32 %v4085, 7
  %v4087 = vsub.s32 1, %v4086
  %v4088 = vrot.slane %v1128, %v4087
  %v4089 = vlaneseq
  %v4090 = vshrl.u32 %v4089, 7
  %v4091 = vsub.s32 2, %v4090
  %v4092 = vrot.slane %v1128, %v4091
  %v4093 = vlaneseq
  %v4094 = vshrl.u32 %v4093, 7
  %v4095 = vsub.s32 3, %v4094
  %v4096 = vrot.slane %v1128, %v4095
  %v4097 = vlaneseq
  %v4098 = vshrl.u32 %v4097, 7
  %v4099 = vsub.s32 4, %v4098
  %v4100 = vrot.slane %v1128, %v4099
  %v4101 = vlaneseq
  %v4102 = vshrl.u32 %v4101, 7
  %v4103 = vsub.s32 5, %v4102
  %v4104 = vrot.slane %v1128, %v4103
  %v4105 = vlaneseq
  %v4106 = vshrl.u32 %v4105, 7
  %v4107 = vsub.s32 6, %v4106
  %v4108 = vrot.slane %v1128, %v4107
  %v4109 = vlaneseq
  %v4110 = vshrl.u32 %v4109, 7
  %v4111 = vsub.s32 7, %v4110
  %v4112 = vrot.slane %v1128, %v4111
  %v4113 = vlaneseq
  %v4114 = vshrl.u32 %v4113, 7
  %v4115 = vsub.s32 0, %v4114
  %v4116 = vrot.slane %v1129, %v4115
  %v4117 = vlaneseq
  %v4118 = vshrl.u32 %v4117, 7
  %v4119 = vsub.s32 1, %v4118
  %v4120 = vrot.slane %v1129, %v4119
  %v4121 = vlaneseq
  %v4122 = vshrl.u32 %v4121, 7
  %v4123 = vsub.s32 2, %v4122
  %v4124 = vrot.slane %v1129, %v4123
  %v4125 = vlaneseq
  %v4126 = vshrl.u32 %v4125, 7
  %v4127 = vsub.s32 3, %v4126
  %v4128 = vrot.slane %v1129, %v4127
  %v4129 = vlaneseq
  %v4130 = vshrl.u32 %v4129, 7
  %v4131 = vsub.s32 4, %v4130
  %v4132 = vrot.slane %v1129, %v4131
  %v4133 = vlaneseq
  %v4134 = vshrl.u32 %v4133, 7
  %v4135 = vsub.s32 5, %v4134
  %v4136 = vrot.slane %v1129, %v4135
  %v4137 = vlaneseq
  %v4138 = vshrl.u32 %v4137, 7
  %v4139 = vsub.s32 6, %v4138
  %v4140 = vrot.slane %v1129, %v4139
  %v4141 = vlaneseq
  %v4142 = vshrl.u32 %v4141, 7
  %v4143 = vsub.s32 7, %v4142
  %v4144 = vrot.slane %v1129, %v4143
  %v4145 = vlaneseq
  %v4146 = vshrl.u32 %v4145, 7
  %v4147 = vsub.s32 0, %v4146
  %v4148 = vrot.slane %v1130, %v4147
  %v4149 = vlaneseq
  %v4150 = vshrl.u32 %v4149, 7
  %v4151 = vsub.s32 1, %v4150
  %v4152 = vrot.slane %v1130, %v4151
  %v4153 = vlaneseq
  %v4154 = vshrl.u32 %v4153, 7
  %v4155 = vsub.s32 2, %v4154
  %v4156 = vrot.slane %v1130, %v4155
  %v4157 = vlaneseq
  %v4158 = vshrl.u32 %v4157, 7
  %v4159 = vsub.s32 3, %v4158
  %v4160 = vrot.slane %v1130, %v4159
  %v4161 = vlaneseq
  %v4162 = vshrl.u32 %v4161, 7
  %v4163 = vsub.s32 4, %v4162
  %v4164 = vrot.slane %v1130, %v4163
  %v4165 = vlaneseq
  %v4166 = vshrl.u32 %v4165, 7
  %v4167 = vsub.s32 5, %v4166
  %v4168 = vrot.slane %v1130, %v4167
  %v4169 = vlaneseq
  %v4170 = vshrl.u32 %v4169, 7
  %v4171 = vsub.s32 6, %v4170
  %v4172 = vrot.slane %v1130, %v4171
  %v4173 = vlaneseq
  %v4174 = vshrl.u32 %v4173, 7
  %v4175 = vsub.s32 7, %v4174
  %v4176 = vrot.slane %v1130, %v4175
  %v4177 = vlaneseq
  %v4178 = vshrl.u32 %v4177, 7
  %v4179 = vsub.s32 0, %v4178
  %v4180 = vrot.slane %v1131, %v4179
  %v4181 = vlaneseq
  %v4182 = vshrl.u32 %v4181, 7
  %v4183 = vsub.s32 1, %v4182
  %v4184 = vrot.slane %v1131, %v4183
  %v4185 = vlaneseq
  %v4186 = vshrl.u32 %v4185, 7
  %v4187 = vsub.s32 2, %v4186
  %v4188 = vrot.slane %v1131, %v4187
  %v4189 = vlaneseq
  %v4190 = vshrl.u32 %v4189, 7
  %v4191 = vsub.s32 3, %v4190
  %v4192 = vrot.slane %v1131, %v4191
  %v4193 = vlaneseq
  %v4194 = vshrl.u32 %v4193, 7
  %v4195 = vsub.s32 4, %v4194
  %v4196 = vrot.slane %v1131, %v4195
  %v4197 = vlaneseq
  %v4198 = vshrl.u32 %v4197, 7
  %v4199 = vsub.s32 5, %v4198
  %v4200 = vrot.slane %v1131, %v4199
  %v4201 = vlaneseq
  %v4202 = vshrl.u32 %v4201, 7
  %v4203 = vsub.s32 6, %v4202
  %v4204 = vrot.slane %v1131, %v4203
  %v4205 = vlaneseq
  %v4206 = vshrl.u32 %v4205, 7
  %v4207 = vsub.s32 7, %v4206
  %v4208 = vrot.slane %v1131, %v4207
  %v4209 = vlaneseq
  %v4210 = vshrl.u32 %v4209, 7
  %v4211 = vsub.s32 0, %v4210
  %v4212 = vrot.slane %v1132, %v4211
  %v4213 = vlaneseq
  %v4214 = vshrl.u32 %v4213, 7
  %v4215 = vsub.s32 1, %v4214
  %v4216 = vrot.slane %v1132, %v4215
  %v4217 = vlaneseq
  %v4218 = vshrl.u32 %v4217, 7
  %v4219 = vsub.s32 2, %v4218
  %v4220 = vrot.slane %v1132, %v4219
  %v4221 = vlaneseq
  %v4222 = vshrl.u32 %v4221, 7
  %v4223 = vsub.s32 3, %v4222
  %v4224 = vrot.slane %v1132, %v4223
  %v4225 = vlaneseq
  %v4226 = vshrl.u32 %v4225, 7
  %v4227 = vsub.s32 4, %v4226
  %v4228 = vrot.slane %v1132, %v4227
  %v4229 = vlaneseq
  %v4230 = vshrl.u32 %v4229, 7
  %v4231 = vsub.s32 5, %v4230
  %v4232 = vrot.slane %v1132, %v4231
  %v4233 = vlaneseq
  %v4234 = vshrl.u32 %v4233, 7
  %v4235 = vsub.s32 6, %v4234
  %v4236 = vrot.slane %v1132, %v4235
  %v4237 = vlaneseq
  %v4238 = vshrl.u32 %v4237, 7
  %v4239 = vsub.s32 7, %v4238
  %v4240 = vrot.slane %v1132, %v4239
  %v4241 = vlaneseq
  %v4242 = vshrl.u32 %v4241, 7
  %v4243 = vsub.s32 0, %v4242
  %v4244 = vrot.slane %v1133, %v4243
  %v4245 = vlaneseq
  %v4246 = vshrl.u32 %v4245, 7
  %v4247 = vsub.s32 1, %v4246
  %v4248 = vrot.slane %v1133, %v4247
  %v4249 = vlaneseq
  %v4250 = vshrl.u32 %v4249, 7
  %v4251 = vsub.s32 2, %v4250
  %v4252 = vrot.slane %v1133, %v4251
  %v4253 = vlaneseq
  %v4254 = vshrl.u32 %v4253, 7
  %v4255 = vsub.s32 3, %v4254
  %v4256 = vrot.slane %v1133, %v4255
  %v4257 = vlaneseq
  %v4258 = vshrl.u32 %v4257, 7
  %v4259 = vsub.s32 4, %v4258
  %v4260 = vrot.slane %v1133, %v4259
  %v4261 = vlaneseq
  %v4262 = vshrl.u32 %v4261, 7
  %v4263 = vsub.s32 5, %v4262
  %v4264 = vrot.slane %v1133, %v4263
  %v4265 = vlaneseq
  %v4266 = vshrl.u32 %v4265, 7
  %v4267 = vsub.s32 6, %v4266
  %v4268 = vrot.slane %v1133, %v4267
  %v4269 = vlaneseq
  %v4270 = vshrl.u32 %v4269, 7
  %v4271 = vsub.s32 7, %v4270
  %v4272 = vrot.slane %v1133, %v4271
  %v4273 = vlaneseq
  %v4274 = vshrl.u32 %v4273, 7
  %v4275 = vsub.s32 0, %v4274
  %v4276 = vrot.slane %v1134, %v4275
  %v4277 = vlaneseq
  %v4278 = vshrl.u32 %v4277, 7
  %v4279 = vsub.s32 1, %v4278
  %v4280 = vrot.slane %v1134, %v4279
  %v4281 = vlaneseq
  %v4282 = vshrl.u32 %v4281, 7
  %v4283 = vsub.s32 2, %v4282
  %v4284 = vrot.slane %v1134, %v4283
  %v4285 = vlaneseq
  %v4286 = vshrl.u32 %v4285, 7
  %v4287 = vsub.s32 3, %v4286
  %v4288 = vrot.slane %v1134, %v4287
  %v4289 = vlaneseq
  %v4290 = vshrl.u32 %v4289, 7
  %v4291 = vsub.s32 4, %v4290
  %v4292 = vrot.slane %v1134, %v4291
  %v4293 = vlaneseq
  %v4294 = vshrl.u32 %v4293, 7
  %v4295 = vsub.s32 5, %v4294
  %v4296 = vrot.slane %v1134, %v4295
  %v4297 = vlaneseq
  %v4298 = vshrl.u32 %v4297, 7
  %v4299 = vsub.s32 6, %v4298
  %v4300 = vrot.slane %v1134, %v4299
  %v4301 = vlaneseq
  %v4302 = vshrl.u32 %v4301, 7
  %v4303 = vsub.s32 7, %v4302
  %v4304 = vrot.slane %v1134, %v4303
  %v4305 = vlaneseq
  %v4306 = vshrl.u32 %v4305, 7
  %v4307 = vsub.s32 0, %v4306
  %v4308 = vrot.slane %v1135, %v4307
  %v4309 = vlaneseq
  %v4310 = vshrl.u32 %v4309, 7
  %v4311 = vsub.s32 1, %v4310
  %v4312 = vrot.slane %v1135, %v4311
  %v4313 = vlaneseq
  %v4314 = vshrl.u32 %v4313, 7
  %v4315 = vsub.s32 2, %v4314
  %v4316 = vrot.slane %v1135, %v4315
  %v4317 = vlaneseq
  %v4318 = vshrl.u32 %v4317, 7
  %v4319 = vsub.s32 3, %v4318
  %v4320 = vrot.slane %v1135, %v4319
  %v4321 = vlaneseq
  %v4322 = vshrl.u32 %v4321, 7
  %v4323 = vsub.s32 4, %v4322
  %v4324 = vrot.slane %v1135, %v4323
  %v4325 = vlaneseq
  %v4326 = vshrl.u32 %v4325, 7
  %v4327 = vsub.s32 5, %v4326
  %v4328 = vrot.slane %v1135, %v4327
  %v4329 = vlaneseq
  %v4330 = vshrl.u32 %v4329, 7
  %v4331 = vsub.s32 6, %v4330
  %v4332 = vrot.slane %v1135, %v4331
  %v4333 = vlaneseq
  %v4334 = vshrl.u32 %v4333, 7
  %v4335 = vsub.s32 7, %v4334
  %v4336 = vrot.slane %v1135, %v4335
  %v4337 = vlaneseq
  %v4338 = vshrl.u32 %v4337, 7
  %v4339 = vsub.s32 0, %v4338
  %v4340 = vrot.slane %v1136, %v4339
  %v4341 = vlaneseq
  %v4342 = vshrl.u32 %v4341, 7
  %v4343 = vsub.s32 1, %v4342
  %v4344 = vrot.slane %v1136, %v4343
  %v4345 = vlaneseq
  %v4346 = vshrl.u32 %v4345, 7
  %v4347 = vsub.s32 2, %v4346
  %v4348 = vrot.slane %v1136, %v4347
  %v4349 = vlaneseq
  %v4350 = vshrl.u32 %v4349, 7
  %v4351 = vsub.s32 3, %v4350
  %v4352 = vrot.slane %v1136, %v4351
  %v4353 = vlaneseq
  %v4354 = vshrl.u32 %v4353, 7
  %v4355 = vsub.s32 4, %v4354
  %v4356 = vrot.slane %v1136, %v4355
  %v4357 = vlaneseq
  %v4358 = vshrl.u32 %v4357, 7
  %v4359 = vsub.s32 5, %v4358
  %v4360 = vrot.slane %v1136, %v4359
  %v4361 = vlaneseq
  %v4362 = vshrl.u32 %v4361, 7
  %v4363 = vsub.s32 6, %v4362
  %v4364 = vrot.slane %v1136, %v4363
  %v4365 = vlaneseq
  %v4366 = vshrl.u32 %v4365, 7
  %v4367 = vsub.s32 7, %v4366
  %v4368 = vrot.slane %v1136, %v4367
  %v4369 = vlaneseq
  %v4370 = vshrl.u32 %v4369, 7
  %v4371 = vsub.s32 0, %v4370
  %v4372 = vrot.slane %v1137, %v4371
  %v4373 = vlaneseq
  %v4374 = vshrl.u32 %v4373, 7
  %v4375 = vsub.s32 1, %v4374
  %v4376 = vrot.slane %v1137, %v4375
  %v4377 = vlaneseq
  %v4378 = vshrl.u32 %v4377, 7
  %v4379 = vsub.s32 2, %v4378
  %v4380 = vrot.slane %v1137, %v4379
  %v4381 = vlaneseq
  %v4382 = vshrl.u32 %v4381, 7
  %v4383 = vsub.s32 3, %v4382
  %v4384 = vrot.slane %v1137, %v4383
  %v4385 = vlaneseq
  %v4386 = vshrl.u32 %v4385, 7
  %v4387 = vsub.s32 4, %v4386
  %v4388 = vrot.slane %v1137, %v4387
  %v4389 = vlaneseq
  %v4390 = vshrl.u32 %v4389, 7
  %v4391 = vsub.s32 5, %v4390
  %v4392 = vrot.slane %v1137, %v4391
  %v4393 = vlaneseq
  %v4394 = vshrl.u32 %v4393, 7
  %v4395 = vsub.s32 6, %v4394
  %v4396 = vrot.slane %v1137, %v4395
  %v4397 = vlaneseq
  %v4398 = vshrl.u32 %v4397, 7
  %v4399 = vsub.s32 7, %v4398
  %v4400 = vrot.slane %v1137, %v4399
  %v4401 = vlaneseq
  %v4402 = vshrl.u32 %v4401, 7
  %v4403 = vsub.s32 0, %v4402
  %v4404 = vrot.slane %v1138, %v4403
  %v4405 = vlaneseq
  %v4406 = vshrl.u32 %v4405, 7
  %v4407 = vsub.s32 1, %v4406
  %v4408 = vrot.slane %v1138, %v4407
  %v4409 = vlaneseq
  %v4410 = vshrl.u32 %v4409, 7
  %v4411 = vsub.s32 2, %v4410
  %v4412 = vrot.slane %v1138, %v4411
  %v4413 = vlaneseq
  %v4414 = vshrl.u32 %v4413, 7
  %v4415 = vsub.s32 3, %v4414
  %v4416 = vrot.slane %v1138, %v4415
  %v4417 = vlaneseq
  %v4418 = vshrl.u32 %v4417, 7
  %v4419 = vsub.s32 4, %v4418
  %v4420 = vrot.slane %v1138, %v4419
  %v4421 = vlaneseq
  %v4422 = vshrl.u32 %v4421, 7
  %v4423 = vsub.s32 5, %v4422
  %v4424 = vrot.slane %v1138, %v4423
  %v4425 = vlaneseq
  %v4426 = vshrl.u32 %v4425, 7
  %v4427 = vsub.s32 6, %v4426
  %v4428 = vrot.slane %v1138, %v4427
  %v4429 = vlaneseq
  %v4430 = vshrl.u32 %v4429, 7
  %v4431 = vsub.s32 7, %v4430
  %v4432 = vrot.slane %v1138, %v4431
  %v4433 = vlaneseq
  %v4434 = vshrl.u32 %v4433, 7
  %v4435 = vsub.s32 0, %v4434
  %v4436 = vrot.slane %v1139, %v4435
  %v4437 = vlaneseq
  %v4438 = vshrl.u32 %v4437, 7
  %v4439 = vsub.s32 1, %v4438
  %v4440 = vrot.slane %v1139, %v4439
  %v4441 = vlaneseq
  %v4442 = vshrl.u32 %v4441, 7
  %v4443 = vsub.s32 2, %v4442
  %v4444 = vrot.slane %v1139, %v4443
  %v4445 = vlaneseq
  %v4446 = vshrl.u32 %v4445, 7
  %v4447 = vsub.s32 3, %v4446
  %v4448 = vrot.slane %v1139, %v4447
  %v4449 = vlaneseq
  %v4450 = vshrl.u32 %v4449, 7
  %v4451 = vsub.s32 4, %v4450
  %v4452 = vrot.slane %v1139, %v4451
  %v4453 = vlaneseq
  %v4454 = vshrl.u32 %v4453, 7
  %v4455 = vsub.s32 5, %v4454
  %v4456 = vrot.slane %v1139, %v4455
  %v4457 = vlaneseq
  %v4458 = vshrl.u32 %v4457, 7
  %v4459 = vsub.s32 6, %v4458
  %v4460 = vrot.slane %v1139, %v4459
  %v4461 = vlaneseq
  %v4462 = vshrl.u32 %v4461, 7
  %v4463 = vsub.s32 7, %v4462
  %v4464 = vrot.slane %v1139, %v4463
  %v4465 = vlaneseq
  %v4466 = vshrl.u32 %v4465, 7
  %v4467 = vsub.s32 0, %v4466
  %v4468 = vrot.slane %v1140, %v4467
  %v4469 = vlaneseq
  %v4470 = vshrl.u32 %v4469, 7
  %v4471 = vsub.s32 1, %v4470
  %v4472 = vrot.slane %v1140, %v4471
  %v4473 = vlaneseq
  %v4474 = vshrl.u32 %v4473, 7
  %v4475 = vsub.s32 2, %v4474
  %v4476 = vrot.slane %v1140, %v4475
  %v4477 = vlaneseq
  %v4478 = vshrl.u32 %v4477, 7
  %v4479 = vsub.s32 3, %v4478
  %v4480 = vrot.slane %v1140, %v4479
  %v4481 = vlaneseq
  %v4482 = vshrl.u32 %v4481, 7
  %v4483 = vsub.s32 4, %v4482
  %v4484 = vrot.slane %v1140, %v4483
  %v4485 = vlaneseq
  %v4486 = vshrl.u32 %v4485, 7
  %v4487 = vsub.s32 5, %v4486
  %v4488 = vrot.slane %v1140, %v4487
  %v4489 = vlaneseq
  %v4490 = vshrl.u32 %v4489, 7
  %v4491 = vsub.s32 6, %v4490
  %v4492 = vrot.slane %v1140, %v4491
  %v4493 = vlaneseq
  %v4494 = vshrl.u32 %v4493, 7
  %v4495 = vsub.s32 7, %v4494
  %v4496 = vrot.slane %v1140, %v4495
  %v4497 = vlaneseq
  %v4498 = vshrl.u32 %v4497, 7
  %v4499 = vsub.s32 0, %v4498
  %v4500 = vrot.slane %v1141, %v4499
  %v4501 = vlaneseq
  %v4502 = vshrl.u32 %v4501, 7
  %v4503 = vsub.s32 1, %v4502
  %v4504 = vrot.slane %v1141, %v4503
  %v4505 = vlaneseq
  %v4506 = vshrl.u32 %v4505, 7
  %v4507 = vsub.s32 2, %v4506
  %v4508 = vrot.slane %v1141, %v4507
  %v4509 = vlaneseq
  %v4510 = vshrl.u32 %v4509, 7
  %v4511 = vsub.s32 3, %v4510
  %v4512 = vrot.slane %v1141, %v4511
  %v4513 = vlaneseq
  %v4514 = vshrl.u32 %v4513, 7
  %v4515 = vsub.s32 4, %v4514
  %v4516 = vrot.slane %v1141, %v4515
  %v4517 = vlaneseq
  %v4518 = vshrl.u32 %v4517, 7
  %v4519 = vsub.s32 5, %v4518
  %v4520 = vrot.slane %v1141, %v4519
  %v4521 = vlaneseq
  %v4522 = vshrl.u32 %v4521, 7
  %v4523 = vsub.s32 6, %v4522
  %v4524 = vrot.slane %v1141, %v4523
  %v4525 = vlaneseq
  %v4526 = vshrl.u32 %v4525, 7
  %v4527 = vsub.s32 7, %v4526
  %v4528 = vrot.slane %v1141, %v4527
  %v4529 = vlaneseq
  %v4530 = vshrl.u32 %v4529, 7
  %v4531 = vsub.s32 0, %v4530
  %v4532 = vrot.slane %v1142, %v4531
  %v4533 = vlaneseq
  %v4534 = vshrl.u32 %v4533, 7
  %v4535 = vsub.s32 1, %v4534
  %v4536 = vrot.slane %v1142, %v4535
  %v4537 = vlaneseq
  %v4538 = vshrl.u32 %v4537, 7
  %v4539 = vsub.s32 2, %v4538
  %v4540 = vrot.slane %v1142, %v4539
  %v4541 = vlaneseq
  %v4542 = vshrl.u32 %v4541, 7
  %v4543 = vsub.s32 3, %v4542
  %v4544 = vrot.slane %v1142, %v4543
  %v4545 = vlaneseq
  %v4546 = vshrl.u32 %v4545, 7
  %v4547 = vsub.s32 4, %v4546
  %v4548 = vrot.slane %v1142, %v4547
  %v4549 = vlaneseq
  %v4550 = vshrl.u32 %v4549, 7
  %v4551 = vsub.s32 5, %v4550
  %v4552 = vrot.slane %v1142, %v4551
  %v4553 = vlaneseq
  %v4554 = vshrl.u32 %v4553, 7
  %v4555 = vsub.s32 6, %v4554
  %v4556 = vrot.slane %v1142, %v4555
  %v4557 = vlaneseq
  %v4558 = vshrl.u32 %v4557, 7
  %v4559 = vsub.s32 7, %v4558
  %v4560 = vrot.slane %v1142, %v4559
  %v4561 = vlaneseq
  %v4562 = vshrl.u32 %v4561, 7
  %v4563 = vsub.s32 0, %v4562
  %v4564 = vrot.slane %v1143, %v4563
  %v4565 = vlaneseq
  %v4566 = vshrl.u32 %v4565, 7
  %v4567 = vsub.s32 1, %v4566
  %v4568 = vrot.slane %v1143, %v4567
  %v4569 = vlaneseq
  %v4570 = vshrl.u32 %v4569, 7
  %v4571 = vsub.s32 2, %v4570
  %v4572 = vrot.slane %v1143, %v4571
  %v4573 = vlaneseq
  %v4574 = vshrl.u32 %v4573, 7
  %v4575 = vsub.s32 3, %v4574
  %v4576 = vrot.slane %v1143, %v4575
  %v4577 = vlaneseq
  %v4578 = vshrl.u32 %v4577, 7
  %v4579 = vsub.s32 4, %v4578
  %v4580 = vrot.slane %v1143, %v4579
  %v4581 = vlaneseq
  %v4582 = vshrl.u32 %v4581, 7
  %v4583 = vsub.s32 5, %v4582
  %v4584 = vrot.slane %v1143, %v4583
  %v4585 = vlaneseq
  %v4586 = vshrl.u32 %v4585, 7
  %v4587 = vsub.s32 6, %v4586
  %v4588 = vrot.slane %v1143, %v4587
  %v4589 = vlaneseq
  %v4590 = vshrl.u32 %v4589, 7
  %v4591 = vsub.s32 7, %v4590
  %v4592 = vrot.slane %v1143, %v4591
  %v4593 = vlaneseq
  %v4594 = vshrl.u32 %v4593, 7
  %v4595 = vsub.s32 0, %v4594
  %v4596 = vrot.slane %v1144, %v4595
  %v4597 = vlaneseq
  %v4598 = vshrl.u32 %v4597, 7
  %v4599 = vsub.s32 1, %v4598
  %v4600 = vrot.slane %v1144, %v4599
  %v4601 = vlaneseq
  %v4602 = vshrl.u32 %v4601, 7
  %v4603 = vsub.s32 2, %v4602
  %v4604 = vrot.slane %v1144, %v4603
  %v4605 = vlaneseq
  %v4606 = vshrl.u32 %v4605, 7
  %v4607 = vsub.s32 3, %v4606
  %v4608 = vrot.slane %v1144, %v4607
  %v4609 = vlaneseq
  %v4610 = vshrl.u32 %v4609, 7
  %v4611 = vsub.s32 4, %v4610
  %v4612 = vrot.slane %v1144, %v4611
  %v4613 = vlaneseq
  %v4614 = vshrl.u32 %v4613, 7
  %v4615 = vsub.s32 5, %v4614
  %v4616 = vrot.slane %v1144, %v4615
  %v4617 = vlaneseq
  %v4618 = vshrl.u32 %v4617, 7
  %v4619 = vsub.s32 6, %v4618
  %v4620 = vrot.slane %v1144, %v4619
  %v4621 = vlaneseq
  %v4622 = vshrl.u32 %v4621, 7
  %v4623 = vsub.s32 7, %v4622
  %v4624 = vrot.slane %v1144, %v4623
  %v4625 = vlaneseq
  %v4626 = vshrl.u32 %v4625, 7
  %v4627 = vsub.s32 0, %v4626
  %v4628 = vrot.slane %v1145, %v4627
  %v4629 = vlaneseq
  %v4630 = vshrl.u32 %v4629, 7
  %v4631 = vsub.s32 1, %v4630
  %v4632 = vrot.slane %v1145, %v4631
  %v4633 = vlaneseq
  %v4634 = vshrl.u32 %v4633, 7
  %v4635 = vsub.s32 2, %v4634
  %v4636 = vrot.slane %v1145, %v4635
  %v4637 = vlaneseq
  %v4638 = vshrl.u32 %v4637, 7
  %v4639 = vsub.s32 3, %v4638
  %v4640 = vrot.slane %v1145, %v4639
  %v4641 = vlaneseq
  %v4642 = vshrl.u32 %v4641, 7
  %v4643 = vsub.s32 4, %v4642
  %v4644 = vrot.slane %v1145, %v4643
  %v4645 = vlaneseq
  %v4646 = vshrl.u32 %v4645, 7
  %v4647 = vsub.s32 5, %v4646
  %v4648 = vrot.slane %v1145, %v4647
  %v4649 = vlaneseq
  %v4650 = vshrl.u32 %v4649, 7
  %v4651 = vsub.s32 6, %v4650
  %v4652 = vrot.slane %v1145, %v4651
  %v4653 = vlaneseq
  %v4654 = vshrl.u32 %v4653, 7
  %v4655 = vsub.s32 7, %v4654
  %v4656 = vrot.slane %v1145, %v4655
  %v4657 = vlaneseq
  %v4658 = vshrl.u32 %v4657, 7
  %v4659 = vsub.s32 0, %v4658
  %v4660 = vrot.slane %v1146, %v4659
  %v4661 = vlaneseq
  %v4662 = vshrl.u32 %v4661, 7
  %v4663 = vsub.s32 1, %v4662
  %v4664 = vrot.slane %v1146, %v4663
  %v4665 = vlaneseq
  %v4666 = vshrl.u32 %v4665, 7
  %v4667 = vsub.s32 2, %v4666
  %v4668 = vrot.slane %v1146, %v4667
  %v4669 = vlaneseq
  %v4670 = vshrl.u32 %v4669, 7
  %v4671 = vsub.s32 3, %v4670
  %v4672 = vrot.slane %v1146, %v4671
  %v4673 = vlaneseq
  %v4674 = vshrl.u32 %v4673, 7
  %v4675 = vsub.s32 4, %v4674
  %v4676 = vrot.slane %v1146, %v4675
  %v4677 = vlaneseq
  %v4678 = vshrl.u32 %v4677, 7
  %v4679 = vsub.s32 5, %v4678
  %v4680 = vrot.slane %v1146, %v4679
  %v4681 = vlaneseq
  %v4682 = vshrl.u32 %v4681, 7
  %v4683 = vsub.s32 6, %v4682
  %v4684 = vrot.slane %v1146, %v4683
  %v4685 = vlaneseq
  %v4686 = vshrl.u32 %v4685, 7
  %v4687 = vsub.s32 7, %v4686
  %v4688 = vrot.slane %v1146, %v4687
  %v4689 = vlaneseq
  %v4690 = vshrl.u32 %v4689, 7
  %v4691 = vsub.s32 0, %v4690
  %v4692 = vrot.slane %v1147, %v4691
  %v4693 = vlaneseq
  %v4694 = vshrl.u32 %v4693, 7
  %v4695 = vsub.s32 1, %v4694
  %v4696 = vrot.slane %v1147, %v4695
  %v4697 = vlaneseq
  %v4698 = vshrl.u32 %v4697, 7
  %v4699 = vsub.s32 2, %v4698
  %v4700 = vrot.slane %v1147, %v4699
  %v4701 = vlaneseq
  %v4702 = vshrl.u32 %v4701, 7
  %v4703 = vsub.s32 3, %v4702
  %v4704 = vrot.slane %v1147, %v4703
  %v4705 = vlaneseq
  %v4706 = vshrl.u32 %v4705, 7
  %v4707 = vsub.s32 4, %v4706
  %v4708 = vrot.slane %v1147, %v4707
  %v4709 = vlaneseq
  %v4710 = vshrl.u32 %v4709, 7
  %v4711 = vsub.s32 5, %v4710
  %v4712 = vrot.slane %v1147, %v4711
  %v4713 = vlaneseq
  %v4714 = vshrl.u32 %v4713, 7
  %v4715 = vsub.s32 6, %v4714
  %v4716 = vrot.slane %v1147, %v4715
  %v4717 = vlaneseq
  %v4718 = vshrl.u32 %v4717, 7
  %v4719 = vsub.s32 7, %v4718
  %v4720 = vrot.slane %v1147, %v4719
  %v4721 = vlaneseq
  %v4722 = vshrl.u32 %v4721, 7
  %v4723 = vsub.s32 0, %v4722
  %v4724 = vrot.slane %v1148, %v4723
  %v4725 = vlaneseq
  %v4726 = vshrl.u32 %v4725, 7
  %v4727 = vsub.s32 1, %v4726
  %v4728 = vrot.slane %v1148, %v4727
  %v4729 = vlaneseq
  %v4730 = vshrl.u32 %v4729, 7
  %v4731 = vsub.s32 2, %v4730
  %v4732 = vrot.slane %v1148, %v4731
  %v4733 = vlaneseq
  %v4734 = vshrl.u32 %v4733, 7
  %v4735 = vsub.s32 3, %v4734
  %v4736 = vrot.slane %v1148, %v4735
  %v4737 = vlaneseq
  %v4738 = vshrl.u32 %v4737, 7
  %v4739 = vsub.s32 4, %v4738
  %v4740 = vrot.slane %v1148, %v4739
  %v4741 = vlaneseq
  %v4742 = vshrl.u32 %v4741, 7
  %v4743 = vsub.s32 5, %v4742
  %v4744 = vrot.slane %v1148, %v4743
  %v4745 = vlaneseq
  %v4746 = vshrl.u32 %v4745, 7
  %v4747 = vsub.s32 6, %v4746
  %v4748 = vrot.slane %v1148, %v4747
  %v4749 = vlaneseq
  %v4750 = vshrl.u32 %v4749, 7
  %v4751 = vsub.s32 7, %v4750
  %v4752 = vrot.slane %v1148, %v4751
  %v4753 = vlaneseq
  %v4754 = vshrl.u32 %v4753, 7
  %v4755 = vsub.s32 0, %v4754
  %v4756 = vrot.slane %v1149, %v4755
  %v4757 = vlaneseq
  %v4758 = vshrl.u32 %v4757, 7
  %v4759 = vsub.s32 1, %v4758
  %v4760 = vrot.slane %v1149, %v4759
  %v4761 = vlaneseq
  %v4762 = vshrl.u32 %v4761, 7
  %v4763 = vsub.s32 2, %v4762
  %v4764 = vrot.slane %v1149, %v4763
  %v4765 = vlaneseq
  %v4766 = vshrl.u32 %v4765, 7
  %v4767 = vsub.s32 3, %v4766
  %v4768 = vrot.slane %v1149, %v4767
  %v4769 = vlaneseq
  %v4770 = vshrl.u32 %v4769, 7
  %v4771 = vsub.s32 4, %v4770
  %v4772 = vrot.slane %v1149, %v4771
  %v4773 = vlaneseq
  %v4774 = vshrl.u32 %v4773, 7
  %v4775 = vsub.s32 5, %v4774
  %v4776 = vrot.slane %v1149, %v4775
  %v4777 = vlaneseq
  %v4778 = vshrl.u32 %v4777, 7
  %v4779 = vsub.s32 6, %v4778
  %v4780 = vrot.slane %v1149, %v4779
  %v4781 = vlaneseq
  %v4782 = vshrl.u32 %v4781, 7
  %v4783 = vsub.s32 7, %v4782
  %v4784 = vrot.slane %v1149, %v4783
  %v4785 = vlaneseq
  %v4786 = vshrl.u32 %v4785, 7
  %v4787 = vsub.s32 0, %v4786
  %v4788 = vrot.slane %v1150, %v4787
  %v4789 = vlaneseq
  %v4790 = vshrl.u32 %v4789, 7
  %v4791 = vsub.s32 1, %v4790
  %v4792 = vrot.slane %v1150, %v4791
  %v4793 = vlaneseq
  %v4794 = vshrl.u32 %v4793, 7
  %v4795 = vsub.s32 2, %v4794
  %v4796 = vrot.slane %v1150, %v4795
  %v4797 = vlaneseq
  %v4798 = vshrl.u32 %v4797, 7
  %v4799 = vsub.s32 3, %v4798
  %v4800 = vrot.slane %v1150, %v4799
  %v4801 = vlaneseq
  %v4802 = vshrl.u32 %v4801, 7
  %v4803 = vsub.s32 4, %v4802
  %v4804 = vrot.slane %v1150, %v4803
  %v4805 = vlaneseq
  %v4806 = vshrl.u32 %v4805, 7
  %v4807 = vsub.s32 5, %v4806
  %v4808 = vrot.slane %v1150, %v4807
  %v4809 = vlaneseq
  %v4810 = vshrl.u32 %v4809, 7
  %v4811 = vsub.s32 6, %v4810
  %v4812 = vrot.slane %v1150, %v4811
  %v4813 = vlaneseq
  %v4814 = vshrl.u32 %v4813, 7
  %v4815 = vsub.s32 7, %v4814
  %v4816 = vrot.slane %v1150, %v4815
  %v4817 = vlaneseq
  %v4818 = vshrl.u32 %v4817, 7
  %v4819 = vsub.s32 0, %v4818
  %v4820 = vrot.slane %v1151, %v4819
  %v4821 = vlaneseq
  %v4822 = vshrl.u32 %v4821, 7
  %v4823 = vsub.s32 1, %v4822
  %v4824 = vrot.slane %v1151, %v4823
  %v4825 = vlaneseq
  %v4826 = vshrl.u32 %v4825, 7
  %v4827 = vsub.s32 2, %v4826
  %v4828 = vrot.slane %v1151, %v4827
  %v4829 = vlaneseq
  %v4830 = vshrl.u32 %v4829, 7
  %v4831 = vsub.s32 3, %v4830
  %v4832 = vrot.slane %v1151, %v4831
  %v4833 = vlaneseq
  %v4834 = vshrl.u32 %v4833, 7
  %v4835 = vsub.s32 4, %v4834
  %v4836 = vrot.slane %v1151, %v4835
  %v4837 = vlaneseq
  %v4838 = vshrl.u32 %v4837, 7
  %v4839 = vsub.s32 5, %v4838
  %v4840 = vrot.slane %v1151, %v4839
  %v4841 = vlaneseq
  %v4842 = vshrl.u32 %v4841, 7
  %v4843 = vsub.s32 6, %v4842
  %v4844 = vrot.slane %v1151, %v4843
  %v4845 = vlaneseq
  %v4846 = vshrl.u32 %v4845, 7
  %v4847 = vsub.s32 7, %v4846
  %v4848 = vrot.slane %v1151, %v4847
  %v4849 = vlaneseq
  %v4850 = vshrl.u32 %v4849, 7
  %v4851 = vsub.s32 0, %v4850
  %v4852 = vrot.slane %v1152, %v4851
  %v4853 = vlaneseq
  %v4854 = vshrl.u32 %v4853, 7
  %v4855 = vsub.s32 1, %v4854
  %v4856 = vrot.slane %v1152, %v4855
  %v4857 = vlaneseq
  %v4858 = vshrl.u32 %v4857, 7
  %v4859 = vsub.s32 2, %v4858
  %v4860 = vrot.slane %v1152, %v4859
  %v4861 = vlaneseq
  %v4862 = vshrl.u32 %v4861, 7
  %v4863 = vsub.s32 3, %v4862
  %v4864 = vrot.slane %v1152, %v4863
  %v4865 = vlaneseq
  %v4866 = vshrl.u32 %v4865, 7
  %v4867 = vsub.s32 4, %v4866
  %v4868 = vrot.slane %v1152, %v4867
  %v4869 = vlaneseq
  %v4870 = vshrl.u32 %v4869, 7
  %v4871 = vsub.s32 5, %v4870
  %v4872 = vrot.slane %v1152, %v4871
  %v4873 = vlaneseq
  %v4874 = vshrl.u32 %v4873, 7
  %v4875 = vsub.s32 6, %v4874
  %v4876 = vrot.slane %v1152, %v4875
  %v4877 = vlaneseq
  %v4878 = vshrl.u32 %v4877, 7
  %v4879 = vsub.s32 7, %v4878
  %v4880 = vrot.slane %v1152, %v4879
  %v4881 = vlaneseq
  %v4882 = vshrl.u32 %v4881, 7
  %v4883 = vsub.s32 0, %v4882
  %v4884 = vrot.slane %v1153, %v4883
  %v4885 = vlaneseq
  %v4886 = vshrl.u32 %v4885, 7
  %v4887 = vsub.s32 1, %v4886
  %v4888 = vrot.slane %v1153, %v4887
  %v4889 = vlaneseq
  %v4890 = vshrl.u32 %v4889, 7
  %v4891 = vsub.s32 2, %v4890
  %v4892 = vrot.slane %v1153, %v4891
  %v4893 = vlaneseq
  %v4894 = vshrl.u32 %v4893, 7
  %v4895 = vsub.s32 3, %v4894
  %v4896 = vrot.slane %v1153, %v4895
  %v4897 = vlaneseq
  %v4898 = vshrl.u32 %v4897, 7
  %v4899 = vsub.s32 4, %v4898
  %v4900 = vrot.slane %v1153, %v4899
  %v4901 = vlaneseq
  %v4902 = vshrl.u32 %v4901, 7
  %v4903 = vsub.s32 5, %v4902
  %v4904 = vrot.slane %v1153, %v4903
  %v4905 = vlaneseq
  %v4906 = vshrl.u32 %v4905, 7
  %v4907 = vsub.s32 6, %v4906
  %v4908 = vrot.slane %v1153, %v4907
  %v4909 = vlaneseq
  %v4910 = vshrl.u32 %v4909, 7
  %v4911 = vsub.s32 7, %v4910
  %v4912 = vrot.slane %v1153, %v4911
  %v4913 = vlaneseq
  %v4914 = vshrl.u32 %v4913, 7
  %v4915 = vsub.s32 0, %v4914
  %v4916 = vrot.slane %v1154, %v4915
  %v4917 = vlaneseq
  %v4918 = vshrl.u32 %v4917, 7
  %v4919 = vsub.s32 1, %v4918
  %v4920 = vrot.slane %v1154, %v4919
  %v4921 = vlaneseq
  %v4922 = vshrl.u32 %v4921, 7
  %v4923 = vsub.s32 2, %v4922
  %v4924 = vrot.slane %v1154, %v4923
  %v4925 = vlaneseq
  %v4926 = vshrl.u32 %v4925, 7
  %v4927 = vsub.s32 3, %v4926
  %v4928 = vrot.slane %v1154, %v4927
  %v4929 = vlaneseq
  %v4930 = vshrl.u32 %v4929, 7
  %v4931 = vsub.s32 4, %v4930
  %v4932 = vrot.slane %v1154, %v4931
  %v4933 = vlaneseq
  %v4934 = vshrl.u32 %v4933, 7
  %v4935 = vsub.s32 5, %v4934
  %v4936 = vrot.slane %v1154, %v4935
  %v4937 = vlaneseq
  %v4938 = vshrl.u32 %v4937, 7
  %v4939 = vsub.s32 6, %v4938
  %v4940 = vrot.slane %v1154, %v4939
  %v4941 = vlaneseq
  %v4942 = vshrl.u32 %v4941, 7
  %v4943 = vsub.s32 7, %v4942
  %v4944 = vrot.slane %v1154, %v4943
  %v4945 = vlaneseq
  %v4946 = vshrl.u32 %v4945, 7
  %v4947 = vsub.s32 0, %v4946
  %v4948 = vrot.slane %v1155, %v4947
  %v4949 = vlaneseq
  %v4950 = vshrl.u32 %v4949, 7
  %v4951 = vsub.s32 1, %v4950
  %v4952 = vrot.slane %v1155, %v4951
  %v4953 = vlaneseq
  %v4954 = vshrl.u32 %v4953, 7
  %v4955 = vsub.s32 2, %v4954
  %v4956 = vrot.slane %v1155, %v4955
  %v4957 = vlaneseq
  %v4958 = vshrl.u32 %v4957, 7
  %v4959 = vsub.s32 3, %v4958
  %v4960 = vrot.slane %v1155, %v4959
  %v4961 = vlaneseq
  %v4962 = vshrl.u32 %v4961, 7
  %v4963 = vsub.s32 4, %v4962
  %v4964 = vrot.slane %v1155, %v4963
  %v4965 = vlaneseq
  %v4966 = vshrl.u32 %v4965, 7
  %v4967 = vsub.s32 5, %v4966
  %v4968 = vrot.slane %v1155, %v4967
  %v4969 = vlaneseq
  %v4970 = vshrl.u32 %v4969, 7
  %v4971 = vsub.s32 6, %v4970
  %v4972 = vrot.slane %v1155, %v4971
  %v4973 = vlaneseq
  %v4974 = vshrl.u32 %v4973, 7
  %v4975 = vsub.s32 7, %v4974
  %v4976 = vrot.slane %v1155, %v4975
  %v4977 = vlaneseq
  %v4978 = vshrl.u32 %v4977, 7
  %v4979 = vsub.s32 0, %v4978
  %v4980 = vrot.slane %v1156, %v4979
  %v4981 = vlaneseq
  %v4982 = vshrl.u32 %v4981, 7
  %v4983 = vsub.s32 1, %v4982
  %v4984 = vrot.slane %v1156, %v4983
  %v4985 = vlaneseq
  %v4986 = vshrl.u32 %v4985, 7
  %v4987 = vsub.s32 2, %v4986
  %v4988 = vrot.slane %v1156, %v4987
  %v4989 = vlaneseq
  %v4990 = vshrl.u32 %v4989, 7
  %v4991 = vsub.s32 3, %v4990
  %v4992 = vrot.slane %v1156, %v4991
  %v4993 = vlaneseq
  %v4994 = vshrl.u32 %v4993, 7
  %v4995 = vsub.s32 4, %v4994
  %v4996 = vrot.slane %v1156, %v4995
  %v4997 = vlaneseq
  %v4998 = vshrl.u32 %v4997, 7
  %v4999 = vsub.s32 5, %v4998
  %v5000 = vrot.slane %v1156, %v4999
  %v5001 = vlaneseq
  %v5002 = vshrl.u32 %v5001, 7
  %v5003 = vsub.s32 6, %v5002
  %v5004 = vrot.slane %v1156, %v5003
  %v5005 = vlaneseq
  %v5006 = vshrl.u32 %v5005, 7
  %v5007 = vsub.s32 7, %v5006
  %v5008 = vrot.slane %v1156, %v5007
  %v5009 = vlaneseq
  %v5010 = vshrl.u32 %v5009, 7
  %v5011 = vsub.s32 0, %v5010
  %v5012 = vrot.slane %v1157, %v5011
  %v5013 = vlaneseq
  %v5014 = vshrl.u32 %v5013, 7
  %v5015 = vsub.s32 1, %v5014
  %v5016 = vrot.slane %v1157, %v5015
  %v5017 = vlaneseq
  %v5018 = vshrl.u32 %v5017, 7
  %v5019 = vsub.s32 2, %v5018
  %v5020 = vrot.slane %v1157, %v5019
  %v5021 = vlaneseq
  %v5022 = vshrl.u32 %v5021, 7
  %v5023 = vsub.s32 3, %v5022
  %v5024 = vrot.slane %v1157, %v5023
  %v5025 = vlaneseq
  %v5026 = vshrl.u32 %v5025, 7
  %v5027 = vsub.s32 4, %v5026
  %v5028 = vrot.slane %v1157, %v5027
  %v5029 = vlaneseq
  %v5030 = vshrl.u32 %v5029, 7
  %v5031 = vsub.s32 5, %v5030
  %v5032 = vrot.slane %v1157, %v5031
  %v5033 = vlaneseq
  %v5034 = vshrl.u32 %v5033, 7
  %v5035 = vsub.s32 6, %v5034
  %v5036 = vrot.slane %v1157, %v5035
  %v5037 = vlaneseq
  %v5038 = vshrl.u32 %v5037, 7
  %v5039 = vsub.s32 7, %v5038
  %v5040 = vrot.slane %v1157, %v5039
  %v5041 = vlaneseq
  %v5042 = vshrl.u32 %v5041, 7
  %v5043 = vsub.s32 0, %v5042
  %v5044 = vrot.slane %v1158, %v5043
  %v5045 = vlaneseq
  %v5046 = vshrl.u32 %v5045, 7
  %v5047 = vsub.s32 1, %v5046
  %v5048 = vrot.slane %v1158, %v5047
  %v5049 = vlaneseq
  %v5050 = vshrl.u32 %v5049, 7
  %v5051 = vsub.s32 2, %v5050
  %v5052 = vrot.slane %v1158, %v5051
  %v5053 = vlaneseq
  %v5054 = vshrl.u32 %v5053, 7
  %v5055 = vsub.s32 3, %v5054
  %v5056 = vrot.slane %v1158, %v5055
  %v5057 = vlaneseq
  %v5058 = vshrl.u32 %v5057, 7
  %v5059 = vsub.s32 4, %v5058
  %v5060 = vrot.slane %v1158, %v5059
  %v5061 = vlaneseq
  %v5062 = vshrl.u32 %v5061, 7
  %v5063 = vsub.s32 5, %v5062
  %v5064 = vrot.slane %v1158, %v5063
  %v5065 = vlaneseq
  %v5066 = vshrl.u32 %v5065, 7
  %v5067 = vsub.s32 6, %v5066
  %v5068 = vrot.slane %v1158, %v5067
  %v5069 = vlaneseq
  %v5070 = vshrl.u32 %v5069, 7
  %v5071 = vsub.s32 7, %v5070
  %v5072 = vrot.slane %v1158, %v5071
  %v5073 = vlaneseq
  %v5074 = vshrl.u32 %v5073, 7
  %v5075 = vsub.s32 0, %v5074
  %v5076 = vrot.slane %v1159, %v5075
  %v5077 = vlaneseq
  %v5078 = vshrl.u32 %v5077, 7
  %v5079 = vsub.s32 1, %v5078
  %v5080 = vrot.slane %v1159, %v5079
  %v5081 = vlaneseq
  %v5082 = vshrl.u32 %v5081, 7
  %v5083 = vsub.s32 2, %v5082
  %v5084 = vrot.slane %v1159, %v5083
  %v5085 = vlaneseq
  %v5086 = vshrl.u32 %v5085, 7
  %v5087 = vsub.s32 3, %v5086
  %v5088 = vrot.slane %v1159, %v5087
  %v5089 = vlaneseq
  %v5090 = vshrl.u32 %v5089, 7
  %v5091 = vsub.s32 4, %v5090
  %v5092 = vrot.slane %v1159, %v5091
  %v5093 = vlaneseq
  %v5094 = vshrl.u32 %v5093, 7
  %v5095 = vsub.s32 5, %v5094
  %v5096 = vrot.slane %v1159, %v5095
  %v5097 = vlaneseq
  %v5098 = vshrl.u32 %v5097, 7
  %v5099 = vsub.s32 6, %v5098
  %v5100 = vrot.slane %v1159, %v5099
  %v5101 = vlaneseq
  %v5102 = vshrl.u32 %v5101, 7
  %v5103 = vsub.s32 7, %v5102
  %v5104 = vrot.slane %v1159, %v5103
  %v5105 = vlaneseq
  %v5106 = vshrl.u32 %v5105, 7
  %v5107 = vsub.s32 0, %v5106
  %v5108 = vrot.slane %v1160, %v5107
  %v5109 = vlaneseq
  %v5110 = vshrl.u32 %v5109, 7
  %v5111 = vsub.s32 1, %v5110
  %v5112 = vrot.slane %v1160, %v5111
  %v5113 = vlaneseq
  %v5114 = vshrl.u32 %v5113, 7
  %v5115 = vsub.s32 2, %v5114
  %v5116 = vrot.slane %v1160, %v5115
  %v5117 = vlaneseq
  %v5118 = vshrl.u32 %v5117, 7
  %v5119 = vsub.s32 3, %v5118
  %v5120 = vrot.slane %v1160, %v5119
  %v5121 = vlaneseq
  %v5122 = vshrl.u32 %v5121, 7
  %v5123 = vsub.s32 4, %v5122
  %v5124 = vrot.slane %v1160, %v5123
  %v5125 = vlaneseq
  %v5126 = vshrl.u32 %v5125, 7
  %v5127 = vsub.s32 5, %v5126
  %v5128 = vrot.slane %v1160, %v5127
  %v5129 = vlaneseq
  %v5130 = vshrl.u32 %v5129, 7
  %v5131 = vsub.s32 6, %v5130
  %v5132 = vrot.slane %v1160, %v5131
  %v5133 = vlaneseq
  %v5134 = vshrl.u32 %v5133, 7
  %v5135 = vsub.s32 7, %v5134
  %v5136 = vrot.slane %v1160, %v5135
  %v5137 = vlaneseq
  %v5138 = vshrl.u32 %v5137, 7
  %v5139 = vsub.s32 0, %v5138
  %v5140 = vrot.slane %v1161, %v5139
  %v5141 = vlaneseq
  %v5142 = vshrl.u32 %v5141, 7
  %v5143 = vsub.s32 1, %v5142
  %v5144 = vrot.slane %v1161, %v5143
  %v5145 = vlaneseq
  %v5146 = vshrl.u32 %v5145, 7
  %v5147 = vsub.s32 2, %v5146
  %v5148 = vrot.slane %v1161, %v5147
  %v5149 = vlaneseq
  %v5150 = vshrl.u32 %v5149, 7
  %v5151 = vsub.s32 3, %v5150
  %v5152 = vrot.slane %v1161, %v5151
  %v5153 = vlaneseq
  %v5154 = vshrl.u32 %v5153, 7
  %v5155 = vsub.s32 4, %v5154
  %v5156 = vrot.slane %v1161, %v5155
  %v5157 = vlaneseq
  %v5158 = vshrl.u32 %v5157, 7
  %v5159 = vsub.s32 5, %v5158
  %v5160 = vrot.slane %v1161, %v5159
  %v5161 = vlaneseq
  %v5162 = vshrl.u32 %v5161, 7
  %v5163 = vsub.s32 6, %v5162
  %v5164 = vrot.slane %v1161, %v5163
  %v5165 = vlaneseq
  %v5166 = vshrl.u32 %v5165, 7
  %v5167 = vsub.s32 7, %v5166
  %v5168 = vrot.slane %v1161, %v5167
  %v5169 = vlaneseq
  %v5170 = vshrl.u32 %v5169, 7
  %v5171 = vsub.s32 0, %v5170
  %v5172 = vrot.slane %v1162, %v5171
  %v5173 = vlaneseq
  %v5174 = vshrl.u32 %v5173, 7
  %v5175 = vsub.s32 1, %v5174
  %v5176 = vrot.slane %v1162, %v5175
  %v5177 = vlaneseq
  %v5178 = vshrl.u32 %v5177, 7
  %v5179 = vsub.s32 2, %v5178
  %v5180 = vrot.slane %v1162, %v5179
  %v5181 = vlaneseq
  %v5182 = vshrl.u32 %v5181, 7
  %v5183 = vsub.s32 3, %v5182
  %v5184 = vrot.slane %v1162, %v5183
  %v5185 = vlaneseq
  %v5186 = vshrl.u32 %v5185, 7
  %v5187 = vsub.s32 4, %v5186
  %v5188 = vrot.slane %v1162, %v5187
  %v5189 = vlaneseq
  %v5190 = vshrl.u32 %v5189, 7
  %v5191 = vsub.s32 5, %v5190
  %v5192 = vrot.slane %v1162, %v5191
  %v5193 = vlaneseq
  %v5194 = vshrl.u32 %v5193, 7
  %v5195 = vsub.s32 6, %v5194
  %v5196 = vrot.slane %v1162, %v5195
  %v5197 = vlaneseq
  %v5198 = vshrl.u32 %v5197, 7
  %v5199 = vsub.s32 7, %v5198
  %v5200 = vrot.slane %v1162, %v5199
  %v5201 = vlaneseq
  %v5202 = vshrl.u32 %v5201, 7
  %v5203 = vsub.s32 0, %v5202
  %v5204 = vrot.slane %v1163, %v5203
  %v5205 = vlaneseq
  %v5206 = vshrl.u32 %v5205, 7
  %v5207 = vsub.s32 1, %v5206
  %v5208 = vrot.slane %v1163, %v5207
  %v5209 = vlaneseq
  %v5210 = vshrl.u32 %v5209, 7
  %v5211 = vsub.s32 2, %v5210
  %v5212 = vrot.slane %v1163, %v5211
  %v5213 = vlaneseq
  %v5214 = vshrl.u32 %v5213, 7
  %v5215 = vsub.s32 3, %v5214
  %v5216 = vrot.slane %v1163, %v5215
  %v5217 = vlaneseq
  %v5218 = vshrl.u32 %v5217, 7
  %v5219 = vsub.s32 4, %v5218
  %v5220 = vrot.slane %v1163, %v5219
  %v5221 = vlaneseq
  %v5222 = vshrl.u32 %v5221, 7
  %v5223 = vsub.s32 5, %v5222
  %v5224 = vrot.slane %v1163, %v5223
  %v5225 = vlaneseq
  %v5226 = vshrl.u32 %v5225, 7
  %v5227 = vsub.s32 6, %v5226
  %v5228 = vrot.slane %v1163, %v5227
  %v5229 = vlaneseq
  %v5230 = vshrl.u32 %v5229, 7
  %v5231 = vsub.s32 7, %v5230
  %v5232 = vrot.slane %v1163, %v5231
  %v5233 = vlaneseq
  %v5234 = vshrl.u32 %v5233, 7
  %v5235 = vsub.s32 0, %v5234
  %v5236 = vrot.slane %v1164, %v5235
  %v5237 = vlaneseq
  %v5238 = vshrl.u32 %v5237, 7
  %v5239 = vsub.s32 1, %v5238
  %v5240 = vrot.slane %v1164, %v5239
  %v5241 = vlaneseq
  %v5242 = vshrl.u32 %v5241, 7
  %v5243 = vsub.s32 2, %v5242
  %v5244 = vrot.slane %v1164, %v5243
  %v5245 = vlaneseq
  %v5246 = vshrl.u32 %v5245, 7
  %v5247 = vsub.s32 3, %v5246
  %v5248 = vrot.slane %v1164, %v5247
  %v5249 = vlaneseq
  %v5250 = vshrl.u32 %v5249, 7
  %v5251 = vsub.s32 4, %v5250
  %v5252 = vrot.slane %v1164, %v5251
  %v5253 = vlaneseq
  %v5254 = vshrl.u32 %v5253, 7
  %v5255 = vsub.s32 5, %v5254
  %v5256 = vrot.slane %v1164, %v5255
  %v5257 = vlaneseq
  %v5258 = vshrl.u32 %v5257, 7
  %v5259 = vsub.s32 6, %v5258
  %v5260 = vrot.slane %v1164, %v5259
  %v5261 = vlaneseq
  %v5262 = vshrl.u32 %v5261, 7
  %v5263 = vsub.s32 7, %v5262
  %v5264 = vrot.slane %v1164, %v5263
  %v5265 = vlaneseq
  %v5266 = vshrl.u32 %v5265, 7
  %v5267 = vsub.s32 0, %v5266
  %v5268 = vrot.slane %v1165, %v5267
  %v5269 = vlaneseq
  %v5270 = vshrl.u32 %v5269, 7
  %v5271 = vsub.s32 1, %v5270
  %v5272 = vrot.slane %v1165, %v5271
  %v5273 = vlaneseq
  %v5274 = vshrl.u32 %v5273, 7
  %v5275 = vsub.s32 2, %v5274
  %v5276 = vrot.slane %v1165, %v5275
  %v5277 = vlaneseq
  %v5278 = vshrl.u32 %v5277, 7
  %v5279 = vsub.s32 3, %v5278
  %v5280 = vrot.slane %v1165, %v5279
  %v5281 = vlaneseq
  %v5282 = vshrl.u32 %v5281, 7
  %v5283 = vsub.s32 4, %v5282
  %v5284 = vrot.slane %v1165, %v5283
  %v5285 = vlaneseq
  %v5286 = vshrl.u32 %v5285, 7
  %v5287 = vsub.s32 5, %v5286
  %v5288 = vrot.slane %v1165, %v5287
  %v5289 = vlaneseq
  %v5290 = vshrl.u32 %v5289, 7
  %v5291 = vsub.s32 6, %v5290
  %v5292 = vrot.slane %v1165, %v5291
  %v5293 = vlaneseq
  %v5294 = vshrl.u32 %v5293, 7
  %v5295 = vsub.s32 7, %v5294
  %v5296 = vrot.slane %v1165, %v5295
  %v5297 = vlaneseq
  %v5298 = vshrl.u32 %v5297, 7
  %v5299 = vsub.s32 0, %v5298
  %v5300 = vrot.slane %v1166, %v5299
  %v5301 = vlaneseq
  %v5302 = vshrl.u32 %v5301, 7
  %v5303 = vsub.s32 1, %v5302
  %v5304 = vrot.slane %v1166, %v5303
  %v5305 = vlaneseq
  %v5306 = vshrl.u32 %v5305, 7
  %v5307 = vsub.s32 2, %v5306
  %v5308 = vrot.slane %v1166, %v5307
  %v5309 = vlaneseq
  %v5310 = vshrl.u32 %v5309, 7
  %v5311 = vsub.s32 3, %v5310
  %v5312 = vrot.slane %v1166, %v5311
  %v5313 = vlaneseq
  %v5314 = vshrl.u32 %v5313, 7
  %v5315 = vsub.s32 4, %v5314
  %v5316 = vrot.slane %v1166, %v5315
  %v5317 = vlaneseq
  %v5318 = vshrl.u32 %v5317, 7
  %v5319 = vsub.s32 5, %v5318
  %v5320 = vrot.slane %v1166, %v5319
  %v5321 = vlaneseq
  %v5322 = vshrl.u32 %v5321, 7
  %v5323 = vsub.s32 6, %v5322
  %v5324 = vrot.slane %v1166, %v5323
  %v5325 = vlaneseq
  %v5326 = vshrl.u32 %v5325, 7
  %v5327 = vsub.s32 7, %v5326
  %v5328 = vrot.slane %v1166, %v5327
  %v5329 = vlaneseq
  %v5330 = vshrl.u32 %v5329, 7
  %v5331 = vsub.s32 0, %v5330
  %v5332 = vrot.slane %v1167, %v5331
  %v5333 = vlaneseq
  %v5334 = vshrl.u32 %v5333, 7
  %v5335 = vsub.s32 1, %v5334
  %v5336 = vrot.slane %v1167, %v5335
  %v5337 = vlaneseq
  %v5338 = vshrl.u32 %v5337, 7
  %v5339 = vsub.s32 2, %v5338
  %v5340 = vrot.slane %v1167, %v5339
  %v5341 = vlaneseq
  %v5342 = vshrl.u32 %v5341, 7
  %v5343 = vsub.s32 3, %v5342
  %v5344 = vrot.slane %v1167, %v5343
  %v5345 = vlaneseq
  %v5346 = vshrl.u32 %v5345, 7
  %v5347 = vsub.s32 4, %v5346
  %v5348 = vrot.slane %v1167, %v5347
  %v5349 = vlaneseq
  %v5350 = vshrl.u32 %v5349, 7
  %v5351 = vsub.s32 5, %v5350
  %v5352 = vrot.slane %v1167, %v5351
  %v5353 = vlaneseq
  %v5354 = vshrl.u32 %v5353, 7
  %v5355 = vsub.s32 6, %v5354
  %v5356 = vrot.slane %v1167, %v5355
  %v5357 = vlaneseq
  %v5358 = vshrl.u32 %v5357, 7
  %v5359 = vsub.s32 7, %v5358
  %v5360 = vrot.slane %v1167, %v5359
  %v5361 = vlaneseq
  %v5362 = vshrl.u32 %v5361, 7
  %v5363 = vsub.s32 0, %v5362
  %v5364 = vrot.slane %v1168, %v5363
  %v5365 = vlaneseq
  %v5366 = vshrl.u32 %v5365, 7
  %v5367 = vsub.s32 1, %v5366
  %v5368 = vrot.slane %v1168, %v5367
  %v5369 = vlaneseq
  %v5370 = vshrl.u32 %v5369, 7
  %v5371 = vsub.s32 2, %v5370
  %v5372 = vrot.slane %v1168, %v5371
  %v5373 = vlaneseq
  %v5374 = vshrl.u32 %v5373, 7
  %v5375 = vsub.s32 3, %v5374
  %v5376 = vrot.slane %v1168, %v5375
  %v5377 = vlaneseq
  %v5378 = vshrl.u32 %v5377, 7
  %v5379 = vsub.s32 4, %v5378
  %v5380 = vrot.slane %v1168, %v5379
  %v5381 = vlaneseq
  %v5382 = vshrl.u32 %v5381, 7
  %v5383 = vsub.s32 5, %v5382
  %v5384 = vrot.slane %v1168, %v5383
  %v5385 = vlaneseq
  %v5386 = vshrl.u32 %v5385, 7
  %v5387 = vsub.s32 6, %v5386
  %v5388 = vrot.slane %v1168, %v5387
  %v5389 = vlaneseq
  %v5390 = vshrl.u32 %v5389, 7
  %v5391 = vsub.s32 7, %v5390
  %v5392 = vrot.slane %v1168, %v5391
  %v6417 = vmul.f32 %v17, %v1300
  %v6418 = vmul.f32 %v18, %v1304
  %v6419 = vmul.f32 %v19, %v1308
  %v6420 = vmul.f32 %v20, %v1312
  %v6421 = vmul.f32 %v21, %v1316
  %v6422 = vmul.f32 %v22, %v1320
  %v6423 = vmul.f32 %v23, %v1324
  %v6424 = vmul.f32 %v24, %v1328
  %v6425 = vmul.f32 %v25, %v1332
  %v6426 = vmul.f32 %v26, %v1336
  %v6427 = vmul.f32 %v27, %v1340
  %v6428 = vmul.f32 %v28, %v1344
  %v6429 = vmul.f32 %v29, %v1348
  %v6430 = vmul.f32 %v30, %v1352
  %v6431 = vmul.f32 %v31, %v1356
  %v6432 = vmul.f32 %v32, %v1360
  %v6433 = vmul.f32 %v33, %v1364
  %v6434 = vmul.f32 %v34, %v1368
  %v6435 = vmul.f32 %v35, %v1372
  %v6436 = vmul.f32 %v36, %v1376
  %v6437 = vmul.f32 %v37, %v1380
  %v6438 = vmul.f32 %v38, %v1384
  %v6439 = vmul.f32 %v39, %v1388
  %v6440 = vmul.f32 %v40, %v1392
  %v6441 = vmul.f32 %v41, %v1396
  %v6442 = vmul.f32 %v42, %v1400
  %v6443 = vmul.f32 %v43, %v1404
  %v6444 = vmul.f32 %v44, %v1408
  %v6445 = vmul.f32 %v45, %v1412
  %v6446 = vmul.f32 %v46, %v1416
  %v6447 = vmul.f32 %v47, %v1420
  %v6448 = vmul.f32 %v48, %v1424
  %v6449 = vmul.f32 %v49, %v1428
  %v6450 = vmul.f32 %v50, %v1432
  %v6451 = vmul.f32 %v51, %v1436
  %v6452 = vmul.f32 %v52, %v1440
  %v6453 = vmul.f32 %v53, %v1444
  %v6454 = vmul.f32 %v54, %v1448
  %v6455 = vmul.f32 %v55, %v1452
  %v6456 = vmul.f32 %v56, %v1456
  %v6457 = vmul.f32 %v57, %v1460
  %v6458 = vmul.f32 %v58, %v1464
  %v6459 = vmul.f32 %v59, %v1468
  %v6460 = vmul.f32 %v60, %v1472
  %v6461 = vmul.f32 %v61, %v1476
  %v6462 = vmul.f32 %v62, %v1480
  %v6463 = vmul.f32 %v63, %v1484
  %v6464 = vmul.f32 %v64, %v1488
  %v6465 = vmul.f32 %v65, %v1492
  %v6466 = vmul.f32 %v66, %v1496
  %v6467 = vmul.f32 %v67, %v1500
  %v6468 = vmul.f32 %v68, %v1504
  %v6469 = vmul.f32 %v69, %v1508
  %v6470 = vmul.f32 %v70, %v1512
  %v6471 = vmul.f32 %v71, %v1516
  %v6472 = vmul.f32 %v72, %v1520
  %v6473 = vmul.f32 %v73, %v1524
  %v6474 = vmul.f32 %v74, %v1528
  %v6475 = vmul.f32 %v75, %v1532
  %v6476 = vmul.f32 %v76, %v1536
  %v6477 = vmul.f32 %v77, %v1540
  %v6478 = vmul.f32 %v78, %v1544
  %v6479 = vmul.f32 %v79, %v1548
  %v6480 = vmul.f32 %v80, %v1552
  %v6481 = vmul.f32 %v81, %v1556
  %v6482 = vmul.f32 %v82, %v1560
  %v6483 = vmul.f32 %v83, %v1564
  %v6484 = vmul.f32 %v84, %v1568
  %v6485 = vmul.f32 %v85, %v1572
  %v6486 = vmul.f32 %v86, %v1576
  %v6487 = vmul.f32 %v87, %v1580
  %v6488 = vmul.f32 %v88, %v1584
  %v6489 = vmul.f32 %v89, %v1588
  %v6490 = vmul.f32 %v90, %v1592
  %v6491 = vmul.f32 %v91, %v1596
  %v6492 = vmul.f32 %v92, %v1600
  %v6493 = vmul.f32 %v93, %v1604
  %v6494 = vmul.f32 %v94, %v1608
  %v6495 = vmul.f32 %v95, %v1612
  %v6496 = vmul.f32 %v96, %v1616
  %v6497 = vmul.f32 %v97, %v1620
  %v6498 = vmul.f32 %v98, %v1624
  %v6499 = vmul.f32 %v99, %v1628
  %v6500 = vmul.f32 %v100, %v1632
  %v6501 = vmul.f32 %v101, %v1636
  %v6502 = vmul.f32 %v102, %v1640
  %v6503 = vmul.f32 %v103, %v1644
  %v6504 = vmul.f32 %v104, %v1648
  %v6505 = vmul.f32 %v105, %v1652
  %v6506 = vmul.f32 %v106, %v1656
  %v6507 = vmul.f32 %v107, %v1660
  %v6508 = vmul.f32 %v108, %v1664
  %v6509 = vmul.f32 %v109, %v1668
  %v6510 = vmul.f32 %v110, %v1672
  %v6511 = vmul.f32 %v111, %v1676
  %v6512 = vmul.f32 %v112, %v1680
  %v6513 = vmul.f32 %v113, %v1684
  %v6514 = vmul.f32 %v114, %v1688
  %v6515 = vmul.f32 %v115, %v1692
  %v6516 = vmul.f32 %v116, %v1696
  %v6517 = vmul.f32 %v117, %v1700
  %v6518 = vmul.f32 %v118, %v1704
  %v6519 = vmul.f32 %v119, %v1708
  %v6520 = vmul.f32 %v120, %v1712
  %v6521 = vmul.f32 %v121, %v1716
  %v6522 = vmul.f32 %v122, %v1720
  %v6523 = vmul.f32 %v123, %v1724
  %v6524 = vmul.f32 %v124, %v1728
  %v6525 = vmul.f32 %v125, %v1732
  %v6526 = vmul.f32 %v126, %v1736
  %v6527 = vmul.f32 %v127, %v1740
  %v6528 = vmul.f32 %v128, %v1744
  %v6529 = vmul.f32 %v129, %v1748
  %v6530 = vmul.f32 %v130, %v1752
  %v6531 = vmul.f32 %v131, %v1756
  %v6532 = vmul.f32 %v132, %v1760
  %v6533 = vmul.f32 %v133, %v1764
  %v6534 = vmul.f32 %v134, %v1768
  %v6535 = vmul.f32 %v135, %v1772
  %v6536 = vmul.f32 %v136, %v1776
  %v6537 = vmul.f32 %v137, %v1780
  %v6538 = vmul.f32 %v138, %v1784
  %v6539 = vmul.f32 %v139, %v1788
  %v6540 = vmul.f32 %v140, %v1792
  %v6541 = vmul.f32 %v141, %v1796
  %v6542 = vmul.f32 %v142, %v1800
  %v6543 = vmul.f32 %v143, %v1804
  %v6544 = vmul.f32 %v144, %v1808
  %v6545 = vmul.f32 %v145, %v1812
  %v6546 = vmul.f32 %v146, %v1816
  %v6547 = vmul.f32 %v147, %v1820
  %v6548 = vmul.f32 %v148, %v1824
  %v6549 = vmul.f32 %v149, %v1828
  %v6550 = vmul.f32 %v150, %v1832
  %v6551 = vmul.f32 %v151, %v1836
  %v6552 = vmul.f32 %v152, %v1840
  %v6553 = vmul.f32 %v153, %v1844
  %v6554 = vmul.f32 %v154, %v1848
  %v6555 = vmul.f32 %v155, %v1852
  %v6556 = vmul.f32 %v156, %v1856
  %v6557 = vmul.f32 %v157, %v1860
  %v6558 = vmul.f32 %v158, %v1864
  %v6559 = vmul.f32 %v159, %v1868
  %v6560 = vmul.f32 %v160, %v1872
  %v6561 = vmul.f32 %v161, %v1876
  %v6562 = vmul.f32 %v162, %v1880
  %v6563 = vmul.f32 %v163, %v1884
  %v6564 = vmul.f32 %v164, %v1888
  %v6565 = vmul.f32 %v165, %v1892
  %v6566 = vmul.f32 %v166, %v1896
  %v6567 = vmul.f32 %v167, %v1900
  %v6568 = vmul.f32 %v168, %v1904
  %v6569 = vmul.f32 %v169, %v1908
  %v6570 = vmul.f32 %v170, %v1912
  %v6571 = vmul.f32 %v171, %v1916
  %v6572 = vmul.f32 %v172, %v1920
  %v6573 = vmul.f32 %v173, %v1924
  %v6574 = vmul.f32 %v174, %v1928
  %v6575 = vmul.f32 %v175, %v1932
  %v6576 = vmul.f32 %v176, %v1936
  %v6577 = vmul.f32 %v177, %v1940
  %v6578 = vmul.f32 %v178, %v1944
  %v6579 = vmul.f32 %v179, %v1948
  %v6580 = vmul.f32 %v180, %v1952
  %v6581 = vmul.f32 %v181, %v1956
  %v6582 = vmul.f32 %v182, %v1960
  %v6583 = vmul.f32 %v183, %v1964
  %v6584 = vmul.f32 %v184, %v1968
  %v6585 = vmul.f32 %v185, %v1972
  %v6586 = vmul.f32 %v186, %v1976
  %v6587 = vmul.f32 %v187, %v1980
  %v6588 = vmul.f32 %v188, %v1984
  %v6589 = vmul.f32 %v189, %v1988
  %v6590 = vmul.f32 %v190, %v1992
  %v6591 = vmul.f32 %v191, %v1996
  %v6592 = vmul.f32 %v192, %v2000
  %v6593 = vmul.f32 %v193, %v2004
  %v6594 = vmul.f32 %v194, %v2008
  %v6595 = vmul.f32 %v195, %v2012
  %v6596 = vmul.f32 %v196, %v2016
  %v6597 = vmul.f32 %v197, %v2020
  %v6598 = vmul.f32 %v198, %v2024
  %v6599 = vmul.f32 %v199, %v2028
  %v6600 = vmul.f32 %v200, %v2032
  %v6601 = vmul.f32 %v201, %v2036
  %v6602 = vmul.f32 %v202, %v2040
  %v6603 = vmul.f32 %v203, %v2044
  %v6604 = vmul.f32 %v204, %v2048
  %v6605 = vmul.f32 %v205, %v2052
  %v6606 = vmul.f32 %v206, %v2056
  %v6607 = vmul.f32 %v207, %v2060
  %v6608 = vmul.f32 %v208, %v2064
  %v6609 = vmul.f32 %v209, %v2068
  %v6610 = vmul.f32 %v210, %v2072
  %v6611 = vmul.f32 %v211, %v2076
  %v6612 = vmul.f32 %v212, %v2080
  %v6613 = vmul.f32 %v213, %v2084
  %v6614 = vmul.f32 %v214, %v2088
  %v6615 = vmul.f32 %v215, %v2092
  %v6616 = vmul.f32 %v216, %v2096
  %v6617 = vmul.f32 %v217, %v2100
  %v6618 = vmul.f32 %v218, %v2104
  %v6619 = vmul.f32 %v219, %v2108
  %v6620 = vmul.f32 %v220, %v2112
  %v6621 = vmul.f32 %v221, %v2116
  %v6622 = vmul.f32 %v222, %v2120
  %v6623 = vmul.f32 %v223, %v2124
  %v6624 = vmul.f32 %v224, %v2128
  %v6625 = vmul.f32 %v225, %v2132
  %v6626 = vmul.f32 %v226, %v2136
  %v6627 = vmul.f32 %v227, %v2140
  %v6628 = vmul.f32 %v228, %v2144
  %v6629 = vmul.f32 %v229, %v2148
  %v6630 = vmul.f32 %v230, %v2152
  %v6631 = vmul.f32 %v231, %v2156
  %v6632 = vmul.f32 %v232, %v2160
  %v6633 = vmul.f32 %v233, %v2164
  %v6634 = vmul.f32 %v234, %v2168
  %v6635 = vmul.f32 %v235, %v2172
  %v6636 = vmul.f32 %v236, %v2176
  %v6637 = vmul.f32 %v237, %v2180
  %v6638 = vmul.f32 %v238, %v2184
  %v6639 = vmul.f32 %v239, %v2188
  %v6640 = vmul.f32 %v240, %v2192
  %v6641 = vmul.f32 %v241, %v2196
  %v6642 = vmul.f32 %v242, %v2200
  %v6643 = vmul.f32 %v243, %v2204
  %v6644 = vmul.f32 %v244, %v2208
  %v6645 = vmul.f32 %v245, %v2212
  %v6646 = vmul.f32 %v246, %v2216
  %v6647 = vmul.f32 %v247, %v2220
  %v6648 = vmul.f32 %v248, %v2224
  %v6649 = vmul.f32 %v249, %v2228
  %v6650 = vmul.f32 %v250, %v2232
  %v6651 = vmul.f32 %v251, %v2236
  %v6652 = vmul.f32 %v252, %v2240
  %v6653 = vmul.f32 %v253, %v2244
  %v6654 = vmul.f32 %v254, %v2248
  %v6655 = vmul.f32 %v255, %v2252
  %v6656 = vmul.f32 %v256, %v2256
  %v6657 = vmul.f32 %v257, %v2260
  %v6658 = vmul.f32 %v258, %v2264
  %v6659 = vmul.f32 %v259, %v2268
  %v6660 = vmul.f32 %v260, %v2272
  %v6661 = vmul.f32 %v261, %v2276
  %v6662 = vmul.f32 %v262, %v2280
  %v6663 = vmul.f32 %v263, %v2284
  %v6664 = vmul.f32 %v264, %v2288
  %v6665 = vmul.f32 %v265, %v2292
  %v6666 = vmul.f32 %v266, %v2296
  %v6667 = vmul.f32 %v267, %v2300
  %v6668 = vmul.f32 %v268, %v2304
  %v6669 = vmul.f32 %v269, %v2308
  %v6670 = vmul.f32 %v270, %v2312
  %v6671 = vmul.f32 %v271, %v2316
  %v6672 = vmul.f32 %v272, %v2320
  %v6673 = vmul.f32 %v273, %v2324
  %v6674 = vmul.f32 %v274, %v2328
  %v6675 = vmul.f32 %v275, %v2332
  %v6676 = vmul.f32 %v276, %v2336
  %v6677 = vmul.f32 %v277, %v2340
  %v6678 = vmul.f32 %v278, %v2344
  %v6679 = vmul.f32 %v279, %v2348
  %v6680 = vmul.f32 %v280, %v2352
  %v6681 = vmul.f32 %v281, %v2356
  %v6682 = vmul.f32 %v282, %v2360
  %v6683 = vmul.f32 %v283, %v2364
  %v6684 = vmul.f32 %v284, %v2368
  %v6685 = vmul.f32 %v285, %v2372
  %v6686 = vmul.f32 %v286, %v2376
  %v6687 = vmul.f32 %v287, %v2380
  %v6688 = vmul.f32 %v288, %v2384
  %v6689 = vmul.f32 %v289, %v2388
  %v6690 = vmul.f32 %v290, %v2392
  %v6691 = vmul.f32 %v291, %v2396
  %v6692 = vmul.f32 %v292, %v2400
  %v6693 = vmul.f32 %v293, %v2404
  %v6694 = vmul.f32 %v294, %v2408
  %v6695 = vmul.f32 %v295, %v2412
  %v6696 = vmul.f32 %v296, %v2416
  %v6697 = vmul.f32 %v297, %v2420
  %v6698 = vmul.f32 %v298, %v2424
  %v6699 = vmul.f32 %v299, %v2428
  %v6700 = vmul.f32 %v300, %v2432
  %v6701 = vmul.f32 %v301, %v2436
  %v6702 = vmul.f32 %v302, %v2440
  %v6703 = vmul.f32 %v303, %v2444
  %v6704 = vmul.f32 %v304, %v2448
  %v6705 = vmul.f32 %v305, %v2452
  %v6706 = vmul.f32 %v306, %v2456
  %v6707 = vmul.f32 %v307, %v2460
  %v6708 = vmul.f32 %v308, %v2464
  %v6709 = vmul.f32 %v309, %v2468
  %v6710 = vmul.f32 %v310, %v2472
  %v6711 = vmul.f32 %v311, %v2476
  %v6712 = vmul.f32 %v312, %v2480
  %v6713 = vmul.f32 %v313, %v2484
  %v6714 = vmul.f32 %v314, %v2488
  %v6715 = vmul.f32 %v315, %v2492
  %v6716 = vmul.f32 %v316, %v2496
  %v6717 = vmul.f32 %v317, %v2500
  %v6718 = vmul.f32 %v318, %v2504
  %v6719 = vmul.f32 %v319, %v2508
  %v6720 = vmul.f32 %v320, %v2512
  %v6721 = vmul.f32 %v321, %v2516
  %v6722 = vmul.f32 %v322, %v2520
  %v6723 = vmul.f32 %v323, %v2524
  %v6724 = vmul.f32 %v324, %v2528
  %v6725 = vmul.f32 %v325, %v2532
  %v6726 = vmul.f32 %v326, %v2536
  %v6727 = vmul.f32 %v327, %v2540
  %v6728 = vmul.f32 %v328, %v2544
  %v6729 = vmul.f32 %v329, %v2548
  %v6730 = vmul.f32 %v330, %v2552
  %v6731 = vmul.f32 %v331, %v2556
  %v6732 = vmul.f32 %v332, %v2560
  %v6733 = vmul.f32 %v333, %v2564
  %v6734 = vmul.f32 %v334, %v2568
  %v6735 = vmul.f32 %v335, %v2572
  %v6736 = vmul.f32 %v336, %v2576
  %v6737 = vmul.f32 %v337, %v2580
  %v6738 = vmul.f32 %v338, %v2584
  %v6739 = vmul.f32 %v339, %v2588
  %v6740 = vmul.f32 %v340, %v2592
  %v6741 = vmul.f32 %v341, %v2596
  %v6742 = vmul.f32 %v342, %v2600
  %v6743 = vmul.f32 %v343, %v2604
  %v6744 = vmul.f32 %v344, %v2608
  %v6745 = vmul.f32 %v345, %v2612
  %v6746 = vmul.f32 %v346, %v2616
  %v6747 = vmul.f32 %v347, %v2620
  %v6748 = vmul.f32 %v348, %v2624
  %v6749 = vmul.f32 %v349, %v2628
  %v6750 = vmul.f32 %v350, %v2632
  %v6751 = vmul.f32 %v351, %v2636
  %v6752 = vmul.f32 %v352, %v2640
  %v6753 = vmul.f32 %v353, %v2644
  %v6754 = vmul.f32 %v354, %v2648
  %v6755 = vmul.f32 %v355, %v2652
  %v6756 = vmul.f32 %v356, %v2656
  %v6757 = vmul.f32 %v357, %v2660
  %v6758 = vmul.f32 %v358, %v2664
  %v6759 = vmul.f32 %v359, %v2668
  %v6760 = vmul.f32 %v360, %v2672
  %v6761 = vmul.f32 %v361, %v2676
  %v6762 = vmul.f32 %v362, %v2680
  %v6763 = vmul.f32 %v363, %v2684
  %v6764 = vmul.f32 %v364, %v2688
  %v6765 = vmul.f32 %v365, %v2692
  %v6766 = vmul.f32 %v366, %v2696
  %v6767 = vmul.f32 %v367, %v2700
  %v6768 = vmul.f32 %v368, %v2704
  %v6769 = vmul.f32 %v369, %v2708
  %v6770 = vmul.f32 %v370, %v2712
  %v6771 = vmul.f32 %v371, %v2716
  %v6772 = vmul.f32 %v372, %v2720
  %v6773 = vmul.f32 %v373, %v2724
  %v6774 = vmul.f32 %v374, %v2728
  %v6775 = vmul.f32 %v375, %v2732
  %v6776 = vmul.f32 %v376, %v2736
  %v6777 = vmul.f32 %v377, %v2740
  %v6778 = vmul.f32 %v378, %v2744
  %v6779 = vmul.f32 %v379, %v2748
  %v6780 = vmul.f32 %v380, %v2752
  %v6781 = vmul.f32 %v381, %v2756
  %v6782 = vmul.f32 %v382, %v2760
  %v6783 = vmul.f32 %v383, %v2764
  %v6784 = vmul.f32 %v384, %v2768
  %v6785 = vmul.f32 %v385, %v2772
  %v6786 = vmul.f32 %v386, %v2776
  %v6787 = vmul.f32 %v387, %v2780
  %v6788 = vmul.f32 %v388, %v2784
  %v6789 = vmul.f32 %v389, %v2788
  %v6790 = vmul.f32 %v390, %v2792
  %v6791 = vmul.f32 %v391, %v2796
  %v6792 = vmul.f32 %v392, %v2800
  %v6793 = vmul.f32 %v393, %v2804
  %v6794 = vmul.f32 %v394, %v2808
  %v6795 = vmul.f32 %v395, %v2812
  %v6796 = vmul.f32 %v396, %v2816
  %v6797 = vmul.f32 %v397, %v2820
  %v6798 = vmul.f32 %v398, %v2824
  %v6799 = vmul.f32 %v399, %v2828
  %v6800 = vmul.f32 %v400, %v2832
  %v6801 = vmul.f32 %v401, %v2836
  %v6802 = vmul.f32 %v402, %v2840
  %v6803 = vmul.f32 %v403, %v2844
  %v6804 = vmul.f32 %v404, %v2848
  %v6805 = vmul.f32 %v405, %v2852
  %v6806 = vmul.f32 %v406, %v2856
  %v6807 = vmul.f32 %v407, %v2860
  %v6808 = vmul.f32 %v408, %v2864
  %v6809 = vmul.f32 %v409, %v2868
  %v6810 = vmul.f32 %v410, %v2872
  %v6811 = vmul.f32 %v411, %v2876
  %v6812 = vmul.f32 %v412, %v2880
  %v6813 = vmul.f32 %v413, %v2884
  %v6814 = vmul.f32 %v414, %v2888
  %v6815 = vmul.f32 %v415, %v2892
  %v6816 = vmul.f32 %v416, %v2896
  %v6817 = vmul.f32 %v417, %v2900
  %v6818 = vmul.f32 %v418, %v2904
  %v6819 = vmul.f32 %v419, %v2908
  %v6820 = vmul.f32 %v420, %v2912
  %v6821 = vmul.f32 %v421, %v2916
  %v6822 = vmul.f32 %v422, %v2920
  %v6823 = vmul.f32 %v423, %v2924
  %v6824 = vmul.f32 %v424, %v2928
  %v6825 = vmul.f32 %v425, %v2932
  %v6826 = vmul.f32 %v426, %v2936
  %v6827 = vmul.f32 %v427, %v2940
  %v6828 = vmul.f32 %v428, %v2944
  %v6829 = vmul.f32 %v429, %v2948
  %v6830 = vmul.f32 %v430, %v2952
  %v6831 = vmul.f32 %v431, %v2956
  %v6832 = vmul.f32 %v432, %v2960
  %v6833 = vmul.f32 %v433, %v2964
  %v6834 = vmul.f32 %v434, %v2968
  %v6835 = vmul.f32 %v435, %v2972
  %v6836 = vmul.f32 %v436, %v2976
  %v6837 = vmul.f32 %v437, %v2980
  %v6838 = vmul.f32 %v438, %v2984
  %v6839 = vmul.f32 %v439, %v2988
  %v6840 = vmul.f32 %v440, %v2992
  %v6841 = vmul.f32 %v441, %v2996
  %v6842 = vmul.f32 %v442, %v3000
  %v6843 = vmul.f32 %v443, %v3004
  %v6844 = vmul.f32 %v444, %v3008
  %v6845 = vmul.f32 %v445, %v3012
  %v6846 = vmul.f32 %v446, %v3016
  %v6847 = vmul.f32 %v447, %v3020
  %v6848 = vmul.f32 %v448, %v3024
  %v6849 = vmul.f32 %v449, %v3028
  %v6850 = vmul.f32 %v450, %v3032
  %v6851 = vmul.f32 %v451, %v3036
  %v6852 = vmul.f32 %v452, %v3040
  %v6853 = vmul.f32 %v453, %v3044
  %v6854 = vmul.f32 %v454, %v3048
  %v6855 = vmul.f32 %v455, %v3052
  %v6856 = vmul.f32 %v456, %v3056
  %v6857 = vmul.f32 %v457, %v3060
  %v6858 = vmul.f32 %v458, %v3064
  %v6859 = vmul.f32 %v459, %v3068
  %v6860 = vmul.f32 %v460, %v3072
  %v6861 = vmul.f32 %v461, %v3076
  %v6862 = vmul.f32 %v462, %v3080
  %v6863 = vmul.f32 %v463, %v3084
  %v6864 = vmul.f32 %v464, %v3088
  %v6865 = vmul.f32 %v465, %v3092
  %v6866 = vmul.f32 %v466, %v3096
  %v6867 = vmul.f32 %v467, %v3100
  %v6868 = vmul.f32 %v468, %v3104
  %v6869 = vmul.f32 %v469, %v3108
  %v6870 = vmul.f32 %v470, %v3112
  %v6871 = vmul.f32 %v471, %v3116
  %v6872 = vmul.f32 %v472, %v3120
  %v6873 = vmul.f32 %v473, %v3124
  %v6874 = vmul.f32 %v474, %v3128
  %v6875 = vmul.f32 %v475, %v3132
  %v6876 = vmul.f32 %v476, %v3136
  %v6877 = vmul.f32 %v477, %v3140
  %v6878 = vmul.f32 %v478, %v3144
  %v6879 = vmul.f32 %v479, %v3148
  %v6880 = vmul.f32 %v480, %v3152
  %v6881 = vmul.f32 %v481, %v3156
  %v6882 = vmul.f32 %v482, %v3160
  %v6883 = vmul.f32 %v483, %v3164
  %v6884 = vmul.f32 %v484, %v3168
  %v6885 = vmul.f32 %v485, %v3172
  %v6886 = vmul.f32 %v486, %v3176
  %v6887 = vmul.f32 %v487, %v3180
  %v6888 = vmul.f32 %v488, %v3184
  %v6889 = vmul.f32 %v489, %v3188
  %v6890 = vmul.f32 %v490, %v3192
  %v6891 = vmul.f32 %v491, %v3196
  %v6892 = vmul.f32 %v492, %v3200
  %v6893 = vmul.f32 %v493, %v3204
  %v6894 = vmul.f32 %v494, %v3208
  %v6895 = vmul.f32 %v495, %v3212
  %v6896 = vmul.f32 %v496, %v3216
  %v6897 = vmul.f32 %v497, %v3220
  %v6898 = vmul.f32 %v498, %v3224
  %v6899 = vmul.f32 %v499, %v3228
  %v6900 = vmul.f32 %v500, %v3232
  %v6901 = vmul.f32 %v501, %v3236
  %v6902 = vmul.f32 %v502, %v3240
  %v6903 = vmul.f32 %v503, %v3244
  %v6904 = vmul.f32 %v504, %v3248
  %v6905 = vmul.f32 %v505, %v3252
  %v6906 = vmul.f32 %v506, %v3256
  %v6907 = vmul.f32 %v507, %v3260
  %v6908 = vmul.f32 %v508, %v3264
  %v6909 = vmul.f32 %v509, %v3268
  %v6910 = vmul.f32 %v510, %v3272
  %v6911 = vmul.f32 %v511, %v3276
  %v6912 = vmul.f32 %v512, %v3280
  %v6913 = vmul.f32 %v513, %v3284
  %v6914 = vmul.f32 %v514, %v3288
  %v6915 = vmul.f32 %v515, %v3292
  %v6916 = vmul.f32 %v516, %v3296
  %v6917 = vmul.f32 %v517, %v3300
  %v6918 = vmul.f32 %v518, %v3304
  %v6919 = vmul.f32 %v519, %v3308
  %v6920 = vmul.f32 %v520, %v3312
  %v6921 = vmul.f32 %v521, %v3316
  %v6922 = vmul.f32 %v522, %v3320
  %v6923 = vmul.f32 %v523, %v3324
  %v6924 = vmul.f32 %v524, %v3328
  %v6925 = vmul.f32 %v525, %v3332
  %v6926 = vmul.f32 %v526, %v3336
  %v6927 = vmul.f32 %v527, %v3340
  %v6928 = vmul.f32 %v528, %v3344
  %v6929 = vmul.f32 %v529, %v3348
  %v6930 = vmul.f32 %v530, %v3352
  %v6931 = vmul.f32 %v531, %v3356
  %v6932 = vmul.f32 %v532, %v3360
  %v6933 = vmul.f32 %v533, %v3364
  %v6934 = vmul.f32 %v534, %v3368
  %v6935 = vmul.f32 %v535, %v3372
  %v6936 = vmul.f32 %v536, %v3376
  %v6937 = vmul.f32 %v537, %v3380
  %v6938 = vmul.f32 %v538, %v3384
  %v6939 = vmul.f32 %v539, %v3388
  %v6940 = vmul.f32 %v540, %v3392
  %v6941 = vmul.f32 %v541, %v3396
  %v6942 = vmul.f32 %v542, %v3400
  %v6943 = vmul.f32 %v543, %v3404
  %v6944 = vmul.f32 %v544, %v3408
  %v6945 = vmul.f32 %v545, %v3412
  %v6946 = vmul.f32 %v546, %v3416
  %v6947 = vmul.f32 %v547, %v3420
  %v6948 = vmul.f32 %v548, %v3424
  %v6949 = vmul.f32 %v549, %v3428
  %v6950 = vmul.f32 %v550, %v3432
  %v6951 = vmul.f32 %v551, %v3436
  %v6952 = vmul.f32 %v552, %v3440
  %v6953 = vmul.f32 %v553, %v3444
  %v6954 = vmul.f32 %v554, %v3448
  %v6955 = vmul.f32 %v555, %v3452
  %v6956 = vmul.f32 %v556, %v3456
  %v6957 = vmul.f32 %v557, %v3460
  %v6958 = vmul.f32 %v558, %v3464
  %v6959 = vmul.f32 %v559, %v3468
  %v6960 = vmul.f32 %v560, %v3472
  %v6961 = vmul.f32 %v561, %v3476
  %v6962 = vmul.f32 %v562, %v3480
  %v6963 = vmul.f32 %v563, %v3484
  %v6964 = vmul.f32 %v564, %v3488
  %v6965 = vmul.f32 %v565, %v3492
  %v6966 = vmul.f32 %v566, %v3496
  %v6967 = vmul.f32 %v567, %v3500
  %v6968 = vmul.f32 %v568, %v3504
  %v6969 = vmul.f32 %v569, %v3508
  %v6970 = vmul.f32 %v570, %v3512
  %v6971 = vmul.f32 %v571, %v3516
  %v6972 = vmul.f32 %v572, %v3520
  %v6973 = vmul.f32 %v573, %v3524
  %v6974 = vmul.f32 %v574, %v3528
  %v6975 = vmul.f32 %v575, %v3532
  %v6976 = vmul.f32 %v576, %v3536
  %v6977 = vmul.f32 %v577, %v3540
  %v6978 = vmul.f32 %v578, %v3544
  %v6979 = vmul.f32 %v579, %v3548
  %v6980 = vmul.f32 %v580, %v3552
  %v6981 = vmul.f32 %v581, %v3556
  %v6982 = vmul.f32 %v582, %v3560
  %v6983 = vmul.f32 %v583, %v3564
  %v6984 = vmul.f32 %v584, %v3568
  %v6985 = vmul.f32 %v585, %v3572
  %v6986 = vmul.f32 %v586, %v3576
  %v6987 = vmul.f32 %v587, %v3580
  %v6988 = vmul.f32 %v588, %v3584
  %v6989 = vmul.f32 %v589, %v3588
  %v6990 = vmul.f32 %v590, %v3592
  %v6991 = vmul.f32 %v591, %v3596
  %v6992 = vmul.f32 %v592, %v3600
  %v6993 = vmul.f32 %v593, %v3604
  %v6994 = vmul.f32 %v594, %v3608
  %v6995 = vmul.f32 %v595, %v3612
  %v6996 = vmul.f32 %v596, %v3616
  %v6997 = vmul.f32 %v597, %v3620
  %v6998 = vmul.f32 %v598, %v3624
  %v6999 = vmul.f32 %v599, %v3628
  %v7000 = vmul.f32 %v600, %v3632
  %v7001 = vmul.f32 %v601, %v3636
  %v7002 = vmul.f32 %v602, %v3640
  %v7003 = vmul.f32 %v603, %v3644
  %v7004 = vmul.f32 %v604, %v3648
  %v7005 = vmul.f32 %v605, %v3652
  %v7006 = vmul.f32 %v606, %v3656
  %v7007 = vmul.f32 %v607, %v3660
  %v7008 = vmul.f32 %v608, %v3664
  %v7009 = vmul.f32 %v609, %v3668
  %v7010 = vmul.f32 %v610, %v3672
  %v7011 = vmul.f32 %v611, %v3676
  %v7012 = vmul.f32 %v612, %v3680
  %v7013 = vmul.f32 %v613, %v3684
  %v7014 = vmul.f32 %v614, %v3688
  %v7015 = vmul.f32 %v615, %v3692
  %v7016 = vmul.f32 %v616, %v3696
  %v7017 = vmul.f32 %v617, %v3700
  %v7018 = vmul.f32 %v618, %v3704
  %v7019 = vmul.f32 %v619, %v3708
  %v7020 = vmul.f32 %v620, %v3712
  %v7021 = vmul.f32 %v621, %v3716
  %v7022 = vmul.f32 %v622, %v3720
  %v7023 = vmul.f32 %v623, %v3724
  %v7024 = vmul.f32 %v624, %v3728
  %v7025 = vmul.f32 %v625, %v3732
  %v7026 = vmul.f32 %v626, %v3736
  %v7027 = vmul.f32 %v627, %v3740
  %v7028 = vmul.f32 %v628, %v3744
  %v7029 = vmul.f32 %v629, %v3748
  %v7030 = vmul.f32 %v630, %v3752
  %v7031 = vmul.f32 %v631, %v3756
  %v7032 = vmul.f32 %v632, %v3760
  %v7033 = vmul.f32 %v633, %v3764
  %v7034 = vmul.f32 %v634, %v3768
  %v7035 = vmul.f32 %v635, %v3772
  %v7036 = vmul.f32 %v636, %v3776
  %v7037 = vmul.f32 %v637, %v3780
  %v7038 = vmul.f32 %v638, %v3784
  %v7039 = vmul.f32 %v639, %v3788
  %v7040 = vmul.f32 %v640, %v3792
  %v7041 = vmul.f32 %v641, %v3796
  %v7042 = vmul.f32 %v642, %v3800
  %v7043 = vmul.f32 %v643, %v3804
  %v7044 = vmul.f32 %v644, %v3808
  %v7045 = vmul.f32 %v645, %v3812
  %v7046 = vmul.f32 %v646, %v3816
  %v7047 = vmul.f32 %v647, %v3820
  %v7048 = vmul.f32 %v648, %v3824
  %v7049 = vmul.f32 %v649, %v3828
  %v7050 = vmul.f32 %v650, %v3832
  %v7051 = vmul.f32 %v651, %v3836
  %v7052 = vmul.f32 %v652, %v3840
  %v7053 = vmul.f32 %v653, %v3844
  %v7054 = vmul.f32 %v654, %v3848
  %v7055 = vmul.f32 %v655, %v3852
  %v7056 = vmul.f32 %v656, %v3856
  %v7057 = vmul.f32 %v657, %v3860
  %v7058 = vmul.f32 %v658, %v3864
  %v7059 = vmul.f32 %v659, %v3868
  %v7060 = vmul.f32 %v660, %v3872
  %v7061 = vmul.f32 %v661, %v3876
  %v7062 = vmul.f32 %v662, %v3880
  %v7063 = vmul.f32 %v663, %v3884
  %v7064 = vmul.f32 %v664, %v3888
  %v7065 = vmul.f32 %v665, %v3892
  %v7066 = vmul.f32 %v666, %v3896
  %v7067 = vmul.f32 %v667, %v3900
  %v7068 = vmul.f32 %v668, %v3904
  %v7069 = vmul.f32 %v669, %v3908
  %v7070 = vmul.f32 %v670, %v3912
  %v7071 = vmul.f32 %v671, %v3916
  %v7072 = vmul.f32 %v672, %v3920
  %v7073 = vmul.f32 %v673, %v3924
  %v7074 = vmul.f32 %v674, %v3928
  %v7075 = vmul.f32 %v675, %v3932
  %v7076 = vmul.f32 %v676, %v3936
  %v7077 = vmul.f32 %v677, %v3940
  %v7078 = vmul.f32 %v678, %v3944
  %v7079 = vmul.f32 %v679, %v3948
  %v7080 = vmul.f32 %v680, %v3952
  %v7081 = vmul.f32 %v681, %v3956
  %v7082 = vmul.f32 %v682, %v3960
  %v7083 = vmul.f32 %v683, %v3964
  %v7084 = vmul.f32 %v684, %v3968
  %v7085 = vmul.f32 %v685, %v3972
  %v7086 = vmul.f32 %v686, %v3976
  %v7087 = vmul.f32 %v687, %v3980
  %v7088 = vmul.f32 %v688, %v3984
  %v7089 = vmul.f32 %v689, %v3988
  %v7090 = vmul.f32 %v690, %v3992
  %v7091 = vmul.f32 %v691, %v3996
  %v7092 = vmul.f32 %v692, %v4000
  %v7093 = vmul.f32 %v693, %v4004
  %v7094 = vmul.f32 %v694, %v4008
  %v7095 = vmul.f32 %v695, %v4012
  %v7096 = vmul.f32 %v696, %v4016
  %v7097 = vmul.f32 %v697, %v4020
  %v7098 = vmul.f32 %v698, %v4024
  %v7099 = vmul.f32 %v699, %v4028
  %v7100 = vmul.f32 %v700, %v4032
  %v7101 = vmul.f32 %v701, %v4036
  %v7102 = vmul.f32 %v702, %v4040
  %v7103 = vmul.f32 %v703, %v4044
  %v7104 = vmul.f32 %v704, %v4048
  %v7105 = vmul.f32 %v705, %v4052
  %v7106 = vmul.f32 %v706, %v4056
  %v7107 = vmul.f32 %v707, %v4060
  %v7108 = vmul.f32 %v708, %v4064
  %v7109 = vmul.f32 %v709, %v4068
  %v7110 = vmul.f32 %v710, %v4072
  %v7111 = vmul.f32 %v711, %v4076
  %v7112 = vmul.f32 %v712, %v4080
  %v7113 = vmul.f32 %v713, %v4084
  %v7114 = vmul.f32 %v714, %v4088
  %v7115 = vmul.f32 %v715, %v4092
  %v7116 = vmul.f32 %v716, %v4096
  %v7117 = vmul.f32 %v717, %v4100
  %v7118 = vmul.f32 %v718, %v4104
  %v7119 = vmul.f32 %v719, %v4108
  %v7120 = vmul.f32 %v720, %v4112
  %v7121 = vmul.f32 %v721, %v4116
  %v7122 = vmul.f32 %v722, %v4120
  %v7123 = vmul.f32 %v723, %v4124
  %v7124 = vmul.f32 %v724, %v4128
  %v7125 = vmul.f32 %v725, %v4132
  %v7126 = vmul.f32 %v726, %v4136
  %v7127 = vmul.f32 %v727, %v4140
  %v7128 = vmul.f32 %v728, %v4144
  %v7129 = vmul.f32 %v729, %v4148
  %v7130 = vmul.f32 %v730, %v4152
  %v7131 = vmul.f32 %v731, %v4156
  %v7132 = vmul.f32 %v732, %v4160
  %v7133 = vmul.f32 %v733, %v4164
  %v7134 = vmul.f32 %v734, %v4168
  %v7135 = vmul.f32 %v735, %v4172
  %v7136 = vmul.f32 %v736, %v4176
  %v7137 = vmul.f32 %v737, %v4180
  %v7138 = vmul.f32 %v738, %v4184
  %v7139 = vmul.f32 %v739, %v4188
  %v7140 = vmul.f32 %v740, %v4192
  %v7141 = vmul.f32 %v741, %v4196
  %v7142 = vmul.f32 %v742, %v4200
  %v7143 = vmul.f32 %v743, %v4204
  %v7144 = vmul.f32 %v744, %v4208
  %v7145 = vmul.f32 %v745, %v4212
  %v7146 = vmul.f32 %v746, %v4216
  %v7147 = vmul.f32 %v747, %v4220
  %v7148 = vmul.f32 %v748, %v4224
  %v7149 = vmul.f32 %v749, %v4228
  %v7150 = vmul.f32 %v750, %v4232
  %v7151 = vmul.f32 %v751, %v4236
  %v7152 = vmul.f32 %v752, %v4240
  %v7153 = vmul.f32 %v753, %v4244
  %v7154 = vmul.f32 %v754, %v4248
  %v7155 = vmul.f32 %v755, %v4252
  %v7156 = vmul.f32 %v756, %v4256
  %v7157 = vmul.f32 %v757, %v4260
  %v7158 = vmul.f32 %v758, %v4264
  %v7159 = vmul.f32 %v759, %v4268
  %v7160 = vmul.f32 %v760, %v4272
  %v7161 = vmul.f32 %v761, %v4276
  %v7162 = vmul.f32 %v762, %v4280
  %v7163 = vmul.f32 %v763, %v4284
  %v7164 = vmul.f32 %v764, %v4288
  %v7165 = vmul.f32 %v765, %v4292
  %v7166 = vmul.f32 %v766, %v4296
  %v7167 = vmul.f32 %v767, %v4300
  %v7168 = vmul.f32 %v768, %v4304
  %v7169 = vmul.f32 %v769, %v4308
  %v7170 = vmul.f32 %v770, %v4312
  %v7171 = vmul.f32 %v771, %v4316
  %v7172 = vmul.f32 %v772, %v4320
  %v7173 = vmul.f32 %v773, %v4324
  %v7174 = vmul.f32 %v774, %v4328
  %v7175 = vmul.f32 %v775, %v4332
  %v7176 = vmul.f32 %v776, %v4336
  %v7177 = vmul.f32 %v777, %v4340
  %v7178 = vmul.f32 %v778, %v4344
  %v7179 = vmul.f32 %v779, %v4348
  %v7180 = vmul.f32 %v780, %v4352
  %v7181 = vmul.f32 %v781, %v4356
  %v7182 = vmul.f32 %v782, %v4360
  %v7183 = vmul.f32 %v783, %v4364
  %v7184 = vmul.f32 %v784, %v4368
  %v7185 = vmul.f32 %v785, %v4372
  %v7186 = vmul.f32 %v786, %v4376
  %v7187 = vmul.f32 %v787, %v4380
  %v7188 = vmul.f32 %v788, %v4384
  %v7189 = vmul.f32 %v789, %v4388
  %v7190 = vmul.f32 %v790, %v4392
  %v7191 = vmul.f32 %v791, %v4396
  %v7192 = vmul.f32 %v792, %v4400
  %v7193 = vmul.f32 %v793, %v4404
  %v7194 = vmul.f32 %v794, %v4408
  %v7195 = vmul.f32 %v795, %v4412
  %v7196 = vmul.f32 %v796, %v4416
  %v7197 = vmul.f32 %v797, %v4420
  %v7198 = vmul.f32 %v798, %v4424
  %v7199 = vmul.f32 %v799, %v4428
  %v7200 = vmul.f32 %v800, %v4432
  %v7201 = vmul.f32 %v801, %v4436
  %v7202 = vmul.f32 %v802, %v4440
  %v7203 = vmul.f32 %v803, %v4444
  %v7204 = vmul.f32 %v804, %v4448
  %v7205 = vmul.f32 %v805, %v4452
  %v7206 = vmul.f32 %v806, %v4456
  %v7207 = vmul.f32 %v807, %v4460
  %v7208 = vmul.f32 %v808, %v4464
  %v7209 = vmul.f32 %v809, %v4468
  %v7210 = vmul.f32 %v810, %v4472
  %v7211 = vmul.f32 %v811, %v4476
  %v7212 = vmul.f32 %v812, %v4480
  %v7213 = vmul.f32 %v813, %v4484
  %v7214 = vmul.f32 %v814, %v4488
  %v7215 = vmul.f32 %v815, %v4492
  %v7216 = vmul.f32 %v816, %v4496
  %v7217 = vmul.f32 %v817, %v4500
  %v7218 = vmul.f32 %v818, %v4504
  %v7219 = vmul.f32 %v819, %v4508
  %v7220 = vmul.f32 %v820, %v4512
  %v7221 = vmul.f32 %v821, %v4516
  %v7222 = vmul.f32 %v822, %v4520
  %v7223 = vmul.f32 %v823, %v4524
  %v7224 = vmul.f32 %v824, %v4528
  %v7225 = vmul.f32 %v825, %v4532
  %v7226 = vmul.f32 %v826, %v4536
  %v7227 = vmul.f32 %v827, %v4540
  %v7228 = vmul.f32 %v828, %v4544
  %v7229 = vmul.f32 %v829, %v4548
  %v7230 = vmul.f32 %v830, %v4552
  %v7231 = vmul.f32 %v831, %v4556
  %v7232 = vmul.f32 %v832, %v4560
  %v7233 = vmul.f32 %v833, %v4564
  %v7234 = vmul.f32 %v834, %v4568
  %v7235 = vmul.f32 %v835, %v4572
  %v7236 = vmul.f32 %v836, %v4576
  %v7237 = vmul.f32 %v837, %v4580
  %v7238 = vmul.f32 %v838, %v4584
  %v7239 = vmul.f32 %v839, %v4588
  %v7240 = vmul.f32 %v840, %v4592
  %v7241 = vmul.f32 %v841, %v4596
  %v7242 = vmul.f32 %v842, %v4600
  %v7243 = vmul.f32 %v843, %v4604
  %v7244 = vmul.f32 %v844, %v4608
  %v7245 = vmul.f32 %v845, %v4612
  %v7246 = vmul.f32 %v846, %v4616
  %v7247 = vmul.f32 %v847, %v4620
  %v7248 = vmul.f32 %v848, %v4624
  %v7249 = vmul.f32 %v849, %v4628
  %v7250 = vmul.f32 %v850, %v4632
  %v7251 = vmul.f32 %v851, %v4636
  %v7252 = vmul.f32 %v852, %v4640
  %v7253 = vmul.f32 %v853, %v4644
  %v7254 = vmul.f32 %v854, %v4648
  %v7255 = vmul.f32 %v855, %v4652
  %v7256 = vmul.f32 %v856, %v4656
  %v7257 = vmul.f32 %v857, %v4660
  %v7258 = vmul.f32 %v858, %v4664
  %v7259 = vmul.f32 %v859, %v4668
  %v7260 = vmul.f32 %v860, %v4672
  %v7261 = vmul.f32 %v861, %v4676
  %v7262 = vmul.f32 %v862, %v4680
  %v7263 = vmul.f32 %v863, %v4684
  %v7264 = vmul.f32 %v864, %v4688
  %v7265 = vmul.f32 %v865, %v4692
  %v7266 = vmul.f32 %v866, %v4696
  %v7267 = vmul.f32 %v867, %v4700
  %v7268 = vmul.f32 %v868, %v4704
  %v7269 = vmul.f32 %v869, %v4708
  %v7270 = vmul.f32 %v870, %v4712
  %v7271 = vmul.f32 %v871, %v4716
  %v7272 = vmul.f32 %v872, %v4720
  %v7273 = vmul.f32 %v873, %v4724
  %v7274 = vmul.f32 %v874, %v4728
  %v7275 = vmul.f32 %v875, %v4732
  %v7276 = vmul.f32 %v876, %v4736
  %v7277 = vmul.f32 %v877, %v4740
  %v7278 = vmul.f32 %v878, %v4744
  %v7279 = vmul.f32 %v879, %v4748
  %v7280 = vmul.f32 %v880, %v4752
  %v7281 = vmul.f32 %v881, %v4756
  %v7282 = vmul.f32 %v882, %v4760
  %v7283 = vmul.f32 %v883, %v4764
  %v7284 = vmul.f32 %v884, %v4768
  %v7285 = vmul.f32 %v885, %v4772
  %v7286 = vmul.f32 %v886, %v4776
  %v7287 = vmul.f32 %v887, %v4780
  %v7288 = vmul.f32 %v888, %v4784
  %v7289 = vmul.f32 %v889, %v4788
  %v7290 = vmul.f32 %v890, %v4792
  %v7291 = vmul.f32 %v891, %v4796
  %v7292 = vmul.f32 %v892, %v4800
  %v7293 = vmul.f32 %v893, %v4804
  %v7294 = vmul.f32 %v894, %v4808
  %v7295 = vmul.f32 %v895, %v4812
  %v7296 = vmul.f32 %v896, %v4816
  %v7297 = vmul.f32 %v897, %v4820
  %v7298 = vmul.f32 %v898, %v4824
  %v7299 = vmul.f32 %v899, %v4828
  %v7300 = vmul.f32 %v900, %v4832
  %v7301 = vmul.f32 %v901, %v4836
  %v7302 = vmul.f32 %v902, %v4840
  %v7303 = vmul.f32 %v903, %v4844
  %v7304 = vmul.f32 %v904, %v4848
  %v7305 = vmul.f32 %v905, %v4852
  %v7306 = vmul.f32 %v906, %v4856
  %v7307 = vmul.f32 %v907, %v4860
  %v7308 = vmul.f32 %v908, %v4864
  %v7309 = vmul.f32 %v909, %v4868
  %v7310 = vmul.f32 %v910, %v4872
  %v7311 = vmul.f32 %v911, %v4876
  %v7312 = vmul.f32 %v912, %v4880
  %v7313 = vmul.f32 %v913, %v4884
  %v7314 = vmul.f32 %v914, %v4888
  %v7315 = vmul.f32 %v915, %v4892
  %v7316 = vmul.f32 %v916, %v4896
  %v7317 = vmul.f32 %v917, %v4900
  %v7318 = vmul.f32 %v918, %v4904
  %v7319 = vmul.f32 %v919, %v4908
  %v7320 = vmul.f32 %v920, %v4912
  %v7321 = vmul.f32 %v921, %v4916
  %v7322 = vmul.f32 %v922, %v4920
  %v7323 = vmul.f32 %v923, %v4924
  %v7324 = vmul.f32 %v924, %v4928
  %v7325 = vmul.f32 %v925, %v4932
  %v7326 = vmul.f32 %v926, %v4936
  %v7327 = vmul.f32 %v927, %v4940
  %v7328 = vmul.f32 %v928, %v4944
  %v7329 = vmul.f32 %v929, %v4948
  %v7330 = vmul.f32 %v930, %v4952
  %v7331 = vmul.f32 %v931, %v4956
  %v7332 = vmul.f32 %v932, %v4960
  %v7333 = vmul.f32 %v933, %v4964
  %v7334 = vmul.f32 %v934, %v4968
  %v7335 = vmul.f32 %v935, %v4972
  %v7336 = vmul.f32 %v936, %v4976
  %v7337 = vmul.f32 %v937, %v4980
  %v7338 = vmul.f32 %v938, %v4984
  %v7339 = vmul.f32 %v939, %v4988
  %v7340 = vmul.f32 %v940, %v4992
  %v7341 = vmul.f32 %v941, %v4996
  %v7342 = vmul.f32 %v942, %v5000
  %v7343 = vmul.f32 %v943, %v5004
  %v7344 = vmul.f32 %v944, %v5008
  %v7345 = vmul.f32 %v945, %v5012
  %v7346 = vmul.f32 %v946, %v5016
  %v7347 = vmul.f32 %v947, %v5020
  %v7348 = vmul.f32 %v948, %v5024
  %v7349 = vmul.f32 %v949, %v5028
  %v7350 = vmul.f32 %v950, %v5032
  %v7351 = vmul.f32 %v951, %v5036
  %v7352 = vmul.f32 %v952, %v5040
  %v7353 = vmul.f32 %v953, %v5044
  %v7354 = vmul.f32 %v954, %v5048
  %v7355 = vmul.f32 %v955, %v5052
  %v7356 = vmul.f32 %v956, %v5056
  %v7357 = vmul.f32 %v957, %v5060
  %v7358 = vmul.f32 %v958, %v5064
  %v7359 = vmul.f32 %v959, %v5068
  %v7360 = vmul.f32 %v960, %v5072
  %v7361 = vmul.f32 %v961, %v5076
  %v7362 = vmul.f32 %v962, %v5080
  %v7363 = vmul.f32 %v963, %v5084
  %v7364 = vmul.f32 %v964, %v5088
  %v7365 = vmul.f32 %v965, %v5092
  %v7366 = vmul.f32 %v966, %v5096
  %v7367 = vmul.f32 %v967, %v5100
  %v7368 = vmul.f32 %v968, %v5104
  %v7369 = vmul.f32 %v969, %v5108
  %v7370 = vmul.f32 %v970, %v5112
  %v7371 = vmul.f32 %v971, %v5116
  %v7372 = vmul.f32 %v972, %v5120
  %v7373 = vmul.f32 %v973, %v5124
  %v7374 = vmul.f32 %v974, %v5128
  %v7375 = vmul.f32 %v975, %v5132
  %v7376 = vmul.f32 %v976, %v5136
  %v7377 = vmul.f32 %v977, %v5140
  %v7378 = vmul.f32 %v978, %v5144
  %v7379 = vmul.f32 %v979, %v5148
  %v7380 = vmul.f32 %v980, %v5152
  %v7381 = vmul.f32 %v981, %v5156
  %v7382 = vmul.f32 %v982, %v5160
  %v7383 = vmul.f32 %v983, %v5164
  %v7384 = vmul.f32 %v984, %v5168
  %v7385 = vmul.f32 %v985, %v5172
  %v7386 = vmul.f32 %v986, %v5176
  %v7387 = vmul.f32 %v987, %v5180
  %v7388 = vmul.f32 %v988, %v5184
  %v7389 = vmul.f32 %v989, %v5188
  %v7390 = vmul.f32 %v990, %v5192
  %v7391 = vmul.f32 %v991, %v5196
  %v7392 = vmul.f32 %v992, %v5200
  %v7393 = vmul.f32 %v993, %v5204
  %v7394 = vmul.f32 %v994, %v5208
  %v7395 = vmul.f32 %v995, %v5212
  %v7396 = vmul.f32 %v996, %v5216
  %v7397 = vmul.f32 %v997, %v5220
  %v7398 = vmul.f32 %v998, %v5224
  %v7399 = vmul.f32 %v999, %v5228
  %v7400 = vmul.f32 %v1000, %v5232
  %v7401 = vmul.f32 %v1001, %v5236
  %v7402 = vmul.f32 %v1002, %v5240
  %v7403 = vmul.f32 %v1003, %v5244
  %v7404 = vmul.f32 %v1004, %v5248
  %v7405 = vmul.f32 %v1005, %v5252
  %v7406 = vmul.f32 %v1006, %v5256
  %v7407 = vmul.f32 %v1007, %v5260
  %v7408 = vmul.f32 %v1008, %v5264
  %v7409 = vmul.f32 %v1009, %v5268
  %v7410 = vmul.f32 %v1010, %v5272
  %v7411 = vmul.f32 %v1011, %v5276
  %v7412 = vmul.f32 %v1012, %v5280
  %v7413 = vmul.f32 %v1013, %v5284
  %v7414 = vmul.f32 %v1014, %v5288
  %v7415 = vmul.f32 %v1015, %v5292
  %v7416 = vmul.f32 %v1016, %v5296
  %v7417 = vmul.f32 %v1017, %v5300
  %v7418 = vmul.f32 %v1018, %v5304
  %v7419 = vmul.f32 %v1019, %v5308
  %v7420 = vmul.f32 %v1020, %v5312
  %v7421 = vmul.f32 %v1021, %v5316
  %v7422 = vmul.f32 %v1022, %v5320
  %v7423 = vmul.f32 %v1023, %v5324
  %v7424 = vmul.f32 %v1024, %v5328
  %v7425 = vmul.f32 %v1025, %v5332
  %v7426 = vmul.f32 %v1026, %v5336
  %v7427 = vmul.f32 %v1027, %v5340
  %v7428 = vmul.f32 %v1028, %v5344
  %v7429 = vmul.f32 %v1029, %v5348
  %v7430 = vmul.f32 %v1030, %v5352
  %v7431 = vmul.f32 %v1031, %v5356
  %v7432 = vmul.f32 %v1032, %v5360
  %v7433 = vmul.f32 %v1033, %v5364
  %v7434 = vmul.f32 %v1034, %v5368
  %v7435 = vmul.f32 %v1035, %v5372
  %v7436 = vmul.f32 %v1036, %v5376
  %v7437 = vmul.f32 %v1037, %v5380
  %v7438 = vmul.f32 %v1038, %v5384
  %v7439 = vmul.f32 %v1039, %v5388
  %v7440 = vmul.f32 %v1040, %v5392
  %v7441 = vadd.f32 %v6417, %v6418
  %v7442 = vadd.f32 %v7441, %v6419
  %v7443 = vadd.f32 %v7442, %v6420
  %v7444 = vadd.f32 %v7443, %v6421
  %v7445 = vadd.f32 %v7444, %v6422
  %v7446 = vadd.f32 %v7445, %v6423
  %v7447 = vadd.f32 %v7446, %v6424
  %v7448 = vadd.f32 %v7447, %v6425
  %v7449 = vadd.f32 %v7448, %v6426
  %v7450 = vadd.f32 %v7449, %v6427
  %v7451 = vadd.f32 %v7450, %v6428
  %v7452 = vadd.f32 %v7451, %v6429
  %v7453 = vadd.f32 %v7452, %v6430
  %v7454 = vadd.f32 %v7453, %v6431
  %v7455 = vadd.f32 %v7454, %v6432
  %v7456 = vadd.f32 %v7455, %v6433
  %v7457 = vadd.f32 %v7456, %v6434
  %v7458 = vadd.f32 %v7457, %v6435
  %v7459 = vadd.f32 %v7458, %v6436
  %v7460 = vadd.f32 %v7459, %v6437
  %v7461 = vadd.f32 %v7460, %v6438
  %v7462 = vadd.f32 %v7461, %v6439
  %v7463 = vadd.f32 %v7462, %v6440
  %v7464 = vadd.f32 %v7463, %v6441
  %v7465 = vadd.f32 %v7464, %v6442
  %v7466 = vadd.f32 %v7465, %v6443
  %v7467 = vadd.f32 %v7466, %v6444
  %v7468 = vadd.f32 %v7467, %v6445
  %v7469 = vadd.f32 %v7468, %v6446
  %v7470 = vadd.f32 %v7469, %v6447
  %v7471 = vadd.f32 %v7470, %v6448
  %v7472 = vadd.f32 %v7471, %v6449
  %v7473 = vadd.f32 %v7472, %v6450
  %v7474 = vadd.f32 %v7473, %v6451
  %v7475 = vadd.f32 %v7474, %v6452
  %v7476 = vadd.f32 %v7475, %v6453
  %v7477 = vadd.f32 %v7476, %v6454
  %v7478 = vadd.f32 %v7477, %v6455
  %v7479 = vadd.f32 %v7478, %v6456
  %v7480 = vadd.f32 %v7479, %v6457
  %v7481 = vadd.f32 %v7480, %v6458
  %v7482 = vadd.f32 %v7481, %v6459
  %v7483 = vadd.f32 %v7482, %v6460
  %v7484 = vadd.f32 %v7483, %v6461
  %v7485 = vadd.f32 %v7484, %v6462
  %v7486 = vadd.f32 %v7485, %v6463
  %v7487 = vadd.f32 %v7486, %v6464
  %v7488 = vadd.f32 %v7487, %v6465
  %v7489 = vadd.f32 %v7488, %v6466
  %v7490 = vadd.f32 %v7489, %v6467
  %v7491 = vadd.f32 %v7490, %v6468
  %v7492 = vadd.f32 %v7491, %v6469
  %v7493 = vadd.f32 %v7492, %v6470
  %v7494 = vadd.f32 %v7493, %v6471
  %v7495 = vadd.f32 %v7494, %v6472
  %v7496 = vadd.f32 %v7495, %v6473
  %v7497 = vadd.f32 %v7496, %v6474
  %v7498 = vadd.f32 %v7497, %v6475
  %v7499 = vadd.f32 %v7498, %v6476
  %v7500 = vadd.f32 %v7499, %v6477
  %v7501 = vadd.f32 %v7500, %v6478
  %v7502 = vadd.f32 %v7501, %v6479
  %v7503 = vadd.f32 %v7502, %v6480
  %v7504 = vadd.f32 %v7503, %v6481
  %v7505 = vadd.f32 %v7504, %v6482
  %v7506 = vadd.f32 %v7505, %v6483
  %v7507 = vadd.f32 %v7506, %v6484
  %v7508 = vadd.f32 %v7507, %v6485
  %v7509 = vadd.f32 %v7508, %v6486
  %v7510 = vadd.f32 %v7509, %v6487
  %v7511 = vadd.f32 %v7510, %v6488
  %v7512 = vadd.f32 %v7511, %v6489
  %v7513 = vadd.f32 %v7512, %v6490
  %v7514 = vadd.f32 %v7513, %v6491
  %v7515 = vadd.f32 %v7514, %v6492
  %v7516 = vadd.f32 %v7515, %v6493
  %v7517 = vadd.f32 %v7516, %v6494
  %v7518 = vadd.f32 %v7517, %v6495
  %v7519 = vadd.f32 %v7518, %v6496
  %v7520 = vadd.f32 %v7519, %v6497
  %v7521 = vadd.f32 %v7520, %v6498
  %v7522 = vadd.f32 %v7521, %v6499
  %v7523 = vadd.f32 %v7522, %v6500
  %v7524 = vadd.f32 %v7523, %v6501
  %v7525 = vadd.f32 %v7524, %v6502
  %v7526 = vadd.f32 %v7525, %v6503
  %v7527 = vadd.f32 %v7526, %v6504
  %v7528 = vadd.f32 %v7527, %v6505
  %v7529 = vadd.f32 %v7528, %v6506
  %v7530 = vadd.f32 %v7529, %v6507
  %v7531 = vadd.f32 %v7530, %v6508
  %v7532 = vadd.f32 %v7531, %v6509
  %v7533 = vadd.f32 %v7532, %v6510
  %v7534 = vadd.f32 %v7533, %v6511
  %v7535 = vadd.f32 %v7534, %v6512
  %v7536 = vadd.f32 %v7535, %v6513
  %v7537 = vadd.f32 %v7536, %v6514
  %v7538 = vadd.f32 %v7537, %v6515
  %v7539 = vadd.f32 %v7538, %v6516
  %v7540 = vadd.f32 %v7539, %v6517
  %v7541 = vadd.f32 %v7540, %v6518
  %v7542 = vadd.f32 %v7541, %v6519
  %v7543 = vadd.f32 %v7542, %v6520
  %v7544 = vadd.f32 %v7543, %v6521
  %v7545 = vadd.f32 %v7544, %v6522
  %v7546 = vadd.f32 %v7545, %v6523
  %v7547 = vadd.f32 %v7546, %v6524
  %v7548 = vadd.f32 %v7547, %v6525
  %v7549 = vadd.f32 %v7548, %v6526
  %v7550 = vadd.f32 %v7549, %v6527
  %v7551 = vadd.f32 %v7550, %v6528
  %v7552 = vadd.f32 %v7551, %v6529
  %v7553 = vadd.f32 %v7552, %v6530
  %v7554 = vadd.f32 %v7553, %v6531
  %v7555 = vadd.f32 %v7554, %v6532
  %v7556 = vadd.f32 %v7555, %v6533
  %v7557 = vadd.f32 %v7556, %v6534
  %v7558 = vadd.f32 %v7557, %v6535
  %v7559 = vadd.f32 %v7558, %v6536
  %v7560 = vadd.f32 %v7559, %v6537
  %v7561 = vadd.f32 %v7560, %v6538
  %v7562 = vadd.f32 %v7561, %v6539
  %v7563 = vadd.f32 %v7562, %v6540
  %v7564 = vadd.f32 %v7563, %v6541
  %v7565 = vadd.f32 %v7564, %v6542
  %v7566 = vadd.f32 %v7565, %v6543
  %v7567 = vadd.f32 %v7566, %v6544
  %v7568 = vadd.f32 %v7567, %v6545
  %v7569 = vadd.f32 %v7568, %v6546
  %v7570 = vadd.f32 %v7569, %v6547
  %v7571 = vadd.f32 %v7570, %v6548
  %v7572 = vadd.f32 %v7571, %v6549
  %v7573 = vadd.f32 %v7572, %v6550
  %v7574 = vadd.f32 %v7573, %v6551
  %v7575 = vadd.f32 %v7574, %v6552
  %v7576 = vadd.f32 %v7575, %v6553
  %v7577 = vadd.f32 %v7576, %v6554
  %v7578 = vadd.f32 %v7577, %v6555
  %v7579 = vadd.f32 %v7578, %v6556
  %v7580 = vadd.f32 %v7579, %v6557
  %v7581 = vadd.f32 %v7580, %v6558
  %v7582 = vadd.f32 %v7581, %v6559
  %v7583 = vadd.f32 %v7582, %v6560
  %v7584 = vadd.f32 %v7583, %v6561
  %v7585 = vadd.f32 %v7584, %v6562
  %v7586 = vadd.f32 %v7585, %v6563
  %v7587 = vadd.f32 %v7586, %v6564
  %v7588 = vadd.f32 %v7587, %v6565
  %v7589 = vadd.f32 %v7588, %v6566
  %v7590 = vadd.f32 %v7589, %v6567
  %v7591 = vadd.f32 %v7590, %v6568
  %v7592 = vadd.f32 %v7591, %v6569
  %v7593 = vadd.f32 %v7592, %v6570
  %v7594 = vadd.f32 %v7593, %v6571
  %v7595 = vadd.f32 %v7594, %v6572
  %v7596 = vadd.f32 %v7595, %v6573
  %v7597 = vadd.f32 %v7596, %v6574
  %v7598 = vadd.f32 %v7597, %v6575
  %v7599 = vadd.f32 %v7598, %v6576
  %v7600 = vadd.f32 %v7599, %v6577
  %v7601 = vadd.f32 %v7600, %v6578
  %v7602 = vadd.f32 %v7601, %v6579
  %v7603 = vadd.f32 %v7602, %v6580
  %v7604 = vadd.f32 %v7603, %v6581
  %v7605 = vadd.f32 %v7604, %v6582
  %v7606 = vadd.f32 %v7605, %v6583
  %v7607 = vadd.f32 %v7606, %v6584
  %v7608 = vadd.f32 %v7607, %v6585
  %v7609 = vadd.f32 %v7608, %v6586
  %v7610 = vadd.f32 %v7609, %v6587
  %v7611 = vadd.f32 %v7610, %v6588
  %v7612 = vadd.f32 %v7611, %v6589
  %v7613 = vadd.f32 %v7612, %v6590
  %v7614 = vadd.f32 %v7613, %v6591
  %v7615 = vadd.f32 %v7614, %v6592
  %v7616 = vadd.f32 %v7615, %v6593
  %v7617 = vadd.f32 %v7616, %v6594
  %v7618 = vadd.f32 %v7617, %v6595
  %v7619 = vadd.f32 %v7618, %v6596
  %v7620 = vadd.f32 %v7619, %v6597
  %v7621 = vadd.f32 %v7620, %v6598
  %v7622 = vadd.f32 %v7621, %v6599
  %v7623 = vadd.f32 %v7622, %v6600
  %v7624 = vadd.f32 %v7623, %v6601
  %v7625 = vadd.f32 %v7624, %v6602
  %v7626 = vadd.f32 %v7625, %v6603
  %v7627 = vadd.f32 %v7626, %v6604
  %v7628 = vadd.f32 %v7627, %v6605
  %v7629 = vadd.f32 %v7628, %v6606
  %v7630 = vadd.f32 %v7629, %v6607
  %v7631 = vadd.f32 %v7630, %v6608
  %v7632 = vadd.f32 %v7631, %v6609
  %v7633 = vadd.f32 %v7632, %v6610
  %v7634 = vadd.f32 %v7633, %v6611
  %v7635 = vadd.f32 %v7634, %v6612
  %v7636 = vadd.f32 %v7635, %v6613
  %v7637 = vadd.f32 %v7636, %v6614
  %v7638 = vadd.f32 %v7637, %v6615
  %v7639 = vadd.f32 %v7638, %v6616
  %v7640 = vadd.f32 %v7639, %v6617
  %v7641 = vadd.f32 %v7640, %v6618
  %v7642 = vadd.f32 %v7641, %v6619
  %v7643 = vadd.f32 %v7642, %v6620
  %v7644 = vadd.f32 %v7643, %v6621
  %v7645 = vadd.f32 %v7644, %v6622
  %v7646 = vadd.f32 %v7645, %v6623
  %v7647 = vadd.f32 %v7646, %v6624
  %v7648 = vadd.f32 %v7647, %v6625
  %v7649 = vadd.f32 %v7648, %v6626
  %v7650 = vadd.f32 %v7649, %v6627
  %v7651 = vadd.f32 %v7650, %v6628
  %v7652 = vadd.f32 %v7651, %v6629
  %v7653 = vadd.f32 %v7652, %v6630
  %v7654 = vadd.f32 %v7653, %v6631
  %v7655 = vadd.f32 %v7654, %v6632
  %v7656 = vadd.f32 %v7655, %v6633
  %v7657 = vadd.f32 %v7656, %v6634
  %v7658 = vadd.f32 %v7657, %v6635
  %v7659 = vadd.f32 %v7658, %v6636
  %v7660 = vadd.f32 %v7659, %v6637
  %v7661 = vadd.f32 %v7660, %v6638
  %v7662 = vadd.f32 %v7661, %v6639
  %v7663 = vadd.f32 %v7662, %v6640
  %v7664 = vadd.f32 %v7663, %v6641
  %v7665 = vadd.f32 %v7664, %v6642
  %v7666 = vadd.f32 %v7665, %v6643
  %v7667 = vadd.f32 %v7666, %v6644
  %v7668 = vadd.f32 %v7667, %v6645
  %v7669 = vadd.f32 %v7668, %v6646
  %v7670 = vadd.f32 %v7669, %v6647
  %v7671 = vadd.f32 %v7670, %v6648
  %v7672 = vadd.f32 %v7671, %v6649
  %v7673 = vadd.f32 %v7672, %v6650
  %v7674 = vadd.f32 %v7673, %v6651
  %v7675 = vadd.f32 %v7674, %v6652
  %v7676 = vadd.f32 %v7675, %v6653
  %v7677 = vadd.f32 %v7676, %v6654
  %v7678 = vadd.f32 %v7677, %v6655
  %v7679 = vadd.f32 %v7678, %v6656
  %v7680 = vadd.f32 %v7679, %v6657
  %v7681 = vadd.f32 %v7680, %v6658
  %v7682 = vadd.f32 %v7681, %v6659
  %v7683 = vadd.f32 %v7682, %v6660
  %v7684 = vadd.f32 %v7683, %v6661
  %v7685 = vadd.f32 %v7684, %v6662
  %v7686 = vadd.f32 %v7685, %v6663
  %v7687 = vadd.f32 %v7686, %v6664
  %v7688 = vadd.f32 %v7687, %v6665
  %v7689 = vadd.f32 %v7688, %v6666
  %v7690 = vadd.f32 %v7689, %v6667
  %v7691 = vadd.f32 %v7690, %v6668
  %v7692 = vadd.f32 %v7691, %v6669
  %v7693 = vadd.f32 %v7692, %v6670
  %v7694 = vadd.f32 %v7693, %v6671
  %v7695 = vadd.f32 %v7694, %v6672
  %v7696 = vadd.f32 %v7695, %v6673
  %v7697 = vadd.f32 %v7696, %v6674
  %v7698 = vadd.f32 %v7697, %v6675
  %v7699 = vadd.f32 %v7698, %v6676
  %v7700 = vadd.f32 %v7699, %v6677
  %v7701 = vadd.f32 %v7700, %v6678
  %v7702 = vadd.f32 %v7701, %v6679
  %v7703 = vadd.f32 %v7702, %v6680
  %v7704 = vadd.f32 %v7703, %v6681
  %v7705 = vadd.f32 %v7704, %v6682
  %v7706 = vadd.f32 %v7705, %v6683
  %v7707 = vadd.f32 %v7706, %v6684
  %v7708 = vadd.f32 %v7707, %v6685
  %v7709 = vadd.f32 %v7708, %v6686
  %v7710 = vadd.f32 %v7709, %v6687
  %v7711 = vadd.f32 %v7710, %v6688
  %v7712 = vadd.f32 %v7711, %v6689
  %v7713 = vadd.f32 %v7712, %v6690
  %v7714 = vadd.f32 %v7713, %v6691
  %v7715 = vadd.f32 %v7714, %v6692
  %v7716 = vadd.f32 %v7715, %v6693
  %v7717 = vadd.f32 %v7716, %v6694
  %v7718 = vadd.f32 %v7717, %v6695
  %v7719 = vadd.f32 %v7718, %v6696
  %v7720 = vadd.f32 %v7719, %v6697
  %v7721 = vadd.f32 %v7720, %v6698
  %v7722 = vadd.f32 %v7721, %v6699
  %v7723 = vadd.f32 %v7722, %v6700
  %v7724 = vadd.f32 %v7723, %v6701
  %v7725 = vadd.f32 %v7724, %v6702
  %v7726 = vadd.f32 %v7725, %v6703
  %v7727 = vadd.f32 %v7726, %v6704
  %v7728 = vadd.f32 %v7727, %v6705
  %v7729 = vadd.f32 %v7728, %v6706
  %v7730 = vadd.f32 %v7729, %v6707
  %v7731 = vadd.f32 %v7730, %v6708
  %v7732 = vadd.f32 %v7731, %v6709
  %v7733 = vadd.f32 %v7732, %v6710
  %v7734 = vadd.f32 %v7733, %v6711
  %v7735 = vadd.f32 %v7734, %v6712
  %v7736 = vadd.f32 %v7735, %v6713
  %v7737 = vadd.f32 %v7736, %v6714
  %v7738 = vadd.f32 %v7737, %v6715
  %v7739 = vadd.f32 %v7738, %v6716
  %v7740 = vadd.f32 %v7739, %v6717
  %v7741 = vadd.f32 %v7740, %v6718
  %v7742 = vadd.f32 %v7741, %v6719
  %v7743 = vadd.f32 %v7742, %v6720
  %v7744 = vadd.f32 %v7743, %v6721
  %v7745 = vadd.f32 %v7744, %v6722
  %v7746 = vadd.f32 %v7745, %v6723
  %v7747 = vadd.f32 %v7746, %v6724
  %v7748 = vadd.f32 %v7747, %v6725
  %v7749 = vadd.f32 %v7748, %v6726
  %v7750 = vadd.f32 %v7749, %v6727
  %v7751 = vadd.f32 %v7750, %v6728
  %v7752 = vadd.f32 %v7751, %v6729
  %v7753 = vadd.f32 %v7752, %v6730
  %v7754 = vadd.f32 %v7753, %v6731
  %v7755 = vadd.f32 %v7754, %v6732
  %v7756 = vadd.f32 %v7755, %v6733
  %v7757 = vadd.f32 %v7756, %v6734
  %v7758 = vadd.f32 %v7757, %v6735
  %v7759 = vadd.f32 %v7758, %v6736
  %v7760 = vadd.f32 %v7759, %v6737
  %v7761 = vadd.f32 %v7760, %v6738
  %v7762 = vadd.f32 %v7761, %v6739
  %v7763 = vadd.f32 %v7762, %v6740
  %v7764 = vadd.f32 %v7763, %v6741
  %v7765 = vadd.f32 %v7764, %v6742
  %v7766 = vadd.f32 %v7765, %v6743
  %v7767 = vadd.f32 %v7766, %v6744
  %v7768 = vadd.f32 %v7767, %v6745
  %v7769 = vadd.f32 %v7768, %v6746
  %v7770 = vadd.f32 %v7769, %v6747
  %v7771 = vadd.f32 %v7770, %v6748
  %v7772 = vadd.f32 %v7771, %v6749
  %v7773 = vadd.f32 %v7772, %v6750
  %v7774 = vadd.f32 %v7773, %v6751
  %v7775 = vadd.f32 %v7774, %v6752
  %v7776 = vadd.f32 %v7775, %v6753
  %v7777 = vadd.f32 %v7776, %v6754
  %v7778 = vadd.f32 %v7777, %v6755
  %v7779 = vadd.f32 %v7778, %v6756
  %v7780 = vadd.f32 %v7779, %v6757
  %v7781 = vadd.f32 %v7780, %v6758
  %v7782 = vadd.f32 %v7781, %v6759
  %v7783 = vadd.f32 %v7782, %v6760
  %v7784 = vadd.f32 %v7783, %v6761
  %v7785 = vadd.f32 %v7784, %v6762
  %v7786 = vadd.f32 %v7785, %v6763
  %v7787 = vadd.f32 %v7786, %v6764
  %v7788 = vadd.f32 %v7787, %v6765
  %v7789 = vadd.f32 %v7788, %v6766
  %v7790 = vadd.f32 %v7789, %v6767
  %v7791 = vadd.f32 %v7790, %v6768
  %v7792 = vadd.f32 %v7791, %v6769
  %v7793 = vadd.f32 %v7792, %v6770
  %v7794 = vadd.f32 %v7793, %v6771
  %v7795 = vadd.f32 %v7794, %v6772
  %v7796 = vadd.f32 %v7795, %v6773
  %v7797 = vadd.f32 %v7796, %v6774
  %v7798 = vadd.f32 %v7797, %v6775
  %v7799 = vadd.f32 %v7798, %v6776
  %v7800 = vadd.f32 %v7799, %v6777
  %v7801 = vadd.f32 %v7800, %v6778
  %v7802 = vadd.f32 %v7801, %v6779
  %v7803 = vadd.f32 %v7802, %v6780
  %v7804 = vadd.f32 %v7803, %v6781
  %v7805 = vadd.f32 %v7804, %v6782
  %v7806 = vadd.f32 %v7805, %v6783
  %v7807 = vadd.f32 %v7806, %v6784
  %v7808 = vadd.f32 %v7807, %v6785
  %v7809 = vadd.f32 %v7808, %v6786
  %v7810 = vadd.f32 %v7809, %v6787
  %v7811 = vadd.f32 %v7810, %v6788
  %v7812 = vadd.f32 %v7811, %v6789
  %v7813 = vadd.f32 %v7812, %v6790
  %v7814 = vadd.f32 %v7813, %v6791
  %v7815 = vadd.f32 %v7814, %v6792
  %v7816 = vadd.f32 %v7815, %v6793
  %v7817 = vadd.f32 %v7816, %v6794
  %v7818 = vadd.f32 %v7817, %v6795
  %v7819 = vadd.f32 %v7818, %v6796
  %v7820 = vadd.f32 %v7819, %v6797
  %v7821 = vadd.f32 %v7820, %v6798
  %v7822 = vadd.f32 %v7821, %v6799
  %v7823 = vadd.f32 %v7822, %v6800
  %v7824 = vadd.f32 %v7823, %v6801
  %v7825 = vadd.f32 %v7824, %v6802
  %v7826 = vadd.f32 %v7825, %v6803
  %v7827 = vadd.f32 %v7826, %v6804
  %v7828 = vadd.f32 %v7827, %v6805
  %v7829 = vadd.f32 %v7828, %v6806
  %v7830 = vadd.f32 %v7829, %v6807
  %v7831 = vadd.f32 %v7830, %v6808
  %v7832 = vadd.f32 %v7831, %v6809
  %v7833 = vadd.f32 %v7832, %v6810
  %v7834 = vadd.f32 %v7833, %v6811
  %v7835 = vadd.f32 %v7834, %v6812
  %v7836 = vadd.f32 %v7835, %v6813
  %v7837 = vadd.f32 %v7836, %v6814
  %v7838 = vadd.f32 %v7837, %v6815
  %v7839 = vadd.f32 %v7838, %v6816
  %v7840 = vadd.f32 %v7839, %v6817
  %v7841 = vadd.f32 %v7840, %v6818
  %v7842 = vadd.f32 %v7841, %v6819
  %v7843 = vadd.f32 %v7842, %v6820
  %v7844 = vadd.f32 %v7843, %v6821
  %v7845 = vadd.f32 %v7844, %v6822
  %v7846 = vadd.f32 %v7845, %v6823
  %v7847 = vadd.f32 %v7846, %v6824
  %v7848 = vadd.f32 %v7847, %v6825
  %v7849 = vadd.f32 %v7848, %v6826
  %v7850 = vadd.f32 %v7849, %v6827
  %v7851 = vadd.f32 %v7850, %v6828
  %v7852 = vadd.f32 %v7851, %v6829
  %v7853 = vadd.f32 %v7852, %v6830
  %v7854 = vadd.f32 %v7853, %v6831
  %v7855 = vadd.f32 %v7854, %v6832
  %v7856 = vadd.f32 %v7855, %v6833
  %v7857 = vadd.f32 %v7856, %v6834
  %v7858 = vadd.f32 %v7857, %v6835
  %v7859 = vadd.f32 %v7858, %v6836
  %v7860 = vadd.f32 %v7859, %v6837
  %v7861 = vadd.f32 %v7860, %v6838
  %v7862 = vadd.f32 %v7861, %v6839
  %v7863 = vadd.f32 %v7862, %v6840
  %v7864 = vadd.f32 %v7863, %v6841
  %v7865 = vadd.f32 %v7864, %v6842
  %v7866 = vadd.f32 %v7865, %v6843
  %v7867 = vadd.f32 %v7866, %v6844
  %v7868 = vadd.f32 %v7867, %v6845
  %v7869 = vadd.f32 %v7868, %v6846
  %v7870 = vadd.f32 %v7869, %v6847
  %v7871 = vadd.f32 %v7870, %v6848
  %v7872 = vadd.f32 %v7871, %v6849
  %v7873 = vadd.f32 %v7872, %v6850
  %v7874 = vadd.f32 %v7873, %v6851
  %v7875 = vadd.f32 %v7874, %v6852
  %v7876 = vadd.f32 %v7875, %v6853
  %v7877 = vadd.f32 %v7876, %v6854
  %v7878 = vadd.f32 %v7877, %v6855
  %v7879 = vadd.f32 %v7878, %v6856
  %v7880 = vadd.f32 %v7879, %v6857
  %v7881 = vadd.f32 %v7880, %v6858
  %v7882 = vadd.f32 %v7881, %v6859
  %v7883 = vadd.f32 %v7882, %v6860
  %v7884 = vadd.f32 %v7883, %v6861
  %v7885 = vadd.f32 %v7884, %v6862
  %v7886 = vadd.f32 %v7885, %v6863
  %v7887 = vadd.f32 %v7886, %v6864
  %v7888 = vadd.f32 %v7887, %v6865
  %v7889 = vadd.f32 %v7888, %v6866
  %v7890 = vadd.f32 %v7889, %v6867
  %v7891 = vadd.f32 %v7890, %v6868
  %v7892 = vadd.f32 %v7891, %v6869
  %v7893 = vadd.f32 %v7892, %v6870
  %v7894 = vadd.f32 %v7893, %v6871
  %v7895 = vadd.f32 %v7894, %v6872
  %v7896 = vadd.f32 %v7895, %v6873
  %v7897 = vadd.f32 %v7896, %v6874
  %v7898 = vadd.f32 %v7897, %v6875
  %v7899 = vadd.f32 %v7898, %v6876
  %v7900 = vadd.f32 %v7899, %v6877
  %v7901 = vadd.f32 %v7900, %v6878
  %v7902 = vadd.f32 %v7901, %v6879
  %v7903 = vadd.f32 %v7902, %v6880
  %v7904 = vadd.f32 %v7903, %v6881
  %v7905 = vadd.f32 %v7904, %v6882
  %v7906 = vadd.f32 %v7905, %v6883
  %v7907 = vadd.f32 %v7906, %v6884
  %v7908 = vadd.f32 %v7907, %v6885
  %v7909 = vadd.f32 %v7908, %v6886
  %v7910 = vadd.f32 %v7909, %v6887
  %v7911 = vadd.f32 %v7910, %v6888
  %v7912 = vadd.f32 %v7911, %v6889
  %v7913 = vadd.f32 %v7912, %v6890
  %v7914 = vadd.f32 %v7913, %v6891
  %v7915 = vadd.f32 %v7914, %v6892
  %v7916 = vadd.f32 %v7915, %v6893
  %v7917 = vadd.f32 %v7916, %v6894
  %v7918 = vadd.f32 %v7917, %v6895
  %v7919 = vadd.f32 %v7918, %v6896
  %v7920 = vadd.f32 %v7919, %v6897
  %v7921 = vadd.f32 %v7920, %v6898
  %v7922 = vadd.f32 %v7921, %v6899
  %v7923 = vadd.f32 %v7922, %v6900
  %v7924 = vadd.f32 %v7923, %v6901
  %v7925 = vadd.f32 %v7924, %v6902
  %v7926 = vadd.f32 %v7925, %v6903
  %v7927 = vadd.f32 %v7926, %v6904
  %v7928 = vadd.f32 %v7927, %v6905
  %v7929 = vadd.f32 %v7928, %v6906
  %v7930 = vadd.f32 %v7929, %v6907
  %v7931 = vadd.f32 %v7930, %v6908
  %v7932 = vadd.f32 %v7931, %v6909
  %v7933 = vadd.f32 %v7932, %v6910
  %v7934 = vadd.f32 %v7933, %v6911
  %v7935 = vadd.f32 %v7934, %v6912
  %v7936 = vadd.f32 %v7935, %v6913
  %v7937 = vadd.f32 %v7936, %v6914
  %v7938 = vadd.f32 %v7937, %v6915
  %v7939 = vadd.f32 %v7938, %v6916
  %v7940 = vadd.f32 %v7939, %v6917
  %v7941 = vadd.f32 %v7940, %v6918
  %v7942 = vadd.f32 %v7941, %v6919
  %v7943 = vadd.f32 %v7942, %v6920
  %v7944 = vadd.f32 %v7943, %v6921
  %v7945 = vadd.f32 %v7944, %v6922
  %v7946 = vadd.f32 %v7945, %v6923
  %v7947 = vadd.f32 %v7946, %v6924
  %v7948 = vadd.f32 %v7947, %v6925
  %v7949 = vadd.f32 %v7948, %v6926
  %v7950 = vadd.f32 %v7949, %v6927
  %v7951 = vadd.f32 %v7950, %v6928
  %v7952 = vadd.f32 %v7951, %v6929
  %v7953 = vadd.f32 %v7952, %v6930
  %v7954 = vadd.f32 %v7953, %v6931
  %v7955 = vadd.f32 %v7954, %v6932
  %v7956 = vadd.f32 %v7955, %v6933
  %v7957 = vadd.f32 %v7956, %v6934
  %v7958 = vadd.f32 %v7957, %v6935
  %v7959 = vadd.f32 %v7958, %v6936
  %v7960 = vadd.f32 %v7959, %v6937
  %v7961 = vadd.f32 %v7960, %v6938
  %v7962 = vadd.f32 %v7961, %v6939
  %v7963 = vadd.f32 %v7962, %v6940
  %v7964 = vadd.f32 %v7963, %v6941
  %v7965 = vadd.f32 %v7964, %v6942
  %v7966 = vadd.f32 %v7965, %v6943
  %v7967 = vadd.f32 %v7966, %v6944
  %v7968 = vadd.f32 %v7967, %v6945
  %v7969 = vadd.f32 %v7968, %v6946
  %v7970 = vadd.f32 %v7969, %v6947
  %v7971 = vadd.f32 %v7970, %v6948
  %v7972 = vadd.f32 %v7971, %v6949
  %v7973 = vadd.f32 %v7972, %v6950
  %v7974 = vadd.f32 %v7973, %v6951
  %v7975 = vadd.f32 %v7974, %v6952
  %v7976 = vadd.f32 %v7975, %v6953
  %v7977 = vadd.f32 %v7976, %v6954
  %v7978 = vadd.f32 %v7977, %v6955
  %v7979 = vadd.f32 %v7978, %v6956
  %v7980 = vadd.f32 %v7979, %v6957
  %v7981 = vadd.f32 %v7980, %v6958
  %v7982 = vadd.f32 %v7981, %v6959
  %v7983 = vadd.f32 %v7982, %v6960
  %v7984 = vadd.f32 %v7983, %v6961
  %v7985 = vadd.f32 %v7984, %v6962
  %v7986 = vadd.f32 %v7985, %v6963
  %v7987 = vadd.f32 %v7986, %v6964
  %v7988 = vadd.f32 %v7987, %v6965
  %v7989 = vadd.f32 %v7988, %v6966
  %v7990 = vadd.f32 %v7989, %v6967
  %v7991 = vadd.f32 %v7990, %v6968
  %v7992 = vadd.f32 %v7991, %v6969
  %v7993 = vadd.f32 %v7992, %v6970
  %v7994 = vadd.f32 %v7993, %v6971
  %v7995 = vadd.f32 %v7994, %v6972
  %v7996 = vadd.f32 %v7995, %v6973
  %v7997 = vadd.f32 %v7996, %v6974
  %v7998 = vadd.f32 %v7997, %v6975
  %v7999 = vadd.f32 %v7998, %v6976
  %v8000 = vadd.f32 %v7999, %v6977
  %v8001 = vadd.f32 %v8000, %v6978
  %v8002 = vadd.f32 %v8001, %v6979
  %v8003 = vadd.f32 %v8002, %v6980
  %v8004 = vadd.f32 %v8003, %v6981
  %v8005 = vadd.f32 %v8004, %v6982
  %v8006 = vadd.f32 %v8005, %v6983
  %v8007 = vadd.f32 %v8006, %v6984
  %v8008 = vadd.f32 %v8007, %v6985
  %v8009 = vadd.f32 %v8008, %v6986
  %v8010 = vadd.f32 %v8009, %v6987
  %v8011 = vadd.f32 %v8010, %v6988
  %v8012 = vadd.f32 %v8011, %v6989
  %v8013 = vadd.f32 %v8012, %v6990
  %v8014 = vadd.f32 %v8013, %v6991
  %v8015 = vadd.f32 %v8014, %v6992
  %v8016 = vadd.f32 %v8015, %v6993
  %v8017 = vadd.f32 %v8016, %v6994
  %v8018 = vadd.f32 %v8017, %v6995
  %v8019 = vadd.f32 %v8018, %v6996
  %v8020 = vadd.f32 %v8019, %v6997
  %v8021 = vadd.f32 %v8020, %v6998
  %v8022 = vadd.f32 %v8021, %v6999
  %v8023 = vadd.f32 %v8022, %v7000
  %v8024 = vadd.f32 %v8023, %v7001
  %v8025 = vadd.f32 %v8024, %v7002
  %v8026 = vadd.f32 %v8025, %v7003
  %v8027 = vadd.f32 %v8026, %v7004
  %v8028 = vadd.f32 %v8027, %v7005
  %v8029 = vadd.f32 %v8028, %v7006
  %v8030 = vadd.f32 %v8029, %v7007
  %v8031 = vadd.f32 %v8030, %v7008
  %v8032 = vadd.f32 %v8031, %v7009
  %v8033 = vadd.f32 %v8032, %v7010
  %v8034 = vadd.f32 %v8033, %v7011
  %v8035 = vadd.f32 %v8034, %v7012
  %v8036 = vadd.f32 %v8035, %v7013
  %v8037 = vadd.f32 %v8036, %v7014
  %v8038 = vadd.f32 %v8037, %v7015
  %v8039 = vadd.f32 %v8038, %v7016
  %v8040 = vadd.f32 %v8039, %v7017
  %v8041 = vadd.f32 %v8040, %v7018
  %v8042 = vadd.f32 %v8041, %v7019
  %v8043 = vadd.f32 %v8042, %v7020
  %v8044 = vadd.f32 %v8043, %v7021
  %v8045 = vadd.f32 %v8044, %v7022
  %v8046 = vadd.f32 %v8045, %v7023
  %v8047 = vadd.f32 %v8046, %v7024
  %v8048 = vadd.f32 %v8047, %v7025
  %v8049 = vadd.f32 %v8048, %v7026
  %v8050 = vadd.f32 %v8049, %v7027
  %v8051 = vadd.f32 %v8050, %v7028
  %v8052 = vadd.f32 %v8051, %v7029
  %v8053 = vadd.f32 %v8052, %v7030
  %v8054 = vadd.f32 %v8053, %v7031
  %v8055 = vadd.f32 %v8054, %v7032
  %v8056 = vadd.f32 %v8055, %v7033
  %v8057 = vadd.f32 %v8056, %v7034
  %v8058 = vadd.f32 %v8057, %v7035
  %v8059 = vadd.f32 %v8058, %v7036
  %v8060 = vadd.f32 %v8059, %v7037
  %v8061 = vadd.f32 %v8060, %v7038
  %v8062 = vadd.f32 %v8061, %v7039
  %v8063 = vadd.f32 %v8062, %v7040
  %v8064 = vadd.f32 %v8063, %v7041
  %v8065 = vadd.f32 %v8064, %v7042
  %v8066 = vadd.f32 %v8065, %v7043
  %v8067 = vadd.f32 %v8066, %v7044
  %v8068 = vadd.f32 %v8067, %v7045
  %v8069 = vadd.f32 %v8068, %v7046
  %v8070 = vadd.f32 %v8069, %v7047
  %v8071 = vadd.f32 %v8070, %v7048
  %v8072 = vadd.f32 %v8071, %v7049
  %v8073 = vadd.f32 %v8072, %v7050
  %v8074 = vadd.f32 %v8073, %v7051
  %v8075 = vadd.f32 %v8074, %v7052
  %v8076 = vadd.f32 %v8075, %v7053
  %v8077 = vadd.f32 %v8076, %v7054
  %v8078 = vadd.f32 %v8077, %v7055
  %v8079 = vadd.f32 %v8078, %v7056
  %v8080 = vadd.f32 %v8079, %v7057
  %v8081 = vadd.f32 %v8080, %v7058
  %v8082 = vadd.f32 %v8081, %v7059
  %v8083 = vadd.f32 %v8082, %v7060
  %v8084 = vadd.f32 %v8083, %v7061
  %v8085 = vadd.f32 %v8084, %v7062
  %v8086 = vadd.f32 %v8085, %v7063
  %v8087 = vadd.f32 %v8086, %v7064
  %v8088 = vadd.f32 %v8087, %v7065
  %v8089 = vadd.f32 %v8088, %v7066
  %v8090 = vadd.f32 %v8089, %v7067
  %v8091 = vadd.f32 %v8090, %v7068
  %v8092 = vadd.f32 %v8091, %v7069
  %v8093 = vadd.f32 %v8092, %v7070
  %v8094 = vadd.f32 %v8093, %v7071
  %v8095 = vadd.f32 %v8094, %v7072
  %v8096 = vadd.f32 %v8095, %v7073
  %v8097 = vadd.f32 %v8096, %v7074
  %v8098 = vadd.f32 %v8097, %v7075
  %v8099 = vadd.f32 %v8098, %v7076
  %v8100 = vadd.f32 %v8099, %v7077
  %v8101 = vadd.f32 %v8100, %v7078
  %v8102 = vadd.f32 %v8101, %v7079
  %v8103 = vadd.f32 %v8102, %v7080
  %v8104 = vadd.f32 %v8103, %v7081
  %v8105 = vadd.f32 %v8104, %v7082
  %v8106 = vadd.f32 %v8105, %v7083
  %v8107 = vadd.f32 %v8106, %v7084
  %v8108 = vadd.f32 %v8107, %v7085
  %v8109 = vadd.f32 %v8108, %v7086
  %v8110 = vadd.f32 %v8109, %v7087
  %v8111 = vadd.f32 %v8110, %v7088
  %v8112 = vadd.f32 %v8111, %v7089
  %v8113 = vadd.f32 %v8112, %v7090
  %v8114 = vadd.f32 %v8113, %v7091
  %v8115 = vadd.f32 %v8114, %v7092
  %v8116 = vadd.f32 %v8115, %v7093
  %v8117 = vadd.f32 %v8116, %v7094
  %v8118 = vadd.f32 %v8117, %v7095
  %v8119 = vadd.f32 %v8118, %v7096
  %v8120 = vadd.f32 %v8119, %v7097
  %v8121 = vadd.f32 %v8120, %v7098
  %v8122 = vadd.f32 %v8121, %v7099
  %v8123 = vadd.f32 %v8122, %v7100
  %v8124 = vadd.f32 %v8123, %v7101
  %v8125 = vadd.f32 %v8124, %v7102
  %v8126 = vadd.f32 %v8125, %v7103
  %v8127 = vadd.f32 %v8126, %v7104
  %v8128 = vadd.f32 %v8127, %v7105
  %v8129 = vadd.f32 %v8128, %v7106
  %v8130 = vadd.f32 %v8129, %v7107
  %v8131 = vadd.f32 %v8130, %v7108
  %v8132 = vadd.f32 %v8131, %v7109
  %v8133 = vadd.f32 %v8132, %v7110
  %v8134 = vadd.f32 %v8133, %v7111
  %v8135 = vadd.f32 %v8134, %v7112
  %v8136 = vadd.f32 %v8135, %v7113
  %v8137 = vadd.f32 %v8136, %v7114
  %v8138 = vadd.f32 %v8137, %v7115
  %v8139 = vadd.f32 %v8138, %v7116
  %v8140 = vadd.f32 %v8139, %v7117
  %v8141 = vadd.f32 %v8140, %v7118
  %v8142 = vadd.f32 %v8141, %v7119
  %v8143 = vadd.f32 %v8142, %v7120
  %v8144 = vadd.f32 %v8143, %v7121
  %v8145 = vadd.f32 %v8144, %v7122
  %v8146 = vadd.f32 %v8145, %v7123
  %v8147 = vadd.f32 %v8146, %v7124
  %v8148 = vadd.f32 %v8147, %v7125
  %v8149 = vadd.f32 %v8148, %v7126
  %v8150 = vadd.f32 %v8149, %v7127
  %v8151 = vadd.f32 %v8150, %v7128
  %v8152 = vadd.f32 %v8151, %v7129
  %v8153 = vadd.f32 %v8152, %v7130
  %v8154 = vadd.f32 %v8153, %v7131
  %v8155 = vadd.f32 %v8154, %v7132
  %v8156 = vadd.f32 %v8155, %v7133
  %v8157 = vadd.f32 %v8156, %v7134
  %v8158 = vadd.f32 %v8157, %v7135
  %v8159 = vadd.f32 %v8158, %v7136
  %v8160 = vadd.f32 %v8159, %v7137
  %v8161 = vadd.f32 %v8160, %v7138
  %v8162 = vadd.f32 %v8161, %v7139
  %v8163 = vadd.f32 %v8162, %v7140
  %v8164 = vadd.f32 %v8163, %v7141
  %v8165 = vadd.f32 %v8164, %v7142
  %v8166 = vadd.f32 %v8165, %v7143
  %v8167 = vadd.f32 %v8166, %v7144
  %v8168 = vadd.f32 %v8167, %v7145
  %v8169 = vadd.f32 %v8168, %v7146
  %v8170 = vadd.f32 %v8169, %v7147
  %v8171 = vadd.f32 %v8170, %v7148
  %v8172 = vadd.f32 %v8171, %v7149
  %v8173 = vadd.f32 %v8172, %v7150
  %v8174 = vadd.f32 %v8173, %v7151
  %v8175 = vadd.f32 %v8174, %v7152
  %v8176 = vadd.f32 %v8175, %v7153
  %v8177 = vadd.f32 %v8176, %v7154
  %v8178 = vadd.f32 %v8177, %v7155
  %v8179 = vadd.f32 %v8178, %v7156
  %v8180 = vadd.f32 %v8179, %v7157
  %v8181 = vadd.f32 %v8180, %v7158
  %v8182 = vadd.f32 %v8181, %v7159
  %v8183 = vadd.f32 %v8182, %v7160
  %v8184 = vadd.f32 %v8183, %v7161
  %v8185 = vadd.f32 %v8184, %v7162
  %v8186 = vadd.f32 %v8185, %v7163
  %v8187 = vadd.f32 %v8186, %v7164
  %v8188 = vadd.f32 %v8187, %v7165
  %v8189 = vadd.f32 %v8188, %v7166
  %v8190 = vadd.f32 %v8189, %v7167
  %v8191 = vadd.f32 %v8190, %v7168
  %v8192 = vadd.f32 %v8191, %v7169
  %v8193 = vadd.f32 %v8192, %v7170
  %v8194 = vadd.f32 %v8193, %v7171
  %v8195 = vadd.f32 %v8194, %v7172
  %v8196 = vadd.f32 %v8195, %v7173
  %v8197 = vadd.f32 %v8196, %v7174
  %v8198 = vadd.f32 %v8197, %v7175
  %v8199 = vadd.f32 %v8198, %v7176
  %v8200 = vadd.f32 %v8199, %v7177
  %v8201 = vadd.f32 %v8200, %v7178
  %v8202 = vadd.f32 %v8201, %v7179
  %v8203 = vadd.f32 %v8202, %v7180
  %v8204 = vadd.f32 %v8203, %v7181
  %v8205 = vadd.f32 %v8204, %v7182
  %v8206 = vadd.f32 %v8205, %v7183
  %v8207 = vadd.f32 %v8206, %v7184
  %v8208 = vadd.f32 %v8207, %v7185
  %v8209 = vadd.f32 %v8208, %v7186
  %v8210 = vadd.f32 %v8209, %v7187
  %v8211 = vadd.f32 %v8210, %v7188
  %v8212 = vadd.f32 %v8211, %v7189
  %v8213 = vadd.f32 %v8212, %v7190
  %v8214 = vadd.f32 %v8213, %v7191
  %v8215 = vadd.f32 %v8214, %v7192
  %v8216 = vadd.f32 %v8215, %v7193
  %v8217 = vadd.f32 %v8216, %v7194
  %v8218 = vadd.f32 %v8217, %v7195
  %v8219 = vadd.f32 %v8218, %v7196
  %v8220 = vadd.f32 %v8219, %v7197
  %v8221 = vadd.f32 %v8220, %v7198
  %v8222 = vadd.f32 %v8221, %v7199
  %v8223 = vadd.f32 %v8222, %v7200
  %v8224 = vadd.f32 %v8223, %v7201
  %v8225 = vadd.f32 %v8224, %v7202
  %v8226 = vadd.f32 %v8225, %v7203
  %v8227 = vadd.f32 %v8226, %v7204
  %v8228 = vadd.f32 %v8227, %v7205
  %v8229 = vadd.f32 %v8228, %v7206
  %v8230 = vadd.f32 %v8229, %v7207
  %v8231 = vadd.f32 %v8230, %v7208
  %v8232 = vadd.f32 %v8231, %v7209
  %v8233 = vadd.f32 %v8232, %v7210
  %v8234 = vadd.f32 %v8233, %v7211
  %v8235 = vadd.f32 %v8234, %v7212
  %v8236 = vadd.f32 %v8235, %v7213
  %v8237 = vadd.f32 %v8236, %v7214
  %v8238 = vadd.f32 %v8237, %v7215
  %v8239 = vadd.f32 %v8238, %v7216
  %v8240 = vadd.f32 %v8239, %v7217
  %v8241 = vadd.f32 %v8240, %v7218
  %v8242 = vadd.f32 %v8241, %v7219
  %v8243 = vadd.f32 %v8242, %v7220
  %v8244 = vadd.f32 %v8243, %v7221
  %v8245 = vadd.f32 %v8244, %v7222
  %v8246 = vadd.f32 %v8245, %v7223
  %v8247 = vadd.f32 %v8246, %v7224
  %v8248 = vadd.f32 %v8247, %v7225
  %v8249 = vadd.f32 %v8248, %v7226
  %v8250 = vadd.f32 %v8249, %v7227
  %v8251 = vadd.f32 %v8250, %v7228
  %v8252 = vadd.f32 %v8251, %v7229
  %v8253 = vadd.f32 %v8252, %v7230
  %v8254 = vadd.f32 %v8253, %v7231
  %v8255 = vadd.f32 %v8254, %v7232
  %v8256 = vadd.f32 %v8255, %v7233
  %v8257 = vadd.f32 %v8256, %v7234
  %v8258 = vadd.f32 %v8257, %v7235
  %v8259 = vadd.f32 %v8258, %v7236
  %v8260 = vadd.f32 %v8259, %v7237
  %v8261 = vadd.f32 %v8260, %v7238
  %v8262 = vadd.f32 %v8261, %v7239
  %v8263 = vadd.f32 %v8262, %v7240
  %v8264 = vadd.f32 %v8263, %v7241
  %v8265 = vadd.f32 %v8264, %v7242
  %v8266 = vadd.f32 %v8265, %v7243
  %v8267 = vadd.f32 %v8266, %v7244
  %v8268 = vadd.f32 %v8267, %v7245
  %v8269 = vadd.f32 %v8268, %v7246
  %v8270 = vadd.f32 %v8269, %v7247
  %v8271 = vadd.f32 %v8270, %v7248
  %v8272 = vadd.f32 %v8271, %v7249
  %v8273 = vadd.f32 %v8272, %v7250
  %v8274 = vadd.f32 %v8273, %v7251
  %v8275 = vadd.f32 %v8274, %v7252
  %v8276 = vadd.f32 %v8275, %v7253
  %v8277 = vadd.f32 %v8276, %v7254
  %v8278 = vadd.f32 %v8277, %v7255
  %v8279 = vadd.f32 %v8278, %v7256
  %v8280 = vadd.f32 %v8279, %v7257
  %v8281 = vadd.f32 %v8280, %v7258
  %v8282 = vadd.f32 %v8281, %v7259
  %v8283 = vadd.f32 %v8282, %v7260
  %v8284 = vadd.f32 %v8283, %v7261
  %v8285 = vadd.f32 %v8284, %v7262
  %v8286 = vadd.f32 %v8285, %v7263
  %v8287 = vadd.f32 %v8286, %v7264
  %v8288 = vadd.f32 %v8287, %v7265
  %v8289 = vadd.f32 %v8288, %v7266
  %v8290 = vadd.f32 %v8289, %v7267
  %v8291 = vadd.f32 %v8290, %v7268
  %v8292 = vadd.f32 %v8291, %v7269
  %v8293 = vadd.f32 %v8292, %v7270
  %v8294 = vadd.f32 %v8293, %v7271
  %v8295 = vadd.f32 %v8294, %v7272
  %v8296 = vadd.f32 %v8295, %v7273
  %v8297 = vadd.f32 %v8296, %v7274
  %v8298 = vadd.f32 %v8297, %v7275
  %v8299 = vadd.f32 %v8298, %v7276
  %v8300 = vadd.f32 %v8299, %v7277
  %v8301 = vadd.f32 %v8300, %v7278
  %v8302 = vadd.f32 %v8301, %v7279
  %v8303 = vadd.f32 %v8302, %v7280
  %v8304 = vadd.f32 %v8303, %v7281
  %v8305 = vadd.f32 %v8304, %v7282
  %v8306 = vadd.f32 %v8305, %v7283
  %v8307 = vadd.f32 %v8306, %v7284
  %v8308 = vadd.f32 %v8307, %v7285
  %v8309 = vadd.f32 %v8308, %v7286
  %v8310 = vadd.f32 %v8309, %v7287
  %v8311 = vadd.f32 %v8310, %v7288
  %v8312 = vadd.f32 %v8311, %v7289
  %v8313 = vadd.f32 %v8312, %v7290
  %v8314 = vadd.f32 %v8313, %v7291
  %v8315 = vadd.f32 %v8314, %v7292
  %v8316 = vadd.f32 %v8315, %v7293
  %v8317 = vadd.f32 %v8316, %v7294
  %v8318 = vadd.f32 %v8317, %v7295
  %v8319 = vadd.f32 %v8318, %v7296
  %v8320 = vadd.f32 %v8319, %v7297
  %v8321 = vadd.f32 %v8320, %v7298
  %v8322 = vadd.f32 %v8321, %v7299
  %v8323 = vadd.f32 %v8322, %v7300
  %v8324 = vadd.f32 %v8323, %v7301
  %v8325 = vadd.f32 %v8324, %v7302
  %v8326 = vadd.f32 %v8325, %v7303
  %v8327 = vadd.f32 %v8326, %v7304
  %v8328 = vadd.f32 %v8327, %v7305
  %v8329 = vadd.f32 %v8328, %v7306
  %v8330 = vadd.f32 %v8329, %v7307
  %v8331 = vadd.f32 %v8330, %v7308
  %v8332 = vadd.f32 %v8331, %v7309
  %v8333 = vadd.f32 %v8332, %v7310
  %v8334 = vadd.f32 %v8333, %v7311
  %v8335 = vadd.f32 %v8334, %v7312
  %v8336 = vadd.f32 %v8335, %v7313
  %v8337 = vadd.f32 %v8336, %v7314
  %v8338 = vadd.f32 %v8337, %v7315
  %v8339 = vadd.f32 %v8338, %v7316
  %v8340 = vadd.f32 %v8339, %v7317
  %v8341 = vadd.f32 %v8340, %v7318
  %v8342 = vadd.f32 %v8341, %v7319
  %v8343 = vadd.f32 %v8342, %v7320
  %v8344 = vadd.f32 %v8343, %v7321
  %v8345 = vadd.f32 %v8344, %v7322
  %v8346 = vadd.f32 %v8345, %v7323
  %v8347 = vadd.f32 %v8346, %v7324
  %v8348 = vadd.f32 %v8347, %v7325
  %v8349 = vadd.f32 %v8348, %v7326
  %v8350 = vadd.f32 %v8349, %v7327
  %v8351 = vadd.f32 %v8350, %v7328
  %v8352 = vadd.f32 %v8351, %v7329
  %v8353 = vadd.f32 %v8352, %v7330
  %v8354 = vadd.f32 %v8353, %v7331
  %v8355 = vadd.f32 %v8354, %v7332
  %v8356 = vadd.f32 %v8355, %v7333
  %v8357 = vadd.f32 %v8356, %v7334
  %v8358 = vadd.f32 %v8357, %v7335
  %v8359 = vadd.f32 %v8358, %v7336
  %v8360 = vadd.f32 %v8359, %v7337
  %v8361 = vadd.f32 %v8360, %v7338
  %v8362 = vadd.f32 %v8361, %v7339
  %v8363 = vadd.f32 %v8362, %v7340
  %v8364 = vadd.f32 %v8363, %v7341
  %v8365 = vadd.f32 %v8364, %v7342
  %v8366 = vadd.f32 %v8365, %v7343
  %v8367 = vadd.f32 %v8366, %v7344
  %v8368 = vadd.f32 %v8367, %v7345
  %v8369 = vadd.f32 %v8368, %v7346
  %v8370 = vadd.f32 %v8369, %v7347
  %v8371 = vadd.f32 %v8370, %v7348
  %v8372 = vadd.f32 %v8371, %v7349
  %v8373 = vadd.f32 %v8372, %v7350
  %v8374 = vadd.f32 %v8373, %v7351
  %v8375 = vadd.f32 %v8374, %v7352
  %v8376 = vadd.f32 %v8375, %v7353
  %v8377 = vadd.f32 %v8376, %v7354
  %v8378 = vadd.f32 %v8377, %v7355
  %v8379 = vadd.f32 %v8378, %v7356
  %v8380 = vadd.f32 %v8379, %v7357
  %v8381 = vadd.f32 %v8380, %v7358
  %v8382 = vadd.f32 %v8381, %v7359
  %v8383 = vadd.f32 %v8382, %v7360
  %v8384 = vadd.f32 %v8383, %v7361
  %v8385 = vadd.f32 %v8384, %v7362
  %v8386 = vadd.f32 %v8385, %v7363
  %v8387 = vadd.f32 %v8386, %v7364
  %v8388 = vadd.f32 %v8387, %v7365
  %v8389 = vadd.f32 %v8388, %v7366
  %v8390 = vadd.f32 %v8389, %v7367
  %v8391 = vadd.f32 %v8390, %v7368
  %v8392 = vadd.f32 %v8391, %v7369
  %v8393 = vadd.f32 %v8392, %v7370
  %v8394 = vadd.f32 %v8393, %v7371
  %v8395 = vadd.f32 %v8394, %v7372
  %v8396 = vadd.f32 %v8395, %v7373
  %v8397 = vadd.f32 %v8396, %v7374
  %v8398 = vadd.f32 %v8397, %v7375
  %v8399 = vadd.f32 %v8398, %v7376
  %v8400 = vadd.f32 %v8399, %v7377
  %v8401 = vadd.f32 %v8400, %v7378
  %v8402 = vadd.f32 %v8401, %v7379
  %v8403 = vadd.f32 %v8402, %v7380
  %v8404 = vadd.f32 %v8403, %v7381
  %v8405 = vadd.f32 %v8404, %v7382
  %v8406 = vadd.f32 %v8405, %v7383
  %v8407 = vadd.f32 %v8406, %v7384
  %v8408 = vadd.f32 %v8407, %v7385
  %v8409 = vadd.f32 %v8408, %v7386
  %v8410 = vadd.f32 %v8409, %v7387
  %v8411 = vadd.f32 %v8410, %v7388
  %v8412 = vadd.f32 %v8411, %v7389
  %v8413 = vadd.f32 %v8412, %v7390
  %v8414 = vadd.f32 %v8413, %v7391
  %v8415 = vadd.f32 %v8414, %v7392
  %v8416 = vadd.f32 %v8415, %v7393
  %v8417 = vadd.f32 %v8416, %v7394
  %v8418 = vadd.f32 %v8417, %v7395
  %v8419 = vadd.f32 %v8418, %v7396
  %v8420 = vadd.f32 %v8419, %v7397
  %v8421 = vadd.f32 %v8420, %v7398
  %v8422 = vadd.f32 %v8421, %v7399
  %v8423 = vadd.f32 %v8422, %v7400
  %v8424 = vadd.f32 %v8423, %v7401
  %v8425 = vadd.f32 %v8424, %v7402
  %v8426 = vadd.f32 %v8425, %v7403
  %v8427 = vadd.f32 %v8426, %v7404
  %v8428 = vadd.f32 %v8427, %v7405
  %v8429 = vadd.f32 %v8428, %v7406
  %v8430 = vadd.f32 %v8429, %v7407
  %v8431 = vadd.f32 %v8430, %v7408
  %v8432 = vadd.f32 %v8431, %v7409
  %v8433 = vadd.f32 %v8432, %v7410
  %v8434 = vadd.f32 %v8433, %v7411
  %v8435 = vadd.f32 %v8434, %v7412
  %v8436 = vadd.f32 %v8435, %v7413
  %v8437 = vadd.f32 %v8436, %v7414
  %v8438 = vadd.f32 %v8437, %v7415
  %v8439 = vadd.f32 %v8438, %v7416
  %v8440 = vadd.f32 %v8439, %v7417
  %v8441 = vadd.f32 %v8440, %v7418
  %v8442 = vadd.f32 %v8441, %v7419
  %v8443 = vadd.f32 %v8442, %v7420
  %v8444 = vadd.f32 %v8443, %v7421
  %v8445 = vadd.f32 %v8444, %v7422
  %v8446 = vadd.f32 %v8445, %v7423
  %v8447 = vadd.f32 %v8446, %v7424
  %v8448 = vadd.f32 %v8447, %v7425
  %v8449 = vadd.f32 %v8448, %v7426
  %v8450 = vadd.f32 %v8449, %v7427
  %v8451 = vadd.f32 %v8450, %v7428
  %v8452 = vadd.f32 %v8451, %v7429
  %v8453 = vadd.f32 %v8452, %v7430
  %v8454 = vadd.f32 %v8453, %v7431
  %v8455 = vadd.f32 %v8454, %v7432
  %v8456 = vadd.f32 %v8455, %v7433
  %v8457 = vadd.f32 %v8456, %v7434
  %v8458 = vadd.f32 %v8457, %v7435
  %v8459 = vadd.f32 %v8458, %v7436
  %v8460 = vadd.f32 %v8459, %v7437
  %v8461 = vadd.f32 %v8460, %v7438
  %v8462 = vadd.f32 %v8461, %v7439
  %v8463 = vadd.f32 %v8462, %v7440
  %8464 = vadd.xlane.f32.xlu0 %v8463
  %v8465 = vpop.xlane.xlu0 %8464
  %s8466 = sld [smem:[#allocation2]]
  %v8467 = vstv %s8466
  %v8468 = vadd.f32 %v8465, %v8467
  %vm8469 = vcmask 7168
  %8470 = vst.msk [vmem:[%s3] sm:$0xff] %vm8469, %v8468
  %v8471 = vxor.u32 %v8468, 2147483648
  %v8472 = vmul.f32 %v8471, 1.442695
  %v8473 = vpow.pop %v8472
  %v8474 = vadd.f32 %v8473, 1.0
  %v8475 = vrcp.pop %v8474
  %v8476 = vmul.f32 1.0, %v8475
  %8477 = vst.msk [vmem:[%s4] sm:$0xff] %vm8469, %v8476
  // Predicated region
  $region14: #{behaviour_forward.1} parent=0 // pred_check
    _
  $region15: #{behaviour_forward.1} parent=0 // pred_check_branch
    %8479 = sbr.rel (0) target = $region17
  $region16: #{behaviour_forward.1} parent=0 // pred_region
    _
  $region17: #{behaviour_forward.1} parent=0 // pred_fallthru
    _
  // Predicated region
  $region18: #{behaviour_forward.1} parent=0 // pred_check
    _
  $region19: #{behaviour_forward.1} parent=0 // pred_check_branch
    %8481 = sbr.rel (0) target = $region21
  $region20: #{behaviour_forward.1} parent=0 // pred_region
    _
  $region21: #{behaviour_forward.1} parent=0 // pred_fallthru
    _
  // Predicated region
  $region22: #{behaviour_forward.1} parent=0 // pred_check
    _
  $region23: #{behaviour_forward.1} parent=0 // pred_check_branch
    %8483 = sbr.rel (0) target = $region25
  $region24: #{behaviour_forward.1} parent=0 // pred_region
    _
  $region25: #{behaviour_forward.1} parent=0 // pred_fallthru
    _
  // Predicated region
  $region26: #{behaviour_forward.1} parent=0 // pred_check
    _
  $region27: #{behaviour_forward.1} parent=0 // pred_check_branch
    %8485 = sbr.rel (0) target = $region29
  $region28: #{behaviour_forward.1} parent=0 // pred_region
    _
  $region29: #{behaviour_forward.1} parent=0 // pred_fallthru
    _

</llo_original>
